<compile_context>
chip_gen: v7x
topology: tpu7x:2x2x1
jax: 0.10.0
libtpu: 0.0.40
codegen_flags: <defaults>
</compile_context>

<pallas_src>
import functools

import jax
import jax.numpy as jnp
from jax.experimental import pallas as pl
from jax.experimental.pallas import tpu as pltpu


WORD_HIDDEN = 32
SENT_HIDDEN = 32
NUM_CLASSES = 4
MAX_SENT_LENGTH = 3
MAX_WORD_LENGTH = 8
VOCAB = 50
EMBED = 32
BATCH = 2
NUM_BRANCHES = 3   # processing order of the torch forward: before2, before1, input
_SUBLANE = 8


def _round_up(x, m):
    return (x + m - 1) // m * m


# -----------------------------------------------------------------------------
# In-kernel helpers (pure functions on VMEM-resident values; T is small and
# static, so everything unrolls inside the single kernel body)
# -----------------------------------------------------------------------------
def _fwd_lane_mask(H):
    """(1, 8H) mask, True on the forward-direction lanes of the wide gate
    layout [i_f i_b | f_f f_b | o_f o_b | g_f g_b]."""
    lane = jax.lax.broadcasted_iota(jnp.int32, (1, 8 * H), 1)
    return (lane % (2 * H)) < H


def _bilstm_steps(gx_list, h, c, whh_bd, fwd_mask, H):
    """Fused bidirectional LSTM recurrence on a wide (Bc, 2H) state.

    gx_list[t] : (Bc, 8H) f32 pre-projected gate input for time t
                 (x_t @ wih_both + bias; fwd lanes = fwd gates, bwd = bwd gates)
    whh_bd     : (2H, 8H) block-diagonal recurrent weights (both directions)
    Step i advances forward time i and backward time T-1-i with ONE matmul.
    Returns loop-order hidden list (step i = [h_fwd(i) | h_bwd(T-1-i)]),
    final h, final c.
    """
    T = len(gx_list)
    # Forward/backward time pairing done with a static lane select, hoisted
    # off the serial chain (only h @ whh + activations remain per step).
    gsel = [jnp.where(fwd_mask, gx_list[i], gx_list[T - 1 - i]) for i in range(T)]
    hs_loop = []
    for i in range(T):
        gates = gsel[i] + jnp.dot(h, whh_bd, preferred_element_type=jnp.float32)
        sig = jax.nn.sigmoid(gates[:, 0:6 * H])     # [i | f | o]  -> one EUP push
        g_g = jnp.tanh(gates[:, 6 * H:8 * H])       # [g]          -> one EUP push
        c = sig[:, 2 * H:4 * H] * c + sig[:, 0:2 * H] * g_g
        h = sig[:, 4 * H:6 * H] * jnp.tanh(c)
        hs_loop.append(h)
    return hs_loop, h, c


def _align_time(hs_loop, H):
    """Loop-order wide states -> time-aligned (T*Bc, 2H) stack with row block t
    = [h_fwd(t) | h_bwd(t)].  Two sublane concats + one lane concat (no
    per-timestep lane concats)."""
    fwd = jnp.concatenate(hs_loop, axis=0)[:, 0:H]             # time order
    bwd = jnp.concatenate(hs_loop[::-1], axis=0)[:, H:2 * H]   # time order
    return jnp.concatenate([fwd, bwd], axis=-1)


def _attention_pool(hs_flat, watt, batt, ctx, *, G, T, Bc):
    """Additive attention + softmax over the T axis, batched over G groups.

    hs_flat : (G*T*Bc, 2H) time-aligned hidden states, group-major, time-major.
    Returns : (G*Bc, 2H) pooled vectors (group-major).
    One matmul + one tanh covers all groups; the softmax/pool stays in the
    natural (T*Bc, 1) score-column layout (no lane-sparse (Bc, T) relayout).
    """
    u = jnp.tanh(jnp.dot(hs_flat, watt, preferred_element_type=jnp.float32) + batt)
    s_all = jnp.sum(u * ctx, axis=-1, keepdims=True)           # (G*T*Bc, 1)
    pooled = []
    for g in range(G):
        base = g * T * Bc
        s_t = [s_all[base + t * Bc: base + (t + 1) * Bc, :] for t in range(T)]
        m = s_t[0]
        for t in range(1, T):
            m = jnp.maximum(m, s_t[t])
        # one exp per group over the contiguous (T*Bc, 1) block
        e = jnp.exp(s_all[base: base + T * Bc, :]
                    - jnp.concatenate([m] * T, axis=0))
        den = e[0:Bc, :]
        for t in range(1, T):
            den = den + e[t * Bc:(t + 1) * Bc, :]
        inv = 1.0 / den                                        # (Bc, 1)
        acc = (e[0:Bc, :] * inv) * hs_flat[base: base + Bc, :]
        for t in range(1, T):
            acc = acc + ((e[t * Bc:(t + 1) * Bc, :] * inv)
                         * hs_flat[base + t * Bc: base + (t + 1) * Bc, :])
        pooled.append(acc)
    return pooled[0] if G == 1 else jnp.concatenate(pooled, axis=0)


# -----------------------------------------------------------------------------
# Fused whole-network kernel
# -----------------------------------------------------------------------------
def han_fused_kernel(x_ref,
                     w_wih, w_whh, w_b, w_watt, w_batt, w_ctx,
                     s_wih, s_whh, s_b, s_watt, s_batt, s_ctx,
                     t_wih, t_whh, t_b, t_watt, t_batt, t_ctx,
                     fc_w, fc_b, out_ref,
                     *, S, W, BBp, B, NB):
    """Entire HierAttNet forward; every intermediate stays in VMEM.

    x_ref : (S*W*BBp, E) bf16 embedded tokens, rows ordered
            (sentence, word, [before2 | before1 | input | pad]).
    out   : (B, num_classes) f32 logits.
    """
    Hw = w_whh.shape[0] // 2
    Hs = s_whh.shape[0] // 2

    # ---- word level ---------------------------------------------------------
    # ONE batched input projection for every branch/sentence/word (bf16 MXU
    # operands, f32 accumulate); fwd+bwd biases folded in exactly once.
    gx_all = (jnp.dot(x_ref[...], w_wih[...], preferred_element_type=jnp.float32)
              + w_b[...])                                        # (S*W*BBp, 8Hw)
    mask_w = _fwd_lane_mask(Hw)
    whh_w = w_whh[...]

    # Hidden state chains across the sentences of a branch (matches the
    # persistent word_hidden_state_* usage inside one torch forward()).
    h = jnp.zeros((BBp, 2 * Hw), jnp.float32)
    c = jnp.zeros((BBp, 2 * Hw), jnp.float32)
    hs_word = []
    for s in range(S):
        gx_s = [gx_all[(s * W + t) * BBp:(s * W + t + 1) * BBp, :]
                for t in range(W)]
        hs_loop, h, c = _bilstm_steps(gx_s, h, c, whh_w, mask_w, Hw)
        hs_word.append(_align_time(hs_loop, Hw))                 # (W*BBp, 2Hw)

    # ONE batched attention over all sentences (softmax per sentence over W).
    sent_vecs = _attention_pool(jnp.concatenate(hs_word, axis=0),
                                w_watt[...], w_batt[...], w_ctx[...],
                                G=S, T=W, Bc=BBp)                # (S*BBp, 2Hw)

    # ---- sentence level (per branch, still row-batched) ----------------------
    gx_sent = (jnp.dot(sent_vecs, s_wih[...], preferred_element_type=jnp.float32)
               + s_b[...])                                       # (S*BBp, 8Hs)
    mask_s = _fwd_lane_mask(Hs)
    z = jnp.zeros((BBp, 2 * Hs), jnp.float32)
    hs_loop, _, _ = _bilstm_steps(
        [gx_sent[t * BBp:(t + 1) * BBp, :] for t in range(S)], z, z,
        s_whh[...], mask_s, Hs)
    doc_vec = _attention_pool(_align_time(hs_loop, Hs),
                              s_watt[...], s_batt[...], s_ctx[...],
                              G=1, T=S, Bc=BBp)                  # (BBp, 2Hs)

    # ---- total level: the NB branch vectors form a length-NB sequence -------
    tot_in = doc_vec[0:NB * B, :]                                # drop pad rows
    gx_tot = (jnp.dot(tot_in, t_wih[...], preferred_element_type=jnp.float32)
              + t_b[...])                                        # (NB*B, 8Hs)
    z_t = jnp.zeros((B, 2 * Hs), jnp.float32)
    hs_loop, _, _ = _bilstm_steps(
        [gx_tot[k * B:(k + 1) * B, :] for k in range(NB)], z_t, z_t,
        t_whh[...], mask_s, Hs)
    tot_vec = _attention_pool(_align_time(hs_loop, Hs),
                              t_watt[...], t_batt[...], t_ctx[...],
                              G=1, T=NB, Bc=B)                   # (B, 2Hs)

    # ---- classifier head -----------------------------------------------------
    out_ref[...] = (jnp.dot(tot_vec, fc_w[...], preferred_element_type=jnp.float32)
                    + fc_b[...])


# -----------------------------------------------------------------------------
# Parameter packing (hoisted out of the per-call forward; done once at init)
# -----------------------------------------------------------------------------
def _pack_bilstm(p, H, wih_dtype=jnp.float32):
    """torch-style per-direction LSTM params -> fused wide layout.

    Input : wih (2, Din, 4H), whh (2, H, 4H), b (2, 1, 4H); gate order [i,f,g,o];
            index 0 = forward, 1 = backward.
    Output: wih (Din, 8H) DENSE (fwd lanes = dir0, bwd lanes = dir1),
            whh (2H, 8H) block-diagonal (rows 0:H act on h_fwd, H:2H on h_bwd),
            b   (1, 8H) both biases, applied exactly once with the projection.
            Wide gate column order: [i_f i_b | f_f f_b | o_f o_b | g_f g_b]
            (sigmoid gates contiguous in lanes 0:6H, tanh gate in 6H:8H).
    """
    wih, whh, b = p['wih'], p['whh'], p['b']
    gate_order = (0, 1, 3, 2)   # i, f, o, g  (from the stored i, f, g, o)

    def widen(a_f, a_b):
        return jnp.concatenate(
            [jnp.concatenate([a_f[..., k * H:(k + 1) * H],
                              a_b[..., k * H:(k + 1) * H]], axis=-1)
             for k in gate_order], axis=-1)

    zh = jnp.zeros_like(whh[0])
    return {
        'wih': widen(wih[0], wih[1]).astype(wih_dtype),
        'whh': jnp.concatenate([widen(whh[0], zh), widen(zh, whh[1])], axis=0),
        'b': widen(b[0], b[1]),
        'watt': p['watt'], 'batt': p['batt'], 'ctx': p['ctx'],
    }


def pack_params(raw):
    """One-time weight packing (kept out of the jitted forward path)."""
    return {
        'embedding': raw['embedding'],
        # word-level wih feeds the big batched projection -> bf16 MXU operand
        'word':  _pack_bilstm(raw['word'], WORD_HIDDEN, wih_dtype=jnp.bfloat16),
        'sent':  _pack_bilstm(raw['sent'], SENT_HIDDEN),
        'total': _pack_bilstm(raw['total'], SENT_HIDDEN),
        'fc_w': raw['fc_w'], 'fc_b': raw['fc_b'],
    }


_VMEM = pl.BlockSpec(memory_space=pltpu.MemorySpace.VMEM)


def hier_att_net_forward(packed, input_ids, before1_ids, before2_ids):
    B, S, W = input_ids.shape
    BB = NUM_BRANCHES * B
    BBp = _round_up(BB, _SUBLANE)   # pad rows to a full 8-sublane granule

    # One batched embedding gather for all branches/sentences/words (the
    # (VOCAB, E) table never needs VMEM residency), then a time-major
    # (sentence, word, row) layout with rows = [before2 | before1 | input | pad]
    # matching the torch forward's branch order.
    ids_all = jnp.stack([before2_ids, before1_ids, input_ids], axis=0)   # (3,B,S,W)
    emb = jnp.take(packed['embedding'], ids_all, axis=0)                 # (3,B,S,W,E)
    x = jnp.transpose(emb, (2, 3, 0, 1, 4)).reshape(S, W, BB, EMBED)
    if BBp != BB:
        x = jnp.pad(x, ((0, 0), (0, 0), (0, BBp - BB), (0, 0)))
    x = x.reshape(S * W * BBp, EMBED).astype(jnp.bfloat16)   # bf16 MXU operand

    level_args = []
    for lvl in ('word', 'sent', 'total'):
        p = packed[lvl]
        level_args += [p['wih'], p['whh'], p['b'], p['watt'], p['batt'], p['ctx']]

    kernel = functools.partial(han_fused_kernel, S=S, W=W, BBp=BBp, B=B,
                               NB=NUM_BRANCHES)
    n_in = 1 + len(level_args) + 2
    # Everything (< ~0.5 MB) fits whole-array in VMEM; no grid needed.
    # TODO(synk): if S*W*B or EMBED grows, switch x to a gridded BlockSpec and
    # set pltpu.CompilerParams(vmem_limit_bytes=...) (v7x has only 64 MiB VMEM).
    return pl.pallas_call(
        kernel,
        out_shape=jax.ShapeDtypeStruct((B, NUM_CLASSES), jnp.float32),
        in_specs=[_VMEM] * n_in,
        out_specs=_VMEM,
    )(x, *level_args, packed['fc_w'], packed['fc_b'])


# -----------------------------------------------------------------------------
# Parameter init (torch-like per-direction layout; random stand-in for word2vec)
# -----------------------------------------------------------------------------
def init_params(key):
    ks = jax.random.split(key, 8)

    def nrm(k, shape, scale=0.1):
        return (scale * jax.random.normal(k, shape)).astype(jnp.float32)

    def lstm_attn_params(k, din, h):
        kk = jax.random.split(k, 6)
        return {
            'wih':  nrm(kk[0], (2, din, 4 * h)),
            'whh':  nrm(kk[1], (2, h, 4 * h)),
            'b':    nrm(kk[2], (2, 1, 4 * h)),
            'watt': nrm(kk[3], (2 * h, 2 * h)),
            'batt': nrm(kk[4], (1, 2 * h)),
            'ctx':  nrm(kk[5], (1, 2 * h)),
        }

    return {
        'embedding': nrm(ks[0], (VOCAB, EMBED)),     # stands in for word2vec
        'word':  lstm_attn_params(ks[1], EMBED, WORD_HIDDEN),
        'sent':  lstm_attn_params(ks[2], 2 * WORD_HIDDEN, SENT_HIDDEN),
        'total': lstm_attn_params(ks[3], 2 * SENT_HIDDEN, SENT_HIDDEN),
        'fc_w':  nrm(ks[4], (2 * SENT_HIDDEN, NUM_CLASSES)),
        'fc_b':  nrm(ks[5], (1, NUM_CLASSES)),
    }


if __name__ == "__main__":
    key = jax.random.PRNGKey(0)
    k_params, k_in, k_b1, k_b2 = jax.random.split(key, 4)
    raw_params = init_params(k_params)
    params = pack_params(raw_params)   # one-time packing, outside the forward

    shp = (BATCH, MAX_SENT_LENGTH, MAX_WORD_LENGTH)
    input_ids = jax.random.randint(k_in, shp, 0, VOCAB, dtype=jnp.int32)
    before1_ids = jax.random.randint(k_b1, shp, 0, VOCAB, dtype=jnp.int32)
    before2_ids = jax.random.randint(k_b2, shp, 0, VOCAB, dtype=jnp.int32)

    fwd = jax.jit(hier_att_net_forward)
    out = fwd(params, input_ids, before1_ids, before2_ids)
    out = jax.block_until_ready(out)
    assert out.shape == (BATCH, NUM_CLASSES)
    assert bool(jnp.all(jnp.isfinite(out)))
    print("KERNEL_OK")
</pallas_src>

<mosaic_0001>
module attributes {stable_mosaic.version = 11 : i64} {
  func.func @han_fused_kernel(%arg0: memref<192x32xbf16, #tpu.memory_space<vmem>>, %arg1: memref<32x256xbf16, #tpu.memory_space<vmem>>, %arg2: memref<64x256xf32, #tpu.memory_space<vmem>>, %arg3: memref<1x256xf32, #tpu.memory_space<vmem>>, %arg4: memref<64x64xf32, #tpu.memory_space<vmem>>, %arg5: memref<1x64xf32, #tpu.memory_space<vmem>>, %arg6: memref<1x64xf32, #tpu.memory_space<vmem>>, %arg7: memref<64x256xf32, #tpu.memory_space<vmem>>, %arg8: memref<64x256xf32, #tpu.memory_space<vmem>>, %arg9: memref<1x256xf32, #tpu.memory_space<vmem>>, %arg10: memref<64x64xf32, #tpu.memory_space<vmem>>, %arg11: memref<1x64xf32, #tpu.memory_space<vmem>>, %arg12: memref<1x64xf32, #tpu.memory_space<vmem>>, %arg13: memref<64x256xf32, #tpu.memory_space<vmem>>, %arg14: memref<64x256xf32, #tpu.memory_space<vmem>>, %arg15: memref<1x256xf32, #tpu.memory_space<vmem>>, %arg16: memref<64x64xf32, #tpu.memory_space<vmem>>, %arg17: memref<1x64xf32, #tpu.memory_space<vmem>>, %arg18: memref<1x64xf32, #tpu.memory_space<vmem>>, %arg19: memref<64x4xf32, #tpu.memory_space<vmem>>, %arg20: memref<1x4xf32, #tpu.memory_space<vmem>>, %arg21: memref<2x4xf32, #tpu.memory_space<vmem>>) attributes {dimension_semantics = [], scalar_prefetch = 0 : i64, scratch_operands = 0 : i64, tpu.core_type = #tpu.core_type<tc>} {
    %c0 = arith.constant 0 : index
    %c0_0 = arith.constant 0 : index
    %0 = vector.load %arg0[%c0, %c0_0] : memref<192x32xbf16, #tpu.memory_space<vmem>>, vector<192x32xbf16>
    %c0_1 = arith.constant 0 : index
    %c0_2 = arith.constant 0 : index
    %1 = vector.load %arg1[%c0_1, %c0_2] : memref<32x256xbf16, #tpu.memory_space<vmem>>, vector<32x256xbf16>
    %cst = arith.constant dense<0.000000e+00> : vector<192x256xf32>
    %2 = tpu.matmul %0, %1, %cst {dimension_numbers = #tpu.dot_dimension_numbers<[1], [0], [0], [1], [0, 0, 1, 1], [], []>} : vector<192x32xbf16>, vector<32x256xbf16>, vector<192x256xf32> -> vector<192x256xf32>
    %c0_3 = arith.constant 0 : index
    %c0_4 = arith.constant 0 : index
    %3 = vector.load %arg3[%c0_3, %c0_4] : memref<1x256xf32, #tpu.memory_space<vmem>>, vector<1x256xf32>
    %4 = vector.broadcast %3 : vector<1x256xf32> to vector<192x256xf32>
    %5 = arith.addf %2, %4 : vector<192x256xf32>
    %6 = tpu.iota {dimensions = array<i32: 1>} : vector<1x256xi32>
    %c64_i32 = arith.constant 64 : i32
    %c0_i32 = arith.constant 0 : i32
    %7 = arith.cmpi eq, %c64_i32, %c0_i32 : i32
    %c1_i32 = arith.constant 1 : i32
    %8 = arith.select %7, %c1_i32, %c64_i32 : i32
    %9 = vector.broadcast %8 : i32 to vector<1x256xi32>
    %10 = arith.remsi %6, %9 : vector<1x256xi32>
    %c0_i32_5 = arith.constant 0 : i32
    %11 = vector.broadcast %c0_i32_5 : i32 to vector<1x256xi32>
    %12 = arith.cmpi ne, %10, %11 : vector<1x256xi32>
    %c0_i32_6 = arith.constant 0 : i32
    %13 = vector.broadcast %c0_i32_6 : i32 to vector<1x256xi32>
    %14 = arith.cmpi slt, %10, %13 : vector<1x256xi32>
    %c0_i32_7 = arith.constant 0 : i32
    %15 = arith.cmpi slt, %8, %c0_i32_7 : i32
    %16 = vector.broadcast %15 : i1 to vector<1x256xi1>
    %17 = vector.broadcast %16 : vector<1x256xi1> to vector<1x256xi1>
    %18 = arith.xori %14, %17 : vector<1x256xi1>
    %19 = arith.andi %18, %12 : vector<1x256xi1>
    %20 = vector.broadcast %8 : i32 to vector<1x256xi32>
    %21 = arith.addi %10, %20 : vector<1x256xi32>
    %22 = arith.select %19, %21, %10 : vector<1x256xi1>, vector<1x256xi32>
    %c32_i32 = arith.constant 32 : i32
    %23 = vector.broadcast %c32_i32 : i32 to vector<1x256xi32>
    %24 = arith.cmpi slt, %22, %23 : vector<1x256xi32>
    %c0_8 = arith.constant 0 : index
    %c0_9 = arith.constant 0 : index
    %25 = vector.load %arg2[%c0_8, %c0_9] : memref<64x256xf32, #tpu.memory_space<vmem>>, vector<64x256xf32>
    %cst_10 = arith.constant 0.000000e+00 : f32
    %26 = vector.broadcast %cst_10 : f32 to vector<8x64xf32>
    %cst_11 = arith.constant 0.000000e+00 : f32
    %27 = vector.broadcast %cst_11 : f32 to vector<8x64xf32>
    %28 = vector.extract_strided_slice %5 {offsets = [0, 0], sizes = [8, 256], strides = [1, 1]} : vector<192x256xf32> to vector<8x256xf32>
    %29 = vector.extract_strided_slice %5 {offsets = [8, 0], sizes = [8, 256], strides = [1, 1]} : vector<192x256xf32> to vector<8x256xf32>
    %30 = vector.extract_strided_slice %5 {offsets = [16, 0], sizes = [8, 256], strides = [1, 1]} : vector<192x256xf32> to vector<8x256xf32>
    %31 = vector.extract_strided_slice %5 {offsets = [24, 0], sizes = [8, 256], strides = [1, 1]} : vector<192x256xf32> to vector<8x256xf32>
    %32 = vector.extract_strided_slice %5 {offsets = [32, 0], sizes = [8, 256], strides = [1, 1]} : vector<192x256xf32> to vector<8x256xf32>
    %33 = vector.extract_strided_slice %5 {offsets = [40, 0], sizes = [8, 256], strides = [1, 1]} : vector<192x256xf32> to vector<8x256xf32>
    %34 = vector.extract_strided_slice %5 {offsets = [48, 0], sizes = [8, 256], strides = [1, 1]} : vector<192x256xf32> to vector<8x256xf32>
    %35 = vector.extract_strided_slice %5 {offsets = [56, 0], sizes = [8, 256], strides = [1, 1]} : vector<192x256xf32> to vector<8x256xf32>
    %36 = vector.shape_cast %24 : vector<1x256xi1> to vector<1x256xi1>
    %37 = vector.broadcast %36 : vector<1x256xi1> to vector<8x256xi1>
    %38 = arith.select %37, %28, %35 : vector<8x256xi1>, vector<8x256xf32>
    %39 = vector.shape_cast %24 : vector<1x256xi1> to vector<1x256xi1>
    %40 = vector.broadcast %39 : vector<1x256xi1> to vector<8x256xi1>
    %41 = arith.select %40, %29, %34 : vector<8x256xi1>, vector<8x256xf32>
    %42 = vector.shape_cast %24 : vector<1x256xi1> to vector<1x256xi1>
    %43 = vector.broadcast %42 : vector<1x256xi1> to vector<8x256xi1>
    %44 = arith.select %43, %30, %33 : vector<8x256xi1>, vector<8x256xf32>
    %45 = vector.shape_cast %24 : vector<1x256xi1> to vector<1x256xi1>
    %46 = vector.broadcast %45 : vector<1x256xi1> to vector<8x256xi1>
    %47 = arith.select %46, %31, %32 : vector<8x256xi1>, vector<8x256xf32>
    %48 = vector.shape_cast %24 : vector<1x256xi1> to vector<1x256xi1>
    %49 = vector.broadcast %48 : vector<1x256xi1> to vector<8x256xi1>
    %50 = arith.select %49, %32, %31 : vector<8x256xi1>, vector<8x256xf32>
    %51 = vector.shape_cast %24 : vector<1x256xi1> to vector<1x256xi1>
    %52 = vector.broadcast %51 : vector<1x256xi1> to vector<8x256xi1>
    %53 = arith.select %52, %33, %30 : vector<8x256xi1>, vector<8x256xf32>
    %54 = vector.shape_cast %24 : vector<1x256xi1> to vector<1x256xi1>
    %55 = vector.broadcast %54 : vector<1x256xi1> to vector<8x256xi1>
    %56 = arith.select %55, %34, %29 : vector<8x256xi1>, vector<8x256xf32>
    %57 = vector.shape_cast %24 : vector<1x256xi1> to vector<1x256xi1>
    %58 = vector.broadcast %57 : vector<1x256xi1> to vector<8x256xi1>
    %59 = arith.select %58, %35, %28 : vector<8x256xi1>, vector<8x256xf32>
    %cst_12 = arith.constant dense<0.000000e+00> : vector<8x256xf32>
    %60 = tpu.matmul %26, %25, %cst_12 {dimension_numbers = #tpu.dot_dimension_numbers<[1], [0], [0], [1], [0, 0, 1, 1], [], []>} : vector<8x64xf32>, vector<64x256xf32>, vector<8x256xf32> -> vector<8x256xf32>
    %61 = arith.addf %38, %60 : vector<8x256xf32>
    %62 = vector.extract_strided_slice %61 {offsets = [0, 0], sizes = [8, 192], strides = [1, 1]} : vector<8x256xf32> to vector<8x192xf32>
    %63 = arith.negf %62 : vector<8x192xf32>
    %64 = math.exp %63 : vector<8x192xf32>
    %cst_13 = arith.constant 1.000000e+00 : f32
    %65 = vector.broadcast %cst_13 : f32 to vector<8x192xf32>
    %66 = arith.addf %65, %64 : vector<8x192xf32>
    %67 = arith.divf %65, %66 : vector<8x192xf32>
    %68 = vector.extract_strided_slice %61 {offsets = [0, 192], sizes = [8, 64], strides = [1, 1]} : vector<8x256xf32> to vector<8x64xf32>
    %69 = math.tanh %68 : vector<8x64xf32>
    %70 = vector.extract_strided_slice %67 {offsets = [0, 64], sizes = [8, 64], strides = [1, 1]} : vector<8x192xf32> to vector<8x64xf32>
    %71 = arith.mulf %70, %27 : vector<8x64xf32>
    %72 = vector.extract_strided_slice %67 {offsets = [0, 0], sizes = [8, 64], strides = [1, 1]} : vector<8x192xf32> to vector<8x64xf32>
    %73 = arith.mulf %72, %69 : vector<8x64xf32>
    %74 = arith.addf %71, %73 : vector<8x64xf32>
    %75 = vector.extract_strided_slice %67 {offsets = [0, 128], sizes = [8, 64], strides = [1, 1]} : vector<8x192xf32> to vector<8x64xf32>
    %76 = math.tanh %74 : vector<8x64xf32>
    %77 = arith.mulf %75, %76 : vector<8x64xf32>
    %cst_14 = arith.constant dense<0.000000e+00> : vector<8x256xf32>
    %78 = tpu.matmul %77, %25, %cst_14 {dimension_numbers = #tpu.dot_dimension_numbers<[1], [0], [0], [1], [0, 0, 1, 1], [], []>} : vector<8x64xf32>, vector<64x256xf32>, vector<8x256xf32> -> vector<8x256xf32>
    %79 = arith.addf %41, %78 : vector<8x256xf32>
    %80 = vector.extract_strided_slice %79 {offsets = [0, 0], sizes = [8, 192], strides = [1, 1]} : vector<8x256xf32> to vector<8x192xf32>
    %81 = arith.negf %80 : vector<8x192xf32>
    %82 = math.exp %81 : vector<8x192xf32>
    %cst_15 = arith.constant 1.000000e+00 : f32
    %83 = vector.broadcast %cst_15 : f32 to vector<8x192xf32>
    %84 = arith.addf %83, %82 : vector<8x192xf32>
    %85 = arith.divf %83, %84 : vector<8x192xf32>
    %86 = vector.extract_strided_slice %79 {offsets = [0, 192], sizes = [8, 64], strides = [1, 1]} : vector<8x256xf32> to vector<8x64xf32>
    %87 = math.tanh %86 : vector<8x64xf32>
    %88 = vector.extract_strided_slice %85 {offsets = [0, 64], sizes = [8, 64], strides = [1, 1]} : vector<8x192xf32> to vector<8x64xf32>
    %89 = arith.mulf %88, %74 : vector<8x64xf32>
    %90 = vector.extract_strided_slice %85 {offsets = [0, 0], sizes = [8, 64], strides = [1, 1]} : vector<8x192xf32> to vector<8x64xf32>
    %91 = arith.mulf %90, %87 : vector<8x64xf32>
    %92 = arith.addf %89, %91 : vector<8x64xf32>
    %93 = vector.extract_strided_slice %85 {offsets = [0, 128], sizes = [8, 64], strides = [1, 1]} : vector<8x192xf32> to vector<8x64xf32>
    %94 = math.tanh %92 : vector<8x64xf32>
    %95 = arith.mulf %93, %94 : vector<8x64xf32>
    %cst_16 = arith.constant dense<0.000000e+00> : vector<8x256xf32>
    %96 = tpu.matmul %95, %25, %cst_16 {dimension_numbers = #tpu.dot_dimension_numbers<[1], [0], [0], [1], [0, 0, 1, 1], [], []>} : vector<8x64xf32>, vector<64x256xf32>, vector<8x256xf32> -> vector<8x256xf32>
    %97 = arith.addf %44, %96 : vector<8x256xf32>
    %98 = vector.extract_strided_slice %97 {offsets = [0, 0], sizes = [8, 192], strides = [1, 1]} : vector<8x256xf32> to vector<8x192xf32>
    %99 = arith.negf %98 : vector<8x192xf32>
    %100 = math.exp %99 : vector<8x192xf32>
    %cst_17 = arith.constant 1.000000e+00 : f32
    %101 = vector.broadcast %cst_17 : f32 to vector<8x192xf32>
    %102 = arith.addf %101, %100 : vector<8x192xf32>
    %103 = arith.divf %101, %102 : vector<8x192xf32>
    %104 = vector.extract_strided_slice %97 {offsets = [0, 192], sizes = [8, 64], strides = [1, 1]} : vector<8x256xf32> to vector<8x64xf32>
    %105 = math.tanh %104 : vector<8x64xf32>
    %106 = vector.extract_strided_slice %103 {offsets = [0, 64], sizes = [8, 64], strides = [1, 1]} : vector<8x192xf32> to vector<8x64xf32>
    %107 = arith.mulf %106, %92 : vector<8x64xf32>
    %108 = vector.extract_strided_slice %103 {offsets = [0, 0], sizes = [8, 64], strides = [1, 1]} : vector<8x192xf32> to vector<8x64xf32>
    %109 = arith.mulf %108, %105 : vector<8x64xf32>
    %110 = arith.addf %107, %109 : vector<8x64xf32>
    %111 = vector.extract_strided_slice %103 {offsets = [0, 128], sizes = [8, 64], strides = [1, 1]} : vector<8x192xf32> to vector<8x64xf32>
    %112 = math.tanh %110 : vector<8x64xf32>
    %113 = arith.mulf %111, %112 : vector<8x64xf32>
    %cst_18 = arith.constant dense<0.000000e+00> : vector<8x256xf32>
    %114 = tpu.matmul %113, %25, %cst_18 {dimension_numbers = #tpu.dot_dimension_numbers<[1], [0], [0], [1], [0, 0, 1, 1], [], []>} : vector<8x64xf32>, vector<64x256xf32>, vector<8x256xf32> -> vector<8x256xf32>
    %115 = arith.addf %47, %114 : vector<8x256xf32>
    %116 = vector.extract_strided_slice %115 {offsets = [0, 0], sizes = [8, 192], strides = [1, 1]} : vector<8x256xf32> to vector<8x192xf32>
    %117 = arith.negf %116 : vector<8x192xf32>
    %118 = math.exp %117 : vector<8x192xf32>
    %cst_19 = arith.constant 1.000000e+00 : f32
    %119 = vector.broadcast %cst_19 : f32 to vector<8x192xf32>
    %120 = arith.addf %119, %118 : vector<8x192xf32>
    %121 = arith.divf %119, %120 : vector<8x192xf32>
    %122 = vector.extract_strided_slice %115 {offsets = [0, 192], sizes = [8, 64], strides = [1, 1]} : vector<8x256xf32> to vector<8x64xf32>
    %123 = math.tanh %122 : vector<8x64xf32>
    %124 = vector.extract_strided_slice %121 {offsets = [0, 64], sizes = [8, 64], strides = [1, 1]} : vector<8x192xf32> to vector<8x64xf32>
    %125 = arith.mulf %124, %110 : vector<8x64xf32>
    %126 = vector.extract_strided_slice %121 {offsets = [0, 0], sizes = [8, 64], strides = [1, 1]} : vector<8x192xf32> to vector<8x64xf32>
    %127 = arith.mulf %126, %123 : vector<8x64xf32>
    %128 = arith.addf %125, %127 : vector<8x64xf32>
    %129 = vector.extract_strided_slice %121 {offsets = [0, 128], sizes = [8, 64], strides = [1, 1]} : vector<8x192xf32> to vector<8x64xf32>
    %130 = math.tanh %128 : vector<8x64xf32>
    %131 = arith.mulf %129, %130 : vector<8x64xf32>
    %cst_20 = arith.constant dense<0.000000e+00> : vector<8x256xf32>
    %132 = tpu.matmul %131, %25, %cst_20 {dimension_numbers = #tpu.dot_dimension_numbers<[1], [0], [0], [1], [0, 0, 1, 1], [], []>} : vector<8x64xf32>, vector<64x256xf32>, vector<8x256xf32> -> vector<8x256xf32>
    %133 = arith.addf %50, %132 : vector<8x256xf32>
    %134 = vector.extract_strided_slice %133 {offsets = [0, 0], sizes = [8, 192], strides = [1, 1]} : vector<8x256xf32> to vector<8x192xf32>
    %135 = arith.negf %134 : vector<8x192xf32>
    %136 = math.exp %135 : vector<8x192xf32>
    %cst_21 = arith.constant 1.000000e+00 : f32
    %137 = vector.broadcast %cst_21 : f32 to vector<8x192xf32>
    %138 = arith.addf %137, %136 : vector<8x192xf32>
    %139 = arith.divf %137, %138 : vector<8x192xf32>
    %140 = vector.extract_strided_slice %133 {offsets = [0, 192], sizes = [8, 64], strides = [1, 1]} : vector<8x256xf32> to vector<8x64xf32>
    %141 = math.tanh %140 : vector<8x64xf32>
    %142 = vector.extract_strided_slice %139 {offsets = [0, 64], sizes = [8, 64], strides = [1, 1]} : vector<8x192xf32> to vector<8x64xf32>
    %143 = arith.mulf %142, %128 : vector<8x64xf32>
    %144 = vector.extract_strided_slice %139 {offsets = [0, 0], sizes = [8, 64], strides = [1, 1]} : vector<8x192xf32> to vector<8x64xf32>
    %145 = arith.mulf %144, %141 : vector<8x64xf32>
    %146 = arith.addf %143, %145 : vector<8x64xf32>
    %147 = vector.extract_strided_slice %139 {offsets = [0, 128], sizes = [8, 64], strides = [1, 1]} : vector<8x192xf32> to vector<8x64xf32>
    %148 = math.tanh %146 : vector<8x64xf32>
    %149 = arith.mulf %147, %148 : vector<8x64xf32>
    %cst_22 = arith.constant dense<0.000000e+00> : vector<8x256xf32>
    %150 = tpu.matmul %149, %25, %cst_22 {dimension_numbers = #tpu.dot_dimension_numbers<[1], [0], [0], [1], [0, 0, 1, 1], [], []>} : vector<8x64xf32>, vector<64x256xf32>, vector<8x256xf32> -> vector<8x256xf32>
    %151 = arith.addf %53, %150 : vector<8x256xf32>
    %152 = vector.extract_strided_slice %151 {offsets = [0, 0], sizes = [8, 192], strides = [1, 1]} : vector<8x256xf32> to vector<8x192xf32>
    %153 = arith.negf %152 : vector<8x192xf32>
    %154 = math.exp %153 : vector<8x192xf32>
    %cst_23 = arith.constant 1.000000e+00 : f32
    %155 = vector.broadcast %cst_23 : f32 to vector<8x192xf32>
    %156 = arith.addf %155, %154 : vector<8x192xf32>
    %157 = arith.divf %155, %156 : vector<8x192xf32>
    %158 = vector.extract_strided_slice %151 {offsets = [0, 192], sizes = [8, 64], strides = [1, 1]} : vector<8x256xf32> to vector<8x64xf32>
    %159 = math.tanh %158 : vector<8x64xf32>
    %160 = vector.extract_strided_slice %157 {offsets = [0, 64], sizes = [8, 64], strides = [1, 1]} : vector<8x192xf32> to vector<8x64xf32>
    %161 = arith.mulf %160, %146 : vector<8x64xf32>
    %162 = vector.extract_strided_slice %157 {offsets = [0, 0], sizes = [8, 64], strides = [1, 1]} : vector<8x192xf32> to vector<8x64xf32>
    %163 = arith.mulf %162, %159 : vector<8x64xf32>
    %164 = arith.addf %161, %163 : vector<8x64xf32>
    %165 = vector.extract_strided_slice %157 {offsets = [0, 128], sizes = [8, 64], strides = [1, 1]} : vector<8x192xf32> to vector<8x64xf32>
    %166 = math.tanh %164 : vector<8x64xf32>
    %167 = arith.mulf %165, %166 : vector<8x64xf32>
    %cst_24 = arith.constant dense<0.000000e+00> : vector<8x256xf32>
    %168 = tpu.matmul %167, %25, %cst_24 {dimension_numbers = #tpu.dot_dimension_numbers<[1], [0], [0], [1], [0, 0, 1, 1], [], []>} : vector<8x64xf32>, vector<64x256xf32>, vector<8x256xf32> -> vector<8x256xf32>
    %169 = arith.addf %56, %168 : vector<8x256xf32>
    %170 = vector.extract_strided_slice %169 {offsets = [0, 0], sizes = [8, 192], strides = [1, 1]} : vector<8x256xf32> to vector<8x192xf32>
    %171 = arith.negf %170 : vector<8x192xf32>
    %172 = math.exp %171 : vector<8x192xf32>
    %cst_25 = arith.constant 1.000000e+00 : f32
    %173 = vector.broadcast %cst_25 : f32 to vector<8x192xf32>
    %174 = arith.addf %173, %172 : vector<8x192xf32>
    %175 = arith.divf %173, %174 : vector<8x192xf32>
    %176 = vector.extract_strided_slice %169 {offsets = [0, 192], sizes = [8, 64], strides = [1, 1]} : vector<8x256xf32> to vector<8x64xf32>
    %177 = math.tanh %176 : vector<8x64xf32>
    %178 = vector.extract_strided_slice %175 {offsets = [0, 64], sizes = [8, 64], strides = [1, 1]} : vector<8x192xf32> to vector<8x64xf32>
    %179 = arith.mulf %178, %164 : vector<8x64xf32>
    %180 = vector.extract_strided_slice %175 {offsets = [0, 0], sizes = [8, 64], strides = [1, 1]} : vector<8x192xf32> to vector<8x64xf32>
    %181 = arith.mulf %180, %177 : vector<8x64xf32>
    %182 = arith.addf %179, %181 : vector<8x64xf32>
    %183 = vector.extract_strided_slice %175 {offsets = [0, 128], sizes = [8, 64], strides = [1, 1]} : vector<8x192xf32> to vector<8x64xf32>
    %184 = math.tanh %182 : vector<8x64xf32>
    %185 = arith.mulf %183, %184 : vector<8x64xf32>
    %cst_26 = arith.constant dense<0.000000e+00> : vector<8x256xf32>
    %186 = tpu.matmul %185, %25, %cst_26 {dimension_numbers = #tpu.dot_dimension_numbers<[1], [0], [0], [1], [0, 0, 1, 1], [], []>} : vector<8x64xf32>, vector<64x256xf32>, vector<8x256xf32> -> vector<8x256xf32>
    %187 = arith.addf %59, %186 : vector<8x256xf32>
    %188 = vector.extract_strided_slice %187 {offsets = [0, 0], sizes = [8, 192], strides = [1, 1]} : vector<8x256xf32> to vector<8x192xf32>
    %189 = arith.negf %188 : vector<8x192xf32>
    %190 = math.exp %189 : vector<8x192xf32>
    %cst_27 = arith.constant 1.000000e+00 : f32
    %191 = vector.broadcast %cst_27 : f32 to vector<8x192xf32>
    %192 = arith.addf %191, %190 : vector<8x192xf32>
    %193 = arith.divf %191, %192 : vector<8x192xf32>
    %194 = vector.extract_strided_slice %187 {offsets = [0, 192], sizes = [8, 64], strides = [1, 1]} : vector<8x256xf32> to vector<8x64xf32>
    %195 = math.tanh %194 : vector<8x64xf32>
    %196 = vector.extract_strided_slice %193 {offsets = [0, 64], sizes = [8, 64], strides = [1, 1]} : vector<8x192xf32> to vector<8x64xf32>
    %197 = arith.mulf %196, %182 : vector<8x64xf32>
    %198 = vector.extract_strided_slice %193 {offsets = [0, 0], sizes = [8, 64], strides = [1, 1]} : vector<8x192xf32> to vector<8x64xf32>
    %199 = arith.mulf %198, %195 : vector<8x64xf32>
    %200 = arith.addf %197, %199 : vector<8x64xf32>
    %201 = vector.extract_strided_slice %193 {offsets = [0, 128], sizes = [8, 64], strides = [1, 1]} : vector<8x192xf32> to vector<8x64xf32>
    %202 = math.tanh %200 : vector<8x64xf32>
    %203 = arith.mulf %201, %202 : vector<8x64xf32>
    %204 = tpu.concatenate %77, %95, %113, %131, %149, %167, %185, %203 in 0 : vector<8x64xf32>, vector<8x64xf32>, vector<8x64xf32>, vector<8x64xf32>, vector<8x64xf32>, vector<8x64xf32>, vector<8x64xf32>, vector<8x64xf32> -> vector<64x64xf32>
    %205 = vector.extract_strided_slice %204 {offsets = [0, 0], sizes = [64, 32], strides = [1, 1]} : vector<64x64xf32> to vector<64x32xf32>
    %206 = tpu.concatenate %203, %185, %167, %149, %131, %113, %95, %77 in 0 : vector<8x64xf32>, vector<8x64xf32>, vector<8x64xf32>, vector<8x64xf32>, vector<8x64xf32>, vector<8x64xf32>, vector<8x64xf32>, vector<8x64xf32> -> vector<64x64xf32>
    %207 = vector.extract_strided_slice %206 {offsets = [0, 32], sizes = [64, 32], strides = [1, 1]} : vector<64x64xf32> to vector<64x32xf32>
    %208 = tpu.concatenate %205, %207 in 1 : vector<64x32xf32>, vector<64x32xf32> -> vector<64x64xf32>
    %209 = vector.extract_strided_slice %5 {offsets = [64, 0], sizes = [8, 256], strides = [1, 1]} : vector<192x256xf32> to vector<8x256xf32>
    %210 = vector.extract_strided_slice %5 {offsets = [72, 0], sizes = [8, 256], strides = [1, 1]} : vector<192x256xf32> to vector<8x256xf32>
    %211 = vector.extract_strided_slice %5 {offsets = [80, 0], sizes = [8, 256], strides = [1, 1]} : vector<192x256xf32> to vector<8x256xf32>
    %212 = vector.extract_strided_slice %5 {offsets = [88, 0], sizes = [8, 256], strides = [1, 1]} : vector<192x256xf32> to vector<8x256xf32>
    %213 = vector.extract_strided_slice %5 {offsets = [96, 0], sizes = [8, 256], strides = [1, 1]} : vector<192x256xf32> to vector<8x256xf32>
    %214 = vector.extract_strided_slice %5 {offsets = [104, 0], sizes = [8, 256], strides = [1, 1]} : vector<192x256xf32> to vector<8x256xf32>
    %215 = vector.extract_strided_slice %5 {offsets = [112, 0], sizes = [8, 256], strides = [1, 1]} : vector<192x256xf32> to vector<8x256xf32>
    %216 = vector.extract_strided_slice %5 {offsets = [120, 0], sizes = [8, 256], strides = [1, 1]} : vector<192x256xf32> to vector<8x256xf32>
    %217 = vector.shape_cast %24 : vector<1x256xi1> to vector<1x256xi1>
    %218 = vector.broadcast %217 : vector<1x256xi1> to vector<8x256xi1>
    %219 = arith.select %218, %209, %216 : vector<8x256xi1>, vector<8x256xf32>
    %220 = vector.shape_cast %24 : vector<1x256xi1> to vector<1x256xi1>
    %221 = vector.broadcast %220 : vector<1x256xi1> to vector<8x256xi1>
    %222 = arith.select %221, %210, %215 : vector<8x256xi1>, vector<8x256xf32>
    %223 = vector.shape_cast %24 : vector<1x256xi1> to vector<1x256xi1>
    %224 = vector.broadcast %223 : vector<1x256xi1> to vector<8x256xi1>
    %225 = arith.select %224, %211, %214 : vector<8x256xi1>, vector<8x256xf32>
    %226 = vector.shape_cast %24 : vector<1x256xi1> to vector<1x256xi1>
    %227 = vector.broadcast %226 : vector<1x256xi1> to vector<8x256xi1>
    %228 = arith.select %227, %212, %213 : vector<8x256xi1>, vector<8x256xf32>
    %229 = vector.shape_cast %24 : vector<1x256xi1> to vector<1x256xi1>
    %230 = vector.broadcast %229 : vector<1x256xi1> to vector<8x256xi1>
    %231 = arith.select %230, %213, %212 : vector<8x256xi1>, vector<8x256xf32>
    %232 = vector.shape_cast %24 : vector<1x256xi1> to vector<1x256xi1>
    %233 = vector.broadcast %232 : vector<1x256xi1> to vector<8x256xi1>
    %234 = arith.select %233, %214, %211 : vector<8x256xi1>, vector<8x256xf32>
    %235 = vector.shape_cast %24 : vector<1x256xi1> to vector<1x256xi1>
    %236 = vector.broadcast %235 : vector<1x256xi1> to vector<8x256xi1>
    %237 = arith.select %236, %215, %210 : vector<8x256xi1>, vector<8x256xf32>
    %238 = vector.shape_cast %24 : vector<1x256xi1> to vector<1x256xi1>
    %239 = vector.broadcast %238 : vector<1x256xi1> to vector<8x256xi1>
    %240 = arith.select %239, %216, %209 : vector<8x256xi1>, vector<8x256xf32>
    %cst_28 = arith.constant dense<0.000000e+00> : vector<8x256xf32>
    %241 = tpu.matmul %203, %25, %cst_28 {dimension_numbers = #tpu.dot_dimension_numbers<[1], [0], [0], [1], [0, 0, 1, 1], [], []>} : vector<8x64xf32>, vector<64x256xf32>, vector<8x256xf32> -> vector<8x256xf32>
    %242 = arith.addf %219, %241 : vector<8x256xf32>
    %243 = vector.extract_strided_slice %242 {offsets = [0, 0], sizes = [8, 192], strides = [1, 1]} : vector<8x256xf32> to vector<8x192xf32>
    %244 = arith.negf %243 : vector<8x192xf32>
    %245 = math.exp %244 : vector<8x192xf32>
    %cst_29 = arith.constant 1.000000e+00 : f32
    %246 = vector.broadcast %cst_29 : f32 to vector<8x192xf32>
    %247 = arith.addf %246, %245 : vector<8x192xf32>
    %248 = arith.divf %246, %247 : vector<8x192xf32>
    %249 = vector.extract_strided_slice %242 {offsets = [0, 192], sizes = [8, 64], strides = [1, 1]} : vector<8x256xf32> to vector<8x64xf32>
    %250 = math.tanh %249 : vector<8x64xf32>
    %251 = vector.extract_strided_slice %248 {offsets = [0, 64], sizes = [8, 64], strides = [1, 1]} : vector<8x192xf32> to vector<8x64xf32>
    %252 = arith.mulf %251, %200 : vector<8x64xf32>
    %253 = vector.extract_strided_slice %248 {offsets = [0, 0], sizes = [8, 64], strides = [1, 1]} : vector<8x192xf32> to vector<8x64xf32>
    %254 = arith.mulf %253, %250 : vector<8x64xf32>
    %255 = arith.addf %252, %254 : vector<8x64xf32>
    %256 = vector.extract_strided_slice %248 {offsets = [0, 128], sizes = [8, 64], strides = [1, 1]} : vector<8x192xf32> to vector<8x64xf32>
    %257 = math.tanh %255 : vector<8x64xf32>
    %258 = arith.mulf %256, %257 : vector<8x64xf32>
    %cst_30 = arith.constant dense<0.000000e+00> : vector<8x256xf32>
    %259 = tpu.matmul %258, %25, %cst_30 {dimension_numbers = #tpu.dot_dimension_numbers<[1], [0], [0], [1], [0, 0, 1, 1], [], []>} : vector<8x64xf32>, vector<64x256xf32>, vector<8x256xf32> -> vector<8x256xf32>
    %260 = arith.addf %222, %259 : vector<8x256xf32>
    %261 = vector.extract_strided_slice %260 {offsets = [0, 0], sizes = [8, 192], strides = [1, 1]} : vector<8x256xf32> to vector<8x192xf32>
    %262 = arith.negf %261 : vector<8x192xf32>
    %263 = math.exp %262 : vector<8x192xf32>
    %cst_31 = arith.constant 1.000000e+00 : f32
    %264 = vector.broadcast %cst_31 : f32 to vector<8x192xf32>
    %265 = arith.addf %264, %263 : vector<8x192xf32>
    %266 = arith.divf %264, %265 : vector<8x192xf32>
    %267 = vector.extract_strided_slice %260 {offsets = [0, 192], sizes = [8, 64], strides = [1, 1]} : vector<8x256xf32> to vector<8x64xf32>
    %268 = math.tanh %267 : vector<8x64xf32>
    %269 = vector.extract_strided_slice %266 {offsets = [0, 64], sizes = [8, 64], strides = [1, 1]} : vector<8x192xf32> to vector<8x64xf32>
    %270 = arith.mulf %269, %255 : vector<8x64xf32>
    %271 = vector.extract_strided_slice %266 {offsets = [0, 0], sizes = [8, 64], strides = [1, 1]} : vector<8x192xf32> to vector<8x64xf32>
    %272 = arith.mulf %271, %268 : vector<8x64xf32>
    %273 = arith.addf %270, %272 : vector<8x64xf32>
    %274 = vector.extract_strided_slice %266 {offsets = [0, 128], sizes = [8, 64], strides = [1, 1]} : vector<8x192xf32> to vector<8x64xf32>
    %275 = math.tanh %273 : vector<8x64xf32>
    %276 = arith.mulf %274, %275 : vector<8x64xf32>
    %cst_32 = arith.constant dense<0.000000e+00> : vector<8x256xf32>
    %277 = tpu.matmul %276, %25, %cst_32 {dimension_numbers = #tpu.dot_dimension_numbers<[1], [0], [0], [1], [0, 0, 1, 1], [], []>} : vector<8x64xf32>, vector<64x256xf32>, vector<8x256xf32> -> vector<8x256xf32>
    %278 = arith.addf %225, %277 : vector<8x256xf32>
    %279 = vector.extract_strided_slice %278 {offsets = [0, 0], sizes = [8, 192], strides = [1, 1]} : vector<8x256xf32> to vector<8x192xf32>
    %280 = arith.negf %279 : vector<8x192xf32>
    %281 = math.exp %280 : vector<8x192xf32>
    %cst_33 = arith.constant 1.000000e+00 : f32
    %282 = vector.broadcast %cst_33 : f32 to vector<8x192xf32>
    %283 = arith.addf %282, %281 : vector<8x192xf32>
    %284 = arith.divf %282, %283 : vector<8x192xf32>
    %285 = vector.extract_strided_slice %278 {offsets = [0, 192], sizes = [8, 64], strides = [1, 1]} : vector<8x256xf32> to vector<8x64xf32>
    %286 = math.tanh %285 : vector<8x64xf32>
    %287 = vector.extract_strided_slice %284 {offsets = [0, 64], sizes = [8, 64], strides = [1, 1]} : vector<8x192xf32> to vector<8x64xf32>
    %288 = arith.mulf %287, %273 : vector<8x64xf32>
    %289 = vector.extract_strided_slice %284 {offsets = [0, 0], sizes = [8, 64], strides = [1, 1]} : vector<8x192xf32> to vector<8x64xf32>
    %290 = arith.mulf %289, %286 : vector<8x64xf32>
    %291 = arith.addf %288, %290 : vector<8x64xf32>
    %292 = vector.extract_strided_slice %284 {offsets = [0, 128], sizes = [8, 64], strides = [1, 1]} : vector<8x192xf32> to vector<8x64xf32>
    %293 = math.tanh %291 : vector<8x64xf32>
    %294 = arith.mulf %292, %293 : vector<8x64xf32>
    %cst_34 = arith.constant dense<0.000000e+00> : vector<8x256xf32>
    %295 = tpu.matmul %294, %25, %cst_34 {dimension_numbers = #tpu.dot_dimension_numbers<[1], [0], [0], [1], [0, 0, 1, 1], [], []>} : vector<8x64xf32>, vector<64x256xf32>, vector<8x256xf32> -> vector<8x256xf32>
    %296 = arith.addf %228, %295 : vector<8x256xf32>
    %297 = vector.extract_strided_slice %296 {offsets = [0, 0], sizes = [8, 192], strides = [1, 1]} : vector<8x256xf32> to vector<8x192xf32>
    %298 = arith.negf %297 : vector<8x192xf32>
    %299 = math.exp %298 : vector<8x192xf32>
    %cst_35 = arith.constant 1.000000e+00 : f32
    %300 = vector.broadcast %cst_35 : f32 to vector<8x192xf32>
    %301 = arith.addf %300, %299 : vector<8x192xf32>
    %302 = arith.divf %300, %301 : vector<8x192xf32>
    %303 = vector.extract_strided_slice %296 {offsets = [0, 192], sizes = [8, 64], strides = [1, 1]} : vector<8x256xf32> to vector<8x64xf32>
    %304 = math.tanh %303 : vector<8x64xf32>
    %305 = vector.extract_strided_slice %302 {offsets = [0, 64], sizes = [8, 64], strides = [1, 1]} : vector<8x192xf32> to vector<8x64xf32>
    %306 = arith.mulf %305, %291 : vector<8x64xf32>
    %307 = vector.extract_strided_slice %302 {offsets = [0, 0], sizes = [8, 64], strides = [1, 1]} : vector<8x192xf32> to vector<8x64xf32>
    %308 = arith.mulf %307, %304 : vector<8x64xf32>
    %309 = arith.addf %306, %308 : vector<8x64xf32>
    %310 = vector.extract_strided_slice %302 {offsets = [0, 128], sizes = [8, 64], strides = [1, 1]} : vector<8x192xf32> to vector<8x64xf32>
    %311 = math.tanh %309 : vector<8x64xf32>
    %312 = arith.mulf %310, %311 : vector<8x64xf32>
    %cst_36 = arith.constant dense<0.000000e+00> : vector<8x256xf32>
    %313 = tpu.matmul %312, %25, %cst_36 {dimension_numbers = #tpu.dot_dimension_numbers<[1], [0], [0], [1], [0, 0, 1, 1], [], []>} : vector<8x64xf32>, vector<64x256xf32>, vector<8x256xf32> -> vector<8x256xf32>
    %314 = arith.addf %231, %313 : vector<8x256xf32>
    %315 = vector.extract_strided_slice %314 {offsets = [0, 0], sizes = [8, 192], strides = [1, 1]} : vector<8x256xf32> to vector<8x192xf32>
    %316 = arith.negf %315 : vector<8x192xf32>
    %317 = math.exp %316 : vector<8x192xf32>
    %cst_37 = arith.constant 1.000000e+00 : f32
    %318 = vector.broadcast %cst_37 : f32 to vector<8x192xf32>
    %319 = arith.addf %318, %317 : vector<8x192xf32>
    %320 = arith.divf %318, %319 : vector<8x192xf32>
    %321 = vector.extract_strided_slice %314 {offsets = [0, 192], sizes = [8, 64], strides = [1, 1]} : vector<8x256xf32> to vector<8x64xf32>
    %322 = math.tanh %321 : vector<8x64xf32>
    %323 = vector.extract_strided_slice %320 {offsets = [0, 64], sizes = [8, 64], strides = [1, 1]} : vector<8x192xf32> to vector<8x64xf32>
    %324 = arith.mulf %323, %309 : vector<8x64xf32>
    %325 = vector.extract_strided_slice %320 {offsets = [0, 0], sizes = [8, 64], strides = [1, 1]} : vector<8x192xf32> to vector<8x64xf32>
    %326 = arith.mulf %325, %322 : vector<8x64xf32>
    %327 = arith.addf %324, %326 : vector<8x64xf32>
    %328 = vector.extract_strided_slice %320 {offsets = [0, 128], sizes = [8, 64], strides = [1, 1]} : vector<8x192xf32> to vector<8x64xf32>
    %329 = math.tanh %327 : vector<8x64xf32>
    %330 = arith.mulf %328, %329 : vector<8x64xf32>
    %cst_38 = arith.constant dense<0.000000e+00> : vector<8x256xf32>
    %331 = tpu.matmul %330, %25, %cst_38 {dimension_numbers = #tpu.dot_dimension_numbers<[1], [0], [0], [1], [0, 0, 1, 1], [], []>} : vector<8x64xf32>, vector<64x256xf32>, vector<8x256xf32> -> vector<8x256xf32>
    %332 = arith.addf %234, %331 : vector<8x256xf32>
    %333 = vector.extract_strided_slice %332 {offsets = [0, 0], sizes = [8, 192], strides = [1, 1]} : vector<8x256xf32> to vector<8x192xf32>
    %334 = arith.negf %333 : vector<8x192xf32>
    %335 = math.exp %334 : vector<8x192xf32>
    %cst_39 = arith.constant 1.000000e+00 : f32
    %336 = vector.broadcast %cst_39 : f32 to vector<8x192xf32>
    %337 = arith.addf %336, %335 : vector<8x192xf32>
    %338 = arith.divf %336, %337 : vector<8x192xf32>
    %339 = vector.extract_strided_slice %332 {offsets = [0, 192], sizes = [8, 64], strides = [1, 1]} : vector<8x256xf32> to vector<8x64xf32>
    %340 = math.tanh %339 : vector<8x64xf32>
    %341 = vector.extract_strided_slice %338 {offsets = [0, 64], sizes = [8, 64], strides = [1, 1]} : vector<8x192xf32> to vector<8x64xf32>
    %342 = arith.mulf %341, %327 : vector<8x64xf32>
    %343 = vector.extract_strided_slice %338 {offsets = [0, 0], sizes = [8, 64], strides = [1, 1]} : vector<8x192xf32> to vector<8x64xf32>
    %344 = arith.mulf %343, %340 : vector<8x64xf32>
    %345 = arith.addf %342, %344 : vector<8x64xf32>
    %346 = vector.extract_strided_slice %338 {offsets = [0, 128], sizes = [8, 64], strides = [1, 1]} : vector<8x192xf32> to vector<8x64xf32>
    %347 = math.tanh %345 : vector<8x64xf32>
    %348 = arith.mulf %346, %347 : vector<8x64xf32>
    %cst_40 = arith.constant dense<0.000000e+00> : vector<8x256xf32>
    %349 = tpu.matmul %348, %25, %cst_40 {dimension_numbers = #tpu.dot_dimension_numbers<[1], [0], [0], [1], [0, 0, 1, 1], [], []>} : vector<8x64xf32>, vector<64x256xf32>, vector<8x256xf32> -> vector<8x256xf32>
    %350 = arith.addf %237, %349 : vector<8x256xf32>
    %351 = vector.extract_strided_slice %350 {offsets = [0, 0], sizes = [8, 192], strides = [1, 1]} : vector<8x256xf32> to vector<8x192xf32>
    %352 = arith.negf %351 : vector<8x192xf32>
    %353 = math.exp %352 : vector<8x192xf32>
    %cst_41 = arith.constant 1.000000e+00 : f32
    %354 = vector.broadcast %cst_41 : f32 to vector<8x192xf32>
    %355 = arith.addf %354, %353 : vector<8x192xf32>
    %356 = arith.divf %354, %355 : vector<8x192xf32>
    %357 = vector.extract_strided_slice %350 {offsets = [0, 192], sizes = [8, 64], strides = [1, 1]} : vector<8x256xf32> to vector<8x64xf32>
    %358 = math.tanh %357 : vector<8x64xf32>
    %359 = vector.extract_strided_slice %356 {offsets = [0, 64], sizes = [8, 64], strides = [1, 1]} : vector<8x192xf32> to vector<8x64xf32>
    %360 = arith.mulf %359, %345 : vector<8x64xf32>
    %361 = vector.extract_strided_slice %356 {offsets = [0, 0], sizes = [8, 64], strides = [1, 1]} : vector<8x192xf32> to vector<8x64xf32>
    %362 = arith.mulf %361, %358 : vector<8x64xf32>
    %363 = arith.addf %360, %362 : vector<8x64xf32>
    %364 = vector.extract_strided_slice %356 {offsets = [0, 128], sizes = [8, 64], strides = [1, 1]} : vector<8x192xf32> to vector<8x64xf32>
    %365 = math.tanh %363 : vector<8x64xf32>
    %366 = arith.mulf %364, %365 : vector<8x64xf32>
    %cst_42 = arith.constant dense<0.000000e+00> : vector<8x256xf32>
    %367 = tpu.matmul %366, %25, %cst_42 {dimension_numbers = #tpu.dot_dimension_numbers<[1], [0], [0], [1], [0, 0, 1, 1], [], []>} : vector<8x64xf32>, vector<64x256xf32>, vector<8x256xf32> -> vector<8x256xf32>
    %368 = arith.addf %240, %367 : vector<8x256xf32>
    %369 = vector.extract_strided_slice %368 {offsets = [0, 0], sizes = [8, 192], strides = [1, 1]} : vector<8x256xf32> to vector<8x192xf32>
    %370 = arith.negf %369 : vector<8x192xf32>
    %371 = math.exp %370 : vector<8x192xf32>
    %cst_43 = arith.constant 1.000000e+00 : f32
    %372 = vector.broadcast %cst_43 : f32 to vector<8x192xf32>
    %373 = arith.addf %372, %371 : vector<8x192xf32>
    %374 = arith.divf %372, %373 : vector<8x192xf32>
    %375 = vector.extract_strided_slice %368 {offsets = [0, 192], sizes = [8, 64], strides = [1, 1]} : vector<8x256xf32> to vector<8x64xf32>
    %376 = math.tanh %375 : vector<8x64xf32>
    %377 = vector.extract_strided_slice %374 {offsets = [0, 64], sizes = [8, 64], strides = [1, 1]} : vector<8x192xf32> to vector<8x64xf32>
    %378 = arith.mulf %377, %363 : vector<8x64xf32>
    %379 = vector.extract_strided_slice %374 {offsets = [0, 0], sizes = [8, 64], strides = [1, 1]} : vector<8x192xf32> to vector<8x64xf32>
    %380 = arith.mulf %379, %376 : vector<8x64xf32>
    %381 = arith.addf %378, %380 : vector<8x64xf32>
    %382 = vector.extract_strided_slice %374 {offsets = [0, 128], sizes = [8, 64], strides = [1, 1]} : vector<8x192xf32> to vector<8x64xf32>
    %383 = math.tanh %381 : vector<8x64xf32>
    %384 = arith.mulf %382, %383 : vector<8x64xf32>
    %385 = tpu.concatenate %258, %276, %294, %312, %330, %348, %366, %384 in 0 : vector<8x64xf32>, vector<8x64xf32>, vector<8x64xf32>, vector<8x64xf32>, vector<8x64xf32>, vector<8x64xf32>, vector<8x64xf32>, vector<8x64xf32> -> vector<64x64xf32>
    %386 = vector.extract_strided_slice %385 {offsets = [0, 0], sizes = [64, 32], strides = [1, 1]} : vector<64x64xf32> to vector<64x32xf32>
    %387 = tpu.concatenate %384, %366, %348, %330, %312, %294, %276, %258 in 0 : vector<8x64xf32>, vector<8x64xf32>, vector<8x64xf32>, vector<8x64xf32>, vector<8x64xf32>, vector<8x64xf32>, vector<8x64xf32>, vector<8x64xf32> -> vector<64x64xf32>
    %388 = vector.extract_strided_slice %387 {offsets = [0, 32], sizes = [64, 32], strides = [1, 1]} : vector<64x64xf32> to vector<64x32xf32>
    %389 = tpu.concatenate %386, %388 in 1 : vector<64x32xf32>, vector<64x32xf32> -> vector<64x64xf32>
    %390 = vector.extract_strided_slice %5 {offsets = [128, 0], sizes = [8, 256], strides = [1, 1]} : vector<192x256xf32> to vector<8x256xf32>
    %391 = vector.extract_strided_slice %5 {offsets = [136, 0], sizes = [8, 256], strides = [1, 1]} : vector<192x256xf32> to vector<8x256xf32>
    %392 = vector.extract_strided_slice %5 {offsets = [144, 0], sizes = [8, 256], strides = [1, 1]} : vector<192x256xf32> to vector<8x256xf32>
    %393 = vector.extract_strided_slice %5 {offsets = [152, 0], sizes = [8, 256], strides = [1, 1]} : vector<192x256xf32> to vector<8x256xf32>
    %394 = vector.extract_strided_slice %5 {offsets = [160, 0], sizes = [8, 256], strides = [1, 1]} : vector<192x256xf32> to vector<8x256xf32>
    %395 = vector.extract_strided_slice %5 {offsets = [168, 0], sizes = [8, 256], strides = [1, 1]} : vector<192x256xf32> to vector<8x256xf32>
    %396 = vector.extract_strided_slice %5 {offsets = [176, 0], sizes = [8, 256], strides = [1, 1]} : vector<192x256xf32> to vector<8x256xf32>
    %397 = vector.extract_strided_slice %5 {offsets = [184, 0], sizes = [8, 256], strides = [1, 1]} : vector<192x256xf32> to vector<8x256xf32>
    %398 = vector.shape_cast %24 : vector<1x256xi1> to vector<1x256xi1>
    %399 = vector.broadcast %398 : vector<1x256xi1> to vector<8x256xi1>
    %400 = arith.select %399, %390, %397 : vector<8x256xi1>, vector<8x256xf32>
    %401 = vector.shape_cast %24 : vector<1x256xi1> to vector<1x256xi1>
    %402 = vector.broadcast %401 : vector<1x256xi1> to vector<8x256xi1>
    %403 = arith.select %402, %391, %396 : vector<8x256xi1>, vector<8x256xf32>
    %404 = vector.shape_cast %24 : vector<1x256xi1> to vector<1x256xi1>
    %405 = vector.broadcast %404 : vector<1x256xi1> to vector<8x256xi1>
    %406 = arith.select %405, %392, %395 : vector<8x256xi1>, vector<8x256xf32>
    %407 = vector.shape_cast %24 : vector<1x256xi1> to vector<1x256xi1>
    %408 = vector.broadcast %407 : vector<1x256xi1> to vector<8x256xi1>
    %409 = arith.select %408, %393, %394 : vector<8x256xi1>, vector<8x256xf32>
    %410 = vector.shape_cast %24 : vector<1x256xi1> to vector<1x256xi1>
    %411 = vector.broadcast %410 : vector<1x256xi1> to vector<8x256xi1>
    %412 = arith.select %411, %394, %393 : vector<8x256xi1>, vector<8x256xf32>
    %413 = vector.shape_cast %24 : vector<1x256xi1> to vector<1x256xi1>
    %414 = vector.broadcast %413 : vector<1x256xi1> to vector<8x256xi1>
    %415 = arith.select %414, %395, %392 : vector<8x256xi1>, vector<8x256xf32>
    %416 = vector.shape_cast %24 : vector<1x256xi1> to vector<1x256xi1>
    %417 = vector.broadcast %416 : vector<1x256xi1> to vector<8x256xi1>
    %418 = arith.select %417, %396, %391 : vector<8x256xi1>, vector<8x256xf32>
    %419 = vector.shape_cast %24 : vector<1x256xi1> to vector<1x256xi1>
    %420 = vector.broadcast %419 : vector<1x256xi1> to vector<8x256xi1>
    %421 = arith.select %420, %397, %390 : vector<8x256xi1>, vector<8x256xf32>
    %cst_44 = arith.constant dense<0.000000e+00> : vector<8x256xf32>
    %422 = tpu.matmul %384, %25, %cst_44 {dimension_numbers = #tpu.dot_dimension_numbers<[1], [0], [0], [1], [0, 0, 1, 1], [], []>} : vector<8x64xf32>, vector<64x256xf32>, vector<8x256xf32> -> vector<8x256xf32>
    %423 = arith.addf %400, %422 : vector<8x256xf32>
    %424 = vector.extract_strided_slice %423 {offsets = [0, 0], sizes = [8, 192], strides = [1, 1]} : vector<8x256xf32> to vector<8x192xf32>
    %425 = arith.negf %424 : vector<8x192xf32>
    %426 = math.exp %425 : vector<8x192xf32>
    %cst_45 = arith.constant 1.000000e+00 : f32
    %427 = vector.broadcast %cst_45 : f32 to vector<8x192xf32>
    %428 = arith.addf %427, %426 : vector<8x192xf32>
    %429 = arith.divf %427, %428 : vector<8x192xf32>
    %430 = vector.extract_strided_slice %423 {offsets = [0, 192], sizes = [8, 64], strides = [1, 1]} : vector<8x256xf32> to vector<8x64xf32>
    %431 = math.tanh %430 : vector<8x64xf32>
    %432 = vector.extract_strided_slice %429 {offsets = [0, 64], sizes = [8, 64], strides = [1, 1]} : vector<8x192xf32> to vector<8x64xf32>
    %433 = arith.mulf %432, %381 : vector<8x64xf32>
    %434 = vector.extract_strided_slice %429 {offsets = [0, 0], sizes = [8, 64], strides = [1, 1]} : vector<8x192xf32> to vector<8x64xf32>
    %435 = arith.mulf %434, %431 : vector<8x64xf32>
    %436 = arith.addf %433, %435 : vector<8x64xf32>
    %437 = vector.extract_strided_slice %429 {offsets = [0, 128], sizes = [8, 64], strides = [1, 1]} : vector<8x192xf32> to vector<8x64xf32>
    %438 = math.tanh %436 : vector<8x64xf32>
    %439 = arith.mulf %437, %438 : vector<8x64xf32>
    %cst_46 = arith.constant dense<0.000000e+00> : vector<8x256xf32>
    %440 = tpu.matmul %439, %25, %cst_46 {dimension_numbers = #tpu.dot_dimension_numbers<[1], [0], [0], [1], [0, 0, 1, 1], [], []>} : vector<8x64xf32>, vector<64x256xf32>, vector<8x256xf32> -> vector<8x256xf32>
    %441 = arith.addf %403, %440 : vector<8x256xf32>
    %442 = vector.extract_strided_slice %441 {offsets = [0, 0], sizes = [8, 192], strides = [1, 1]} : vector<8x256xf32> to vector<8x192xf32>
    %443 = arith.negf %442 : vector<8x192xf32>
    %444 = math.exp %443 : vector<8x192xf32>
    %cst_47 = arith.constant 1.000000e+00 : f32
    %445 = vector.broadcast %cst_47 : f32 to vector<8x192xf32>
    %446 = arith.addf %445, %444 : vector<8x192xf32>
    %447 = arith.divf %445, %446 : vector<8x192xf32>
    %448 = vector.extract_strided_slice %441 {offsets = [0, 192], sizes = [8, 64], strides = [1, 1]} : vector<8x256xf32> to vector<8x64xf32>
    %449 = math.tanh %448 : vector<8x64xf32>
    %450 = vector.extract_strided_slice %447 {offsets = [0, 64], sizes = [8, 64], strides = [1, 1]} : vector<8x192xf32> to vector<8x64xf32>
    %451 = arith.mulf %450, %436 : vector<8x64xf32>
    %452 = vector.extract_strided_slice %447 {offsets = [0, 0], sizes = [8, 64], strides = [1, 1]} : vector<8x192xf32> to vector<8x64xf32>
    %453 = arith.mulf %452, %449 : vector<8x64xf32>
    %454 = arith.addf %451, %453 : vector<8x64xf32>
    %455 = vector.extract_strided_slice %447 {offsets = [0, 128], sizes = [8, 64], strides = [1, 1]} : vector<8x192xf32> to vector<8x64xf32>
    %456 = math.tanh %454 : vector<8x64xf32>
    %457 = arith.mulf %455, %456 : vector<8x64xf32>
    %cst_48 = arith.constant dense<0.000000e+00> : vector<8x256xf32>
    %458 = tpu.matmul %457, %25, %cst_48 {dimension_numbers = #tpu.dot_dimension_numbers<[1], [0], [0], [1], [0, 0, 1, 1], [], []>} : vector<8x64xf32>, vector<64x256xf32>, vector<8x256xf32> -> vector<8x256xf32>
    %459 = arith.addf %406, %458 : vector<8x256xf32>
    %460 = vector.extract_strided_slice %459 {offsets = [0, 0], sizes = [8, 192], strides = [1, 1]} : vector<8x256xf32> to vector<8x192xf32>
    %461 = arith.negf %460 : vector<8x192xf32>
    %462 = math.exp %461 : vector<8x192xf32>
    %cst_49 = arith.constant 1.000000e+00 : f32
    %463 = vector.broadcast %cst_49 : f32 to vector<8x192xf32>
    %464 = arith.addf %463, %462 : vector<8x192xf32>
    %465 = arith.divf %463, %464 : vector<8x192xf32>
    %466 = vector.extract_strided_slice %459 {offsets = [0, 192], sizes = [8, 64], strides = [1, 1]} : vector<8x256xf32> to vector<8x64xf32>
    %467 = math.tanh %466 : vector<8x64xf32>
    %468 = vector.extract_strided_slice %465 {offsets = [0, 64], sizes = [8, 64], strides = [1, 1]} : vector<8x192xf32> to vector<8x64xf32>
    %469 = arith.mulf %468, %454 : vector<8x64xf32>
    %470 = vector.extract_strided_slice %465 {offsets = [0, 0], sizes = [8, 64], strides = [1, 1]} : vector<8x192xf32> to vector<8x64xf32>
    %471 = arith.mulf %470, %467 : vector<8x64xf32>
    %472 = arith.addf %469, %471 : vector<8x64xf32>
    %473 = vector.extract_strided_slice %465 {offsets = [0, 128], sizes = [8, 64], strides = [1, 1]} : vector<8x192xf32> to vector<8x64xf32>
    %474 = math.tanh %472 : vector<8x64xf32>
    %475 = arith.mulf %473, %474 : vector<8x64xf32>
    %cst_50 = arith.constant dense<0.000000e+00> : vector<8x256xf32>
    %476 = tpu.matmul %475, %25, %cst_50 {dimension_numbers = #tpu.dot_dimension_numbers<[1], [0], [0], [1], [0, 0, 1, 1], [], []>} : vector<8x64xf32>, vector<64x256xf32>, vector<8x256xf32> -> vector<8x256xf32>
    %477 = arith.addf %409, %476 : vector<8x256xf32>
    %478 = vector.extract_strided_slice %477 {offsets = [0, 0], sizes = [8, 192], strides = [1, 1]} : vector<8x256xf32> to vector<8x192xf32>
    %479 = arith.negf %478 : vector<8x192xf32>
    %480 = math.exp %479 : vector<8x192xf32>
    %cst_51 = arith.constant 1.000000e+00 : f32
    %481 = vector.broadcast %cst_51 : f32 to vector<8x192xf32>
    %482 = arith.addf %481, %480 : vector<8x192xf32>
    %483 = arith.divf %481, %482 : vector<8x192xf32>
    %484 = vector.extract_strided_slice %477 {offsets = [0, 192], sizes = [8, 64], strides = [1, 1]} : vector<8x256xf32> to vector<8x64xf32>
    %485 = math.tanh %484 : vector<8x64xf32>
    %486 = vector.extract_strided_slice %483 {offsets = [0, 64], sizes = [8, 64], strides = [1, 1]} : vector<8x192xf32> to vector<8x64xf32>
    %487 = arith.mulf %486, %472 : vector<8x64xf32>
    %488 = vector.extract_strided_slice %483 {offsets = [0, 0], sizes = [8, 64], strides = [1, 1]} : vector<8x192xf32> to vector<8x64xf32>
    %489 = arith.mulf %488, %485 : vector<8x64xf32>
    %490 = arith.addf %487, %489 : vector<8x64xf32>
    %491 = vector.extract_strided_slice %483 {offsets = [0, 128], sizes = [8, 64], strides = [1, 1]} : vector<8x192xf32> to vector<8x64xf32>
    %492 = math.tanh %490 : vector<8x64xf32>
    %493 = arith.mulf %491, %492 : vector<8x64xf32>
    %cst_52 = arith.constant dense<0.000000e+00> : vector<8x256xf32>
    %494 = tpu.matmul %493, %25, %cst_52 {dimension_numbers = #tpu.dot_dimension_numbers<[1], [0], [0], [1], [0, 0, 1, 1], [], []>} : vector<8x64xf32>, vector<64x256xf32>, vector<8x256xf32> -> vector<8x256xf32>
    %495 = arith.addf %412, %494 : vector<8x256xf32>
    %496 = vector.extract_strided_slice %495 {offsets = [0, 0], sizes = [8, 192], strides = [1, 1]} : vector<8x256xf32> to vector<8x192xf32>
    %497 = arith.negf %496 : vector<8x192xf32>
    %498 = math.exp %497 : vector<8x192xf32>
    %cst_53 = arith.constant 1.000000e+00 : f32
    %499 = vector.broadcast %cst_53 : f32 to vector<8x192xf32>
    %500 = arith.addf %499, %498 : vector<8x192xf32>
    %501 = arith.divf %499, %500 : vector<8x192xf32>
    %502 = vector.extract_strided_slice %495 {offsets = [0, 192], sizes = [8, 64], strides = [1, 1]} : vector<8x256xf32> to vector<8x64xf32>
    %503 = math.tanh %502 : vector<8x64xf32>
    %504 = vector.extract_strided_slice %501 {offsets = [0, 64], sizes = [8, 64], strides = [1, 1]} : vector<8x192xf32> to vector<8x64xf32>
    %505 = arith.mulf %504, %490 : vector<8x64xf32>
    %506 = vector.extract_strided_slice %501 {offsets = [0, 0], sizes = [8, 64], strides = [1, 1]} : vector<8x192xf32> to vector<8x64xf32>
    %507 = arith.mulf %506, %503 : vector<8x64xf32>
    %508 = arith.addf %505, %507 : vector<8x64xf32>
    %509 = vector.extract_strided_slice %501 {offsets = [0, 128], sizes = [8, 64], strides = [1, 1]} : vector<8x192xf32> to vector<8x64xf32>
    %510 = math.tanh %508 : vector<8x64xf32>
    %511 = arith.mulf %509, %510 : vector<8x64xf32>
    %cst_54 = arith.constant dense<0.000000e+00> : vector<8x256xf32>
    %512 = tpu.matmul %511, %25, %cst_54 {dimension_numbers = #tpu.dot_dimension_numbers<[1], [0], [0], [1], [0, 0, 1, 1], [], []>} : vector<8x64xf32>, vector<64x256xf32>, vector<8x256xf32> -> vector<8x256xf32>
    %513 = arith.addf %415, %512 : vector<8x256xf32>
    %514 = vector.extract_strided_slice %513 {offsets = [0, 0], sizes = [8, 192], strides = [1, 1]} : vector<8x256xf32> to vector<8x192xf32>
    %515 = arith.negf %514 : vector<8x192xf32>
    %516 = math.exp %515 : vector<8x192xf32>
    %cst_55 = arith.constant 1.000000e+00 : f32
    %517 = vector.broadcast %cst_55 : f32 to vector<8x192xf32>
    %518 = arith.addf %517, %516 : vector<8x192xf32>
    %519 = arith.divf %517, %518 : vector<8x192xf32>
    %520 = vector.extract_strided_slice %513 {offsets = [0, 192], sizes = [8, 64], strides = [1, 1]} : vector<8x256xf32> to vector<8x64xf32>
    %521 = math.tanh %520 : vector<8x64xf32>
    %522 = vector.extract_strided_slice %519 {offsets = [0, 64], sizes = [8, 64], strides = [1, 1]} : vector<8x192xf32> to vector<8x64xf32>
    %523 = arith.mulf %522, %508 : vector<8x64xf32>
    %524 = vector.extract_strided_slice %519 {offsets = [0, 0], sizes = [8, 64], strides = [1, 1]} : vector<8x192xf32> to vector<8x64xf32>
    %525 = arith.mulf %524, %521 : vector<8x64xf32>
    %526 = arith.addf %523, %525 : vector<8x64xf32>
    %527 = vector.extract_strided_slice %519 {offsets = [0, 128], sizes = [8, 64], strides = [1, 1]} : vector<8x192xf32> to vector<8x64xf32>
    %528 = math.tanh %526 : vector<8x64xf32>
    %529 = arith.mulf %527, %528 : vector<8x64xf32>
    %cst_56 = arith.constant dense<0.000000e+00> : vector<8x256xf32>
    %530 = tpu.matmul %529, %25, %cst_56 {dimension_numbers = #tpu.dot_dimension_numbers<[1], [0], [0], [1], [0, 0, 1, 1], [], []>} : vector<8x64xf32>, vector<64x256xf32>, vector<8x256xf32> -> vector<8x256xf32>
    %531 = arith.addf %418, %530 : vector<8x256xf32>
    %532 = vector.extract_strided_slice %531 {offsets = [0, 0], sizes = [8, 192], strides = [1, 1]} : vector<8x256xf32> to vector<8x192xf32>
    %533 = arith.negf %532 : vector<8x192xf32>
    %534 = math.exp %533 : vector<8x192xf32>
    %cst_57 = arith.constant 1.000000e+00 : f32
    %535 = vector.broadcast %cst_57 : f32 to vector<8x192xf32>
    %536 = arith.addf %535, %534 : vector<8x192xf32>
    %537 = arith.divf %535, %536 : vector<8x192xf32>
    %538 = vector.extract_strided_slice %531 {offsets = [0, 192], sizes = [8, 64], strides = [1, 1]} : vector<8x256xf32> to vector<8x64xf32>
    %539 = math.tanh %538 : vector<8x64xf32>
    %540 = vector.extract_strided_slice %537 {offsets = [0, 64], sizes = [8, 64], strides = [1, 1]} : vector<8x192xf32> to vector<8x64xf32>
    %541 = arith.mulf %540, %526 : vector<8x64xf32>
    %542 = vector.extract_strided_slice %537 {offsets = [0, 0], sizes = [8, 64], strides = [1, 1]} : vector<8x192xf32> to vector<8x64xf32>
    %543 = arith.mulf %542, %539 : vector<8x64xf32>
    %544 = arith.addf %541, %543 : vector<8x64xf32>
    %545 = vector.extract_strided_slice %537 {offsets = [0, 128], sizes = [8, 64], strides = [1, 1]} : vector<8x192xf32> to vector<8x64xf32>
    %546 = math.tanh %544 : vector<8x64xf32>
    %547 = arith.mulf %545, %546 : vector<8x64xf32>
    %cst_58 = arith.constant dense<0.000000e+00> : vector<8x256xf32>
    %548 = tpu.matmul %547, %25, %cst_58 {dimension_numbers = #tpu.dot_dimension_numbers<[1], [0], [0], [1], [0, 0, 1, 1], [], []>} : vector<8x64xf32>, vector<64x256xf32>, vector<8x256xf32> -> vector<8x256xf32>
    %549 = arith.addf %421, %548 : vector<8x256xf32>
    %550 = vector.extract_strided_slice %549 {offsets = [0, 0], sizes = [8, 192], strides = [1, 1]} : vector<8x256xf32> to vector<8x192xf32>
    %551 = arith.negf %550 : vector<8x192xf32>
    %552 = math.exp %551 : vector<8x192xf32>
    %cst_59 = arith.constant 1.000000e+00 : f32
    %553 = vector.broadcast %cst_59 : f32 to vector<8x192xf32>
    %554 = arith.addf %553, %552 : vector<8x192xf32>
    %555 = arith.divf %553, %554 : vector<8x192xf32>
    %556 = vector.extract_strided_slice %549 {offsets = [0, 192], sizes = [8, 64], strides = [1, 1]} : vector<8x256xf32> to vector<8x64xf32>
    %557 = math.tanh %556 : vector<8x64xf32>
    %558 = vector.extract_strided_slice %555 {offsets = [0, 64], sizes = [8, 64], strides = [1, 1]} : vector<8x192xf32> to vector<8x64xf32>
    %559 = arith.mulf %558, %544 : vector<8x64xf32>
    %560 = vector.extract_strided_slice %555 {offsets = [0, 0], sizes = [8, 64], strides = [1, 1]} : vector<8x192xf32> to vector<8x64xf32>
    %561 = arith.mulf %560, %557 : vector<8x64xf32>
    %562 = arith.addf %559, %561 : vector<8x64xf32>
    %563 = vector.extract_strided_slice %555 {offsets = [0, 128], sizes = [8, 64], strides = [1, 1]} : vector<8x192xf32> to vector<8x64xf32>
    %564 = math.tanh %562 : vector<8x64xf32>
    %565 = arith.mulf %563, %564 : vector<8x64xf32>
    %566 = tpu.concatenate %439, %457, %475, %493, %511, %529, %547, %565 in 0 : vector<8x64xf32>, vector<8x64xf32>, vector<8x64xf32>, vector<8x64xf32>, vector<8x64xf32>, vector<8x64xf32>, vector<8x64xf32>, vector<8x64xf32> -> vector<64x64xf32>
    %567 = vector.extract_strided_slice %566 {offsets = [0, 0], sizes = [64, 32], strides = [1, 1]} : vector<64x64xf32> to vector<64x32xf32>
    %568 = tpu.concatenate %565, %547, %529, %511, %493, %475, %457, %439 in 0 : vector<8x64xf32>, vector<8x64xf32>, vector<8x64xf32>, vector<8x64xf32>, vector<8x64xf32>, vector<8x64xf32>, vector<8x64xf32>, vector<8x64xf32> -> vector<64x64xf32>
    %569 = vector.extract_strided_slice %568 {offsets = [0, 32], sizes = [64, 32], strides = [1, 1]} : vector<64x64xf32> to vector<64x32xf32>
    %570 = tpu.concatenate %567, %569 in 1 : vector<64x32xf32>, vector<64x32xf32> -> vector<64x64xf32>
    %571 = tpu.concatenate %208, %389, %570 in 0 : vector<64x64xf32>, vector<64x64xf32>, vector<64x64xf32> -> vector<192x64xf32>
    %c0_60 = arith.constant 0 : index
    %c0_61 = arith.constant 0 : index
    %572 = vector.load %arg4[%c0_60, %c0_61] : memref<64x64xf32, #tpu.memory_space<vmem>>, vector<64x64xf32>
    %c0_62 = arith.constant 0 : index
    %c0_63 = arith.constant 0 : index
    %573 = vector.load %arg5[%c0_62, %c0_63] : memref<1x64xf32, #tpu.memory_space<vmem>>, vector<1x64xf32>
    %c0_64 = arith.constant 0 : index
    %c0_65 = arith.constant 0 : index
    %574 = vector.load %arg6[%c0_64, %c0_65] : memref<1x64xf32, #tpu.memory_space<vmem>>, vector<1x64xf32>
    %cst_66 = arith.constant dense<0.000000e+00> : vector<192x64xf32>
    %575 = tpu.matmul %571, %572, %cst_66 {dimension_numbers = #tpu.dot_dimension_numbers<[1], [0], [0], [1], [0, 0, 1, 1], [], []>} : vector<192x64xf32>, vector<64x64xf32>, vector<192x64xf32> -> vector<192x64xf32>
    %576 = vector.broadcast %573 : vector<1x64xf32> to vector<192x64xf32>
    %577 = arith.addf %575, %576 : vector<192x64xf32>
    %578 = math.tanh %577 : vector<192x64xf32>
    %579 = vector.broadcast %574 : vector<1x64xf32> to vector<192x64xf32>
    %580 = arith.mulf %578, %579 : vector<192x64xf32>
    %cst_67 = arith.constant dense<0.000000e+00> : vector<192xf32>
    %581 = vector.multi_reduction <add>, %580, %cst_67 [1] : vector<192x64xf32> to vector<192xf32>
    %582 = vector.shape_cast %581 : vector<192xf32> to vector<192x1xf32>
    %583 = vector.extract_strided_slice %582 {offsets = [0, 0], sizes = [8, 1], strides = [1, 1]} : vector<192x1xf32> to vector<8x1xf32>
    %584 = vector.extract_strided_slice %582 {offsets = [8, 0], sizes = [8, 1], strides = [1, 1]} : vector<192x1xf32> to vector<8x1xf32>
    %585 = vector.extract_strided_slice %582 {offsets = [16, 0], sizes = [8, 1], strides = [1, 1]} : vector<192x1xf32> to vector<8x1xf32>
    %586 = vector.extract_strided_slice %582 {offsets = [24, 0], sizes = [8, 1], strides = [1, 1]} : vector<192x1xf32> to vector<8x1xf32>
    %587 = vector.extract_strided_slice %582 {offsets = [32, 0], sizes = [8, 1], strides = [1, 1]} : vector<192x1xf32> to vector<8x1xf32>
    %588 = vector.extract_strided_slice %582 {offsets = [40, 0], sizes = [8, 1], strides = [1, 1]} : vector<192x1xf32> to vector<8x1xf32>
    %589 = vector.extract_strided_slice %582 {offsets = [48, 0], sizes = [8, 1], strides = [1, 1]} : vector<192x1xf32> to vector<8x1xf32>
    %590 = vector.extract_strided_slice %582 {offsets = [56, 0], sizes = [8, 1], strides = [1, 1]} : vector<192x1xf32> to vector<8x1xf32>
    %591 = arith.maximumf %583, %584 : vector<8x1xf32>
    %592 = arith.maximumf %591, %585 : vector<8x1xf32>
    %593 = arith.maximumf %592, %586 : vector<8x1xf32>
    %594 = arith.maximumf %593, %587 : vector<8x1xf32>
    %595 = arith.maximumf %594, %588 : vector<8x1xf32>
    %596 = arith.maximumf %595, %589 : vector<8x1xf32>
    %597 = arith.maximumf %596, %590 : vector<8x1xf32>
    %598 = vector.extract_strided_slice %582 {offsets = [0, 0], sizes = [64, 1], strides = [1, 1]} : vector<192x1xf32> to vector<64x1xf32>
    %599 = tpu.concatenate %597, %597, %597, %597, %597, %597, %597, %597 in 0 : vector<8x1xf32>, vector<8x1xf32>, vector<8x1xf32>, vector<8x1xf32>, vector<8x1xf32>, vector<8x1xf32>, vector<8x1xf32>, vector<8x1xf32> -> vector<64x1xf32>
    %600 = arith.subf %598, %599 : vector<64x1xf32>
    %601 = math.exp %600 : vector<64x1xf32>
    %602 = vector.extract_strided_slice %601 {offsets = [0, 0], sizes = [8, 1], strides = [1, 1]} : vector<64x1xf32> to vector<8x1xf32>
    %603 = vector.extract_strided_slice %601 {offsets = [8, 0], sizes = [8, 1], strides = [1, 1]} : vector<64x1xf32> to vector<8x1xf32>
    %604 = arith.addf %602, %603 : vector<8x1xf32>
    %605 = vector.extract_strided_slice %601 {offsets = [16, 0], sizes = [8, 1], strides = [1, 1]} : vector<64x1xf32> to vector<8x1xf32>
    %606 = arith.addf %604, %605 : vector<8x1xf32>
    %607 = vector.extract_strided_slice %601 {offsets = [24, 0], sizes = [8, 1], strides = [1, 1]} : vector<64x1xf32> to vector<8x1xf32>
    %608 = arith.addf %606, %607 : vector<8x1xf32>
    %609 = vector.extract_strided_slice %601 {offsets = [32, 0], sizes = [8, 1], strides = [1, 1]} : vector<64x1xf32> to vector<8x1xf32>
    %610 = arith.addf %608, %609 : vector<8x1xf32>
    %611 = vector.extract_strided_slice %601 {offsets = [40, 0], sizes = [8, 1], strides = [1, 1]} : vector<64x1xf32> to vector<8x1xf32>
    %612 = arith.addf %610, %611 : vector<8x1xf32>
    %613 = vector.extract_strided_slice %601 {offsets = [48, 0], sizes = [8, 1], strides = [1, 1]} : vector<64x1xf32> to vector<8x1xf32>
    %614 = arith.addf %612, %613 : vector<8x1xf32>
    %615 = vector.extract_strided_slice %601 {offsets = [56, 0], sizes = [8, 1], strides = [1, 1]} : vector<64x1xf32> to vector<8x1xf32>
    %616 = arith.addf %614, %615 : vector<8x1xf32>
    %cst_68 = arith.constant 1.000000e+00 : f32
    %617 = vector.broadcast %cst_68 : f32 to vector<8x1xf32>
    %618 = arith.divf %617, %616 : vector<8x1xf32>
    %619 = vector.extract_strided_slice %601 {offsets = [0, 0], sizes = [8, 1], strides = [1, 1]} : vector<64x1xf32> to vector<8x1xf32>
    %620 = arith.mulf %619, %618 : vector<8x1xf32>
    %621 = vector.extract_strided_slice %571 {offsets = [0, 0], sizes = [8, 64], strides = [1, 1]} : vector<192x64xf32> to vector<8x64xf32>
    %622 = vector.broadcast %620 : vector<8x1xf32> to vector<8x64xf32>
    %623 = arith.mulf %622, %621 : vector<8x64xf32>
    %624 = vector.extract_strided_slice %601 {offsets = [8, 0], sizes = [8, 1], strides = [1, 1]} : vector<64x1xf32> to vector<8x1xf32>
    %625 = arith.mulf %624, %618 : vector<8x1xf32>
    %626 = vector.extract_strided_slice %571 {offsets = [8, 0], sizes = [8, 64], strides = [1, 1]} : vector<192x64xf32> to vector<8x64xf32>
    %627 = vector.broadcast %625 : vector<8x1xf32> to vector<8x64xf32>
    %628 = arith.mulf %627, %626 : vector<8x64xf32>
    %629 = arith.addf %623, %628 : vector<8x64xf32>
    %630 = vector.extract_strided_slice %601 {offsets = [16, 0], sizes = [8, 1], strides = [1, 1]} : vector<64x1xf32> to vector<8x1xf32>
    %631 = arith.mulf %630, %618 : vector<8x1xf32>
    %632 = vector.extract_strided_slice %571 {offsets = [16, 0], sizes = [8, 64], strides = [1, 1]} : vector<192x64xf32> to vector<8x64xf32>
    %633 = vector.broadcast %631 : vector<8x1xf32> to vector<8x64xf32>
    %634 = arith.mulf %633, %632 : vector<8x64xf32>
    %635 = arith.addf %629, %634 : vector<8x64xf32>
    %636 = vector.extract_strided_slice %601 {offsets = [24, 0], sizes = [8, 1], strides = [1, 1]} : vector<64x1xf32> to vector<8x1xf32>
    %637 = arith.mulf %636, %618 : vector<8x1xf32>
    %638 = vector.extract_strided_slice %571 {offsets = [24, 0], sizes = [8, 64], strides = [1, 1]} : vector<192x64xf32> to vector<8x64xf32>
    %639 = vector.broadcast %637 : vector<8x1xf32> to vector<8x64xf32>
    %640 = arith.mulf %639, %638 : vector<8x64xf32>
    %641 = arith.addf %635, %640 : vector<8x64xf32>
    %642 = vector.extract_strided_slice %601 {offsets = [32, 0], sizes = [8, 1], strides = [1, 1]} : vector<64x1xf32> to vector<8x1xf32>
    %643 = arith.mulf %642, %618 : vector<8x1xf32>
    %644 = vector.extract_strided_slice %571 {offsets = [32, 0], sizes = [8, 64], strides = [1, 1]} : vector<192x64xf32> to vector<8x64xf32>
    %645 = vector.broadcast %643 : vector<8x1xf32> to vector<8x64xf32>
    %646 = arith.mulf %645, %644 : vector<8x64xf32>
    %647 = arith.addf %641, %646 : vector<8x64xf32>
    %648 = vector.extract_strided_slice %601 {offsets = [40, 0], sizes = [8, 1], strides = [1, 1]} : vector<64x1xf32> to vector<8x1xf32>
    %649 = arith.mulf %648, %618 : vector<8x1xf32>
    %650 = vector.extract_strided_slice %571 {offsets = [40, 0], sizes = [8, 64], strides = [1, 1]} : vector<192x64xf32> to vector<8x64xf32>
    %651 = vector.broadcast %649 : vector<8x1xf32> to vector<8x64xf32>
    %652 = arith.mulf %651, %650 : vector<8x64xf32>
    %653 = arith.addf %647, %652 : vector<8x64xf32>
    %654 = vector.extract_strided_slice %601 {offsets = [48, 0], sizes = [8, 1], strides = [1, 1]} : vector<64x1xf32> to vector<8x1xf32>
    %655 = arith.mulf %654, %618 : vector<8x1xf32>
    %656 = vector.extract_strided_slice %571 {offsets = [48, 0], sizes = [8, 64], strides = [1, 1]} : vector<192x64xf32> to vector<8x64xf32>
    %657 = vector.broadcast %655 : vector<8x1xf32> to vector<8x64xf32>
    %658 = arith.mulf %657, %656 : vector<8x64xf32>
    %659 = arith.addf %653, %658 : vector<8x64xf32>
    %660 = vector.extract_strided_slice %601 {offsets = [56, 0], sizes = [8, 1], strides = [1, 1]} : vector<64x1xf32> to vector<8x1xf32>
    %661 = arith.mulf %660, %618 : vector<8x1xf32>
    %662 = vector.extract_strided_slice %571 {offsets = [56, 0], sizes = [8, 64], strides = [1, 1]} : vector<192x64xf32> to vector<8x64xf32>
    %663 = vector.broadcast %661 : vector<8x1xf32> to vector<8x64xf32>
    %664 = arith.mulf %663, %662 : vector<8x64xf32>
    %665 = arith.addf %659, %664 : vector<8x64xf32>
    %666 = vector.extract_strided_slice %582 {offsets = [64, 0], sizes = [8, 1], strides = [1, 1]} : vector<192x1xf32> to vector<8x1xf32>
    %667 = vector.extract_strided_slice %582 {offsets = [72, 0], sizes = [8, 1], strides = [1, 1]} : vector<192x1xf32> to vector<8x1xf32>
    %668 = vector.extract_strided_slice %582 {offsets = [80, 0], sizes = [8, 1], strides = [1, 1]} : vector<192x1xf32> to vector<8x1xf32>
    %669 = vector.extract_strided_slice %582 {offsets = [88, 0], sizes = [8, 1], strides = [1, 1]} : vector<192x1xf32> to vector<8x1xf32>
    %670 = vector.extract_strided_slice %582 {offsets = [96, 0], sizes = [8, 1], strides = [1, 1]} : vector<192x1xf32> to vector<8x1xf32>
    %671 = vector.extract_strided_slice %582 {offsets = [104, 0], sizes = [8, 1], strides = [1, 1]} : vector<192x1xf32> to vector<8x1xf32>
    %672 = vector.extract_strided_slice %582 {offsets = [112, 0], sizes = [8, 1], strides = [1, 1]} : vector<192x1xf32> to vector<8x1xf32>
    %673 = vector.extract_strided_slice %582 {offsets = [120, 0], sizes = [8, 1], strides = [1, 1]} : vector<192x1xf32> to vector<8x1xf32>
    %674 = arith.maximumf %666, %667 : vector<8x1xf32>
    %675 = arith.maximumf %674, %668 : vector<8x1xf32>
    %676 = arith.maximumf %675, %669 : vector<8x1xf32>
    %677 = arith.maximumf %676, %670 : vector<8x1xf32>
    %678 = arith.maximumf %677, %671 : vector<8x1xf32>
    %679 = arith.maximumf %678, %672 : vector<8x1xf32>
    %680 = arith.maximumf %679, %673 : vector<8x1xf32>
    %681 = vector.extract_strided_slice %582 {offsets = [64, 0], sizes = [64, 1], strides = [1, 1]} : vector<192x1xf32> to vector<64x1xf32>
    %682 = tpu.concatenate %680, %680, %680, %680, %680, %680, %680, %680 in 0 : vector<8x1xf32>, vector<8x1xf32>, vector<8x1xf32>, vector<8x1xf32>, vector<8x1xf32>, vector<8x1xf32>, vector<8x1xf32>, vector<8x1xf32> -> vector<64x1xf32>
    %683 = arith.subf %681, %682 : vector<64x1xf32>
    %684 = math.exp %683 : vector<64x1xf32>
    %685 = vector.extract_strided_slice %684 {offsets = [0, 0], sizes = [8, 1], strides = [1, 1]} : vector<64x1xf32> to vector<8x1xf32>
    %686 = vector.extract_strided_slice %684 {offsets = [8, 0], sizes = [8, 1], strides = [1, 1]} : vector<64x1xf32> to vector<8x1xf32>
    %687 = arith.addf %685, %686 : vector<8x1xf32>
    %688 = vector.extract_strided_slice %684 {offsets = [16, 0], sizes = [8, 1], strides = [1, 1]} : vector<64x1xf32> to vector<8x1xf32>
    %689 = arith.addf %687, %688 : vector<8x1xf32>
    %690 = vector.extract_strided_slice %684 {offsets = [24, 0], sizes = [8, 1], strides = [1, 1]} : vector<64x1xf32> to vector<8x1xf32>
    %691 = arith.addf %689, %690 : vector<8x1xf32>
    %692 = vector.extract_strided_slice %684 {offsets = [32, 0], sizes = [8, 1], strides = [1, 1]} : vector<64x1xf32> to vector<8x1xf32>
    %693 = arith.addf %691, %692 : vector<8x1xf32>
    %694 = vector.extract_strided_slice %684 {offsets = [40, 0], sizes = [8, 1], strides = [1, 1]} : vector<64x1xf32> to vector<8x1xf32>
    %695 = arith.addf %693, %694 : vector<8x1xf32>
    %696 = vector.extract_strided_slice %684 {offsets = [48, 0], sizes = [8, 1], strides = [1, 1]} : vector<64x1xf32> to vector<8x1xf32>
    %697 = arith.addf %695, %696 : vector<8x1xf32>
    %698 = vector.extract_strided_slice %684 {offsets = [56, 0], sizes = [8, 1], strides = [1, 1]} : vector<64x1xf32> to vector<8x1xf32>
    %699 = arith.addf %697, %698 : vector<8x1xf32>
    %cst_69 = arith.constant 1.000000e+00 : f32
    %700 = vector.broadcast %cst_69 : f32 to vector<8x1xf32>
    %701 = arith.divf %700, %699 : vector<8x1xf32>
    %702 = vector.extract_strided_slice %684 {offsets = [0, 0], sizes = [8, 1], strides = [1, 1]} : vector<64x1xf32> to vector<8x1xf32>
    %703 = arith.mulf %702, %701 : vector<8x1xf32>
    %704 = vector.extract_strided_slice %571 {offsets = [64, 0], sizes = [8, 64], strides = [1, 1]} : vector<192x64xf32> to vector<8x64xf32>
    %705 = vector.broadcast %703 : vector<8x1xf32> to vector<8x64xf32>
    %706 = arith.mulf %705, %704 : vector<8x64xf32>
    %707 = vector.extract_strided_slice %684 {offsets = [8, 0], sizes = [8, 1], strides = [1, 1]} : vector<64x1xf32> to vector<8x1xf32>
    %708 = arith.mulf %707, %701 : vector<8x1xf32>
    %709 = vector.extract_strided_slice %571 {offsets = [72, 0], sizes = [8, 64], strides = [1, 1]} : vector<192x64xf32> to vector<8x64xf32>
    %710 = vector.broadcast %708 : vector<8x1xf32> to vector<8x64xf32>
    %711 = arith.mulf %710, %709 : vector<8x64xf32>
    %712 = arith.addf %706, %711 : vector<8x64xf32>
    %713 = vector.extract_strided_slice %684 {offsets = [16, 0], sizes = [8, 1], strides = [1, 1]} : vector<64x1xf32> to vector<8x1xf32>
    %714 = arith.mulf %713, %701 : vector<8x1xf32>
    %715 = vector.extract_strided_slice %571 {offsets = [80, 0], sizes = [8, 64], strides = [1, 1]} : vector<192x64xf32> to vector<8x64xf32>
    %716 = vector.broadcast %714 : vector<8x1xf32> to vector<8x64xf32>
    %717 = arith.mulf %716, %715 : vector<8x64xf32>
    %718 = arith.addf %712, %717 : vector<8x64xf32>
    %719 = vector.extract_strided_slice %684 {offsets = [24, 0], sizes = [8, 1], strides = [1, 1]} : vector<64x1xf32> to vector<8x1xf32>
    %720 = arith.mulf %719, %701 : vector<8x1xf32>
    %721 = vector.extract_strided_slice %571 {offsets = [88, 0], sizes = [8, 64], strides = [1, 1]} : vector<192x64xf32> to vector<8x64xf32>
    %722 = vector.broadcast %720 : vector<8x1xf32> to vector<8x64xf32>
    %723 = arith.mulf %722, %721 : vector<8x64xf32>
    %724 = arith.addf %718, %723 : vector<8x64xf32>
    %725 = vector.extract_strided_slice %684 {offsets = [32, 0], sizes = [8, 1], strides = [1, 1]} : vector<64x1xf32> to vector<8x1xf32>
    %726 = arith.mulf %725, %701 : vector<8x1xf32>
    %727 = vector.extract_strided_slice %571 {offsets = [96, 0], sizes = [8, 64], strides = [1, 1]} : vector<192x64xf32> to vector<8x64xf32>
    %728 = vector.broadcast %726 : vector<8x1xf32> to vector<8x64xf32>
    %729 = arith.mulf %728, %727 : vector<8x64xf32>
    %730 = arith.addf %724, %729 : vector<8x64xf32>
    %731 = vector.extract_strided_slice %684 {offsets = [40, 0], sizes = [8, 1], strides = [1, 1]} : vector<64x1xf32> to vector<8x1xf32>
    %732 = arith.mulf %731, %701 : vector<8x1xf32>
    %733 = vector.extract_strided_slice %571 {offsets = [104, 0], sizes = [8, 64], strides = [1, 1]} : vector<192x64xf32> to vector<8x64xf32>
    %734 = vector.broadcast %732 : vector<8x1xf32> to vector<8x64xf32>
    %735 = arith.mulf %734, %733 : vector<8x64xf32>
    %736 = arith.addf %730, %735 : vector<8x64xf32>
    %737 = vector.extract_strided_slice %684 {offsets = [48, 0], sizes = [8, 1], strides = [1, 1]} : vector<64x1xf32> to vector<8x1xf32>
    %738 = arith.mulf %737, %701 : vector<8x1xf32>
    %739 = vector.extract_strided_slice %571 {offsets = [112, 0], sizes = [8, 64], strides = [1, 1]} : vector<192x64xf32> to vector<8x64xf32>
    %740 = vector.broadcast %738 : vector<8x1xf32> to vector<8x64xf32>
    %741 = arith.mulf %740, %739 : vector<8x64xf32>
    %742 = arith.addf %736, %741 : vector<8x64xf32>
    %743 = vector.extract_strided_slice %684 {offsets = [56, 0], sizes = [8, 1], strides = [1, 1]} : vector<64x1xf32> to vector<8x1xf32>
    %744 = arith.mulf %743, %701 : vector<8x1xf32>
    %745 = vector.extract_strided_slice %571 {offsets = [120, 0], sizes = [8, 64], strides = [1, 1]} : vector<192x64xf32> to vector<8x64xf32>
    %746 = vector.broadcast %744 : vector<8x1xf32> to vector<8x64xf32>
    %747 = arith.mulf %746, %745 : vector<8x64xf32>
    %748 = arith.addf %742, %747 : vector<8x64xf32>
    %749 = vector.extract_strided_slice %582 {offsets = [128, 0], sizes = [8, 1], strides = [1, 1]} : vector<192x1xf32> to vector<8x1xf32>
    %750 = vector.extract_strided_slice %582 {offsets = [136, 0], sizes = [8, 1], strides = [1, 1]} : vector<192x1xf32> to vector<8x1xf32>
    %751 = vector.extract_strided_slice %582 {offsets = [144, 0], sizes = [8, 1], strides = [1, 1]} : vector<192x1xf32> to vector<8x1xf32>
    %752 = vector.extract_strided_slice %582 {offsets = [152, 0], sizes = [8, 1], strides = [1, 1]} : vector<192x1xf32> to vector<8x1xf32>
    %753 = vector.extract_strided_slice %582 {offsets = [160, 0], sizes = [8, 1], strides = [1, 1]} : vector<192x1xf32> to vector<8x1xf32>
    %754 = vector.extract_strided_slice %582 {offsets = [168, 0], sizes = [8, 1], strides = [1, 1]} : vector<192x1xf32> to vector<8x1xf32>
    %755 = vector.extract_strided_slice %582 {offsets = [176, 0], sizes = [8, 1], strides = [1, 1]} : vector<192x1xf32> to vector<8x1xf32>
    %756 = vector.extract_strided_slice %582 {offsets = [184, 0], sizes = [8, 1], strides = [1, 1]} : vector<192x1xf32> to vector<8x1xf32>
    %757 = arith.maximumf %749, %750 : vector<8x1xf32>
    %758 = arith.maximumf %757, %751 : vector<8x1xf32>
    %759 = arith.maximumf %758, %752 : vector<8x1xf32>
    %760 = arith.maximumf %759, %753 : vector<8x1xf32>
    %761 = arith.maximumf %760, %754 : vector<8x1xf32>
    %762 = arith.maximumf %761, %755 : vector<8x1xf32>
    %763 = arith.maximumf %762, %756 : vector<8x1xf32>
    %764 = vector.extract_strided_slice %582 {offsets = [128, 0], sizes = [64, 1], strides = [1, 1]} : vector<192x1xf32> to vector<64x1xf32>
    %765 = tpu.concatenate %763, %763, %763, %763, %763, %763, %763, %763 in 0 : vector<8x1xf32>, vector<8x1xf32>, vector<8x1xf32>, vector<8x1xf32>, vector<8x1xf32>, vector<8x1xf32>, vector<8x1xf32>, vector<8x1xf32> -> vector<64x1xf32>
    %766 = arith.subf %764, %765 : vector<64x1xf32>
    %767 = math.exp %766 : vector<64x1xf32>
    %768 = vector.extract_strided_slice %767 {offsets = [0, 0], sizes = [8, 1], strides = [1, 1]} : vector<64x1xf32> to vector<8x1xf32>
    %769 = vector.extract_strided_slice %767 {offsets = [8, 0], sizes = [8, 1], strides = [1, 1]} : vector<64x1xf32> to vector<8x1xf32>
    %770 = arith.addf %768, %769 : vector<8x1xf32>
    %771 = vector.extract_strided_slice %767 {offsets = [16, 0], sizes = [8, 1], strides = [1, 1]} : vector<64x1xf32> to vector<8x1xf32>
    %772 = arith.addf %770, %771 : vector<8x1xf32>
    %773 = vector.extract_strided_slice %767 {offsets = [24, 0], sizes = [8, 1], strides = [1, 1]} : vector<64x1xf32> to vector<8x1xf32>
    %774 = arith.addf %772, %773 : vector<8x1xf32>
    %775 = vector.extract_strided_slice %767 {offsets = [32, 0], sizes = [8, 1], strides = [1, 1]} : vector<64x1xf32> to vector<8x1xf32>
    %776 = arith.addf %774, %775 : vector<8x1xf32>
    %777 = vector.extract_strided_slice %767 {offsets = [40, 0], sizes = [8, 1], strides = [1, 1]} : vector<64x1xf32> to vector<8x1xf32>
    %778 = arith.addf %776, %777 : vector<8x1xf32>
    %779 = vector.extract_strided_slice %767 {offsets = [48, 0], sizes = [8, 1], strides = [1, 1]} : vector<64x1xf32> to vector<8x1xf32>
    %780 = arith.addf %778, %779 : vector<8x1xf32>
    %781 = vector.extract_strided_slice %767 {offsets = [56, 0], sizes = [8, 1], strides = [1, 1]} : vector<64x1xf32> to vector<8x1xf32>
    %782 = arith.addf %780, %781 : vector<8x1xf32>
    %cst_70 = arith.constant 1.000000e+00 : f32
    %783 = vector.broadcast %cst_70 : f32 to vector<8x1xf32>
    %784 = arith.divf %783, %782 : vector<8x1xf32>
    %785 = vector.extract_strided_slice %767 {offsets = [0, 0], sizes = [8, 1], strides = [1, 1]} : vector<64x1xf32> to vector<8x1xf32>
    %786 = arith.mulf %785, %784 : vector<8x1xf32>
    %787 = vector.extract_strided_slice %571 {offsets = [128, 0], sizes = [8, 64], strides = [1, 1]} : vector<192x64xf32> to vector<8x64xf32>
    %788 = vector.broadcast %786 : vector<8x1xf32> to vector<8x64xf32>
    %789 = arith.mulf %788, %787 : vector<8x64xf32>
    %790 = vector.extract_strided_slice %767 {offsets = [8, 0], sizes = [8, 1], strides = [1, 1]} : vector<64x1xf32> to vector<8x1xf32>
    %791 = arith.mulf %790, %784 : vector<8x1xf32>
    %792 = vector.extract_strided_slice %571 {offsets = [136, 0], sizes = [8, 64], strides = [1, 1]} : vector<192x64xf32> to vector<8x64xf32>
    %793 = vector.broadcast %791 : vector<8x1xf32> to vector<8x64xf32>
    %794 = arith.mulf %793, %792 : vector<8x64xf32>
    %795 = arith.addf %789, %794 : vector<8x64xf32>
    %796 = vector.extract_strided_slice %767 {offsets = [16, 0], sizes = [8, 1], strides = [1, 1]} : vector<64x1xf32> to vector<8x1xf32>
    %797 = arith.mulf %796, %784 : vector<8x1xf32>
    %798 = vector.extract_strided_slice %571 {offsets = [144, 0], sizes = [8, 64], strides = [1, 1]} : vector<192x64xf32> to vector<8x64xf32>
    %799 = vector.broadcast %797 : vector<8x1xf32> to vector<8x64xf32>
    %800 = arith.mulf %799, %798 : vector<8x64xf32>
    %801 = arith.addf %795, %800 : vector<8x64xf32>
    %802 = vector.extract_strided_slice %767 {offsets = [24, 0], sizes = [8, 1], strides = [1, 1]} : vector<64x1xf32> to vector<8x1xf32>
    %803 = arith.mulf %802, %784 : vector<8x1xf32>
    %804 = vector.extract_strided_slice %571 {offsets = [152, 0], sizes = [8, 64], strides = [1, 1]} : vector<192x64xf32> to vector<8x64xf32>
    %805 = vector.broadcast %803 : vector<8x1xf32> to vector<8x64xf32>
    %806 = arith.mulf %805, %804 : vector<8x64xf32>
    %807 = arith.addf %801, %806 : vector<8x64xf32>
    %808 = vector.extract_strided_slice %767 {offsets = [32, 0], sizes = [8, 1], strides = [1, 1]} : vector<64x1xf32> to vector<8x1xf32>
    %809 = arith.mulf %808, %784 : vector<8x1xf32>
    %810 = vector.extract_strided_slice %571 {offsets = [160, 0], sizes = [8, 64], strides = [1, 1]} : vector<192x64xf32> to vector<8x64xf32>
    %811 = vector.broadcast %809 : vector<8x1xf32> to vector<8x64xf32>
    %812 = arith.mulf %811, %810 : vector<8x64xf32>
    %813 = arith.addf %807, %812 : vector<8x64xf32>
    %814 = vector.extract_strided_slice %767 {offsets = [40, 0], sizes = [8, 1], strides = [1, 1]} : vector<64x1xf32> to vector<8x1xf32>
    %815 = arith.mulf %814, %784 : vector<8x1xf32>
    %816 = vector.extract_strided_slice %571 {offsets = [168, 0], sizes = [8, 64], strides = [1, 1]} : vector<192x64xf32> to vector<8x64xf32>
    %817 = vector.broadcast %815 : vector<8x1xf32> to vector<8x64xf32>
    %818 = arith.mulf %817, %816 : vector<8x64xf32>
    %819 = arith.addf %813, %818 : vector<8x64xf32>
    %820 = vector.extract_strided_slice %767 {offsets = [48, 0], sizes = [8, 1], strides = [1, 1]} : vector<64x1xf32> to vector<8x1xf32>
    %821 = arith.mulf %820, %784 : vector<8x1xf32>
    %822 = vector.extract_strided_slice %571 {offsets = [176, 0], sizes = [8, 64], strides = [1, 1]} : vector<192x64xf32> to vector<8x64xf32>
    %823 = vector.broadcast %821 : vector<8x1xf32> to vector<8x64xf32>
    %824 = arith.mulf %823, %822 : vector<8x64xf32>
    %825 = arith.addf %819, %824 : vector<8x64xf32>
    %826 = vector.extract_strided_slice %767 {offsets = [56, 0], sizes = [8, 1], strides = [1, 1]} : vector<64x1xf32> to vector<8x1xf32>
    %827 = arith.mulf %826, %784 : vector<8x1xf32>
    %828 = vector.extract_strided_slice %571 {offsets = [184, 0], sizes = [8, 64], strides = [1, 1]} : vector<192x64xf32> to vector<8x64xf32>
    %829 = vector.broadcast %827 : vector<8x1xf32> to vector<8x64xf32>
    %830 = arith.mulf %829, %828 : vector<8x64xf32>
    %831 = arith.addf %825, %830 : vector<8x64xf32>
    %832 = tpu.concatenate %665, %748, %831 in 0 : vector<8x64xf32>, vector<8x64xf32>, vector<8x64xf32> -> vector<24x64xf32>
    %c0_71 = arith.constant 0 : index
    %c0_72 = arith.constant 0 : index
    %833 = vector.load %arg7[%c0_71, %c0_72] : memref<64x256xf32, #tpu.memory_space<vmem>>, vector<64x256xf32>
    %cst_73 = arith.constant dense<0.000000e+00> : vector<24x256xf32>
    %834 = tpu.matmul %832, %833, %cst_73 {dimension_numbers = #tpu.dot_dimension_numbers<[1], [0], [0], [1], [0, 0, 1, 1], [], []>} : vector<24x64xf32>, vector<64x256xf32>, vector<24x256xf32> -> vector<24x256xf32>
    %c0_74 = arith.constant 0 : index
    %c0_75 = arith.constant 0 : index
    %835 = vector.load %arg9[%c0_74, %c0_75] : memref<1x256xf32, #tpu.memory_space<vmem>>, vector<1x256xf32>
    %836 = vector.broadcast %835 : vector<1x256xf32> to vector<24x256xf32>
    %837 = arith.addf %834, %836 : vector<24x256xf32>
    %838 = tpu.iota {dimensions = array<i32: 1>} : vector<1x256xi32>
    %c64_i32_76 = arith.constant 64 : i32
    %c0_i32_77 = arith.constant 0 : i32
    %839 = arith.cmpi eq, %c64_i32_76, %c0_i32_77 : i32
    %c1_i32_78 = arith.constant 1 : i32
    %840 = arith.select %839, %c1_i32_78, %c64_i32_76 : i32
    %841 = vector.broadcast %840 : i32 to vector<1x256xi32>
    %842 = arith.remsi %838, %841 : vector<1x256xi32>
    %c0_i32_79 = arith.constant 0 : i32
    %843 = vector.broadcast %c0_i32_79 : i32 to vector<1x256xi32>
    %844 = arith.cmpi ne, %842, %843 : vector<1x256xi32>
    %c0_i32_80 = arith.constant 0 : i32
    %845 = vector.broadcast %c0_i32_80 : i32 to vector<1x256xi32>
    %846 = arith.cmpi slt, %842, %845 : vector<1x256xi32>
    %c0_i32_81 = arith.constant 0 : i32
    %847 = arith.cmpi slt, %840, %c0_i32_81 : i32
    %848 = vector.broadcast %847 : i1 to vector<1x256xi1>
    %849 = vector.broadcast %848 : vector<1x256xi1> to vector<1x256xi1>
    %850 = arith.xori %846, %849 : vector<1x256xi1>
    %851 = arith.andi %850, %844 : vector<1x256xi1>
    %852 = vector.broadcast %840 : i32 to vector<1x256xi32>
    %853 = arith.addi %842, %852 : vector<1x256xi32>
    %854 = arith.select %851, %853, %842 : vector<1x256xi1>, vector<1x256xi32>
    %c32_i32_82 = arith.constant 32 : i32
    %855 = vector.broadcast %c32_i32_82 : i32 to vector<1x256xi32>
    %856 = arith.cmpi slt, %854, %855 : vector<1x256xi32>
    %cst_83 = arith.constant 0.000000e+00 : f32
    %857 = vector.broadcast %cst_83 : f32 to vector<8x64xf32>
    %858 = vector.extract_strided_slice %837 {offsets = [0, 0], sizes = [8, 256], strides = [1, 1]} : vector<24x256xf32> to vector<8x256xf32>
    %859 = vector.extract_strided_slice %837 {offsets = [8, 0], sizes = [8, 256], strides = [1, 1]} : vector<24x256xf32> to vector<8x256xf32>
    %860 = vector.extract_strided_slice %837 {offsets = [16, 0], sizes = [8, 256], strides = [1, 1]} : vector<24x256xf32> to vector<8x256xf32>
    %c0_84 = arith.constant 0 : index
    %c0_85 = arith.constant 0 : index
    %861 = vector.load %arg8[%c0_84, %c0_85] : memref<64x256xf32, #tpu.memory_space<vmem>>, vector<64x256xf32>
    %862 = vector.shape_cast %856 : vector<1x256xi1> to vector<1x256xi1>
    %863 = vector.broadcast %862 : vector<1x256xi1> to vector<8x256xi1>
    %864 = arith.select %863, %858, %860 : vector<8x256xi1>, vector<8x256xf32>
    %865 = vector.shape_cast %856 : vector<1x256xi1> to vector<1x256xi1>
    %866 = vector.broadcast %865 : vector<1x256xi1> to vector<8x256xi1>
    %867 = arith.select %866, %859, %859 : vector<8x256xi1>, vector<8x256xf32>
    %868 = vector.shape_cast %856 : vector<1x256xi1> to vector<1x256xi1>
    %869 = vector.broadcast %868 : vector<1x256xi1> to vector<8x256xi1>
    %870 = arith.select %869, %860, %858 : vector<8x256xi1>, vector<8x256xf32>
    %cst_86 = arith.constant dense<0.000000e+00> : vector<8x256xf32>
    %871 = tpu.matmul %857, %861, %cst_86 {dimension_numbers = #tpu.dot_dimension_numbers<[1], [0], [0], [1], [0, 0, 1, 1], [], []>} : vector<8x64xf32>, vector<64x256xf32>, vector<8x256xf32> -> vector<8x256xf32>
    %872 = arith.addf %864, %871 : vector<8x256xf32>
    %873 = vector.extract_strided_slice %872 {offsets = [0, 0], sizes = [8, 192], strides = [1, 1]} : vector<8x256xf32> to vector<8x192xf32>
    %874 = arith.negf %873 : vector<8x192xf32>
    %875 = math.exp %874 : vector<8x192xf32>
    %cst_87 = arith.constant 1.000000e+00 : f32
    %876 = vector.broadcast %cst_87 : f32 to vector<8x192xf32>
    %877 = arith.addf %876, %875 : vector<8x192xf32>
    %878 = arith.divf %876, %877 : vector<8x192xf32>
    %879 = vector.extract_strided_slice %872 {offsets = [0, 192], sizes = [8, 64], strides = [1, 1]} : vector<8x256xf32> to vector<8x64xf32>
    %880 = math.tanh %879 : vector<8x64xf32>
    %881 = vector.extract_strided_slice %878 {offsets = [0, 64], sizes = [8, 64], strides = [1, 1]} : vector<8x192xf32> to vector<8x64xf32>
    %882 = arith.mulf %881, %857 : vector<8x64xf32>
    %883 = vector.extract_strided_slice %878 {offsets = [0, 0], sizes = [8, 64], strides = [1, 1]} : vector<8x192xf32> to vector<8x64xf32>
    %884 = arith.mulf %883, %880 : vector<8x64xf32>
    %885 = arith.addf %882, %884 : vector<8x64xf32>
    %886 = vector.extract_strided_slice %878 {offsets = [0, 128], sizes = [8, 64], strides = [1, 1]} : vector<8x192xf32> to vector<8x64xf32>
    %887 = math.tanh %885 : vector<8x64xf32>
    %888 = arith.mulf %886, %887 : vector<8x64xf32>
    %cst_88 = arith.constant dense<0.000000e+00> : vector<8x256xf32>
    %889 = tpu.matmul %888, %861, %cst_88 {dimension_numbers = #tpu.dot_dimension_numbers<[1], [0], [0], [1], [0, 0, 1, 1], [], []>} : vector<8x64xf32>, vector<64x256xf32>, vector<8x256xf32> -> vector<8x256xf32>
    %890 = arith.addf %867, %889 : vector<8x256xf32>
    %891 = vector.extract_strided_slice %890 {offsets = [0, 0], sizes = [8, 192], strides = [1, 1]} : vector<8x256xf32> to vector<8x192xf32>
    %892 = arith.negf %891 : vector<8x192xf32>
    %893 = math.exp %892 : vector<8x192xf32>
    %cst_89 = arith.constant 1.000000e+00 : f32
    %894 = vector.broadcast %cst_89 : f32 to vector<8x192xf32>
    %895 = arith.addf %894, %893 : vector<8x192xf32>
    %896 = arith.divf %894, %895 : vector<8x192xf32>
    %897 = vector.extract_strided_slice %890 {offsets = [0, 192], sizes = [8, 64], strides = [1, 1]} : vector<8x256xf32> to vector<8x64xf32>
    %898 = math.tanh %897 : vector<8x64xf32>
    %899 = vector.extract_strided_slice %896 {offsets = [0, 64], sizes = [8, 64], strides = [1, 1]} : vector<8x192xf32> to vector<8x64xf32>
    %900 = arith.mulf %899, %885 : vector<8x64xf32>
    %901 = vector.extract_strided_slice %896 {offsets = [0, 0], sizes = [8, 64], strides = [1, 1]} : vector<8x192xf32> to vector<8x64xf32>
    %902 = arith.mulf %901, %898 : vector<8x64xf32>
    %903 = arith.addf %900, %902 : vector<8x64xf32>
    %904 = vector.extract_strided_slice %896 {offsets = [0, 128], sizes = [8, 64], strides = [1, 1]} : vector<8x192xf32> to vector<8x64xf32>
    %905 = math.tanh %903 : vector<8x64xf32>
    %906 = arith.mulf %904, %905 : vector<8x64xf32>
    %cst_90 = arith.constant dense<0.000000e+00> : vector<8x256xf32>
    %907 = tpu.matmul %906, %861, %cst_90 {dimension_numbers = #tpu.dot_dimension_numbers<[1], [0], [0], [1], [0, 0, 1, 1], [], []>} : vector<8x64xf32>, vector<64x256xf32>, vector<8x256xf32> -> vector<8x256xf32>
    %908 = arith.addf %870, %907 : vector<8x256xf32>
    %909 = vector.extract_strided_slice %908 {offsets = [0, 0], sizes = [8, 192], strides = [1, 1]} : vector<8x256xf32> to vector<8x192xf32>
    %910 = arith.negf %909 : vector<8x192xf32>
    %911 = math.exp %910 : vector<8x192xf32>
    %cst_91 = arith.constant 1.000000e+00 : f32
    %912 = vector.broadcast %cst_91 : f32 to vector<8x192xf32>
    %913 = arith.addf %912, %911 : vector<8x192xf32>
    %914 = arith.divf %912, %913 : vector<8x192xf32>
    %915 = vector.extract_strided_slice %908 {offsets = [0, 192], sizes = [8, 64], strides = [1, 1]} : vector<8x256xf32> to vector<8x64xf32>
    %916 = math.tanh %915 : vector<8x64xf32>
    %917 = vector.extract_strided_slice %914 {offsets = [0, 64], sizes = [8, 64], strides = [1, 1]} : vector<8x192xf32> to vector<8x64xf32>
    %918 = arith.mulf %917, %903 : vector<8x64xf32>
    %919 = vector.extract_strided_slice %914 {offsets = [0, 0], sizes = [8, 64], strides = [1, 1]} : vector<8x192xf32> to vector<8x64xf32>
    %920 = arith.mulf %919, %916 : vector<8x64xf32>
    %921 = arith.addf %918, %920 : vector<8x64xf32>
    %922 = vector.extract_strided_slice %914 {offsets = [0, 128], sizes = [8, 64], strides = [1, 1]} : vector<8x192xf32> to vector<8x64xf32>
    %923 = math.tanh %921 : vector<8x64xf32>
    %924 = arith.mulf %922, %923 : vector<8x64xf32>
    %925 = tpu.concatenate %888, %906, %924 in 0 : vector<8x64xf32>, vector<8x64xf32>, vector<8x64xf32> -> vector<24x64xf32>
    %926 = vector.extract_strided_slice %925 {offsets = [0, 0], sizes = [24, 32], strides = [1, 1]} : vector<24x64xf32> to vector<24x32xf32>
    %927 = tpu.concatenate %924, %906, %888 in 0 : vector<8x64xf32>, vector<8x64xf32>, vector<8x64xf32> -> vector<24x64xf32>
    %928 = vector.extract_strided_slice %927 {offsets = [0, 32], sizes = [24, 32], strides = [1, 1]} : vector<24x64xf32> to vector<24x32xf32>
    %929 = tpu.concatenate %926, %928 in 1 : vector<24x32xf32>, vector<24x32xf32> -> vector<24x64xf32>
    %c0_92 = arith.constant 0 : index
    %c0_93 = arith.constant 0 : index
    %930 = vector.load %arg10[%c0_92, %c0_93] : memref<64x64xf32, #tpu.memory_space<vmem>>, vector<64x64xf32>
    %c0_94 = arith.constant 0 : index
    %c0_95 = arith.constant 0 : index
    %931 = vector.load %arg11[%c0_94, %c0_95] : memref<1x64xf32, #tpu.memory_space<vmem>>, vector<1x64xf32>
    %c0_96 = arith.constant 0 : index
    %c0_97 = arith.constant 0 : index
    %932 = vector.load %arg12[%c0_96, %c0_97] : memref<1x64xf32, #tpu.memory_space<vmem>>, vector<1x64xf32>
    %cst_98 = arith.constant dense<0.000000e+00> : vector<24x64xf32>
    %933 = tpu.matmul %929, %930, %cst_98 {dimension_numbers = #tpu.dot_dimension_numbers<[1], [0], [0], [1], [0, 0, 1, 1], [], []>} : vector<24x64xf32>, vector<64x64xf32>, vector<24x64xf32> -> vector<24x64xf32>
    %934 = vector.broadcast %931 : vector<1x64xf32> to vector<24x64xf32>
    %935 = arith.addf %933, %934 : vector<24x64xf32>
    %936 = math.tanh %935 : vector<24x64xf32>
    %937 = vector.broadcast %932 : vector<1x64xf32> to vector<24x64xf32>
    %938 = arith.mulf %936, %937 : vector<24x64xf32>
    %cst_99 = arith.constant dense<0.000000e+00> : vector<24xf32>
    %939 = vector.multi_reduction <add>, %938, %cst_99 [1] : vector<24x64xf32> to vector<24xf32>
    %940 = vector.shape_cast %939 : vector<24xf32> to vector<24x1xf32>
    %941 = vector.extract_strided_slice %940 {offsets = [0, 0], sizes = [8, 1], strides = [1, 1]} : vector<24x1xf32> to vector<8x1xf32>
    %942 = vector.extract_strided_slice %940 {offsets = [8, 0], sizes = [8, 1], strides = [1, 1]} : vector<24x1xf32> to vector<8x1xf32>
    %943 = vector.extract_strided_slice %940 {offsets = [16, 0], sizes = [8, 1], strides = [1, 1]} : vector<24x1xf32> to vector<8x1xf32>
    %944 = arith.maximumf %941, %942 : vector<8x1xf32>
    %945 = arith.maximumf %944, %943 : vector<8x1xf32>
    %946 = tpu.concatenate %945, %945, %945 in 0 : vector<8x1xf32>, vector<8x1xf32>, vector<8x1xf32> -> vector<24x1xf32>
    %947 = arith.subf %940, %946 : vector<24x1xf32>
    %948 = math.exp %947 : vector<24x1xf32>
    %949 = vector.extract_strided_slice %948 {offsets = [0, 0], sizes = [8, 1], strides = [1, 1]} : vector<24x1xf32> to vector<8x1xf32>
    %950 = vector.extract_strided_slice %948 {offsets = [8, 0], sizes = [8, 1], strides = [1, 1]} : vector<24x1xf32> to vector<8x1xf32>
    %951 = arith.addf %949, %950 : vector<8x1xf32>
    %952 = vector.extract_strided_slice %948 {offsets = [16, 0], sizes = [8, 1], strides = [1, 1]} : vector<24x1xf32> to vector<8x1xf32>
    %953 = arith.addf %951, %952 : vector<8x1xf32>
    %cst_100 = arith.constant 1.000000e+00 : f32
    %954 = vector.broadcast %cst_100 : f32 to vector<8x1xf32>
    %955 = arith.divf %954, %953 : vector<8x1xf32>
    %956 = vector.extract_strided_slice %948 {offsets = [0, 0], sizes = [8, 1], strides = [1, 1]} : vector<24x1xf32> to vector<8x1xf32>
    %957 = arith.mulf %956, %955 : vector<8x1xf32>
    %958 = vector.extract_strided_slice %929 {offsets = [0, 0], sizes = [8, 64], strides = [1, 1]} : vector<24x64xf32> to vector<8x64xf32>
    %959 = vector.broadcast %957 : vector<8x1xf32> to vector<8x64xf32>
    %960 = arith.mulf %959, %958 : vector<8x64xf32>
    %961 = vector.extract_strided_slice %948 {offsets = [8, 0], sizes = [8, 1], strides = [1, 1]} : vector<24x1xf32> to vector<8x1xf32>
    %962 = arith.mulf %961, %955 : vector<8x1xf32>
    %963 = vector.extract_strided_slice %929 {offsets = [8, 0], sizes = [8, 64], strides = [1, 1]} : vector<24x64xf32> to vector<8x64xf32>
    %964 = vector.broadcast %962 : vector<8x1xf32> to vector<8x64xf32>
    %965 = arith.mulf %964, %963 : vector<8x64xf32>
    %966 = arith.addf %960, %965 : vector<8x64xf32>
    %967 = vector.extract_strided_slice %948 {offsets = [16, 0], sizes = [8, 1], strides = [1, 1]} : vector<24x1xf32> to vector<8x1xf32>
    %968 = arith.mulf %967, %955 : vector<8x1xf32>
    %969 = vector.extract_strided_slice %929 {offsets = [16, 0], sizes = [8, 64], strides = [1, 1]} : vector<24x64xf32> to vector<8x64xf32>
    %970 = vector.broadcast %968 : vector<8x1xf32> to vector<8x64xf32>
    %971 = arith.mulf %970, %969 : vector<8x64xf32>
    %972 = arith.addf %966, %971 : vector<8x64xf32>
    %973 = vector.extract_strided_slice %972 {offsets = [0, 0], sizes = [6, 64], strides = [1, 1]} : vector<8x64xf32> to vector<6x64xf32>
    %c0_101 = arith.constant 0 : index
    %c0_102 = arith.constant 0 : index
    %974 = vector.load %arg13[%c0_101, %c0_102] : memref<64x256xf32, #tpu.memory_space<vmem>>, vector<64x256xf32>
    %cst_103 = arith.constant dense<0.000000e+00> : vector<6x256xf32>
    %975 = tpu.matmul %973, %974, %cst_103 {dimension_numbers = #tpu.dot_dimension_numbers<[1], [0], [0], [1], [0, 0, 1, 1], [], []>} : vector<6x64xf32>, vector<64x256xf32>, vector<6x256xf32> -> vector<6x256xf32>
    %c0_104 = arith.constant 0 : index
    %c0_105 = arith.constant 0 : index
    %976 = vector.load %arg15[%c0_104, %c0_105] : memref<1x256xf32, #tpu.memory_space<vmem>>, vector<1x256xf32>
    %977 = vector.broadcast %976 : vector<1x256xf32> to vector<6x256xf32>
    %978 = arith.addf %975, %977 : vector<6x256xf32>
    %cst_106 = arith.constant 0.000000e+00 : f32
    %979 = vector.broadcast %cst_106 : f32 to vector<2x64xf32>
    %980 = vector.extract_strided_slice %978 {offsets = [0, 0], sizes = [2, 256], strides = [1, 1]} : vector<6x256xf32> to vector<2x256xf32>
    %981 = vector.extract_strided_slice %978 {offsets = [2, 0], sizes = [2, 256], strides = [1, 1]} : vector<6x256xf32> to vector<2x256xf32>
    %982 = vector.extract_strided_slice %978 {offsets = [4, 0], sizes = [2, 256], strides = [1, 1]} : vector<6x256xf32> to vector<2x256xf32>
    %c0_107 = arith.constant 0 : index
    %c0_108 = arith.constant 0 : index
    %983 = vector.load %arg14[%c0_107, %c0_108] : memref<64x256xf32, #tpu.memory_space<vmem>>, vector<64x256xf32>
    %984 = vector.shape_cast %856 : vector<1x256xi1> to vector<1x256xi1>
    %985 = vector.broadcast %984 : vector<1x256xi1> to vector<2x256xi1>
    %986 = arith.select %985, %980, %982 : vector<2x256xi1>, vector<2x256xf32>
    %987 = vector.shape_cast %856 : vector<1x256xi1> to vector<1x256xi1>
    %988 = vector.broadcast %987 : vector<1x256xi1> to vector<2x256xi1>
    %989 = arith.select %988, %981, %981 : vector<2x256xi1>, vector<2x256xf32>
    %990 = vector.shape_cast %856 : vector<1x256xi1> to vector<1x256xi1>
    %991 = vector.broadcast %990 : vector<1x256xi1> to vector<2x256xi1>
    %992 = arith.select %991, %982, %980 : vector<2x256xi1>, vector<2x256xf32>
    %cst_109 = arith.constant dense<0.000000e+00> : vector<2x256xf32>
    %993 = tpu.matmul %979, %983, %cst_109 {dimension_numbers = #tpu.dot_dimension_numbers<[1], [0], [0], [1], [0, 0, 1, 1], [], []>} : vector<2x64xf32>, vector<64x256xf32>, vector<2x256xf32> -> vector<2x256xf32>
    %994 = arith.addf %986, %993 : vector<2x256xf32>
    %995 = vector.extract_strided_slice %994 {offsets = [0, 0], sizes = [2, 192], strides = [1, 1]} : vector<2x256xf32> to vector<2x192xf32>
    %996 = arith.negf %995 : vector<2x192xf32>
    %997 = math.exp %996 : vector<2x192xf32>
    %cst_110 = arith.constant 1.000000e+00 : f32
    %998 = vector.broadcast %cst_110 : f32 to vector<2x192xf32>
    %999 = arith.addf %998, %997 : vector<2x192xf32>
    %1000 = arith.divf %998, %999 : vector<2x192xf32>
    %1001 = vector.extract_strided_slice %994 {offsets = [0, 192], sizes = [2, 64], strides = [1, 1]} : vector<2x256xf32> to vector<2x64xf32>
    %1002 = math.tanh %1001 : vector<2x64xf32>
    %1003 = vector.extract_strided_slice %1000 {offsets = [0, 64], sizes = [2, 64], strides = [1, 1]} : vector<2x192xf32> to vector<2x64xf32>
    %1004 = arith.mulf %1003, %979 : vector<2x64xf32>
    %1005 = vector.extract_strided_slice %1000 {offsets = [0, 0], sizes = [2, 64], strides = [1, 1]} : vector<2x192xf32> to vector<2x64xf32>
    %1006 = arith.mulf %1005, %1002 : vector<2x64xf32>
    %1007 = arith.addf %1004, %1006 : vector<2x64xf32>
    %1008 = vector.extract_strided_slice %1000 {offsets = [0, 128], sizes = [2, 64], strides = [1, 1]} : vector<2x192xf32> to vector<2x64xf32>
    %1009 = math.tanh %1007 : vector<2x64xf32>
    %1010 = arith.mulf %1008, %1009 : vector<2x64xf32>
    %cst_111 = arith.constant dense<0.000000e+00> : vector<2x256xf32>
    %1011 = tpu.matmul %1010, %983, %cst_111 {dimension_numbers = #tpu.dot_dimension_numbers<[1], [0], [0], [1], [0, 0, 1, 1], [], []>} : vector<2x64xf32>, vector<64x256xf32>, vector<2x256xf32> -> vector<2x256xf32>
    %1012 = arith.addf %989, %1011 : vector<2x256xf32>
    %1013 = vector.extract_strided_slice %1012 {offsets = [0, 0], sizes = [2, 192], strides = [1, 1]} : vector<2x256xf32> to vector<2x192xf32>
    %1014 = arith.negf %1013 : vector<2x192xf32>
    %1015 = math.exp %1014 : vector<2x192xf32>
    %cst_112 = arith.constant 1.000000e+00 : f32
    %1016 = vector.broadcast %cst_112 : f32 to vector<2x192xf32>
    %1017 = arith.addf %1016, %1015 : vector<2x192xf32>
    %1018 = arith.divf %1016, %1017 : vector<2x192xf32>
    %1019 = vector.extract_strided_slice %1012 {offsets = [0, 192], sizes = [2, 64], strides = [1, 1]} : vector<2x256xf32> to vector<2x64xf32>
    %1020 = math.tanh %1019 : vector<2x64xf32>
    %1021 = vector.extract_strided_slice %1018 {offsets = [0, 64], sizes = [2, 64], strides = [1, 1]} : vector<2x192xf32> to vector<2x64xf32>
    %1022 = arith.mulf %1021, %1007 : vector<2x64xf32>
    %1023 = vector.extract_strided_slice %1018 {offsets = [0, 0], sizes = [2, 64], strides = [1, 1]} : vector<2x192xf32> to vector<2x64xf32>
    %1024 = arith.mulf %1023, %1020 : vector<2x64xf32>
    %1025 = arith.addf %1022, %1024 : vector<2x64xf32>
    %1026 = vector.extract_strided_slice %1018 {offsets = [0, 128], sizes = [2, 64], strides = [1, 1]} : vector<2x192xf32> to vector<2x64xf32>
    %1027 = math.tanh %1025 : vector<2x64xf32>
    %1028 = arith.mulf %1026, %1027 : vector<2x64xf32>
    %cst_113 = arith.constant dense<0.000000e+00> : vector<2x256xf32>
    %1029 = tpu.matmul %1028, %983, %cst_113 {dimension_numbers = #tpu.dot_dimension_numbers<[1], [0], [0], [1], [0, 0, 1, 1], [], []>} : vector<2x64xf32>, vector<64x256xf32>, vector<2x256xf32> -> vector<2x256xf32>
    %1030 = arith.addf %992, %1029 : vector<2x256xf32>
    %1031 = vector.extract_strided_slice %1030 {offsets = [0, 0], sizes = [2, 192], strides = [1, 1]} : vector<2x256xf32> to vector<2x192xf32>
    %1032 = arith.negf %1031 : vector<2x192xf32>
    %1033 = math.exp %1032 : vector<2x192xf32>
    %cst_114 = arith.constant 1.000000e+00 : f32
    %1034 = vector.broadcast %cst_114 : f32 to vector<2x192xf32>
    %1035 = arith.addf %1034, %1033 : vector<2x192xf32>
    %1036 = arith.divf %1034, %1035 : vector<2x192xf32>
    %1037 = vector.extract_strided_slice %1030 {offsets = [0, 192], sizes = [2, 64], strides = [1, 1]} : vector<2x256xf32> to vector<2x64xf32>
    %1038 = math.tanh %1037 : vector<2x64xf32>
    %1039 = vector.extract_strided_slice %1036 {offsets = [0, 64], sizes = [2, 64], strides = [1, 1]} : vector<2x192xf32> to vector<2x64xf32>
    %1040 = arith.mulf %1039, %1025 : vector<2x64xf32>
    %1041 = vector.extract_strided_slice %1036 {offsets = [0, 0], sizes = [2, 64], strides = [1, 1]} : vector<2x192xf32> to vector<2x64xf32>
    %1042 = arith.mulf %1041, %1038 : vector<2x64xf32>
    %1043 = arith.addf %1040, %1042 : vector<2x64xf32>
    %1044 = vector.extract_strided_slice %1036 {offsets = [0, 128], sizes = [2, 64], strides = [1, 1]} : vector<2x192xf32> to vector<2x64xf32>
    %1045 = math.tanh %1043 : vector<2x64xf32>
    %1046 = arith.mulf %1044, %1045 : vector<2x64xf32>
    %1047 = tpu.concatenate %1010, %1028, %1046 in 0 : vector<2x64xf32>, vector<2x64xf32>, vector<2x64xf32> -> vector<6x64xf32>
    %1048 = vector.extract_strided_slice %1047 {offsets = [0, 0], sizes = [6, 32], strides = [1, 1]} : vector<6x64xf32> to vector<6x32xf32>
    %1049 = tpu.concatenate %1046, %1028, %1010 in 0 : vector<2x64xf32>, vector<2x64xf32>, vector<2x64xf32> -> vector<6x64xf32>
    %1050 = vector.extract_strided_slice %1049 {offsets = [0, 32], sizes = [6, 32], strides = [1, 1]} : vector<6x64xf32> to vector<6x32xf32>
    %1051 = tpu.concatenate %1048, %1050 in 1 : vector<6x32xf32>, vector<6x32xf32> -> vector<6x64xf32>
    %c0_115 = arith.constant 0 : index
    %c0_116 = arith.constant 0 : index
    %1052 = vector.load %arg16[%c0_115, %c0_116] : memref<64x64xf32, #tpu.memory_space<vmem>>, vector<64x64xf32>
    %c0_117 = arith.constant 0 : index
    %c0_118 = arith.constant 0 : index
    %1053 = vector.load %arg17[%c0_117, %c0_118] : memref<1x64xf32, #tpu.memory_space<vmem>>, vector<1x64xf32>
    %c0_119 = arith.constant 0 : index
    %c0_120 = arith.constant 0 : index
    %1054 = vector.load %arg18[%c0_119, %c0_120] : memref<1x64xf32, #tpu.memory_space<vmem>>, vector<1x64xf32>
    %cst_121 = arith.constant dense<0.000000e+00> : vector<6x64xf32>
    %1055 = tpu.matmul %1051, %1052, %cst_121 {dimension_numbers = #tpu.dot_dimension_numbers<[1], [0], [0], [1], [0, 0, 1, 1], [], []>} : vector<6x64xf32>, vector<64x64xf32>, vector<6x64xf32> -> vector<6x64xf32>
    %1056 = vector.broadcast %1053 : vector<1x64xf32> to vector<6x64xf32>
    %1057 = arith.addf %1055, %1056 : vector<6x64xf32>
    %1058 = math.tanh %1057 : vector<6x64xf32>
    %1059 = vector.broadcast %1054 : vector<1x64xf32> to vector<6x64xf32>
    %1060 = arith.mulf %1058, %1059 : vector<6x64xf32>
    %cst_122 = arith.constant dense<0.000000e+00> : vector<6xf32>
    %1061 = vector.multi_reduction <add>, %1060, %cst_122 [1] : vector<6x64xf32> to vector<6xf32>
    %1062 = vector.shape_cast %1061 : vector<6xf32> to vector<6x1xf32>
    %1063 = vector.extract_strided_slice %1062 {offsets = [0, 0], sizes = [2, 1], strides = [1, 1]} : vector<6x1xf32> to vector<2x1xf32>
    %1064 = vector.extract_strided_slice %1062 {offsets = [2, 0], sizes = [2, 1], strides = [1, 1]} : vector<6x1xf32> to vector<2x1xf32>
    %1065 = vector.extract_strided_slice %1062 {offsets = [4, 0], sizes = [2, 1], strides = [1, 1]} : vector<6x1xf32> to vector<2x1xf32>
    %1066 = arith.maximumf %1063, %1064 : vector<2x1xf32>
    %1067 = arith.maximumf %1066, %1065 : vector<2x1xf32>
    %1068 = tpu.concatenate %1067, %1067, %1067 in 0 : vector<2x1xf32>, vector<2x1xf32>, vector<2x1xf32> -> vector<6x1xf32>
    %1069 = arith.subf %1062, %1068 : vector<6x1xf32>
    %1070 = math.exp %1069 : vector<6x1xf32>
    %1071 = vector.extract_strided_slice %1070 {offsets = [0, 0], sizes = [2, 1], strides = [1, 1]} : vector<6x1xf32> to vector<2x1xf32>
    %1072 = vector.extract_strided_slice %1070 {offsets = [2, 0], sizes = [2, 1], strides = [1, 1]} : vector<6x1xf32> to vector<2x1xf32>
    %1073 = arith.addf %1071, %1072 : vector<2x1xf32>
    %1074 = vector.extract_strided_slice %1070 {offsets = [4, 0], sizes = [2, 1], strides = [1, 1]} : vector<6x1xf32> to vector<2x1xf32>
    %1075 = arith.addf %1073, %1074 : vector<2x1xf32>
    %cst_123 = arith.constant 1.000000e+00 : f32
    %1076 = vector.broadcast %cst_123 : f32 to vector<2x1xf32>
    %1077 = arith.divf %1076, %1075 : vector<2x1xf32>
    %1078 = vector.extract_strided_slice %1070 {offsets = [0, 0], sizes = [2, 1], strides = [1, 1]} : vector<6x1xf32> to vector<2x1xf32>
    %1079 = arith.mulf %1078, %1077 : vector<2x1xf32>
    %1080 = vector.extract_strided_slice %1051 {offsets = [0, 0], sizes = [2, 64], strides = [1, 1]} : vector<6x64xf32> to vector<2x64xf32>
    %1081 = vector.broadcast %1079 : vector<2x1xf32> to vector<2x64xf32>
    %1082 = arith.mulf %1081, %1080 : vector<2x64xf32>
    %1083 = vector.extract_strided_slice %1070 {offsets = [2, 0], sizes = [2, 1], strides = [1, 1]} : vector<6x1xf32> to vector<2x1xf32>
    %1084 = arith.mulf %1083, %1077 : vector<2x1xf32>
    %1085 = vector.extract_strided_slice %1051 {offsets = [2, 0], sizes = [2, 64], strides = [1, 1]} : vector<6x64xf32> to vector<2x64xf32>
    %1086 = vector.broadcast %1084 : vector<2x1xf32> to vector<2x64xf32>
    %1087 = arith.mulf %1086, %1085 : vector<2x64xf32>
    %1088 = arith.addf %1082, %1087 : vector<2x64xf32>
    %1089 = vector.extract_strided_slice %1070 {offsets = [4, 0], sizes = [2, 1], strides = [1, 1]} : vector<6x1xf32> to vector<2x1xf32>
    %1090 = arith.mulf %1089, %1077 : vector<2x1xf32>
    %1091 = vector.extract_strided_slice %1051 {offsets = [4, 0], sizes = [2, 64], strides = [1, 1]} : vector<6x64xf32> to vector<2x64xf32>
    %1092 = vector.broadcast %1090 : vector<2x1xf32> to vector<2x64xf32>
    %1093 = arith.mulf %1092, %1091 : vector<2x64xf32>
    %1094 = arith.addf %1088, %1093 : vector<2x64xf32>
    %c0_124 = arith.constant 0 : index
    %c0_125 = arith.constant 0 : index
    %1095 = vector.load %arg19[%c0_124, %c0_125] : memref<64x4xf32, #tpu.memory_space<vmem>>, vector<64x4xf32>
    %cst_126 = arith.constant dense<0.000000e+00> : vector<2x4xf32>
    %1096 = tpu.matmul %1094, %1095, %cst_126 {dimension_numbers = #tpu.dot_dimension_numbers<[1], [0], [0], [1], [0, 0, 1, 1], [], []>} : vector<2x64xf32>, vector<64x4xf32>, vector<2x4xf32> -> vector<2x4xf32>
    %c0_127 = arith.constant 0 : index
    %c0_128 = arith.constant 0 : index
    %1097 = vector.load %arg20[%c0_127, %c0_128] : memref<1x4xf32, #tpu.memory_space<vmem>>, vector<1x4xf32>
    %1098 = vector.broadcast %1097 : vector<1x4xf32> to vector<2x4xf32>
    %1099 = arith.addf %1096, %1098 : vector<2x4xf32>
    %c0_129 = arith.constant 0 : index
    %c0_130 = arith.constant 0 : index
    %1100 = vector.load %arg21[%c0_129, %c0_130] : memref<2x4xf32, #tpu.memory_space<vmem>>, vector<2x4xf32>
    tpu.vector_store %arg21[%c0_129, %c0_130], %1099 {strides = array<i32>} : memref<2x4xf32, #tpu.memory_space<vmem>>, vector<2x4xf32>,
    return
  }
}

</mosaic_0001>

<llo_original>
// kernel: hier_att_net_forward.1
$region0: #{hier_att_net_forward.1}
  #allocation0 [shape = 'u32[]', space=smem, size = 0x4, offset = 0x4, fixed_abs, tag = 'smem constant byte address 0x4 - core index']
  #allocation1 [shape = 'u32[144,128]{1,0:T(1,128)}', space=vmem, size = 0x12000, scoped, tag = 'internal scratch']
  %s0 = inlined_call_operand.vmem [shape: bf16[192,32], index: 0, kind: input, shape index: {}]
  %s1 = inlined_call_operand.vmem [shape: bf16[32,256], index: 1, kind: input, shape index: {}]
  %s2 = inlined_call_operand.vmem [shape: f32[64,256], index: 2, kind: input, shape index: {}]
  %s3 = inlined_call_operand.vmem [shape: f32[1,256], index: 3, kind: input, shape index: {}]
  %s4 = inlined_call_operand.vmem [shape: f32[64,64], index: 4, kind: input, shape index: {}]
  %s5 = inlined_call_operand.vmem [shape: f32[1,64], index: 5, kind: input, shape index: {}]
  %s6 = inlined_call_operand.vmem [shape: f32[1,64], index: 6, kind: input, shape index: {}]
  %s7 = inlined_call_operand.vmem [shape: f32[64,256], index: 7, kind: input, shape index: {}]
  %s8 = inlined_call_operand.vmem [shape: f32[64,256], index: 8, kind: input, shape index: {}]
  %s9 = inlined_call_operand.vmem [shape: f32[1,256], index: 9, kind: input, shape index: {}]
  %s10 = inlined_call_operand.vmem [shape: f32[64,64], index: 10, kind: input, shape index: {}]
  %s11 = inlined_call_operand.vmem [shape: f32[1,64], index: 11, kind: input, shape index: {}]
  %s12 = inlined_call_operand.vmem [shape: f32[1,64], index: 12, kind: input, shape index: {}]
  %s13 = inlined_call_operand.vmem [shape: f32[64,256], index: 13, kind: input, shape index: {}]
  %s14 = inlined_call_operand.vmem [shape: f32[64,256], index: 14, kind: input, shape index: {}]
  %s15 = inlined_call_operand.vmem [shape: f32[1,256], index: 15, kind: input, shape index: {}]
  %s16 = inlined_call_operand.vmem [shape: f32[64,64], index: 16, kind: input, shape index: {}]
  %s17 = inlined_call_operand.vmem [shape: f32[1,64], index: 17, kind: input, shape index: {}]
  %s18 = inlined_call_operand.vmem [shape: f32[1,64], index: 18, kind: input, shape index: {}]
  %s19 = inlined_call_operand.vmem [shape: f32[64,4], index: 19, kind: input, shape index: {}]
  %s20 = inlined_call_operand.vmem [shape: f32[1,4], index: 20, kind: input, shape index: {}]
  %s21 = inlined_call_operand.hbm [shape: f32[2,4], index: 21, kind: output, shape index: {}]
  %s22 = sld [smem:[#allocation0]]
  $region94: #{hier_att_net_forward.1} parent=0
    _
  %s24 = ssub.s32 1, %s22
  %s25 = scalar_select 0, %s24, %s22
  $region1: #{hier_att_net_forward.1} parent=0
    #allocation2 [shape = 'u8[1024]{0}', space=vmem, size = 0x400, scoped, tag = 'output window, operand 0, single buffered']
    #allocation3 [shape = 's32[1]{0}', space=sflag, size = 0x4, scoped, tag = 'scoped memory for hier_att_net_forward.1']
    %26 = vsyncpa [#allocation3], 0
    // Predicated region
    $region2: #{hier_att_net_forward.1} parent=1 // pred_check
      _
    $region3: #{hier_att_net_forward.1} parent=1 // pred_check_branch
      %28 = sbr.rel (0) target = $region5
    $region4: #{hier_att_net_forward.1} parent=1 // pred_region
      _
    $region5: #{hier_att_net_forward.1} parent=1 // pred_fallthru
      _
    // Predicated region
    $region6: #{hier_att_net_forward.1} parent=1 // pred_check
      _
    $region7: #{hier_att_net_forward.1} parent=1 // pred_check_branch
      %30 = sbr.rel (0) target = $region9
    $region8: #{hier_att_net_forward.1} parent=1 // pred_region
      _
    $region9: #{hier_att_net_forward.1} parent=1 // pred_fallthru
      _
    // Predicated region
    $region10: #{hier_att_net_forward.1} parent=1 // pred_check
      _
    $region11: #{hier_att_net_forward.1} parent=1 // pred_check_branch
      %32 = sbr.rel (0) target = $region13
    $region12: #{hier_att_net_forward.1} parent=1 // pred_region
      _
    $region13: #{hier_att_net_forward.1} parent=1 // pred_fallthru
      _
    // Predicated region
    $region14: #{hier_att_net_forward.1} parent=1 // pred_check
      _
    $region15: #{hier_att_net_forward.1} parent=1 // pred_check_branch
      %34 = sbr.rel (0) target = $region17
    $region16: #{hier_att_net_forward.1} parent=1 // pred_region
      _
    $region17: #{hier_att_net_forward.1} parent=1 // pred_fallthru
      _
    // Predicated region
    $region18: #{hier_att_net_forward.1} parent=1 // pred_check
      _
    $region19: #{hier_att_net_forward.1} parent=1 // pred_check_branch
      %36 = sbr.rel (0) target = $region21
    $region20: #{hier_att_net_forward.1} parent=1 // pred_region
      _
    $region21: #{hier_att_net_forward.1} parent=1 // pred_fallthru
      _
    // Predicated region
    $region22: #{hier_att_net_forward.1} parent=1 // pred_check
      _
    $region23: #{hier_att_net_forward.1} parent=1 // pred_check_branch
      %38 = sbr.rel (0) target = $region25
    $region24: #{hier_att_net_forward.1} parent=1 // pred_region
      _
    $region25: #{hier_att_net_forward.1} parent=1 // pred_fallthru
      _
    // Predicated region
    $region26: #{hier_att_net_forward.1} parent=1 // pred_check
      _
    $region27: #{hier_att_net_forward.1} parent=1 // pred_check_branch
      %40 = sbr.rel (0) target = $region29
    $region28: #{hier_att_net_forward.1} parent=1 // pred_region
      _
    $region29: #{hier_att_net_forward.1} parent=1 // pred_fallthru
      _
    // Predicated region
    $region30: #{hier_att_net_forward.1} parent=1 // pred_check
      _
    $region31: #{hier_att_net_forward.1} parent=1 // pred_check_branch
      %42 = sbr.rel (0) target = $region33
    $region32: #{hier_att_net_forward.1} parent=1 // pred_region
      _
    $region33: #{hier_att_net_forward.1} parent=1 // pred_fallthru
      _
    // Predicated region
    $region34: #{hier_att_net_forward.1} parent=1 // pred_check
      _
    $region35: #{hier_att_net_forward.1} parent=1 // pred_check_branch
      %44 = sbr.rel (0) target = $region37
    $region36: #{hier_att_net_forward.1} parent=1 // pred_region
      _
    $region37: #{hier_att_net_forward.1} parent=1 // pred_fallthru
      _
    // Predicated region
    $region38: #{hier_att_net_forward.1} parent=1 // pred_check
      _
    $region39: #{hier_att_net_forward.1} parent=1 // pred_check_branch
      %46 = sbr.rel (0) target = $region41
    $region40: #{hier_att_net_forward.1} parent=1 // pred_region
      _
    $region41: #{hier_att_net_forward.1} parent=1 // pred_fallthru
      _
    // Predicated region
    $region42: #{hier_att_net_forward.1} parent=1 // pred_check
      _
    $region43: #{hier_att_net_forward.1} parent=1 // pred_check_branch
      %48 = sbr.rel (0) target = $region45
    $region44: #{hier_att_net_forward.1} parent=1 // pred_region
      _
    $region45: #{hier_att_net_forward.1} parent=1 // pred_fallthru
      _
    // Predicated region
    $region46: #{hier_att_net_forward.1} parent=1 // pred_check
      _
    $region47: #{hier_att_net_forward.1} parent=1 // pred_check_branch
      %50 = sbr.rel (0) target = $region49
    $region48: #{hier_att_net_forward.1} parent=1 // pred_region
      _
    $region49: #{hier_att_net_forward.1} parent=1 // pred_fallthru
      _
    // Predicated region
    $region50: #{hier_att_net_forward.1} parent=1 // pred_check
      _
    $region51: #{hier_att_net_forward.1} parent=1 // pred_check_branch
      %52 = sbr.rel (0) target = $region53
    $region52: #{hier_att_net_forward.1} parent=1 // pred_region
      _
    $region53: #{hier_att_net_forward.1} parent=1 // pred_fallthru
      _
    // Predicated region
    $region54: #{hier_att_net_forward.1} parent=1 // pred_check
      _
    $region55: #{hier_att_net_forward.1} parent=1 // pred_check_branch
      %54 = sbr.rel (0) target = $region57
    $region56: #{hier_att_net_forward.1} parent=1 // pred_region
      _
    $region57: #{hier_att_net_forward.1} parent=1 // pred_fallthru
      _
    // Predicated region
    $region58: #{hier_att_net_forward.1} parent=1 // pred_check
      _
    $region59: #{hier_att_net_forward.1} parent=1 // pred_check_branch
      %56 = sbr.rel (0) target = $region61
    $region60: #{hier_att_net_forward.1} parent=1 // pred_region
      _
    $region61: #{hier_att_net_forward.1} parent=1 // pred_fallthru
      _
    // Predicated region
    $region62: #{hier_att_net_forward.1} parent=1 // pred_check
      _
    $region63: #{hier_att_net_forward.1} parent=1 // pred_check_branch
      %58 = sbr.rel (0) target = $region65
    $region64: #{hier_att_net_forward.1} parent=1 // pred_region
      _
    $region65: #{hier_att_net_forward.1} parent=1 // pred_fallthru
      _
    // Predicated region
    $region66: #{hier_att_net_forward.1} parent=1 // pred_check
      _
    $region67: #{hier_att_net_forward.1} parent=1 // pred_check_branch
      %60 = sbr.rel (0) target = $region69
    $region68: #{hier_att_net_forward.1} parent=1 // pred_region
      _
    $region69: #{hier_att_net_forward.1} parent=1 // pred_fallthru
      _
    // Predicated region
    $region70: #{hier_att_net_forward.1} parent=1 // pred_check
      _
    $region71: #{hier_att_net_forward.1} parent=1 // pred_check_branch
      %62 = sbr.rel (0) target = $region73
    $region72: #{hier_att_net_forward.1} parent=1 // pred_region
      _
    $region73: #{hier_att_net_forward.1} parent=1 // pred_fallthru
      _
    // Predicated region
    $region74: #{hier_att_net_forward.1} parent=1 // pred_check
      _
    $region75: #{hier_att_net_forward.1} parent=1 // pred_check_branch
      %64 = sbr.rel (0) target = $region77
    $region76: #{hier_att_net_forward.1} parent=1 // pred_region
      _
    $region77: #{hier_att_net_forward.1} parent=1 // pred_fallthru
      _
    // Predicated region
    $region78: #{hier_att_net_forward.1} parent=1 // pred_check
      _
    $region79: #{hier_att_net_forward.1} parent=1 // pred_check_branch
      %66 = sbr.rel (0) target = $region81
    $region80: #{hier_att_net_forward.1} parent=1 // pred_region
      _
    $region81: #{hier_att_net_forward.1} parent=1 // pred_fallthru
      _
    // Predicated region
    $region82: #{hier_att_net_forward.1} parent=1 // pred_check
      _
    $region83: #{hier_att_net_forward.1} parent=1 // pred_check_branch
      %68 = sbr.rel (0) target = $region85
    $region84: #{hier_att_net_forward.1} parent=1 // pred_region
      _
    $region85: #{hier_att_net_forward.1} parent=1 // pred_fallthru
      _
    %v70 = vld [vmem:[%s0] sm:$0xf]
    %v71 = vld [vmem:[%s0 + $0x4] sm:$0xf]
    %v72 = vld [vmem:[%s0 + $0x8] sm:$0xf]
    %v73 = vld [vmem:[%s0 + $0xc] sm:$0xf]
    %v74 = vld [vmem:[%s0 + $0x10] sm:$0xf]
    %v75 = vld [vmem:[%s0 + $0x14] sm:$0xf]
    %v76 = vld [vmem:[%s0 + $0x18] sm:$0xf]
    %v77 = vld [vmem:[%s0 + $0x1c] sm:$0xf]
    %v78 = vld [vmem:[%s0 + $0x20] sm:$0xf]
    %v79 = vld [vmem:[%s0 + $0x24] sm:$0xf]
    %v80 = vld [vmem:[%s0 + $0x28] sm:$0xf]
    %v81 = vld [vmem:[%s0 + $0x2c] sm:$0xf]
    %v82 = vld [vmem:[%s0 + $0x30] sm:$0xf]
    %v83 = vld [vmem:[%s0 + $0x34] sm:$0xf]
    %v84 = vld [vmem:[%s0 + $0x38] sm:$0xf]
    %v85 = vld [vmem:[%s0 + $0x3c] sm:$0xf]
    %v86 = vld [vmem:[%s0 + $0x40] sm:$0xf]
    %v87 = vld [vmem:[%s0 + $0x44] sm:$0xf]
    %v88 = vld [vmem:[%s0 + $0x48] sm:$0xf]
    %v89 = vld [vmem:[%s0 + $0x4c] sm:$0xf]
    %v90 = vld [vmem:[%s0 + $0x50] sm:$0xf]
    %v91 = vld [vmem:[%s0 + $0x54] sm:$0xf]
    %v92 = vld [vmem:[%s0 + $0x58] sm:$0xf]
    %v93 = vld [vmem:[%s0 + $0x5c] sm:$0xf]
    %v94 = vld [vmem:[%s1] sm:$0xff]
    %v95 = vld [vmem:[%s1 + $0x8] sm:$0xff]
    %v96 = vld [vmem:[%s1 + $0x10] sm:$0xff]
    %v97 = vld [vmem:[%s1 + $0x18] sm:$0xff]
    %v98 = vld [vmem:[%s3] sm:$0x3]
    %v100 = vlaneseq
    %v101 = vshrl.u32 %v100, 7
    %v102 = vsub.s32 0, %v101
    %v103 = vrot.slane %v98, %v102
    %v104 = vlaneseq
    %v105 = vshrl.u32 %v104, 7
    %v106 = vsub.s32 1, %v105
    %v107 = vrot.slane %v98, %v106
    %v134 = vunpack.c.l.b16 %v70
    %v135 = vunpack.c.l.b16 %v71
    %v136 = vunpack.c.l.b16 %v72
    %v137 = vunpack.c.l.b16 %v73
    %v138 = vunpack.c.l.b16 %v74
    %v139 = vunpack.c.l.b16 %v75
    %v140 = vunpack.c.l.b16 %v76
    %v141 = vunpack.c.l.b16 %v77
    %v142 = vunpack.c.l.b16 %v78
    %v143 = vunpack.c.l.b16 %v79
    %v144 = vunpack.c.l.b16 %v80
    %v145 = vunpack.c.l.b16 %v81
    %v146 = vunpack.c.l.b16 %v82
    %v147 = vunpack.c.l.b16 %v83
    %v148 = vunpack.c.l.b16 %v84
    %v149 = vunpack.c.l.b16 %v85
    %v150 = vunpack.c.l.b16 %v86
    %v151 = vunpack.c.l.b16 %v87
    %v152 = vunpack.c.l.b16 %v88
    %v153 = vunpack.c.l.b16 %v89
    %v154 = vunpack.c.l.b16 %v90
    %v155 = vunpack.c.l.b16 %v91
    %v156 = vunpack.c.l.b16 %v92
    %v157 = vunpack.c.l.b16 %v93
    %v158 = vpack.c.b16 %v135, %v134
    %v159 = vpack.c.b16 %v137, %v136
    %v160 = vpack.c.b16 %v139, %v138
    %v161 = vpack.c.b16 %v141, %v140
    %v162 = vpack.c.b16 %v143, %v142
    %v163 = vpack.c.b16 %v145, %v144
    %v164 = vpack.c.b16 %v147, %v146
    %v165 = vpack.c.b16 %v149, %v148
    %v166 = vpack.c.b16 %v151, %v150
    %v167 = vpack.c.b16 %v153, %v152
    %v168 = vpack.c.b16 %v155, %v154
    %v169 = vpack.c.b16 %v157, %v156
    %v174 = vunpack.c.l.b16 %v94
    %v175 = vunpack.c.h.b16 %v94
    %v176 = vunpack.c.l.b16 %v95
    %v177 = vunpack.c.h.b16 %v95
    %v178 = vunpack.c.l.b16 %v96
    %v179 = vunpack.c.h.b16 %v96
    %v180 = vunpack.c.l.b16 %v97
    %v181 = vunpack.c.h.b16 %v97
    %v182 = vpack.c.b16 %v176, %v174
    %v183 = vpack.c.b16 %v177, %v175
    %v184 = vpack.c.b16 %v180, %v178
    %v185 = vpack.c.b16 %v181, %v179
    %vm190 = vcmask 261120
    %v192 = vsel %vm190, %v158, 0
    %v195 = vsel %vm190, %v159, 0
    %v198 = vsel %vm190, %v160, 0
    %v201 = vsel %vm190, %v161, 0
    %v204 = vsel %vm190, %v162, 0
    %v207 = vsel %vm190, %v163, 0
    %v210 = vsel %vm190, %v164, 0
    %v213 = vsel %vm190, %v165, 0
    %v216 = vsel %vm190, %v166, 0
    %v219 = vsel %vm190, %v167, 0
    %v222 = vsel %vm190, %v168, 0
    %v225 = vsel %vm190, %v169, 0
    %227 = vmatprep.subr.bf16.mxu0 %v183
    %228 = vmatpush1.bf16.msra.mxu0 %v182
    %229 = vmatprep.subr.bf16.mxu0 %v185
    %230 = vmatpush1.bf16.msra.mxu0 %v184
    %231 = vmatprep.subr.bf16.mxu0 0
    %232 = vmatpush1.bf16.msra.mxu0 0
    %233 = vmatprep.subr.bf16.mxu0 0
    %234 = vmatpush1.bf16.msra.mxu0 0
    %235 = vmatprep.subr.bf16.mxu0 0
    %236 = vmatpush1.bf16.msra.mxu0 0
    %237 = vmatprep.subr.bf16.mxu0 0
    %238 = vmatpush1.bf16.msra.mxu0 0
    %239 = vmatprep.subr.bf16.mxu0 0
    %240 = vmatpush1.bf16.msra.mxu0 0
    %241 = vmatprep.subr.bf16.mxu0 0
    %242 = vmatpush1.bf16.msra.mxu0 0
    %243 = vmatprep.subr.bf16.mxu0 0
    %244 = vmatpush1.bf16.msra.mxu0 0
    %245 = vmatprep.subr.bf16.mxu0 0
    %246 = vmatpush1.bf16.msra.mxu0 0
    %247 = vmatprep.subr.bf16.mxu0 0
    %248 = vmatpush1.bf16.msra.mxu0 0
    %249 = vmatprep.subr.bf16.mxu0 0
    %250 = vmatpush1.bf16.msra.mxu0 0
    %251 = vmatprep.subr.bf16.mxu0 0
    %252 = vmatpush1.bf16.msra.mxu0 0
    %253 = vmatprep.subr.bf16.mxu0 0
    %254 = vmatpush1.bf16.msra.mxu0 0
    %255 = vmatprep.subr.bf16.mxu0 0
    %256 = vmatpush1.bf16.msra.mxu0 0
    %257 = vmatprep.subr.bf16.mxu0 0
    %258 = vmatpush1.bf16.msra.mxu0 0
    %259 = vmatprep.mubr.bf16.mxu0 0
    %260 = vmatmul.mubr.bf16.gmra.mrb[0].mxu0 %v192
    %v261 = vpop.f32.mrb[0].mxu0
    %v262 = vadd.f32 %v103, %v261
    %v263 = vpop.f32.mrb[0].mxu0
    %v264 = vadd.f32 %v107, %v263
    %v265 = vpop.f32.mrb[0].mxu0
    %v266 = vadd.f32 %v103, %v265
    %v267 = vpop.f32.mrb[0].mxu0
    %v268 = vadd.f32 %v107, %v267
    %269 = vmatprep.mubr.bf16.mxu0 0
    %270 = vmatmul.mubr.bf16.gmra.mrb[0].mxu0 %v195
    %v271 = vpop.f32.mrb[0].mxu0
    %v272 = vadd.f32 %v103, %v271
    %v273 = vpop.f32.mrb[0].mxu0
    %v274 = vadd.f32 %v107, %v273
    %v275 = vpop.f32.mrb[0].mxu0
    %v276 = vadd.f32 %v103, %v275
    %v277 = vpop.f32.mrb[0].mxu0
    %v278 = vadd.f32 %v107, %v277
    %279 = vmatprep.mubr.bf16.mxu0 0
    %280 = vmatmul.mubr.bf16.gmra.mrb[0].mxu0 %v198
    %v281 = vpop.f32.mrb[0].mxu0
    %v282 = vadd.f32 %v103, %v281
    %v283 = vpop.f32.mrb[0].mxu0
    %v284 = vadd.f32 %v107, %v283
    %v285 = vpop.f32.mrb[0].mxu0
    %v286 = vadd.f32 %v103, %v285
    %v287 = vpop.f32.mrb[0].mxu0
    %v288 = vadd.f32 %v107, %v287
    %289 = vmatprep.mubr.bf16.mxu0 0
    %290 = vmatmul.mubr.bf16.gmra.mrb[0].mxu0 %v201
    %v291 = vpop.f32.mrb[0].mxu0
    %v292 = vadd.f32 %v103, %v291
    %v293 = vpop.f32.mrb[0].mxu0
    %v294 = vadd.f32 %v107, %v293
    %v295 = vpop.f32.mrb[0].mxu0
    %v296 = vadd.f32 %v103, %v295
    %v297 = vpop.f32.mrb[0].mxu0
    %v298 = vadd.f32 %v107, %v297
    %299 = vmatprep.mubr.bf16.mxu0 0
    %300 = vmatmul.mubr.bf16.gmra.mrb[0].mxu0 %v204
    %v301 = vpop.f32.mrb[0].mxu0
    %v302 = vadd.f32 %v103, %v301
    %v303 = vpop.f32.mrb[0].mxu0
    %v304 = vadd.f32 %v107, %v303
    %v305 = vpop.f32.mrb[0].mxu0
    %v306 = vadd.f32 %v103, %v305
    %v307 = vpop.f32.mrb[0].mxu0
    %v308 = vadd.f32 %v107, %v307
    %309 = vmatprep.mubr.bf16.mxu0 0
    %310 = vmatmul.mubr.bf16.gmra.mrb[0].mxu0 %v207
    %v311 = vpop.f32.mrb[0].mxu0
    %v312 = vadd.f32 %v103, %v311
    %v313 = vpop.f32.mrb[0].mxu0
    %v314 = vadd.f32 %v107, %v313
    %v315 = vpop.f32.mrb[0].mxu0
    %v316 = vadd.f32 %v103, %v315
    %v317 = vpop.f32.mrb[0].mxu0
    %v318 = vadd.f32 %v107, %v317
    %319 = vmatprep.mubr.bf16.mxu0 0
    %320 = vmatmul.mubr.bf16.gmra.mrb[0].mxu0 %v210
    %v321 = vpop.f32.mrb[0].mxu0
    %v322 = vadd.f32 %v103, %v321
    %v323 = vpop.f32.mrb[0].mxu0
    %v324 = vadd.f32 %v107, %v323
    %v325 = vpop.f32.mrb[0].mxu0
    %v326 = vadd.f32 %v103, %v325
    %v327 = vpop.f32.mrb[0].mxu0
    %v328 = vadd.f32 %v107, %v327
    %329 = vmatprep.mubr.bf16.mxu0 0
    %330 = vmatmul.mubr.bf16.gmra.mrb[0].mxu0 %v213
    %v331 = vpop.f32.mrb[0].mxu0
    %v332 = vadd.f32 %v103, %v331
    %v333 = vpop.f32.mrb[0].mxu0
    %v334 = vadd.f32 %v107, %v333
    %v335 = vpop.f32.mrb[0].mxu0
    %v336 = vadd.f32 %v103, %v335
    %v337 = vpop.f32.mrb[0].mxu0
    %v338 = vadd.f32 %v107, %v337
    %339 = vmatprep.mubr.bf16.mxu0 0
    %340 = vmatmul.mubr.bf16.gmra.mrb[0].mxu0 %v216
    %v341 = vpop.f32.mrb[0].mxu0
    %v342 = vadd.f32 %v103, %v341
    %v343 = vpop.f32.mrb[0].mxu0
    %v344 = vadd.f32 %v107, %v343
    %v345 = vpop.f32.mrb[0].mxu0
    %v346 = vadd.f32 %v103, %v345
    %v347 = vpop.f32.mrb[0].mxu0
    %v348 = vadd.f32 %v107, %v347
    %349 = vmatprep.mubr.bf16.mxu0 0
    %350 = vmatmul.mubr.bf16.gmra.mrb[0].mxu0 %v219
    %v351 = vpop.f32.mrb[0].mxu0
    %v352 = vadd.f32 %v103, %v351
    %v353 = vpop.f32.mrb[0].mxu0
    %v354 = vadd.f32 %v107, %v353
    %v355 = vpop.f32.mrb[0].mxu0
    %v356 = vadd.f32 %v103, %v355
    %v357 = vpop.f32.mrb[0].mxu0
    %v358 = vadd.f32 %v107, %v357
    %359 = vmatprep.mubr.bf16.mxu0 0
    %360 = vmatmul.mubr.bf16.gmra.mrb[0].mxu0 %v222
    %v361 = vpop.f32.mrb[0].mxu0
    %v362 = vadd.f32 %v103, %v361
    %v363 = vpop.f32.mrb[0].mxu0
    %v364 = vadd.f32 %v107, %v363
    %v365 = vpop.f32.mrb[0].mxu0
    %v366 = vadd.f32 %v103, %v365
    %v367 = vpop.f32.mrb[0].mxu0
    %v368 = vadd.f32 %v107, %v367
    %369 = vmatprep.mubr.bf16.mxu0 0
    %370 = vmatmul.mubr.bf16.gmra.mrb[0].mxu0 %v225
    %v371 = vpop.f32.mrb[0].mxu0
    %v372 = vadd.f32 %v103, %v371
    %v373 = vpop.f32.mrb[0].mxu0
    %v374 = vadd.f32 %v107, %v373
    %v375 = vpop.f32.mrb[0].mxu0
    %v376 = vadd.f32 %v103, %v375
    %v377 = vpop.f32.mrb[0].mxu0
    %v378 = vadd.f32 %v107, %v377
    %379 = vdwg.mxu0
    %v380 = vlaneseq
    %v381 = vand.u32 %v380, 127
    %v382 = vadd.s32 %v381, 128
    %vm383 = vcmp.lt.s32.totalorder %v381, 0
    %v384 = vsub.s32 0, %v381
    %v385 = vsel %vm383, %v384, %v381
    %v386 = vshrl.u32 %v385, 6
    %v387 = vand.u32 %v385, 63
    %v388 = vsub.s32 0, %v387
    %v389 = vsel %vm383, %v388, %v387
    %vm390 = vcmp.lt.s32.totalorder %v382, 0
    %v391 = vsub.s32 0, %v382
    %v392 = vsel %vm390, %v391, %v382
    %v393 = vshrl.u32 %v392, 6
    %v394 = vand.u32 %v392, 63
    %v395 = vsub.s32 0, %v394
    %v396 = vsel %vm390, %v395, %v394
    %vm397 = vcmp.ne.s32.totalorder %v389, 0
    %vm398 = vcmp.ne.s32.totalorder %v396, 0
    %vm399 = vcmp.lt.s32.totalorder %v389, 0
    %vm400 = vcmp.lt.s32.totalorder %v396, 0
    %vm401 = vmand %vm399, %vm397
    %vm402 = vmand %vm400, %vm398
    %v403 = vadd.s32 %v389, 64
    %v404 = vadd.s32 %v396, 64
    %v405 = vsel %vm401, %v403, %v389
    %v406 = vsel %vm402, %v404, %v396
    %vm407 = vcmp.lt.s32.totalorder %v405, 32
    %vm408 = vcmp.lt.s32.totalorder %v406, 32
    %v409 = vld [vmem:[%s2] sm:$0xff]
    %v410 = vld [vmem:[%s2 + $0x8] sm:$0xff]
    %v411 = vld [vmem:[%s2 + $0x10] sm:$0xff]
    %v412 = vld [vmem:[%s2 + $0x18] sm:$0xff]
    %v413 = vld [vmem:[%s2 + $0x20] sm:$0xff]
    %v414 = vld [vmem:[%s2 + $0x28] sm:$0xff]
    %v415 = vld [vmem:[%s2 + $0x30] sm:$0xff]
    %v416 = vld [vmem:[%s2 + $0x38] sm:$0xff]
    %v417 = vld [vmem:[%s2 + $0x40] sm:$0xff]
    %v418 = vld [vmem:[%s2 + $0x48] sm:$0xff]
    %v419 = vld [vmem:[%s2 + $0x50] sm:$0xff]
    %v420 = vld [vmem:[%s2 + $0x58] sm:$0xff]
    %v421 = vld [vmem:[%s2 + $0x60] sm:$0xff]
    %v422 = vld [vmem:[%s2 + $0x68] sm:$0xff]
    %v423 = vld [vmem:[%s2 + $0x70] sm:$0xff]
    %v424 = vld [vmem:[%s2 + $0x78] sm:$0xff]
    %v425 = vsel %vm407, 1, 0
    %v426 = vsel %vm408, 1, 0
    %vm427 = vcmp.eq.s32.totalorder %v425, 1
    %vm428 = vcmp.eq.s32.totalorder %v426, 1
    %v429 = vsel %vm427, %v262, %v296
    %v430 = vsel %vm428, %v264, %v298
    %v431 = vsel %vm427, %v266, %v292
    %v432 = vsel %vm428, %v268, %v294
    %v433 = vsel %vm427, %v272, %v286
    %v434 = vsel %vm428, %v274, %v288
    %v435 = vsel %vm427, %v276, %v282
    %v436 = vsel %vm428, %v278, %v284
    %v437 = vsel %vm427, %v282, %v276
    %v438 = vsel %vm428, %v284, %v278
    %v439 = vsel %vm427, %v286, %v272
    %v440 = vsel %vm428, %v288, %v274
    %v441 = vsel %vm427, %v292, %v266
    %v442 = vsel %vm428, %v294, %v268
    %v443 = vsel %vm427, %v296, %v262
    %v444 = vsel %vm428, %v298, %v264
    %vm445 = vcmask 523264
    %v447 = vsel %vm445, 0.0, 0
    %449 = vmatprep.subr.mxu0 %v410
    %450 = vmatpush1.msra.mxu0 %v409
    %451 = vmatprep.subr.mxu0 %v412
    %452 = vmatpush1.msra.mxu0 %v411
    %453 = vmatprep.subr.mxu0 %v414
    %454 = vmatpush1.msra.mxu0 %v413
    %455 = vmatprep.subr.mxu0 %v416
    %456 = vmatpush1.msra.mxu0 %v415
    %457 = vmatprep.subr.mxu0 %v418
    %458 = vmatpush1.msra.mxu0 %v417
    %459 = vmatprep.subr.mxu0 %v420
    %460 = vmatpush1.msra.mxu0 %v419
    %461 = vmatprep.subr.mxu0 %v422
    %462 = vmatpush1.msra.mxu0 %v421
    %463 = vmatprep.subr.mxu0 %v424
    %464 = vmatpush1.msra.mxu0 %v423
    %465 = vmatprep.subr.mxu0 0.0
    %466 = vmatpush1.msra.mxu0 0.0
    %467 = vmatprep.subr.mxu0 0.0
    %468 = vmatpush1.msra.mxu0 0.0
    %469 = vmatprep.subr.mxu0 0.0
    %470 = vmatpush1.msra.mxu0 0.0
    %471 = vmatprep.subr.mxu0 0.0
    %472 = vmatpush1.msra.mxu0 0.0
    %473 = vmatprep.subr.mxu0 0.0
    %474 = vmatpush1.msra.mxu0 0.0
    %475 = vmatprep.subr.mxu0 0.0
    %476 = vmatpush1.msra.mxu0 0.0
    %477 = vmatprep.subr.mxu0 0.0
    %478 = vmatpush1.msra.mxu0 0.0
    %479 = vmatprep.subr.mxu0 0.0
    %480 = vmatpush1.msra.mxu0 0.0
    %481 = vmatprep.subr.mxu0 0.0
    %482 = vmatpush1.msra.mxu0 0.0
    %483 = vmatprep.subr.mxu0 0.0
    %484 = vmatpush1.msra.mxu0 0.0
    %485 = vmatprep.subr.mxu0 0.0
    %486 = vmatpush1.msra.mxu0 0.0
    %487 = vmatprep.subr.mxu0 0.0
    %488 = vmatpush1.msra.mxu0 0.0
    %489 = vmatprep.subr.mxu0 0.0
    %490 = vmatpush1.msra.mxu0 0.0
    %491 = vmatprep.subr.mxu0 0.0
    %492 = vmatpush1.msra.mxu0 0.0
    %493 = vmatprep.subr.mxu0 0.0
    %494 = vmatpush1.msra.mxu0 0.0
    %495 = vmatprep.subr.mxu0 0.0
    %496 = vmatpush1.msra.mxu0 0.0
    %497 = vmatprep.subr.mxu0 0.0
    %498 = vmatpush1.msra.mxu0 0.0
    %499 = vmatprep.subr.mxu0 0.0
    %500 = vmatpush1.msra.mxu0 0.0
    %501 = vmatprep.subr.mxu0 0.0
    %502 = vmatpush1.msra.mxu0 0.0
    %503 = vmatprep.subr.mxu0 0.0
    %504 = vmatpush1.msra.mxu0 0.0
    %505 = vmatprep.subr.mxu0 0.0
    %506 = vmatpush1.msra.mxu0 0.0
    %507 = vmatprep.subr.mxu0 0.0
    %508 = vmatpush1.msra.mxu0 0.0
    %509 = vmatprep.subr.mxu0 0.0
    %510 = vmatpush1.msra.mxu0 0.0
    %511 = vmatprep.subr.mxu0 0.0
    %512 = vmatpush1.msra.mxu0 0.0
    %513 = vmatprep.mubr.f32.mxu0 0.0
    %514 = vmatmul.mubr.f32.gmra.mrb[0].mxu0 %v447
    %v515 = vpop.f32.mrb[0].mxu0
    %v516 = vadd.f32 0.0, %v515
    %v517 = vpop.f32.mrb[0].mxu0
    %v518 = vadd.f32 0.0, %v517
    %519 = vdwg.mxu0
    %v520 = vadd.f32 %v429, %v516
    %v521 = vadd.f32 %v430, %v518
    %v522 = vxor.u32 %v520, 2147483648
    %v523 = vxor.u32 %v521, 2147483648
    %v524 = vmul.f32 %v522, 1.442695
    %v525 = vpow.pop %v524
    %v526 = vmul.f32 %v523, 1.442695
    %v527 = vpow.pop %v526
    %v528 = vadd.f32 %v525, 1.0
    %v529 = vadd.f32 %v527, 1.0
    %v530 = vrcp.pop %v528
    %v531 = vmul.f32 1.0, %v530
    %v532 = vrcp.pop %v529
    %v533 = vmul.f32 1.0, %v532
    %v534 = vtanh.pop %v521
    %v535 = vmul.f32 %v531, 0.0
    %537 = vrot.lane.b32.xlu0 %v534, 64
    %v538 = vpop.permute.xlu0 %537
    %v540 = vmul.f32 %v531, %v538
    %542 = vrot.lane.b32.xlu0 %v540, 64
    %v543 = vpop.permute.xlu0 %542
    %v545 = vadd.f32 %v535, %v543
    %v546 = vtanh.pop %v545
    %548 = vrot.lane.b32.xlu0 %v546, 64
    %v549 = vpop.permute.xlu0 %548
    %v551 = vmul.f32 %v533, %v549
    %v553 = vsel %vm445, %v551, 0
    %555 = vmatprep.subr.mxu0 %v410
    %556 = vmatpush1.msra.mxu0 %v409
    %557 = vmatprep.subr.mxu0 %v412
    %558 = vmatpush1.msra.mxu0 %v411
    %559 = vmatprep.subr.mxu0 %v414
    %560 = vmatpush1.msra.mxu0 %v413
    %561 = vmatprep.subr.mxu0 %v416
    %562 = vmatpush1.msra.mxu0 %v415
    %563 = vmatprep.subr.mxu0 %v418
    %564 = vmatpush1.msra.mxu0 %v417
    %565 = vmatprep.subr.mxu0 %v420
    %566 = vmatpush1.msra.mxu0 %v419
    %567 = vmatprep.subr.mxu0 %v422
    %568 = vmatpush1.msra.mxu0 %v421
    %569 = vmatprep.subr.mxu0 %v424
    %570 = vmatpush1.msra.mxu0 %v423
    %571 = vmatprep.subr.mxu0 0.0
    %572 = vmatpush1.msra.mxu0 0.0
    %573 = vmatprep.subr.mxu0 0.0
    %574 = vmatpush1.msra.mxu0 0.0
    %575 = vmatprep.subr.mxu0 0.0
    %576 = vmatpush1.msra.mxu0 0.0
    %577 = vmatprep.subr.mxu0 0.0
    %578 = vmatpush1.msra.mxu0 0.0
    %579 = vmatprep.subr.mxu0 0.0
    %580 = vmatpush1.msra.mxu0 0.0
    %581 = vmatprep.subr.mxu0 0.0
    %582 = vmatpush1.msra.mxu0 0.0
    %583 = vmatprep.subr.mxu0 0.0
    %584 = vmatpush1.msra.mxu0 0.0
    %585 = vmatprep.subr.mxu0 0.0
    %586 = vmatpush1.msra.mxu0 0.0
    %587 = vmatprep.subr.mxu0 0.0
    %588 = vmatpush1.msra.mxu0 0.0
    %589 = vmatprep.subr.mxu0 0.0
    %590 = vmatpush1.msra.mxu0 0.0
    %591 = vmatprep.subr.mxu0 0.0
    %592 = vmatpush1.msra.mxu0 0.0
    %593 = vmatprep.subr.mxu0 0.0
    %594 = vmatpush1.msra.mxu0 0.0
    %595 = vmatprep.subr.mxu0 0.0
    %596 = vmatpush1.msra.mxu0 0.0
    %597 = vmatprep.subr.mxu0 0.0
    %598 = vmatpush1.msra.mxu0 0.0
    %599 = vmatprep.subr.mxu0 0.0
    %600 = vmatpush1.msra.mxu0 0.0
    %601 = vmatprep.subr.mxu0 0.0
    %602 = vmatpush1.msra.mxu0 0.0
    %603 = vmatprep.subr.mxu0 0.0
    %604 = vmatpush1.msra.mxu0 0.0
    %605 = vmatprep.subr.mxu0 0.0
    %606 = vmatpush1.msra.mxu0 0.0
    %607 = vmatprep.subr.mxu0 0.0
    %608 = vmatpush1.msra.mxu0 0.0
    %609 = vmatprep.subr.mxu0 0.0
    %610 = vmatpush1.msra.mxu0 0.0
    %611 = vmatprep.subr.mxu0 0.0
    %612 = vmatpush1.msra.mxu0 0.0
    %613 = vmatprep.subr.mxu0 0.0
    %614 = vmatpush1.msra.mxu0 0.0
    %615 = vmatprep.subr.mxu0 0.0
    %616 = vmatpush1.msra.mxu0 0.0
    %617 = vmatprep.subr.mxu0 0.0
    %618 = vmatpush1.msra.mxu0 0.0
    %619 = vmatprep.mubr.f32.mxu0 0.0
    %620 = vmatmul.mubr.f32.gmra.mrb[0].mxu0 %v553
    %v621 = vpop.f32.mrb[0].mxu0
    %v622 = vadd.f32 0.0, %v621
    %v623 = vpop.f32.mrb[0].mxu0
    %v624 = vadd.f32 0.0, %v623
    %625 = vdwg.mxu0
    %v626 = vadd.f32 %v431, %v622
    %v627 = vadd.f32 %v432, %v624
    %v628 = vxor.u32 %v626, 2147483648
    %v629 = vxor.u32 %v627, 2147483648
    %v630 = vmul.f32 %v628, 1.442695
    %v631 = vpow.pop %v630
    %v632 = vmul.f32 %v629, 1.442695
    %v633 = vpow.pop %v632
    %v634 = vadd.f32 %v631, 1.0
    %v635 = vadd.f32 %v633, 1.0
    %v636 = vrcp.pop %v634
    %v637 = vmul.f32 1.0, %v636
    %v638 = vrcp.pop %v635
    %v639 = vmul.f32 1.0, %v638
    %v640 = vtanh.pop %v627
    %v641 = vmul.f32 %v637, %v545
    %643 = vrot.lane.b32.xlu0 %v640, 64
    %v644 = vpop.permute.xlu0 %643
    %v646 = vmul.f32 %v637, %v644
    %648 = vrot.lane.b32.xlu0 %v646, 64
    %v649 = vpop.permute.xlu0 %648
    %v651 = vadd.f32 %v641, %v649
    %v652 = vtanh.pop %v651
    %654 = vrot.lane.b32.xlu0 %v652, 64
    %v655 = vpop.permute.xlu0 %654
    %v657 = vmul.f32 %v639, %v655
    %v659 = vsel %vm445, %v657, 0
    %661 = vmatprep.subr.mxu0 %v410
    %662 = vmatpush1.msra.mxu0 %v409
    %663 = vmatprep.subr.mxu0 %v412
    %664 = vmatpush1.msra.mxu0 %v411
    %665 = vmatprep.subr.mxu0 %v414
    %666 = vmatpush1.msra.mxu0 %v413
    %667 = vmatprep.subr.mxu0 %v416
    %668 = vmatpush1.msra.mxu0 %v415
    %669 = vmatprep.subr.mxu0 %v418
    %670 = vmatpush1.msra.mxu0 %v417
    %671 = vmatprep.subr.mxu0 %v420
    %672 = vmatpush1.msra.mxu0 %v419
    %673 = vmatprep.subr.mxu0 %v422
    %674 = vmatpush1.msra.mxu0 %v421
    %675 = vmatprep.subr.mxu0 %v424
    %676 = vmatpush1.msra.mxu0 %v423
    %677 = vmatprep.subr.mxu0 0.0
    %678 = vmatpush1.msra.mxu0 0.0
    %679 = vmatprep.subr.mxu0 0.0
    %680 = vmatpush1.msra.mxu0 0.0
    %681 = vmatprep.subr.mxu0 0.0
    %682 = vmatpush1.msra.mxu0 0.0
    %683 = vmatprep.subr.mxu0 0.0
    %684 = vmatpush1.msra.mxu0 0.0
    %685 = vmatprep.subr.mxu0 0.0
    %686 = vmatpush1.msra.mxu0 0.0
    %687 = vmatprep.subr.mxu0 0.0
    %688 = vmatpush1.msra.mxu0 0.0
    %689 = vmatprep.subr.mxu0 0.0
    %690 = vmatpush1.msra.mxu0 0.0
    %691 = vmatprep.subr.mxu0 0.0
    %692 = vmatpush1.msra.mxu0 0.0
    %693 = vmatprep.subr.mxu0 0.0
    %694 = vmatpush1.msra.mxu0 0.0
    %695 = vmatprep.subr.mxu0 0.0
    %696 = vmatpush1.msra.mxu0 0.0
    %697 = vmatprep.subr.mxu0 0.0
    %698 = vmatpush1.msra.mxu0 0.0
    %699 = vmatprep.subr.mxu0 0.0
    %700 = vmatpush1.msra.mxu0 0.0
    %701 = vmatprep.subr.mxu0 0.0
    %702 = vmatpush1.msra.mxu0 0.0
    %703 = vmatprep.subr.mxu0 0.0
    %704 = vmatpush1.msra.mxu0 0.0
    %705 = vmatprep.subr.mxu0 0.0
    %706 = vmatpush1.msra.mxu0 0.0
    %707 = vmatprep.subr.mxu0 0.0
    %708 = vmatpush1.msra.mxu0 0.0
    %709 = vmatprep.subr.mxu0 0.0
    %710 = vmatpush1.msra.mxu0 0.0
    %711 = vmatprep.subr.mxu0 0.0
    %712 = vmatpush1.msra.mxu0 0.0
    %713 = vmatprep.subr.mxu0 0.0
    %714 = vmatpush1.msra.mxu0 0.0
    %715 = vmatprep.subr.mxu0 0.0
    %716 = vmatpush1.msra.mxu0 0.0
    %717 = vmatprep.subr.mxu0 0.0
    %718 = vmatpush1.msra.mxu0 0.0
    %719 = vmatprep.subr.mxu0 0.0
    %720 = vmatpush1.msra.mxu0 0.0
    %721 = vmatprep.subr.mxu0 0.0
    %722 = vmatpush1.msra.mxu0 0.0
    %723 = vmatprep.subr.mxu0 0.0
    %724 = vmatpush1.msra.mxu0 0.0
    %725 = vmatprep.mubr.f32.mxu0 0.0
    %726 = vmatmul.mubr.f32.gmra.mrb[0].mxu0 %v659
    %v727 = vpop.f32.mrb[0].mxu0
    %v728 = vadd.f32 0.0, %v727
    %v729 = vpop.f32.mrb[0].mxu0
    %v730 = vadd.f32 0.0, %v729
    %731 = vdwg.mxu0
    %v732 = vadd.f32 %v433, %v728
    %v733 = vadd.f32 %v434, %v730
    %v734 = vxor.u32 %v732, 2147483648
    %v735 = vxor.u32 %v733, 2147483648
    %v736 = vmul.f32 %v734, 1.442695
    %v737 = vpow.pop %v736
    %v738 = vmul.f32 %v735, 1.442695
    %v739 = vpow.pop %v738
    %v740 = vadd.f32 %v737, 1.0
    %v741 = vadd.f32 %v739, 1.0
    %v742 = vrcp.pop %v740
    %v743 = vmul.f32 1.0, %v742
    %v744 = vrcp.pop %v741
    %v745 = vmul.f32 1.0, %v744
    %v746 = vtanh.pop %v733
    %v747 = vmul.f32 %v743, %v651
    %749 = vrot.lane.b32.xlu0 %v746, 64
    %v750 = vpop.permute.xlu0 %749
    %v752 = vmul.f32 %v743, %v750
    %754 = vrot.lane.b32.xlu0 %v752, 64
    %v755 = vpop.permute.xlu0 %754
    %v757 = vadd.f32 %v747, %v755
    %v758 = vtanh.pop %v757
    %760 = vrot.lane.b32.xlu0 %v758, 64
    %v761 = vpop.permute.xlu0 %760
    %v763 = vmul.f32 %v745, %v761
    %v765 = vsel %vm445, %v763, 0
    %767 = vmatprep.subr.mxu0 %v410
    %768 = vmatpush1.msra.mxu0 %v409
    %769 = vmatprep.subr.mxu0 %v412
    %770 = vmatpush1.msra.mxu0 %v411
    %771 = vmatprep.subr.mxu0 %v414
    %772 = vmatpush1.msra.mxu0 %v413
    %773 = vmatprep.subr.mxu0 %v416
    %774 = vmatpush1.msra.mxu0 %v415
    %775 = vmatprep.subr.mxu0 %v418
    %776 = vmatpush1.msra.mxu0 %v417
    %777 = vmatprep.subr.mxu0 %v420
    %778 = vmatpush1.msra.mxu0 %v419
    %779 = vmatprep.subr.mxu0 %v422
    %780 = vmatpush1.msra.mxu0 %v421
    %781 = vmatprep.subr.mxu0 %v424
    %782 = vmatpush1.msra.mxu0 %v423
    %783 = vmatprep.subr.mxu0 0.0
    %784 = vmatpush1.msra.mxu0 0.0
    %785 = vmatprep.subr.mxu0 0.0
    %786 = vmatpush1.msra.mxu0 0.0
    %787 = vmatprep.subr.mxu0 0.0
    %788 = vmatpush1.msra.mxu0 0.0
    %789 = vmatprep.subr.mxu0 0.0
    %790 = vmatpush1.msra.mxu0 0.0
    %791 = vmatprep.subr.mxu0 0.0
    %792 = vmatpush1.msra.mxu0 0.0
    %793 = vmatprep.subr.mxu0 0.0
    %794 = vmatpush1.msra.mxu0 0.0
    %795 = vmatprep.subr.mxu0 0.0
    %796 = vmatpush1.msra.mxu0 0.0
    %797 = vmatprep.subr.mxu0 0.0
    %798 = vmatpush1.msra.mxu0 0.0
    %799 = vmatprep.subr.mxu0 0.0
    %800 = vmatpush1.msra.mxu0 0.0
    %801 = vmatprep.subr.mxu0 0.0
    %802 = vmatpush1.msra.mxu0 0.0
    %803 = vmatprep.subr.mxu0 0.0
    %804 = vmatpush1.msra.mxu0 0.0
    %805 = vmatprep.subr.mxu0 0.0
    %806 = vmatpush1.msra.mxu0 0.0
    %807 = vmatprep.subr.mxu0 0.0
    %808 = vmatpush1.msra.mxu0 0.0
    %809 = vmatprep.subr.mxu0 0.0
    %810 = vmatpush1.msra.mxu0 0.0
    %811 = vmatprep.subr.mxu0 0.0
    %812 = vmatpush1.msra.mxu0 0.0
    %813 = vmatprep.subr.mxu0 0.0
    %814 = vmatpush1.msra.mxu0 0.0
    %815 = vmatprep.subr.mxu0 0.0
    %816 = vmatpush1.msra.mxu0 0.0
    %817 = vmatprep.subr.mxu0 0.0
    %818 = vmatpush1.msra.mxu0 0.0
    %819 = vmatprep.subr.mxu0 0.0
    %820 = vmatpush1.msra.mxu0 0.0
    %821 = vmatprep.subr.mxu0 0.0
    %822 = vmatpush1.msra.mxu0 0.0
    %823 = vmatprep.subr.mxu0 0.0
    %824 = vmatpush1.msra.mxu0 0.0
    %825 = vmatprep.subr.mxu0 0.0
    %826 = vmatpush1.msra.mxu0 0.0
    %827 = vmatprep.subr.mxu0 0.0
    %828 = vmatpush1.msra.mxu0 0.0
    %829 = vmatprep.subr.mxu0 0.0
    %830 = vmatpush1.msra.mxu0 0.0
    %831 = vmatprep.mubr.f32.mxu0 0.0
    %832 = vmatmul.mubr.f32.gmra.mrb[0].mxu0 %v765
    %v833 = vpop.f32.mrb[0].mxu0
    %v834 = vadd.f32 0.0, %v833
    %v835 = vpop.f32.mrb[0].mxu0
    %v836 = vadd.f32 0.0, %v835
    %837 = vdwg.mxu0
    %v838 = vadd.f32 %v435, %v834
    %v839 = vadd.f32 %v436, %v836
    %v840 = vxor.u32 %v838, 2147483648
    %v841 = vxor.u32 %v839, 2147483648
    %v842 = vmul.f32 %v840, 1.442695
    %v843 = vpow.pop %v842
    %v844 = vmul.f32 %v841, 1.442695
    %v845 = vpow.pop %v844
    %v846 = vadd.f32 %v843, 1.0
    %v847 = vadd.f32 %v845, 1.0
    %v848 = vrcp.pop %v846
    %v849 = vmul.f32 1.0, %v848
    %v850 = vrcp.pop %v847
    %v851 = vmul.f32 1.0, %v850
    %v852 = vtanh.pop %v839
    %v853 = vmul.f32 %v849, %v757
    %855 = vrot.lane.b32.xlu0 %v852, 64
    %v856 = vpop.permute.xlu0 %855
    %v858 = vmul.f32 %v849, %v856
    %860 = vrot.lane.b32.xlu0 %v858, 64
    %v861 = vpop.permute.xlu0 %860
    %v863 = vadd.f32 %v853, %v861
    %v864 = vtanh.pop %v863
    %866 = vrot.lane.b32.xlu0 %v864, 64
    %v867 = vpop.permute.xlu0 %866
    %v869 = vmul.f32 %v851, %v867
    %v871 = vsel %vm445, %v869, 0
    %873 = vmatprep.subr.mxu0 %v410
    %874 = vmatpush1.msra.mxu0 %v409
    %875 = vmatprep.subr.mxu0 %v412
    %876 = vmatpush1.msra.mxu0 %v411
    %877 = vmatprep.subr.mxu0 %v414
    %878 = vmatpush1.msra.mxu0 %v413
    %879 = vmatprep.subr.mxu0 %v416
    %880 = vmatpush1.msra.mxu0 %v415
    %881 = vmatprep.subr.mxu0 %v418
    %882 = vmatpush1.msra.mxu0 %v417
    %883 = vmatprep.subr.mxu0 %v420
    %884 = vmatpush1.msra.mxu0 %v419
    %885 = vmatprep.subr.mxu0 %v422
    %886 = vmatpush1.msra.mxu0 %v421
    %887 = vmatprep.subr.mxu0 %v424
    %888 = vmatpush1.msra.mxu0 %v423
    %889 = vmatprep.subr.mxu0 0.0
    %890 = vmatpush1.msra.mxu0 0.0
    %891 = vmatprep.subr.mxu0 0.0
    %892 = vmatpush1.msra.mxu0 0.0
    %893 = vmatprep.subr.mxu0 0.0
    %894 = vmatpush1.msra.mxu0 0.0
    %895 = vmatprep.subr.mxu0 0.0
    %896 = vmatpush1.msra.mxu0 0.0
    %897 = vmatprep.subr.mxu0 0.0
    %898 = vmatpush1.msra.mxu0 0.0
    %899 = vmatprep.subr.mxu0 0.0
    %900 = vmatpush1.msra.mxu0 0.0
    %901 = vmatprep.subr.mxu0 0.0
    %902 = vmatpush1.msra.mxu0 0.0
    %903 = vmatprep.subr.mxu0 0.0
    %904 = vmatpush1.msra.mxu0 0.0
    %905 = vmatprep.subr.mxu0 0.0
    %906 = vmatpush1.msra.mxu0 0.0
    %907 = vmatprep.subr.mxu0 0.0
    %908 = vmatpush1.msra.mxu0 0.0
    %909 = vmatprep.subr.mxu0 0.0
    %910 = vmatpush1.msra.mxu0 0.0
    %911 = vmatprep.subr.mxu0 0.0
    %912 = vmatpush1.msra.mxu0 0.0
    %913 = vmatprep.subr.mxu0 0.0
    %914 = vmatpush1.msra.mxu0 0.0
    %915 = vmatprep.subr.mxu0 0.0
    %916 = vmatpush1.msra.mxu0 0.0
    %917 = vmatprep.subr.mxu0 0.0
    %918 = vmatpush1.msra.mxu0 0.0
    %919 = vmatprep.subr.mxu0 0.0
    %920 = vmatpush1.msra.mxu0 0.0
    %921 = vmatprep.subr.mxu0 0.0
    %922 = vmatpush1.msra.mxu0 0.0
    %923 = vmatprep.subr.mxu0 0.0
    %924 = vmatpush1.msra.mxu0 0.0
    %925 = vmatprep.subr.mxu0 0.0
    %926 = vmatpush1.msra.mxu0 0.0
    %927 = vmatprep.subr.mxu0 0.0
    %928 = vmatpush1.msra.mxu0 0.0
    %929 = vmatprep.subr.mxu0 0.0
    %930 = vmatpush1.msra.mxu0 0.0
    %931 = vmatprep.subr.mxu0 0.0
    %932 = vmatpush1.msra.mxu0 0.0
    %933 = vmatprep.subr.mxu0 0.0
    %934 = vmatpush1.msra.mxu0 0.0
    %935 = vmatprep.subr.mxu0 0.0
    %936 = vmatpush1.msra.mxu0 0.0
    %937 = vmatprep.mubr.f32.mxu0 0.0
    %938 = vmatmul.mubr.f32.gmra.mrb[0].mxu0 %v871
    %v939 = vpop.f32.mrb[0].mxu0
    %v940 = vadd.f32 0.0, %v939
    %v941 = vpop.f32.mrb[0].mxu0
    %v942 = vadd.f32 0.0, %v941
    %943 = vdwg.mxu0
    %v944 = vadd.f32 %v437, %v940
    %v945 = vadd.f32 %v438, %v942
    %v946 = vxor.u32 %v944, 2147483648
    %v947 = vxor.u32 %v945, 2147483648
    %v948 = vmul.f32 %v946, 1.442695
    %v949 = vpow.pop %v948
    %v950 = vmul.f32 %v947, 1.442695
    %v951 = vpow.pop %v950
    %v952 = vadd.f32 %v949, 1.0
    %v953 = vadd.f32 %v951, 1.0
    %v954 = vrcp.pop %v952
    %v955 = vmul.f32 1.0, %v954
    %v956 = vrcp.pop %v953
    %v957 = vmul.f32 1.0, %v956
    %v958 = vtanh.pop %v945
    %v959 = vmul.f32 %v955, %v863
    %961 = vrot.lane.b32.xlu0 %v958, 64
    %v962 = vpop.permute.xlu0 %961
    %v964 = vmul.f32 %v955, %v962
    %966 = vrot.lane.b32.xlu0 %v964, 64
    %v967 = vpop.permute.xlu0 %966
    %v969 = vadd.f32 %v959, %v967
    %v970 = vtanh.pop %v969
    %972 = vrot.lane.b32.xlu0 %v970, 64
    %v973 = vpop.permute.xlu0 %972
    %v975 = vmul.f32 %v957, %v973
    %v977 = vsel %vm445, %v975, 0
    %979 = vmatprep.subr.mxu0 %v410
    %980 = vmatpush1.msra.mxu0 %v409
    %981 = vmatprep.subr.mxu0 %v412
    %982 = vmatpush1.msra.mxu0 %v411
    %983 = vmatprep.subr.mxu0 %v414
    %984 = vmatpush1.msra.mxu0 %v413
    %985 = vmatprep.subr.mxu0 %v416
    %986 = vmatpush1.msra.mxu0 %v415
    %987 = vmatprep.subr.mxu0 %v418
    %988 = vmatpush1.msra.mxu0 %v417
    %989 = vmatprep.subr.mxu0 %v420
    %990 = vmatpush1.msra.mxu0 %v419
    %991 = vmatprep.subr.mxu0 %v422
    %992 = vmatpush1.msra.mxu0 %v421
    %993 = vmatprep.subr.mxu0 %v424
    %994 = vmatpush1.msra.mxu0 %v423
    %995 = vmatprep.subr.mxu0 0.0
    %996 = vmatpush1.msra.mxu0 0.0
    %997 = vmatprep.subr.mxu0 0.0
    %998 = vmatpush1.msra.mxu0 0.0
    %999 = vmatprep.subr.mxu0 0.0
    %1000 = vmatpush1.msra.mxu0 0.0
    %1001 = vmatprep.subr.mxu0 0.0
    %1002 = vmatpush1.msra.mxu0 0.0
    %1003 = vmatprep.subr.mxu0 0.0
    %1004 = vmatpush1.msra.mxu0 0.0
    %1005 = vmatprep.subr.mxu0 0.0
    %1006 = vmatpush1.msra.mxu0 0.0
    %1007 = vmatprep.subr.mxu0 0.0
    %1008 = vmatpush1.msra.mxu0 0.0
    %1009 = vmatprep.subr.mxu0 0.0
    %1010 = vmatpush1.msra.mxu0 0.0
    %1011 = vmatprep.subr.mxu0 0.0
    %1012 = vmatpush1.msra.mxu0 0.0
    %1013 = vmatprep.subr.mxu0 0.0
    %1014 = vmatpush1.msra.mxu0 0.0
    %1015 = vmatprep.subr.mxu0 0.0
    %1016 = vmatpush1.msra.mxu0 0.0
    %1017 = vmatprep.subr.mxu0 0.0
    %1018 = vmatpush1.msra.mxu0 0.0
    %1019 = vmatprep.subr.mxu0 0.0
    %1020 = vmatpush1.msra.mxu0 0.0
    %1021 = vmatprep.subr.mxu0 0.0
    %1022 = vmatpush1.msra.mxu0 0.0
    %1023 = vmatprep.subr.mxu0 0.0
    %1024 = vmatpush1.msra.mxu0 0.0
    %1025 = vmatprep.subr.mxu0 0.0
    %1026 = vmatpush1.msra.mxu0 0.0
    %1027 = vmatprep.subr.mxu0 0.0
    %1028 = vmatpush1.msra.mxu0 0.0
    %1029 = vmatprep.subr.mxu0 0.0
    %1030 = vmatpush1.msra.mxu0 0.0
    %1031 = vmatprep.subr.mxu0 0.0
    %1032 = vmatpush1.msra.mxu0 0.0
    %1033 = vmatprep.subr.mxu0 0.0
    %1034 = vmatpush1.msra.mxu0 0.0
    %1035 = vmatprep.subr.mxu0 0.0
    %1036 = vmatpush1.msra.mxu0 0.0
    %1037 = vmatprep.subr.mxu0 0.0
    %1038 = vmatpush1.msra.mxu0 0.0
    %1039 = vmatprep.subr.mxu0 0.0
    %1040 = vmatpush1.msra.mxu0 0.0
    %1041 = vmatprep.subr.mxu0 0.0
    %1042 = vmatpush1.msra.mxu0 0.0
    %1043 = vmatprep.mubr.f32.mxu0 0.0
    %1044 = vmatmul.mubr.f32.gmra.mrb[0].mxu0 %v977
    %v1045 = vpop.f32.mrb[0].mxu0
    %v1046 = vadd.f32 0.0, %v1045
    %v1047 = vpop.f32.mrb[0].mxu0
    %v1048 = vadd.f32 0.0, %v1047
    %1049 = vdwg.mxu0
    %v1050 = vadd.f32 %v439, %v1046
    %v1051 = vadd.f32 %v440, %v1048
    %v1052 = vxor.u32 %v1050, 2147483648
    %v1053 = vxor.u32 %v1051, 2147483648
    %v1054 = vmul.f32 %v1052, 1.442695
    %v1055 = vpow.pop %v1054
    %v1056 = vmul.f32 %v1053, 1.442695
    %v1057 = vpow.pop %v1056
    %v1058 = vadd.f32 %v1055, 1.0
    %v1059 = vadd.f32 %v1057, 1.0
    %v1060 = vrcp.pop %v1058
    %v1061 = vmul.f32 1.0, %v1060
    %v1062 = vrcp.pop %v1059
    %v1063 = vmul.f32 1.0, %v1062
    %v1064 = vtanh.pop %v1051
    %v1065 = vmul.f32 %v1061, %v969
    %1067 = vrot.lane.b32.xlu0 %v1064, 64
    %v1068 = vpop.permute.xlu0 %1067
    %v1070 = vmul.f32 %v1061, %v1068
    %1072 = vrot.lane.b32.xlu0 %v1070, 64
    %v1073 = vpop.permute.xlu0 %1072
    %v1075 = vadd.f32 %v1065, %v1073
    %v1076 = vtanh.pop %v1075
    %1078 = vrot.lane.b32.xlu0 %v1076, 64
    %v1079 = vpop.permute.xlu0 %1078
    %v1081 = vmul.f32 %v1063, %v1079
    %v1083 = vsel %vm445, %v1081, 0
    %1085 = vmatprep.subr.mxu0 %v410
    %1086 = vmatpush1.msra.mxu0 %v409
    %1087 = vmatprep.subr.mxu0 %v412
    %1088 = vmatpush1.msra.mxu0 %v411
    %1089 = vmatprep.subr.mxu0 %v414
    %1090 = vmatpush1.msra.mxu0 %v413
    %1091 = vmatprep.subr.mxu0 %v416
    %1092 = vmatpush1.msra.mxu0 %v415
    %1093 = vmatprep.subr.mxu0 %v418
    %1094 = vmatpush1.msra.mxu0 %v417
    %1095 = vmatprep.subr.mxu0 %v420
    %1096 = vmatpush1.msra.mxu0 %v419
    %1097 = vmatprep.subr.mxu0 %v422
    %1098 = vmatpush1.msra.mxu0 %v421
    %1099 = vmatprep.subr.mxu0 %v424
    %1100 = vmatpush1.msra.mxu0 %v423
    %1101 = vmatprep.subr.mxu0 0.0
    %1102 = vmatpush1.msra.mxu0 0.0
    %1103 = vmatprep.subr.mxu0 0.0
    %1104 = vmatpush1.msra.mxu0 0.0
    %1105 = vmatprep.subr.mxu0 0.0
    %1106 = vmatpush1.msra.mxu0 0.0
    %1107 = vmatprep.subr.mxu0 0.0
    %1108 = vmatpush1.msra.mxu0 0.0
    %1109 = vmatprep.subr.mxu0 0.0
    %1110 = vmatpush1.msra.mxu0 0.0
    %1111 = vmatprep.subr.mxu0 0.0
    %1112 = vmatpush1.msra.mxu0 0.0
    %1113 = vmatprep.subr.mxu0 0.0
    %1114 = vmatpush1.msra.mxu0 0.0
    %1115 = vmatprep.subr.mxu0 0.0
    %1116 = vmatpush1.msra.mxu0 0.0
    %1117 = vmatprep.subr.mxu0 0.0
    %1118 = vmatpush1.msra.mxu0 0.0
    %1119 = vmatprep.subr.mxu0 0.0
    %1120 = vmatpush1.msra.mxu0 0.0
    %1121 = vmatprep.subr.mxu0 0.0
    %1122 = vmatpush1.msra.mxu0 0.0
    %1123 = vmatprep.subr.mxu0 0.0
    %1124 = vmatpush1.msra.mxu0 0.0
    %1125 = vmatprep.subr.mxu0 0.0
    %1126 = vmatpush1.msra.mxu0 0.0
    %1127 = vmatprep.subr.mxu0 0.0
    %1128 = vmatpush1.msra.mxu0 0.0
    %1129 = vmatprep.subr.mxu0 0.0
    %1130 = vmatpush1.msra.mxu0 0.0
    %1131 = vmatprep.subr.mxu0 0.0
    %1132 = vmatpush1.msra.mxu0 0.0
    %1133 = vmatprep.subr.mxu0 0.0
    %1134 = vmatpush1.msra.mxu0 0.0
    %1135 = vmatprep.subr.mxu0 0.0
    %1136 = vmatpush1.msra.mxu0 0.0
    %1137 = vmatprep.subr.mxu0 0.0
    %1138 = vmatpush1.msra.mxu0 0.0
    %1139 = vmatprep.subr.mxu0 0.0
    %1140 = vmatpush1.msra.mxu0 0.0
    %1141 = vmatprep.subr.mxu0 0.0
    %1142 = vmatpush1.msra.mxu0 0.0
    %1143 = vmatprep.subr.mxu0 0.0
    %1144 = vmatpush1.msra.mxu0 0.0
    %1145 = vmatprep.subr.mxu0 0.0
    %1146 = vmatpush1.msra.mxu0 0.0
    %1147 = vmatprep.subr.mxu0 0.0
    %1148 = vmatpush1.msra.mxu0 0.0
    %1149 = vmatprep.mubr.f32.mxu0 0.0
    %1150 = vmatmul.mubr.f32.gmra.mrb[0].mxu0 %v1083
    %v1151 = vpop.f32.mrb[0].mxu0
    %v1152 = vadd.f32 0.0, %v1151
    %v1153 = vpop.f32.mrb[0].mxu0
    %v1154 = vadd.f32 0.0, %v1153
    %1155 = vdwg.mxu0
    %v1156 = vadd.f32 %v441, %v1152
    %v1157 = vadd.f32 %v442, %v1154
    %v1158 = vxor.u32 %v1156, 2147483648
    %v1159 = vxor.u32 %v1157, 2147483648
    %v1160 = vmul.f32 %v1158, 1.442695
    %v1161 = vpow.pop %v1160
    %v1162 = vmul.f32 %v1159, 1.442695
    %v1163 = vpow.pop %v1162
    %v1164 = vadd.f32 %v1161, 1.0
    %v1165 = vadd.f32 %v1163, 1.0
    %v1166 = vrcp.pop %v1164
    %v1167 = vmul.f32 1.0, %v1166
    %v1168 = vrcp.pop %v1165
    %v1169 = vmul.f32 1.0, %v1168
    %v1170 = vtanh.pop %v1157
    %v1171 = vmul.f32 %v1167, %v1075
    %1173 = vrot.lane.b32.xlu0 %v1170, 64
    %v1174 = vpop.permute.xlu0 %1173
    %v1176 = vmul.f32 %v1167, %v1174
    %1178 = vrot.lane.b32.xlu0 %v1176, 64
    %v1179 = vpop.permute.xlu0 %1178
    %v1181 = vadd.f32 %v1171, %v1179
    %v1182 = vtanh.pop %v1181
    %1184 = vrot.lane.b32.xlu0 %v1182, 64
    %v1185 = vpop.permute.xlu0 %1184
    %v1187 = vmul.f32 %v1169, %v1185
    %v1189 = vsel %vm445, %v1187, 0
    %1191 = vmatprep.subr.mxu0 %v410
    %1192 = vmatpush1.msra.mxu0 %v409
    %1193 = vmatprep.subr.mxu0 %v412
    %1194 = vmatpush1.msra.mxu0 %v411
    %1195 = vmatprep.subr.mxu0 %v414
    %1196 = vmatpush1.msra.mxu0 %v413
    %1197 = vmatprep.subr.mxu0 %v416
    %1198 = vmatpush1.msra.mxu0 %v415
    %1199 = vmatprep.subr.mxu0 %v418
    %1200 = vmatpush1.msra.mxu0 %v417
    %1201 = vmatprep.subr.mxu0 %v420
    %1202 = vmatpush1.msra.mxu0 %v419
    %1203 = vmatprep.subr.mxu0 %v422
    %1204 = vmatpush1.msra.mxu0 %v421
    %1205 = vmatprep.subr.mxu0 %v424
    %1206 = vmatpush1.msra.mxu0 %v423
    %1207 = vmatprep.subr.mxu0 0.0
    %1208 = vmatpush1.msra.mxu0 0.0
    %1209 = vmatprep.subr.mxu0 0.0
    %1210 = vmatpush1.msra.mxu0 0.0
    %1211 = vmatprep.subr.mxu0 0.0
    %1212 = vmatpush1.msra.mxu0 0.0
    %1213 = vmatprep.subr.mxu0 0.0
    %1214 = vmatpush1.msra.mxu0 0.0
    %1215 = vmatprep.subr.mxu0 0.0
    %1216 = vmatpush1.msra.mxu0 0.0
    %1217 = vmatprep.subr.mxu0 0.0
    %1218 = vmatpush1.msra.mxu0 0.0
    %1219 = vmatprep.subr.mxu0 0.0
    %1220 = vmatpush1.msra.mxu0 0.0
    %1221 = vmatprep.subr.mxu0 0.0
    %1222 = vmatpush1.msra.mxu0 0.0
    %1223 = vmatprep.subr.mxu0 0.0
    %1224 = vmatpush1.msra.mxu0 0.0
    %1225 = vmatprep.subr.mxu0 0.0
    %1226 = vmatpush1.msra.mxu0 0.0
    %1227 = vmatprep.subr.mxu0 0.0
    %1228 = vmatpush1.msra.mxu0 0.0
    %1229 = vmatprep.subr.mxu0 0.0
    %1230 = vmatpush1.msra.mxu0 0.0
    %1231 = vmatprep.subr.mxu0 0.0
    %1232 = vmatpush1.msra.mxu0 0.0
    %1233 = vmatprep.subr.mxu0 0.0
    %1234 = vmatpush1.msra.mxu0 0.0
    %1235 = vmatprep.subr.mxu0 0.0
    %1236 = vmatpush1.msra.mxu0 0.0
    %1237 = vmatprep.subr.mxu0 0.0
    %1238 = vmatpush1.msra.mxu0 0.0
    %1239 = vmatprep.subr.mxu0 0.0
    %1240 = vmatpush1.msra.mxu0 0.0
    %1241 = vmatprep.subr.mxu0 0.0
    %1242 = vmatpush1.msra.mxu0 0.0
    %1243 = vmatprep.subr.mxu0 0.0
    %1244 = vmatpush1.msra.mxu0 0.0
    %1245 = vmatprep.subr.mxu0 0.0
    %1246 = vmatpush1.msra.mxu0 0.0
    %1247 = vmatprep.subr.mxu0 0.0
    %1248 = vmatpush1.msra.mxu0 0.0
    %1249 = vmatprep.subr.mxu0 0.0
    %1250 = vmatpush1.msra.mxu0 0.0
    %1251 = vmatprep.subr.mxu0 0.0
    %1252 = vmatpush1.msra.mxu0 0.0
    %1253 = vmatprep.subr.mxu0 0.0
    %1254 = vmatpush1.msra.mxu0 0.0
    %1255 = vmatprep.mubr.f32.mxu0 0.0
    %1256 = vmatmul.mubr.f32.gmra.mrb[0].mxu0 %v1189
    %v1257 = vpop.f32.mrb[0].mxu0
    %v1258 = vadd.f32 0.0, %v1257
    %v1259 = vpop.f32.mrb[0].mxu0
    %v1260 = vadd.f32 0.0, %v1259
    %1261 = vdwg.mxu0
    %v1262 = vadd.f32 %v443, %v1258
    %v1263 = vadd.f32 %v444, %v1260
    %v1264 = vxor.u32 %v1262, 2147483648
    %v1265 = vxor.u32 %v1263, 2147483648
    %v1266 = vmul.f32 %v1264, 1.442695
    %v1267 = vpow.pop %v1266
    %v1268 = vmul.f32 %v1265, 1.442695
    %v1269 = vpow.pop %v1268
    %v1270 = vadd.f32 %v1267, 1.0
    %v1271 = vadd.f32 %v1269, 1.0
    %v1272 = vrcp.pop %v1270
    %v1273 = vmul.f32 1.0, %v1272
    %v1274 = vrcp.pop %v1271
    %v1275 = vmul.f32 1.0, %v1274
    %v1276 = vtanh.pop %v1263
    %v1277 = vmul.f32 %v1273, %v1181
    %1279 = vrot.lane.b32.xlu0 %v1276, 64
    %v1280 = vpop.permute.xlu0 %1279
    %v1282 = vmul.f32 %v1273, %v1280
    %1284 = vrot.lane.b32.xlu0 %v1282, 64
    %v1285 = vpop.permute.xlu0 %1284
    %v1287 = vadd.f32 %v1277, %v1285
    %v1288 = vtanh.pop %v1287
    %1290 = vrot.lane.b32.xlu0 %v1288, 64
    %v1291 = vpop.permute.xlu0 %1290
    %v1293 = vmul.f32 %v1275, %v1291
    %v1294 = vsel %vm190, %v551, %v1293
    %v1295 = vsel %vm190, %v657, %v1187
    %v1296 = vsel %vm190, %v763, %v1081
    %v1297 = vsel %vm190, %v869, %v975
    %v1298 = vsel %vm190, %v975, %v869
    %v1299 = vsel %vm190, %v1081, %v763
    %v1300 = vsel %vm190, %v1187, %v657
    %v1301 = vsel %vm190, %v1293, %v551
    %v1302 = vsel %vm427, %v302, %v336
    %v1303 = vsel %vm428, %v304, %v338
    %v1304 = vsel %vm427, %v306, %v332
    %v1305 = vsel %vm428, %v308, %v334
    %v1306 = vsel %vm427, %v312, %v326
    %v1307 = vsel %vm428, %v314, %v328
    %v1308 = vsel %vm427, %v316, %v322
    %v1309 = vsel %vm428, %v318, %v324
    %v1310 = vsel %vm427, %v322, %v316
    %v1311 = vsel %vm428, %v324, %v318
    %v1312 = vsel %vm427, %v326, %v312
    %v1313 = vsel %vm428, %v328, %v314
    %v1314 = vsel %vm427, %v332, %v306
    %v1315 = vsel %vm428, %v334, %v308
    %v1316 = vsel %vm427, %v336, %v302
    %v1317 = vsel %vm428, %v338, %v304
    %v1319 = vsel %vm445, %v1293, 0
    %1321 = vmatprep.subr.mxu0 %v410
    %1322 = vmatpush1.msra.mxu0 %v409
    %1323 = vmatprep.subr.mxu0 %v412
    %1324 = vmatpush1.msra.mxu0 %v411
    %1325 = vmatprep.subr.mxu0 %v414
    %1326 = vmatpush1.msra.mxu0 %v413
    %1327 = vmatprep.subr.mxu0 %v416
    %1328 = vmatpush1.msra.mxu0 %v415
    %1329 = vmatprep.subr.mxu0 %v418
    %1330 = vmatpush1.msra.mxu0 %v417
    %1331 = vmatprep.subr.mxu0 %v420
    %1332 = vmatpush1.msra.mxu0 %v419
    %1333 = vmatprep.subr.mxu0 %v422
    %1334 = vmatpush1.msra.mxu0 %v421
    %1335 = vmatprep.subr.mxu0 %v424
    %1336 = vmatpush1.msra.mxu0 %v423
    %1337 = vmatprep.subr.mxu0 0.0
    %1338 = vmatpush1.msra.mxu0 0.0
    %1339 = vmatprep.subr.mxu0 0.0
    %1340 = vmatpush1.msra.mxu0 0.0
    %1341 = vmatprep.subr.mxu0 0.0
    %1342 = vmatpush1.msra.mxu0 0.0
    %1343 = vmatprep.subr.mxu0 0.0
    %1344 = vmatpush1.msra.mxu0 0.0
    %1345 = vmatprep.subr.mxu0 0.0
    %1346 = vmatpush1.msra.mxu0 0.0
    %1347 = vmatprep.subr.mxu0 0.0
    %1348 = vmatpush1.msra.mxu0 0.0
    %1349 = vmatprep.subr.mxu0 0.0
    %1350 = vmatpush1.msra.mxu0 0.0
    %1351 = vmatprep.subr.mxu0 0.0
    %1352 = vmatpush1.msra.mxu0 0.0
    %1353 = vmatprep.subr.mxu0 0.0
    %1354 = vmatpush1.msra.mxu0 0.0
    %1355 = vmatprep.subr.mxu0 0.0
    %1356 = vmatpush1.msra.mxu0 0.0
    %1357 = vmatprep.subr.mxu0 0.0
    %1358 = vmatpush1.msra.mxu0 0.0
    %1359 = vmatprep.subr.mxu0 0.0
    %1360 = vmatpush1.msra.mxu0 0.0
    %1361 = vmatprep.subr.mxu0 0.0
    %1362 = vmatpush1.msra.mxu0 0.0
    %1363 = vmatprep.subr.mxu0 0.0
    %1364 = vmatpush1.msra.mxu0 0.0
    %1365 = vmatprep.subr.mxu0 0.0
    %1366 = vmatpush1.msra.mxu0 0.0
    %1367 = vmatprep.subr.mxu0 0.0
    %1368 = vmatpush1.msra.mxu0 0.0
    %1369 = vmatprep.subr.mxu0 0.0
    %1370 = vmatpush1.msra.mxu0 0.0
    %1371 = vmatprep.subr.mxu0 0.0
    %1372 = vmatpush1.msra.mxu0 0.0
    %1373 = vmatprep.subr.mxu0 0.0
    %1374 = vmatpush1.msra.mxu0 0.0
    %1375 = vmatprep.subr.mxu0 0.0
    %1376 = vmatpush1.msra.mxu0 0.0
    %1377 = vmatprep.subr.mxu0 0.0
    %1378 = vmatpush1.msra.mxu0 0.0
    %1379 = vmatprep.subr.mxu0 0.0
    %1380 = vmatpush1.msra.mxu0 0.0
    %1381 = vmatprep.subr.mxu0 0.0
    %1382 = vmatpush1.msra.mxu0 0.0
    %1383 = vmatprep.subr.mxu0 0.0
    %1384 = vmatpush1.msra.mxu0 0.0
    %1385 = vmatprep.mubr.f32.mxu0 0.0
    %1386 = vmatmul.mubr.f32.gmra.mrb[0].mxu0 %v1319
    %v1387 = vpop.f32.mrb[0].mxu0
    %v1388 = vadd.f32 0.0, %v1387
    %v1389 = vpop.f32.mrb[0].mxu0
    %v1390 = vadd.f32 0.0, %v1389
    %1391 = vdwg.mxu0
    %v1392 = vadd.f32 %v1302, %v1388
    %v1393 = vadd.f32 %v1303, %v1390
    %v1394 = vxor.u32 %v1392, 2147483648
    %v1395 = vxor.u32 %v1393, 2147483648
    %v1396 = vmul.f32 %v1394, 1.442695
    %v1397 = vpow.pop %v1396
    %v1398 = vmul.f32 %v1395, 1.442695
    %v1399 = vpow.pop %v1398
    %v1400 = vadd.f32 %v1397, 1.0
    %v1401 = vadd.f32 %v1399, 1.0
    %v1402 = vrcp.pop %v1400
    %v1403 = vmul.f32 1.0, %v1402
    %v1404 = vrcp.pop %v1401
    %v1405 = vmul.f32 1.0, %v1404
    %v1406 = vtanh.pop %v1393
    %v1407 = vmul.f32 %v1403, %v1287
    %1409 = vrot.lane.b32.xlu0 %v1406, 64
    %v1410 = vpop.permute.xlu0 %1409
    %v1412 = vmul.f32 %v1403, %v1410
    %1414 = vrot.lane.b32.xlu0 %v1412, 64
    %v1415 = vpop.permute.xlu0 %1414
    %v1417 = vadd.f32 %v1407, %v1415
    %v1418 = vtanh.pop %v1417
    %1420 = vrot.lane.b32.xlu0 %v1418, 64
    %v1421 = vpop.permute.xlu0 %1420
    %v1423 = vmul.f32 %v1405, %v1421
    %v1425 = vsel %vm445, %v1423, 0
    %1427 = vmatprep.subr.mxu0 %v410
    %1428 = vmatpush1.msra.mxu0 %v409
    %1429 = vmatprep.subr.mxu0 %v412
    %1430 = vmatpush1.msra.mxu0 %v411
    %1431 = vmatprep.subr.mxu0 %v414
    %1432 = vmatpush1.msra.mxu0 %v413
    %1433 = vmatprep.subr.mxu0 %v416
    %1434 = vmatpush1.msra.mxu0 %v415
    %1435 = vmatprep.subr.mxu0 %v418
    %1436 = vmatpush1.msra.mxu0 %v417
    %1437 = vmatprep.subr.mxu0 %v420
    %1438 = vmatpush1.msra.mxu0 %v419
    %1439 = vmatprep.subr.mxu0 %v422
    %1440 = vmatpush1.msra.mxu0 %v421
    %1441 = vmatprep.subr.mxu0 %v424
    %1442 = vmatpush1.msra.mxu0 %v423
    %1443 = vmatprep.subr.mxu0 0.0
    %1444 = vmatpush1.msra.mxu0 0.0
    %1445 = vmatprep.subr.mxu0 0.0
    %1446 = vmatpush1.msra.mxu0 0.0
    %1447 = vmatprep.subr.mxu0 0.0
    %1448 = vmatpush1.msra.mxu0 0.0
    %1449 = vmatprep.subr.mxu0 0.0
    %1450 = vmatpush1.msra.mxu0 0.0
    %1451 = vmatprep.subr.mxu0 0.0
    %1452 = vmatpush1.msra.mxu0 0.0
    %1453 = vmatprep.subr.mxu0 0.0
    %1454 = vmatpush1.msra.mxu0 0.0
    %1455 = vmatprep.subr.mxu0 0.0
    %1456 = vmatpush1.msra.mxu0 0.0
    %1457 = vmatprep.subr.mxu0 0.0
    %1458 = vmatpush1.msra.mxu0 0.0
    %1459 = vmatprep.subr.mxu0 0.0
    %1460 = vmatpush1.msra.mxu0 0.0
    %1461 = vmatprep.subr.mxu0 0.0
    %1462 = vmatpush1.msra.mxu0 0.0
    %1463 = vmatprep.subr.mxu0 0.0
    %1464 = vmatpush1.msra.mxu0 0.0
    %1465 = vmatprep.subr.mxu0 0.0
    %1466 = vmatpush1.msra.mxu0 0.0
    %1467 = vmatprep.subr.mxu0 0.0
    %1468 = vmatpush1.msra.mxu0 0.0
    %1469 = vmatprep.subr.mxu0 0.0
    %1470 = vmatpush1.msra.mxu0 0.0
    %1471 = vmatprep.subr.mxu0 0.0
    %1472 = vmatpush1.msra.mxu0 0.0
    %1473 = vmatprep.subr.mxu0 0.0
    %1474 = vmatpush1.msra.mxu0 0.0
    %1475 = vmatprep.subr.mxu0 0.0
    %1476 = vmatpush1.msra.mxu0 0.0
    %1477 = vmatprep.subr.mxu0 0.0
    %1478 = vmatpush1.msra.mxu0 0.0
    %1479 = vmatprep.subr.mxu0 0.0
    %1480 = vmatpush1.msra.mxu0 0.0
    %1481 = vmatprep.subr.mxu0 0.0
    %1482 = vmatpush1.msra.mxu0 0.0
    %1483 = vmatprep.subr.mxu0 0.0
    %1484 = vmatpush1.msra.mxu0 0.0
    %1485 = vmatprep.subr.mxu0 0.0
    %1486 = vmatpush1.msra.mxu0 0.0
    %1487 = vmatprep.subr.mxu0 0.0
    %1488 = vmatpush1.msra.mxu0 0.0
    %1489 = vmatprep.subr.mxu0 0.0
    %1490 = vmatpush1.msra.mxu0 0.0
    %1491 = vmatprep.mubr.f32.mxu0 0.0
    %1492 = vmatmul.mubr.f32.gmra.mrb[0].mxu0 %v1425
    %v1493 = vpop.f32.mrb[0].mxu0
    %v1494 = vadd.f32 0.0, %v1493
    %v1495 = vpop.f32.mrb[0].mxu0
    %v1496 = vadd.f32 0.0, %v1495
    %1497 = vdwg.mxu0
    %v1498 = vadd.f32 %v1304, %v1494
    %v1499 = vadd.f32 %v1305, %v1496
    %v1500 = vxor.u32 %v1498, 2147483648
    %v1501 = vxor.u32 %v1499, 2147483648
    %v1502 = vmul.f32 %v1500, 1.442695
    %v1503 = vpow.pop %v1502
    %v1504 = vmul.f32 %v1501, 1.442695
    %v1505 = vpow.pop %v1504
    %v1506 = vadd.f32 %v1503, 1.0
    %v1507 = vadd.f32 %v1505, 1.0
    %v1508 = vrcp.pop %v1506
    %v1509 = vmul.f32 1.0, %v1508
    %v1510 = vrcp.pop %v1507
    %v1511 = vmul.f32 1.0, %v1510
    %v1512 = vtanh.pop %v1499
    %v1513 = vmul.f32 %v1509, %v1417
    %1515 = vrot.lane.b32.xlu0 %v1512, 64
    %v1516 = vpop.permute.xlu0 %1515
    %v1518 = vmul.f32 %v1509, %v1516
    %1520 = vrot.lane.b32.xlu0 %v1518, 64
    %v1521 = vpop.permute.xlu0 %1520
    %v1523 = vadd.f32 %v1513, %v1521
    %v1524 = vtanh.pop %v1523
    %1526 = vrot.lane.b32.xlu0 %v1524, 64
    %v1527 = vpop.permute.xlu0 %1526
    %v1529 = vmul.f32 %v1511, %v1527
    %v1531 = vsel %vm445, %v1529, 0
    %1533 = vmatprep.subr.mxu0 %v410
    %1534 = vmatpush1.msra.mxu0 %v409
    %1535 = vmatprep.subr.mxu0 %v412
    %1536 = vmatpush1.msra.mxu0 %v411
    %1537 = vmatprep.subr.mxu0 %v414
    %1538 = vmatpush1.msra.mxu0 %v413
    %1539 = vmatprep.subr.mxu0 %v416
    %1540 = vmatpush1.msra.mxu0 %v415
    %1541 = vmatprep.subr.mxu0 %v418
    %1542 = vmatpush1.msra.mxu0 %v417
    %1543 = vmatprep.subr.mxu0 %v420
    %1544 = vmatpush1.msra.mxu0 %v419
    %1545 = vmatprep.subr.mxu0 %v422
    %1546 = vmatpush1.msra.mxu0 %v421
    %1547 = vmatprep.subr.mxu0 %v424
    %1548 = vmatpush1.msra.mxu0 %v423
    %1549 = vmatprep.subr.mxu0 0.0
    %1550 = vmatpush1.msra.mxu0 0.0
    %1551 = vmatprep.subr.mxu0 0.0
    %1552 = vmatpush1.msra.mxu0 0.0
    %1553 = vmatprep.subr.mxu0 0.0
    %1554 = vmatpush1.msra.mxu0 0.0
    %1555 = vmatprep.subr.mxu0 0.0
    %1556 = vmatpush1.msra.mxu0 0.0
    %1557 = vmatprep.subr.mxu0 0.0
    %1558 = vmatpush1.msra.mxu0 0.0
    %1559 = vmatprep.subr.mxu0 0.0
    %1560 = vmatpush1.msra.mxu0 0.0
    %1561 = vmatprep.subr.mxu0 0.0
    %1562 = vmatpush1.msra.mxu0 0.0
    %1563 = vmatprep.subr.mxu0 0.0
    %1564 = vmatpush1.msra.mxu0 0.0
    %1565 = vmatprep.subr.mxu0 0.0
    %1566 = vmatpush1.msra.mxu0 0.0
    %1567 = vmatprep.subr.mxu0 0.0
    %1568 = vmatpush1.msra.mxu0 0.0
    %1569 = vmatprep.subr.mxu0 0.0
    %1570 = vmatpush1.msra.mxu0 0.0
    %1571 = vmatprep.subr.mxu0 0.0
    %1572 = vmatpush1.msra.mxu0 0.0
    %1573 = vmatprep.subr.mxu0 0.0
    %1574 = vmatpush1.msra.mxu0 0.0
    %1575 = vmatprep.subr.mxu0 0.0
    %1576 = vmatpush1.msra.mxu0 0.0
    %1577 = vmatprep.subr.mxu0 0.0
    %1578 = vmatpush1.msra.mxu0 0.0
    %1579 = vmatprep.subr.mxu0 0.0
    %1580 = vmatpush1.msra.mxu0 0.0
    %1581 = vmatprep.subr.mxu0 0.0
    %1582 = vmatpush1.msra.mxu0 0.0
    %1583 = vmatprep.subr.mxu0 0.0
    %1584 = vmatpush1.msra.mxu0 0.0
    %1585 = vmatprep.subr.mxu0 0.0
    %1586 = vmatpush1.msra.mxu0 0.0
    %1587 = vmatprep.subr.mxu0 0.0
    %1588 = vmatpush1.msra.mxu0 0.0
    %1589 = vmatprep.subr.mxu0 0.0
    %1590 = vmatpush1.msra.mxu0 0.0
    %1591 = vmatprep.subr.mxu0 0.0
    %1592 = vmatpush1.msra.mxu0 0.0
    %1593 = vmatprep.subr.mxu0 0.0
    %1594 = vmatpush1.msra.mxu0 0.0
    %1595 = vmatprep.subr.mxu0 0.0
    %1596 = vmatpush1.msra.mxu0 0.0
    %1597 = vmatprep.mubr.f32.mxu0 0.0
    %1598 = vmatmul.mubr.f32.gmra.mrb[0].mxu0 %v1531
    %v1599 = vpop.f32.mrb[0].mxu0
    %v1600 = vadd.f32 0.0, %v1599
    %v1601 = vpop.f32.mrb[0].mxu0
    %v1602 = vadd.f32 0.0, %v1601
    %1603 = vdwg.mxu0
    %v1604 = vadd.f32 %v1306, %v1600
    %v1605 = vadd.f32 %v1307, %v1602
    %v1606 = vxor.u32 %v1604, 2147483648
    %v1607 = vxor.u32 %v1605, 2147483648
    %v1608 = vmul.f32 %v1606, 1.442695
    %v1609 = vpow.pop %v1608
    %v1610 = vmul.f32 %v1607, 1.442695
    %v1611 = vpow.pop %v1610
    %v1612 = vadd.f32 %v1609, 1.0
    %v1613 = vadd.f32 %v1611, 1.0
    %v1614 = vrcp.pop %v1612
    %v1615 = vmul.f32 1.0, %v1614
    %v1616 = vrcp.pop %v1613
    %v1617 = vmul.f32 1.0, %v1616
    %v1618 = vtanh.pop %v1605
    %v1619 = vmul.f32 %v1615, %v1523
    %1621 = vrot.lane.b32.xlu0 %v1618, 64
    %v1622 = vpop.permute.xlu0 %1621
    %v1624 = vmul.f32 %v1615, %v1622
    %1626 = vrot.lane.b32.xlu0 %v1624, 64
    %v1627 = vpop.permute.xlu0 %1626
    %v1629 = vadd.f32 %v1619, %v1627
    %v1630 = vtanh.pop %v1629
    %1632 = vrot.lane.b32.xlu0 %v1630, 64
    %v1633 = vpop.permute.xlu0 %1632
    %v1635 = vmul.f32 %v1617, %v1633
    %v1637 = vsel %vm445, %v1635, 0
    %1639 = vmatprep.subr.mxu0 %v410
    %1640 = vmatpush1.msra.mxu0 %v409
    %1641 = vmatprep.subr.mxu0 %v412
    %1642 = vmatpush1.msra.mxu0 %v411
    %1643 = vmatprep.subr.mxu0 %v414
    %1644 = vmatpush1.msra.mxu0 %v413
    %1645 = vmatprep.subr.mxu0 %v416
    %1646 = vmatpush1.msra.mxu0 %v415
    %1647 = vmatprep.subr.mxu0 %v418
    %1648 = vmatpush1.msra.mxu0 %v417
    %1649 = vmatprep.subr.mxu0 %v420
    %1650 = vmatpush1.msra.mxu0 %v419
    %1651 = vmatprep.subr.mxu0 %v422
    %1652 = vmatpush1.msra.mxu0 %v421
    %1653 = vmatprep.subr.mxu0 %v424
    %1654 = vmatpush1.msra.mxu0 %v423
    %1655 = vmatprep.subr.mxu0 0.0
    %1656 = vmatpush1.msra.mxu0 0.0
    %1657 = vmatprep.subr.mxu0 0.0
    %1658 = vmatpush1.msra.mxu0 0.0
    %1659 = vmatprep.subr.mxu0 0.0
    %1660 = vmatpush1.msra.mxu0 0.0
    %1661 = vmatprep.subr.mxu0 0.0
    %1662 = vmatpush1.msra.mxu0 0.0
    %1663 = vmatprep.subr.mxu0 0.0
    %1664 = vmatpush1.msra.mxu0 0.0
    %1665 = vmatprep.subr.mxu0 0.0
    %1666 = vmatpush1.msra.mxu0 0.0
    %1667 = vmatprep.subr.mxu0 0.0
    %1668 = vmatpush1.msra.mxu0 0.0
    %1669 = vmatprep.subr.mxu0 0.0
    %1670 = vmatpush1.msra.mxu0 0.0
    %1671 = vmatprep.subr.mxu0 0.0
    %1672 = vmatpush1.msra.mxu0 0.0
    %1673 = vmatprep.subr.mxu0 0.0
    %1674 = vmatpush1.msra.mxu0 0.0
    %1675 = vmatprep.subr.mxu0 0.0
    %1676 = vmatpush1.msra.mxu0 0.0
    %1677 = vmatprep.subr.mxu0 0.0
    %1678 = vmatpush1.msra.mxu0 0.0
    %1679 = vmatprep.subr.mxu0 0.0
    %1680 = vmatpush1.msra.mxu0 0.0
    %1681 = vmatprep.subr.mxu0 0.0
    %1682 = vmatpush1.msra.mxu0 0.0
    %1683 = vmatprep.subr.mxu0 0.0
    %1684 = vmatpush1.msra.mxu0 0.0
    %1685 = vmatprep.subr.mxu0 0.0
    %1686 = vmatpush1.msra.mxu0 0.0
    %1687 = vmatprep.subr.mxu0 0.0
    %1688 = vmatpush1.msra.mxu0 0.0
    %1689 = vmatprep.subr.mxu0 0.0
    %1690 = vmatpush1.msra.mxu0 0.0
    %1691 = vmatprep.subr.mxu0 0.0
    %1692 = vmatpush1.msra.mxu0 0.0
    %1693 = vmatprep.subr.mxu0 0.0
    %1694 = vmatpush1.msra.mxu0 0.0
    %1695 = vmatprep.subr.mxu0 0.0
    %1696 = vmatpush1.msra.mxu0 0.0
    %1697 = vmatprep.subr.mxu0 0.0
    %1698 = vmatpush1.msra.mxu0 0.0
    %1699 = vmatprep.subr.mxu0 0.0
    %1700 = vmatpush1.msra.mxu0 0.0
    %1701 = vmatprep.subr.mxu0 0.0
    %1702 = vmatpush1.msra.mxu0 0.0
    %1703 = vmatprep.mubr.f32.mxu0 0.0
    %1704 = vmatmul.mubr.f32.gmra.mrb[0].mxu0 %v1637
    %v1705 = vpop.f32.mrb[0].mxu0
    %v1706 = vadd.f32 0.0, %v1705
    %v1707 = vpop.f32.mrb[0].mxu0
    %v1708 = vadd.f32 0.0, %v1707
    %1709 = vdwg.mxu0
    %v1710 = vadd.f32 %v1308, %v1706
    %v1711 = vadd.f32 %v1309, %v1708
    %v1712 = vxor.u32 %v1710, 2147483648
    %v1713 = vxor.u32 %v1711, 2147483648
    %v1714 = vmul.f32 %v1712, 1.442695
    %v1715 = vpow.pop %v1714
    %v1716 = vmul.f32 %v1713, 1.442695
    %v1717 = vpow.pop %v1716
    %v1718 = vadd.f32 %v1715, 1.0
    %v1719 = vadd.f32 %v1717, 1.0
    %v1720 = vrcp.pop %v1718
    %v1721 = vmul.f32 1.0, %v1720
    %v1722 = vrcp.pop %v1719
    %v1723 = vmul.f32 1.0, %v1722
    %v1724 = vtanh.pop %v1711
    %v1725 = vmul.f32 %v1721, %v1629
    %1727 = vrot.lane.b32.xlu0 %v1724, 64
    %v1728 = vpop.permute.xlu0 %1727
    %v1730 = vmul.f32 %v1721, %v1728
    %1732 = vrot.lane.b32.xlu0 %v1730, 64
    %v1733 = vpop.permute.xlu0 %1732
    %v1735 = vadd.f32 %v1725, %v1733
    %v1736 = vtanh.pop %v1735
    %1738 = vrot.lane.b32.xlu0 %v1736, 64
    %v1739 = vpop.permute.xlu0 %1738
    %v1741 = vmul.f32 %v1723, %v1739
    %v1743 = vsel %vm445, %v1741, 0
    %1745 = vmatprep.subr.mxu0 %v410
    %1746 = vmatpush1.msra.mxu0 %v409
    %1747 = vmatprep.subr.mxu0 %v412
    %1748 = vmatpush1.msra.mxu0 %v411
    %1749 = vmatprep.subr.mxu0 %v414
    %1750 = vmatpush1.msra.mxu0 %v413
    %1751 = vmatprep.subr.mxu0 %v416
    %1752 = vmatpush1.msra.mxu0 %v415
    %1753 = vmatprep.subr.mxu0 %v418
    %1754 = vmatpush1.msra.mxu0 %v417
    %1755 = vmatprep.subr.mxu0 %v420
    %1756 = vmatpush1.msra.mxu0 %v419
    %1757 = vmatprep.subr.mxu0 %v422
    %1758 = vmatpush1.msra.mxu0 %v421
    %1759 = vmatprep.subr.mxu0 %v424
    %1760 = vmatpush1.msra.mxu0 %v423
    %1761 = vmatprep.subr.mxu0 0.0
    %1762 = vmatpush1.msra.mxu0 0.0
    %1763 = vmatprep.subr.mxu0 0.0
    %1764 = vmatpush1.msra.mxu0 0.0
    %1765 = vmatprep.subr.mxu0 0.0
    %1766 = vmatpush1.msra.mxu0 0.0
    %1767 = vmatprep.subr.mxu0 0.0
    %1768 = vmatpush1.msra.mxu0 0.0
    %1769 = vmatprep.subr.mxu0 0.0
    %1770 = vmatpush1.msra.mxu0 0.0
    %1771 = vmatprep.subr.mxu0 0.0
    %1772 = vmatpush1.msra.mxu0 0.0
    %1773 = vmatprep.subr.mxu0 0.0
    %1774 = vmatpush1.msra.mxu0 0.0
    %1775 = vmatprep.subr.mxu0 0.0
    %1776 = vmatpush1.msra.mxu0 0.0
    %1777 = vmatprep.subr.mxu0 0.0
    %1778 = vmatpush1.msra.mxu0 0.0
    %1779 = vmatprep.subr.mxu0 0.0
    %1780 = vmatpush1.msra.mxu0 0.0
    %1781 = vmatprep.subr.mxu0 0.0
    %1782 = vmatpush1.msra.mxu0 0.0
    %1783 = vmatprep.subr.mxu0 0.0
    %1784 = vmatpush1.msra.mxu0 0.0
    %1785 = vmatprep.subr.mxu0 0.0
    %1786 = vmatpush1.msra.mxu0 0.0
    %1787 = vmatprep.subr.mxu0 0.0
    %1788 = vmatpush1.msra.mxu0 0.0
    %1789 = vmatprep.subr.mxu0 0.0
    %1790 = vmatpush1.msra.mxu0 0.0
    %1791 = vmatprep.subr.mxu0 0.0
    %1792 = vmatpush1.msra.mxu0 0.0
    %1793 = vmatprep.subr.mxu0 0.0
    %1794 = vmatpush1.msra.mxu0 0.0
    %1795 = vmatprep.subr.mxu0 0.0
    %1796 = vmatpush1.msra.mxu0 0.0
    %1797 = vmatprep.subr.mxu0 0.0
    %1798 = vmatpush1.msra.mxu0 0.0
    %1799 = vmatprep.subr.mxu0 0.0
    %1800 = vmatpush1.msra.mxu0 0.0
    %1801 = vmatprep.subr.mxu0 0.0
    %1802 = vmatpush1.msra.mxu0 0.0
    %1803 = vmatprep.subr.mxu0 0.0
    %1804 = vmatpush1.msra.mxu0 0.0
    %1805 = vmatprep.subr.mxu0 0.0
    %1806 = vmatpush1.msra.mxu0 0.0
    %1807 = vmatprep.subr.mxu0 0.0
    %1808 = vmatpush1.msra.mxu0 0.0
    %1809 = vmatprep.mubr.f32.mxu0 0.0
    %1810 = vmatmul.mubr.f32.gmra.mrb[0].mxu0 %v1743
    %v1811 = vpop.f32.mrb[0].mxu0
    %v1812 = vadd.f32 0.0, %v1811
    %v1813 = vpop.f32.mrb[0].mxu0
    %v1814 = vadd.f32 0.0, %v1813
    %1815 = vdwg.mxu0
    %v1816 = vadd.f32 %v1310, %v1812
    %v1817 = vadd.f32 %v1311, %v1814
    %v1818 = vxor.u32 %v1816, 2147483648
    %v1819 = vxor.u32 %v1817, 2147483648
    %v1820 = vmul.f32 %v1818, 1.442695
    %v1821 = vpow.pop %v1820
    %v1822 = vmul.f32 %v1819, 1.442695
    %v1823 = vpow.pop %v1822
    %v1824 = vadd.f32 %v1821, 1.0
    %v1825 = vadd.f32 %v1823, 1.0
    %v1826 = vrcp.pop %v1824
    %v1827 = vmul.f32 1.0, %v1826
    %v1828 = vrcp.pop %v1825
    %v1829 = vmul.f32 1.0, %v1828
    %v1830 = vtanh.pop %v1817
    %v1831 = vmul.f32 %v1827, %v1735
    %1833 = vrot.lane.b32.xlu0 %v1830, 64
    %v1834 = vpop.permute.xlu0 %1833
    %v1836 = vmul.f32 %v1827, %v1834
    %1838 = vrot.lane.b32.xlu0 %v1836, 64
    %v1839 = vpop.permute.xlu0 %1838
    %v1841 = vadd.f32 %v1831, %v1839
    %v1842 = vtanh.pop %v1841
    %1844 = vrot.lane.b32.xlu0 %v1842, 64
    %v1845 = vpop.permute.xlu0 %1844
    %v1847 = vmul.f32 %v1829, %v1845
    %v1849 = vsel %vm445, %v1847, 0
    %1851 = vmatprep.subr.mxu0 %v410
    %1852 = vmatpush1.msra.mxu0 %v409
    %1853 = vmatprep.subr.mxu0 %v412
    %1854 = vmatpush1.msra.mxu0 %v411
    %1855 = vmatprep.subr.mxu0 %v414
    %1856 = vmatpush1.msra.mxu0 %v413
    %1857 = vmatprep.subr.mxu0 %v416
    %1858 = vmatpush1.msra.mxu0 %v415
    %1859 = vmatprep.subr.mxu0 %v418
    %1860 = vmatpush1.msra.mxu0 %v417
    %1861 = vmatprep.subr.mxu0 %v420
    %1862 = vmatpush1.msra.mxu0 %v419
    %1863 = vmatprep.subr.mxu0 %v422
    %1864 = vmatpush1.msra.mxu0 %v421
    %1865 = vmatprep.subr.mxu0 %v424
    %1866 = vmatpush1.msra.mxu0 %v423
    %1867 = vmatprep.subr.mxu0 0.0
    %1868 = vmatpush1.msra.mxu0 0.0
    %1869 = vmatprep.subr.mxu0 0.0
    %1870 = vmatpush1.msra.mxu0 0.0
    %1871 = vmatprep.subr.mxu0 0.0
    %1872 = vmatpush1.msra.mxu0 0.0
    %1873 = vmatprep.subr.mxu0 0.0
    %1874 = vmatpush1.msra.mxu0 0.0
    %1875 = vmatprep.subr.mxu0 0.0
    %1876 = vmatpush1.msra.mxu0 0.0
    %1877 = vmatprep.subr.mxu0 0.0
    %1878 = vmatpush1.msra.mxu0 0.0
    %1879 = vmatprep.subr.mxu0 0.0
    %1880 = vmatpush1.msra.mxu0 0.0
    %1881 = vmatprep.subr.mxu0 0.0
    %1882 = vmatpush1.msra.mxu0 0.0
    %1883 = vmatprep.subr.mxu0 0.0
    %1884 = vmatpush1.msra.mxu0 0.0
    %1885 = vmatprep.subr.mxu0 0.0
    %1886 = vmatpush1.msra.mxu0 0.0
    %1887 = vmatprep.subr.mxu0 0.0
    %1888 = vmatpush1.msra.mxu0 0.0
    %1889 = vmatprep.subr.mxu0 0.0
    %1890 = vmatpush1.msra.mxu0 0.0
    %1891 = vmatprep.subr.mxu0 0.0
    %1892 = vmatpush1.msra.mxu0 0.0
    %1893 = vmatprep.subr.mxu0 0.0
    %1894 = vmatpush1.msra.mxu0 0.0
    %1895 = vmatprep.subr.mxu0 0.0
    %1896 = vmatpush1.msra.mxu0 0.0
    %1897 = vmatprep.subr.mxu0 0.0
    %1898 = vmatpush1.msra.mxu0 0.0
    %1899 = vmatprep.subr.mxu0 0.0
    %1900 = vmatpush1.msra.mxu0 0.0
    %1901 = vmatprep.subr.mxu0 0.0
    %1902 = vmatpush1.msra.mxu0 0.0
    %1903 = vmatprep.subr.mxu0 0.0
    %1904 = vmatpush1.msra.mxu0 0.0
    %1905 = vmatprep.subr.mxu0 0.0
    %1906 = vmatpush1.msra.mxu0 0.0
    %1907 = vmatprep.subr.mxu0 0.0
    %1908 = vmatpush1.msra.mxu0 0.0
    %1909 = vmatprep.subr.mxu0 0.0
    %1910 = vmatpush1.msra.mxu0 0.0
    %1911 = vmatprep.subr.mxu0 0.0
    %1912 = vmatpush1.msra.mxu0 0.0
    %1913 = vmatprep.subr.mxu0 0.0
    %1914 = vmatpush1.msra.mxu0 0.0
    %1915 = vmatprep.mubr.f32.mxu0 0.0
    %1916 = vmatmul.mubr.f32.gmra.mrb[0].mxu0 %v1849
    %v1917 = vpop.f32.mrb[0].mxu0
    %v1918 = vadd.f32 0.0, %v1917
    %v1919 = vpop.f32.mrb[0].mxu0
    %v1920 = vadd.f32 0.0, %v1919
    %1921 = vdwg.mxu0
    %v1922 = vadd.f32 %v1312, %v1918
    %v1923 = vadd.f32 %v1313, %v1920
    %v1924 = vxor.u32 %v1922, 2147483648
    %v1925 = vxor.u32 %v1923, 2147483648
    %v1926 = vmul.f32 %v1924, 1.442695
    %v1927 = vpow.pop %v1926
    %v1928 = vmul.f32 %v1925, 1.442695
    %v1929 = vpow.pop %v1928
    %v1930 = vadd.f32 %v1927, 1.0
    %v1931 = vadd.f32 %v1929, 1.0
    %v1932 = vrcp.pop %v1930
    %v1933 = vmul.f32 1.0, %v1932
    %v1934 = vrcp.pop %v1931
    %v1935 = vmul.f32 1.0, %v1934
    %v1936 = vtanh.pop %v1923
    %v1937 = vmul.f32 %v1933, %v1841
    %1939 = vrot.lane.b32.xlu0 %v1936, 64
    %v1940 = vpop.permute.xlu0 %1939
    %v1942 = vmul.f32 %v1933, %v1940
    %1944 = vrot.lane.b32.xlu0 %v1942, 64
    %v1945 = vpop.permute.xlu0 %1944
    %v1947 = vadd.f32 %v1937, %v1945
    %v1948 = vtanh.pop %v1947
    %1950 = vrot.lane.b32.xlu0 %v1948, 64
    %v1951 = vpop.permute.xlu0 %1950
    %v1953 = vmul.f32 %v1935, %v1951
    %v1955 = vsel %vm445, %v1953, 0
    %1957 = vmatprep.subr.mxu0 %v410
    %1958 = vmatpush1.msra.mxu0 %v409
    %1959 = vmatprep.subr.mxu0 %v412
    %1960 = vmatpush1.msra.mxu0 %v411
    %1961 = vmatprep.subr.mxu0 %v414
    %1962 = vmatpush1.msra.mxu0 %v413
    %1963 = vmatprep.subr.mxu0 %v416
    %1964 = vmatpush1.msra.mxu0 %v415
    %1965 = vmatprep.subr.mxu0 %v418
    %1966 = vmatpush1.msra.mxu0 %v417
    %1967 = vmatprep.subr.mxu0 %v420
    %1968 = vmatpush1.msra.mxu0 %v419
    %1969 = vmatprep.subr.mxu0 %v422
    %1970 = vmatpush1.msra.mxu0 %v421
    %1971 = vmatprep.subr.mxu0 %v424
    %1972 = vmatpush1.msra.mxu0 %v423
    %1973 = vmatprep.subr.mxu0 0.0
    %1974 = vmatpush1.msra.mxu0 0.0
    %1975 = vmatprep.subr.mxu0 0.0
    %1976 = vmatpush1.msra.mxu0 0.0
    %1977 = vmatprep.subr.mxu0 0.0
    %1978 = vmatpush1.msra.mxu0 0.0
    %1979 = vmatprep.subr.mxu0 0.0
    %1980 = vmatpush1.msra.mxu0 0.0
    %1981 = vmatprep.subr.mxu0 0.0
    %1982 = vmatpush1.msra.mxu0 0.0
    %1983 = vmatprep.subr.mxu0 0.0
    %1984 = vmatpush1.msra.mxu0 0.0
    %1985 = vmatprep.subr.mxu0 0.0
    %1986 = vmatpush1.msra.mxu0 0.0
    %1987 = vmatprep.subr.mxu0 0.0
    %1988 = vmatpush1.msra.mxu0 0.0
    %1989 = vmatprep.subr.mxu0 0.0
    %1990 = vmatpush1.msra.mxu0 0.0
    %1991 = vmatprep.subr.mxu0 0.0
    %1992 = vmatpush1.msra.mxu0 0.0
    %1993 = vmatprep.subr.mxu0 0.0
    %1994 = vmatpush1.msra.mxu0 0.0
    %1995 = vmatprep.subr.mxu0 0.0
    %1996 = vmatpush1.msra.mxu0 0.0
    %1997 = vmatprep.subr.mxu0 0.0
    %1998 = vmatpush1.msra.mxu0 0.0
    %1999 = vmatprep.subr.mxu0 0.0
    %2000 = vmatpush1.msra.mxu0 0.0
    %2001 = vmatprep.subr.mxu0 0.0
    %2002 = vmatpush1.msra.mxu0 0.0
    %2003 = vmatprep.subr.mxu0 0.0
    %2004 = vmatpush1.msra.mxu0 0.0
    %2005 = vmatprep.subr.mxu0 0.0
    %2006 = vmatpush1.msra.mxu0 0.0
    %2007 = vmatprep.subr.mxu0 0.0
    %2008 = vmatpush1.msra.mxu0 0.0
    %2009 = vmatprep.subr.mxu0 0.0
    %2010 = vmatpush1.msra.mxu0 0.0
    %2011 = vmatprep.subr.mxu0 0.0
    %2012 = vmatpush1.msra.mxu0 0.0
    %2013 = vmatprep.subr.mxu0 0.0
    %2014 = vmatpush1.msra.mxu0 0.0
    %2015 = vmatprep.subr.mxu0 0.0
    %2016 = vmatpush1.msra.mxu0 0.0
    %2017 = vmatprep.subr.mxu0 0.0
    %2018 = vmatpush1.msra.mxu0 0.0
    %2019 = vmatprep.subr.mxu0 0.0
    %2020 = vmatpush1.msra.mxu0 0.0
    %2021 = vmatprep.mubr.f32.mxu0 0.0
    %2022 = vmatmul.mubr.f32.gmra.mrb[0].mxu0 %v1955
    %v2023 = vpop.f32.mrb[0].mxu0
    %v2024 = vadd.f32 0.0, %v2023
    %v2025 = vpop.f32.mrb[0].mxu0
    %v2026 = vadd.f32 0.0, %v2025
    %2027 = vdwg.mxu0
    %v2028 = vadd.f32 %v1314, %v2024
    %v2029 = vadd.f32 %v1315, %v2026
    %v2030 = vxor.u32 %v2028, 2147483648
    %v2031 = vxor.u32 %v2029, 2147483648
    %v2032 = vmul.f32 %v2030, 1.442695
    %v2033 = vpow.pop %v2032
    %v2034 = vmul.f32 %v2031, 1.442695
    %v2035 = vpow.pop %v2034
    %v2036 = vadd.f32 %v2033, 1.0
    %v2037 = vadd.f32 %v2035, 1.0
    %v2038 = vrcp.pop %v2036
    %v2039 = vmul.f32 1.0, %v2038
    %v2040 = vrcp.pop %v2037
    %v2041 = vmul.f32 1.0, %v2040
    %v2042 = vtanh.pop %v2029
    %v2043 = vmul.f32 %v2039, %v1947
    %2045 = vrot.lane.b32.xlu0 %v2042, 64
    %v2046 = vpop.permute.xlu0 %2045
    %v2048 = vmul.f32 %v2039, %v2046
    %2050 = vrot.lane.b32.xlu0 %v2048, 64
    %v2051 = vpop.permute.xlu0 %2050
    %v2053 = vadd.f32 %v2043, %v2051
    %v2054 = vtanh.pop %v2053
    %2056 = vrot.lane.b32.xlu0 %v2054, 64
    %v2057 = vpop.permute.xlu0 %2056
    %v2059 = vmul.f32 %v2041, %v2057
    %v2061 = vsel %vm445, %v2059, 0
    %2063 = vmatprep.subr.mxu0 %v410
    %2064 = vmatpush1.msra.mxu0 %v409
    %2065 = vmatprep.subr.mxu0 %v412
    %2066 = vmatpush1.msra.mxu0 %v411
    %2067 = vmatprep.subr.mxu0 %v414
    %2068 = vmatpush1.msra.mxu0 %v413
    %2069 = vmatprep.subr.mxu0 %v416
    %2070 = vmatpush1.msra.mxu0 %v415
    %2071 = vmatprep.subr.mxu0 %v418
    %2072 = vmatpush1.msra.mxu0 %v417
    %2073 = vmatprep.subr.mxu0 %v420
    %2074 = vmatpush1.msra.mxu0 %v419
    %2075 = vmatprep.subr.mxu0 %v422
    %2076 = vmatpush1.msra.mxu0 %v421
    %2077 = vmatprep.subr.mxu0 %v424
    %2078 = vmatpush1.msra.mxu0 %v423
    %2079 = vmatprep.subr.mxu0 0.0
    %2080 = vmatpush1.msra.mxu0 0.0
    %2081 = vmatprep.subr.mxu0 0.0
    %2082 = vmatpush1.msra.mxu0 0.0
    %2083 = vmatprep.subr.mxu0 0.0
    %2084 = vmatpush1.msra.mxu0 0.0
    %2085 = vmatprep.subr.mxu0 0.0
    %2086 = vmatpush1.msra.mxu0 0.0
    %2087 = vmatprep.subr.mxu0 0.0
    %2088 = vmatpush1.msra.mxu0 0.0
    %2089 = vmatprep.subr.mxu0 0.0
    %2090 = vmatpush1.msra.mxu0 0.0
    %2091 = vmatprep.subr.mxu0 0.0
    %2092 = vmatpush1.msra.mxu0 0.0
    %2093 = vmatprep.subr.mxu0 0.0
    %2094 = vmatpush1.msra.mxu0 0.0
    %2095 = vmatprep.subr.mxu0 0.0
    %2096 = vmatpush1.msra.mxu0 0.0
    %2097 = vmatprep.subr.mxu0 0.0
    %2098 = vmatpush1.msra.mxu0 0.0
    %2099 = vmatprep.subr.mxu0 0.0
    %2100 = vmatpush1.msra.mxu0 0.0
    %2101 = vmatprep.subr.mxu0 0.0
    %2102 = vmatpush1.msra.mxu0 0.0
    %2103 = vmatprep.subr.mxu0 0.0
    %2104 = vmatpush1.msra.mxu0 0.0
    %2105 = vmatprep.subr.mxu0 0.0
    %2106 = vmatpush1.msra.mxu0 0.0
    %2107 = vmatprep.subr.mxu0 0.0
    %2108 = vmatpush1.msra.mxu0 0.0
    %2109 = vmatprep.subr.mxu0 0.0
    %2110 = vmatpush1.msra.mxu0 0.0
    %2111 = vmatprep.subr.mxu0 0.0
    %2112 = vmatpush1.msra.mxu0 0.0
    %2113 = vmatprep.subr.mxu0 0.0
    %2114 = vmatpush1.msra.mxu0 0.0
    %2115 = vmatprep.subr.mxu0 0.0
    %2116 = vmatpush1.msra.mxu0 0.0
    %2117 = vmatprep.subr.mxu0 0.0
    %2118 = vmatpush1.msra.mxu0 0.0
    %2119 = vmatprep.subr.mxu0 0.0
    %2120 = vmatpush1.msra.mxu0 0.0
    %2121 = vmatprep.subr.mxu0 0.0
    %2122 = vmatpush1.msra.mxu0 0.0
    %2123 = vmatprep.subr.mxu0 0.0
    %2124 = vmatpush1.msra.mxu0 0.0
    %2125 = vmatprep.subr.mxu0 0.0
    %2126 = vmatpush1.msra.mxu0 0.0
    %2127 = vmatprep.mubr.f32.mxu0 0.0
    %2128 = vmatmul.mubr.f32.gmra.mrb[0].mxu0 %v2061
    %v2129 = vpop.f32.mrb[0].mxu0
    %v2130 = vadd.f32 0.0, %v2129
    %v2131 = vpop.f32.mrb[0].mxu0
    %v2132 = vadd.f32 0.0, %v2131
    %2133 = vdwg.mxu0
    %v2134 = vadd.f32 %v1316, %v2130
    %v2135 = vadd.f32 %v1317, %v2132
    %v2136 = vxor.u32 %v2134, 2147483648
    %v2137 = vxor.u32 %v2135, 2147483648
    %v2138 = vmul.f32 %v2136, 1.442695
    %v2139 = vpow.pop %v2138
    %v2140 = vmul.f32 %v2137, 1.442695
    %v2141 = vpow.pop %v2140
    %v2142 = vadd.f32 %v2139, 1.0
    %v2143 = vadd.f32 %v2141, 1.0
    %v2144 = vrcp.pop %v2142
    %v2145 = vmul.f32 1.0, %v2144
    %v2146 = vrcp.pop %v2143
    %v2147 = vmul.f32 1.0, %v2146
    %v2148 = vtanh.pop %v2135
    %v2149 = vmul.f32 %v2145, %v2053
    %2151 = vrot.lane.b32.xlu0 %v2148, 64
    %v2152 = vpop.permute.xlu0 %2151
    %v2154 = vmul.f32 %v2145, %v2152
    %2156 = vrot.lane.b32.xlu0 %v2154, 64
    %v2157 = vpop.permute.xlu0 %2156
    %v2159 = vadd.f32 %v2149, %v2157
    %v2160 = vtanh.pop %v2159
    %2162 = vrot.lane.b32.xlu0 %v2160, 64
    %v2163 = vpop.permute.xlu0 %2162
    %v2165 = vmul.f32 %v2147, %v2163
    %v2166 = vsel %vm190, %v1423, %v2165
    %v2167 = vsel %vm190, %v1529, %v2059
    %v2168 = vsel %vm190, %v1635, %v1953
    %v2169 = vsel %vm190, %v1741, %v1847
    %v2170 = vsel %vm190, %v1847, %v1741
    %v2171 = vsel %vm190, %v1953, %v1635
    %v2172 = vsel %vm190, %v2059, %v1529
    %v2173 = vsel %vm190, %v2165, %v1423
    %v2174 = vsel %vm427, %v342, %v376
    %v2175 = vsel %vm428, %v344, %v378
    %v2176 = vsel %vm427, %v346, %v372
    %v2177 = vsel %vm428, %v348, %v374
    %v2178 = vsel %vm427, %v352, %v366
    %v2179 = vsel %vm428, %v354, %v368
    %v2180 = vsel %vm427, %v356, %v362
    %v2181 = vsel %vm428, %v358, %v364
    %v2182 = vsel %vm427, %v362, %v356
    %v2183 = vsel %vm428, %v364, %v358
    %v2184 = vsel %vm427, %v366, %v352
    %v2185 = vsel %vm428, %v368, %v354
    %v2186 = vsel %vm427, %v372, %v346
    %v2187 = vsel %vm428, %v374, %v348
    %v2188 = vsel %vm427, %v376, %v342
    %v2189 = vsel %vm428, %v378, %v344
    %v2191 = vsel %vm445, %v2165, 0
    %2193 = vmatprep.subr.mxu0 %v410
    %2194 = vmatpush1.msra.mxu0 %v409
    %2195 = vmatprep.subr.mxu0 %v412
    %2196 = vmatpush1.msra.mxu0 %v411
    %2197 = vmatprep.subr.mxu0 %v414
    %2198 = vmatpush1.msra.mxu0 %v413
    %2199 = vmatprep.subr.mxu0 %v416
    %2200 = vmatpush1.msra.mxu0 %v415
    %2201 = vmatprep.subr.mxu0 %v418
    %2202 = vmatpush1.msra.mxu0 %v417
    %2203 = vmatprep.subr.mxu0 %v420
    %2204 = vmatpush1.msra.mxu0 %v419
    %2205 = vmatprep.subr.mxu0 %v422
    %2206 = vmatpush1.msra.mxu0 %v421
    %2207 = vmatprep.subr.mxu0 %v424
    %2208 = vmatpush1.msra.mxu0 %v423
    %2209 = vmatprep.subr.mxu0 0.0
    %2210 = vmatpush1.msra.mxu0 0.0
    %2211 = vmatprep.subr.mxu0 0.0
    %2212 = vmatpush1.msra.mxu0 0.0
    %2213 = vmatprep.subr.mxu0 0.0
    %2214 = vmatpush1.msra.mxu0 0.0
    %2215 = vmatprep.subr.mxu0 0.0
    %2216 = vmatpush1.msra.mxu0 0.0
    %2217 = vmatprep.subr.mxu0 0.0
    %2218 = vmatpush1.msra.mxu0 0.0
    %2219 = vmatprep.subr.mxu0 0.0
    %2220 = vmatpush1.msra.mxu0 0.0
    %2221 = vmatprep.subr.mxu0 0.0
    %2222 = vmatpush1.msra.mxu0 0.0
    %2223 = vmatprep.subr.mxu0 0.0
    %2224 = vmatpush1.msra.mxu0 0.0
    %2225 = vmatprep.subr.mxu0 0.0
    %2226 = vmatpush1.msra.mxu0 0.0
    %2227 = vmatprep.subr.mxu0 0.0
    %2228 = vmatpush1.msra.mxu0 0.0
    %2229 = vmatprep.subr.mxu0 0.0
    %2230 = vmatpush1.msra.mxu0 0.0
    %2231 = vmatprep.subr.mxu0 0.0
    %2232 = vmatpush1.msra.mxu0 0.0
    %2233 = vmatprep.subr.mxu0 0.0
    %2234 = vmatpush1.msra.mxu0 0.0
    %2235 = vmatprep.subr.mxu0 0.0
    %2236 = vmatpush1.msra.mxu0 0.0
    %2237 = vmatprep.subr.mxu0 0.0
    %2238 = vmatpush1.msra.mxu0 0.0
    %2239 = vmatprep.subr.mxu0 0.0
    %2240 = vmatpush1.msra.mxu0 0.0
    %2241 = vmatprep.subr.mxu0 0.0
    %2242 = vmatpush1.msra.mxu0 0.0
    %2243 = vmatprep.subr.mxu0 0.0
    %2244 = vmatpush1.msra.mxu0 0.0
    %2245 = vmatprep.subr.mxu0 0.0
    %2246 = vmatpush1.msra.mxu0 0.0
    %2247 = vmatprep.subr.mxu0 0.0
    %2248 = vmatpush1.msra.mxu0 0.0
    %2249 = vmatprep.subr.mxu0 0.0
    %2250 = vmatpush1.msra.mxu0 0.0
    %2251 = vmatprep.subr.mxu0 0.0
    %2252 = vmatpush1.msra.mxu0 0.0
    %2253 = vmatprep.subr.mxu0 0.0
    %2254 = vmatpush1.msra.mxu0 0.0
    %2255 = vmatprep.subr.mxu0 0.0
    %2256 = vmatpush1.msra.mxu0 0.0
    %2257 = vmatprep.mubr.f32.mxu0 0.0
    %2258 = vmatmul.mubr.f32.gmra.mrb[0].mxu0 %v2191
    %v2259 = vpop.f32.mrb[0].mxu0
    %v2260 = vadd.f32 0.0, %v2259
    %v2261 = vpop.f32.mrb[0].mxu0
    %v2262 = vadd.f32 0.0, %v2261
    %2263 = vdwg.mxu0
    %v2264 = vadd.f32 %v2174, %v2260
    %v2265 = vadd.f32 %v2175, %v2262
    %v2266 = vxor.u32 %v2264, 2147483648
    %v2267 = vxor.u32 %v2265, 2147483648
    %v2268 = vmul.f32 %v2266, 1.442695
    %v2269 = vpow.pop %v2268
    %v2270 = vmul.f32 %v2267, 1.442695
    %v2271 = vpow.pop %v2270
    %v2272 = vadd.f32 %v2269, 1.0
    %v2273 = vadd.f32 %v2271, 1.0
    %v2274 = vrcp.pop %v2272
    %v2275 = vmul.f32 1.0, %v2274
    %v2276 = vrcp.pop %v2273
    %v2277 = vmul.f32 1.0, %v2276
    %v2278 = vtanh.pop %v2265
    %v2279 = vmul.f32 %v2275, %v2159
    %2281 = vrot.lane.b32.xlu0 %v2278, 64
    %v2282 = vpop.permute.xlu0 %2281
    %v2284 = vmul.f32 %v2275, %v2282
    %2286 = vrot.lane.b32.xlu0 %v2284, 64
    %v2287 = vpop.permute.xlu0 %2286
    %v2289 = vadd.f32 %v2279, %v2287
    %v2290 = vtanh.pop %v2289
    %2292 = vrot.lane.b32.xlu0 %v2290, 64
    %v2293 = vpop.permute.xlu0 %2292
    %v2295 = vmul.f32 %v2277, %v2293
    %v2297 = vsel %vm445, %v2295, 0
    %2299 = vmatprep.subr.mxu0 %v410
    %2300 = vmatpush1.msra.mxu0 %v409
    %2301 = vmatprep.subr.mxu0 %v412
    %2302 = vmatpush1.msra.mxu0 %v411
    %2303 = vmatprep.subr.mxu0 %v414
    %2304 = vmatpush1.msra.mxu0 %v413
    %2305 = vmatprep.subr.mxu0 %v416
    %2306 = vmatpush1.msra.mxu0 %v415
    %2307 = vmatprep.subr.mxu0 %v418
    %2308 = vmatpush1.msra.mxu0 %v417
    %2309 = vmatprep.subr.mxu0 %v420
    %2310 = vmatpush1.msra.mxu0 %v419
    %2311 = vmatprep.subr.mxu0 %v422
    %2312 = vmatpush1.msra.mxu0 %v421
    %2313 = vmatprep.subr.mxu0 %v424
    %2314 = vmatpush1.msra.mxu0 %v423
    %2315 = vmatprep.subr.mxu0 0.0
    %2316 = vmatpush1.msra.mxu0 0.0
    %2317 = vmatprep.subr.mxu0 0.0
    %2318 = vmatpush1.msra.mxu0 0.0
    %2319 = vmatprep.subr.mxu0 0.0
    %2320 = vmatpush1.msra.mxu0 0.0
    %2321 = vmatprep.subr.mxu0 0.0
    %2322 = vmatpush1.msra.mxu0 0.0
    %2323 = vmatprep.subr.mxu0 0.0
    %2324 = vmatpush1.msra.mxu0 0.0
    %2325 = vmatprep.subr.mxu0 0.0
    %2326 = vmatpush1.msra.mxu0 0.0
    %2327 = vmatprep.subr.mxu0 0.0
    %2328 = vmatpush1.msra.mxu0 0.0
    %2329 = vmatprep.subr.mxu0 0.0
    %2330 = vmatpush1.msra.mxu0 0.0
    %2331 = vmatprep.subr.mxu0 0.0
    %2332 = vmatpush1.msra.mxu0 0.0
    %2333 = vmatprep.subr.mxu0 0.0
    %2334 = vmatpush1.msra.mxu0 0.0
    %2335 = vmatprep.subr.mxu0 0.0
    %2336 = vmatpush1.msra.mxu0 0.0
    %2337 = vmatprep.subr.mxu0 0.0
    %2338 = vmatpush1.msra.mxu0 0.0
    %2339 = vmatprep.subr.mxu0 0.0
    %2340 = vmatpush1.msra.mxu0 0.0
    %2341 = vmatprep.subr.mxu0 0.0
    %2342 = vmatpush1.msra.mxu0 0.0
    %2343 = vmatprep.subr.mxu0 0.0
    %2344 = vmatpush1.msra.mxu0 0.0
    %2345 = vmatprep.subr.mxu0 0.0
    %2346 = vmatpush1.msra.mxu0 0.0
    %2347 = vmatprep.subr.mxu0 0.0
    %2348 = vmatpush1.msra.mxu0 0.0
    %2349 = vmatprep.subr.mxu0 0.0
    %2350 = vmatpush1.msra.mxu0 0.0
    %2351 = vmatprep.subr.mxu0 0.0
    %2352 = vmatpush1.msra.mxu0 0.0
    %2353 = vmatprep.subr.mxu0 0.0
    %2354 = vmatpush1.msra.mxu0 0.0
    %2355 = vmatprep.subr.mxu0 0.0
    %2356 = vmatpush1.msra.mxu0 0.0
    %2357 = vmatprep.subr.mxu0 0.0
    %2358 = vmatpush1.msra.mxu0 0.0
    %2359 = vmatprep.subr.mxu0 0.0
    %2360 = vmatpush1.msra.mxu0 0.0
    %2361 = vmatprep.subr.mxu0 0.0
    %2362 = vmatpush1.msra.mxu0 0.0
    %2363 = vmatprep.mubr.f32.mxu0 0.0
    %2364 = vmatmul.mubr.f32.gmra.mrb[0].mxu0 %v2297
    %v2365 = vpop.f32.mrb[0].mxu0
    %v2366 = vadd.f32 0.0, %v2365
    %v2367 = vpop.f32.mrb[0].mxu0
    %v2368 = vadd.f32 0.0, %v2367
    %2369 = vdwg.mxu0
    %v2370 = vadd.f32 %v2176, %v2366
    %v2371 = vadd.f32 %v2177, %v2368
    %v2372 = vxor.u32 %v2370, 2147483648
    %v2373 = vxor.u32 %v2371, 2147483648
    %v2374 = vmul.f32 %v2372, 1.442695
    %v2375 = vpow.pop %v2374
    %v2376 = vmul.f32 %v2373, 1.442695
    %v2377 = vpow.pop %v2376
    %v2378 = vadd.f32 %v2375, 1.0
    %v2379 = vadd.f32 %v2377, 1.0
    %v2380 = vrcp.pop %v2378
    %v2381 = vmul.f32 1.0, %v2380
    %v2382 = vrcp.pop %v2379
    %v2383 = vmul.f32 1.0, %v2382
    %v2384 = vtanh.pop %v2371
    %v2385 = vmul.f32 %v2381, %v2289
    %2387 = vrot.lane.b32.xlu0 %v2384, 64
    %v2388 = vpop.permute.xlu0 %2387
    %v2390 = vmul.f32 %v2381, %v2388
    %2392 = vrot.lane.b32.xlu0 %v2390, 64
    %v2393 = vpop.permute.xlu0 %2392
    %v2395 = vadd.f32 %v2385, %v2393
    %v2396 = vtanh.pop %v2395
    %2398 = vrot.lane.b32.xlu0 %v2396, 64
    %v2399 = vpop.permute.xlu0 %2398
    %v2401 = vmul.f32 %v2383, %v2399
    %v2403 = vsel %vm445, %v2401, 0
    %2405 = vmatprep.subr.mxu0 %v410
    %2406 = vmatpush1.msra.mxu0 %v409
    %2407 = vmatprep.subr.mxu0 %v412
    %2408 = vmatpush1.msra.mxu0 %v411
    %2409 = vmatprep.subr.mxu0 %v414
    %2410 = vmatpush1.msra.mxu0 %v413
    %2411 = vmatprep.subr.mxu0 %v416
    %2412 = vmatpush1.msra.mxu0 %v415
    %2413 = vmatprep.subr.mxu0 %v418
    %2414 = vmatpush1.msra.mxu0 %v417
    %2415 = vmatprep.subr.mxu0 %v420
    %2416 = vmatpush1.msra.mxu0 %v419
    %2417 = vmatprep.subr.mxu0 %v422
    %2418 = vmatpush1.msra.mxu0 %v421
    %2419 = vmatprep.subr.mxu0 %v424
    %2420 = vmatpush1.msra.mxu0 %v423
    %2421 = vmatprep.subr.mxu0 0.0
    %2422 = vmatpush1.msra.mxu0 0.0
    %2423 = vmatprep.subr.mxu0 0.0
    %2424 = vmatpush1.msra.mxu0 0.0
    %2425 = vmatprep.subr.mxu0 0.0
    %2426 = vmatpush1.msra.mxu0 0.0
    %2427 = vmatprep.subr.mxu0 0.0
    %2428 = vmatpush1.msra.mxu0 0.0
    %2429 = vmatprep.subr.mxu0 0.0
    %2430 = vmatpush1.msra.mxu0 0.0
    %2431 = vmatprep.subr.mxu0 0.0
    %2432 = vmatpush1.msra.mxu0 0.0
    %2433 = vmatprep.subr.mxu0 0.0
    %2434 = vmatpush1.msra.mxu0 0.0
    %2435 = vmatprep.subr.mxu0 0.0
    %2436 = vmatpush1.msra.mxu0 0.0
    %2437 = vmatprep.subr.mxu0 0.0
    %2438 = vmatpush1.msra.mxu0 0.0
    %2439 = vmatprep.subr.mxu0 0.0
    %2440 = vmatpush1.msra.mxu0 0.0
    %2441 = vmatprep.subr.mxu0 0.0
    %2442 = vmatpush1.msra.mxu0 0.0
    %2443 = vmatprep.subr.mxu0 0.0
    %2444 = vmatpush1.msra.mxu0 0.0
    %2445 = vmatprep.subr.mxu0 0.0
    %2446 = vmatpush1.msra.mxu0 0.0
    %2447 = vmatprep.subr.mxu0 0.0
    %2448 = vmatpush1.msra.mxu0 0.0
    %2449 = vmatprep.subr.mxu0 0.0
    %2450 = vmatpush1.msra.mxu0 0.0
    %2451 = vmatprep.subr.mxu0 0.0
    %2452 = vmatpush1.msra.mxu0 0.0
    %2453 = vmatprep.subr.mxu0 0.0
    %2454 = vmatpush1.msra.mxu0 0.0
    %2455 = vmatprep.subr.mxu0 0.0
    %2456 = vmatpush1.msra.mxu0 0.0
    %2457 = vmatprep.subr.mxu0 0.0
    %2458 = vmatpush1.msra.mxu0 0.0
    %2459 = vmatprep.subr.mxu0 0.0
    %2460 = vmatpush1.msra.mxu0 0.0
    %2461 = vmatprep.subr.mxu0 0.0
    %2462 = vmatpush1.msra.mxu0 0.0
    %2463 = vmatprep.subr.mxu0 0.0
    %2464 = vmatpush1.msra.mxu0 0.0
    %2465 = vmatprep.subr.mxu0 0.0
    %2466 = vmatpush1.msra.mxu0 0.0
    %2467 = vmatprep.subr.mxu0 0.0
    %2468 = vmatpush1.msra.mxu0 0.0
    %2469 = vmatprep.mubr.f32.mxu0 0.0
    %2470 = vmatmul.mubr.f32.gmra.mrb[0].mxu0 %v2403
    %v2471 = vpop.f32.mrb[0].mxu0
    %v2472 = vadd.f32 0.0, %v2471
    %v2473 = vpop.f32.mrb[0].mxu0
    %v2474 = vadd.f32 0.0, %v2473
    %2475 = vdwg.mxu0
    %v2476 = vadd.f32 %v2178, %v2472
    %v2477 = vadd.f32 %v2179, %v2474
    %v2478 = vxor.u32 %v2476, 2147483648
    %v2479 = vxor.u32 %v2477, 2147483648
    %v2480 = vmul.f32 %v2478, 1.442695
    %v2481 = vpow.pop %v2480
    %v2482 = vmul.f32 %v2479, 1.442695
    %v2483 = vpow.pop %v2482
    %v2484 = vadd.f32 %v2481, 1.0
    %v2485 = vadd.f32 %v2483, 1.0
    %v2486 = vrcp.pop %v2484
    %v2487 = vmul.f32 1.0, %v2486
    %v2488 = vrcp.pop %v2485
    %v2489 = vmul.f32 1.0, %v2488
    %v2490 = vtanh.pop %v2477
    %v2491 = vmul.f32 %v2487, %v2395
    %2493 = vrot.lane.b32.xlu0 %v2490, 64
    %v2494 = vpop.permute.xlu0 %2493
    %v2496 = vmul.f32 %v2487, %v2494
    %2498 = vrot.lane.b32.xlu0 %v2496, 64
    %v2499 = vpop.permute.xlu0 %2498
    %v2501 = vadd.f32 %v2491, %v2499
    %v2502 = vtanh.pop %v2501
    %2504 = vrot.lane.b32.xlu0 %v2502, 64
    %v2505 = vpop.permute.xlu0 %2504
    %v2507 = vmul.f32 %v2489, %v2505
    %v2509 = vsel %vm445, %v2507, 0
    %2511 = vmatprep.subr.mxu0 %v410
    %2512 = vmatpush1.msra.mxu0 %v409
    %2513 = vmatprep.subr.mxu0 %v412
    %2514 = vmatpush1.msra.mxu0 %v411
    %2515 = vmatprep.subr.mxu0 %v414
    %2516 = vmatpush1.msra.mxu0 %v413
    %2517 = vmatprep.subr.mxu0 %v416
    %2518 = vmatpush1.msra.mxu0 %v415
    %2519 = vmatprep.subr.mxu0 %v418
    %2520 = vmatpush1.msra.mxu0 %v417
    %2521 = vmatprep.subr.mxu0 %v420
    %2522 = vmatpush1.msra.mxu0 %v419
    %2523 = vmatprep.subr.mxu0 %v422
    %2524 = vmatpush1.msra.mxu0 %v421
    %2525 = vmatprep.subr.mxu0 %v424
    %2526 = vmatpush1.msra.mxu0 %v423
    %2527 = vmatprep.subr.mxu0 0.0
    %2528 = vmatpush1.msra.mxu0 0.0
    %2529 = vmatprep.subr.mxu0 0.0
    %2530 = vmatpush1.msra.mxu0 0.0
    %2531 = vmatprep.subr.mxu0 0.0
    %2532 = vmatpush1.msra.mxu0 0.0
    %2533 = vmatprep.subr.mxu0 0.0
    %2534 = vmatpush1.msra.mxu0 0.0
    %2535 = vmatprep.subr.mxu0 0.0
    %2536 = vmatpush1.msra.mxu0 0.0
    %2537 = vmatprep.subr.mxu0 0.0
    %2538 = vmatpush1.msra.mxu0 0.0
    %2539 = vmatprep.subr.mxu0 0.0
    %2540 = vmatpush1.msra.mxu0 0.0
    %2541 = vmatprep.subr.mxu0 0.0
    %2542 = vmatpush1.msra.mxu0 0.0
    %2543 = vmatprep.subr.mxu0 0.0
    %2544 = vmatpush1.msra.mxu0 0.0
    %2545 = vmatprep.subr.mxu0 0.0
    %2546 = vmatpush1.msra.mxu0 0.0
    %2547 = vmatprep.subr.mxu0 0.0
    %2548 = vmatpush1.msra.mxu0 0.0
    %2549 = vmatprep.subr.mxu0 0.0
    %2550 = vmatpush1.msra.mxu0 0.0
    %2551 = vmatprep.subr.mxu0 0.0
    %2552 = vmatpush1.msra.mxu0 0.0
    %2553 = vmatprep.subr.mxu0 0.0
    %2554 = vmatpush1.msra.mxu0 0.0
    %2555 = vmatprep.subr.mxu0 0.0
    %2556 = vmatpush1.msra.mxu0 0.0
    %2557 = vmatprep.subr.mxu0 0.0
    %2558 = vmatpush1.msra.mxu0 0.0
    %2559 = vmatprep.subr.mxu0 0.0
    %2560 = vmatpush1.msra.mxu0 0.0
    %2561 = vmatprep.subr.mxu0 0.0
    %2562 = vmatpush1.msra.mxu0 0.0
    %2563 = vmatprep.subr.mxu0 0.0
    %2564 = vmatpush1.msra.mxu0 0.0
    %2565 = vmatprep.subr.mxu0 0.0
    %2566 = vmatpush1.msra.mxu0 0.0
    %2567 = vmatprep.subr.mxu0 0.0
    %2568 = vmatpush1.msra.mxu0 0.0
    %2569 = vmatprep.subr.mxu0 0.0
    %2570 = vmatpush1.msra.mxu0 0.0
    %2571 = vmatprep.subr.mxu0 0.0
    %2572 = vmatpush1.msra.mxu0 0.0
    %2573 = vmatprep.subr.mxu0 0.0
    %2574 = vmatpush1.msra.mxu0 0.0
    %2575 = vmatprep.mubr.f32.mxu0 0.0
    %2576 = vmatmul.mubr.f32.gmra.mrb[0].mxu0 %v2509
    %v2577 = vpop.f32.mrb[0].mxu0
    %v2578 = vadd.f32 0.0, %v2577
    %v2579 = vpop.f32.mrb[0].mxu0
    %v2580 = vadd.f32 0.0, %v2579
    %2581 = vdwg.mxu0
    %v2582 = vadd.f32 %v2180, %v2578
    %v2583 = vadd.f32 %v2181, %v2580
    %v2584 = vxor.u32 %v2582, 2147483648
    %v2585 = vxor.u32 %v2583, 2147483648
    %v2586 = vmul.f32 %v2584, 1.442695
    %v2587 = vpow.pop %v2586
    %v2588 = vmul.f32 %v2585, 1.442695
    %v2589 = vpow.pop %v2588
    %v2590 = vadd.f32 %v2587, 1.0
    %v2591 = vadd.f32 %v2589, 1.0
    %v2592 = vrcp.pop %v2590
    %v2593 = vmul.f32 1.0, %v2592
    %v2594 = vrcp.pop %v2591
    %v2595 = vmul.f32 1.0, %v2594
    %v2596 = vtanh.pop %v2583
    %v2597 = vmul.f32 %v2593, %v2501
    %2599 = vrot.lane.b32.xlu0 %v2596, 64
    %v2600 = vpop.permute.xlu0 %2599
    %v2602 = vmul.f32 %v2593, %v2600
    %2604 = vrot.lane.b32.xlu0 %v2602, 64
    %v2605 = vpop.permute.xlu0 %2604
    %v2607 = vadd.f32 %v2597, %v2605
    %v2608 = vtanh.pop %v2607
    %2610 = vrot.lane.b32.xlu0 %v2608, 64
    %v2611 = vpop.permute.xlu0 %2610
    %v2613 = vmul.f32 %v2595, %v2611
    %v2615 = vsel %vm445, %v2613, 0
    %2617 = vmatprep.subr.mxu0 %v410
    %2618 = vmatpush1.msra.mxu0 %v409
    %2619 = vmatprep.subr.mxu0 %v412
    %2620 = vmatpush1.msra.mxu0 %v411
    %2621 = vmatprep.subr.mxu0 %v414
    %2622 = vmatpush1.msra.mxu0 %v413
    %2623 = vmatprep.subr.mxu0 %v416
    %2624 = vmatpush1.msra.mxu0 %v415
    %2625 = vmatprep.subr.mxu0 %v418
    %2626 = vmatpush1.msra.mxu0 %v417
    %2627 = vmatprep.subr.mxu0 %v420
    %2628 = vmatpush1.msra.mxu0 %v419
    %2629 = vmatprep.subr.mxu0 %v422
    %2630 = vmatpush1.msra.mxu0 %v421
    %2631 = vmatprep.subr.mxu0 %v424
    %2632 = vmatpush1.msra.mxu0 %v423
    %2633 = vmatprep.subr.mxu0 0.0
    %2634 = vmatpush1.msra.mxu0 0.0
    %2635 = vmatprep.subr.mxu0 0.0
    %2636 = vmatpush1.msra.mxu0 0.0
    %2637 = vmatprep.subr.mxu0 0.0
    %2638 = vmatpush1.msra.mxu0 0.0
    %2639 = vmatprep.subr.mxu0 0.0
    %2640 = vmatpush1.msra.mxu0 0.0
    %2641 = vmatprep.subr.mxu0 0.0
    %2642 = vmatpush1.msra.mxu0 0.0
    %2643 = vmatprep.subr.mxu0 0.0
    %2644 = vmatpush1.msra.mxu0 0.0
    %2645 = vmatprep.subr.mxu0 0.0
    %2646 = vmatpush1.msra.mxu0 0.0
    %2647 = vmatprep.subr.mxu0 0.0
    %2648 = vmatpush1.msra.mxu0 0.0
    %2649 = vmatprep.subr.mxu0 0.0
    %2650 = vmatpush1.msra.mxu0 0.0
    %2651 = vmatprep.subr.mxu0 0.0
    %2652 = vmatpush1.msra.mxu0 0.0
    %2653 = vmatprep.subr.mxu0 0.0
    %2654 = vmatpush1.msra.mxu0 0.0
    %2655 = vmatprep.subr.mxu0 0.0
    %2656 = vmatpush1.msra.mxu0 0.0
    %2657 = vmatprep.subr.mxu0 0.0
    %2658 = vmatpush1.msra.mxu0 0.0
    %2659 = vmatprep.subr.mxu0 0.0
    %2660 = vmatpush1.msra.mxu0 0.0
    %2661 = vmatprep.subr.mxu0 0.0
    %2662 = vmatpush1.msra.mxu0 0.0
    %2663 = vmatprep.subr.mxu0 0.0
    %2664 = vmatpush1.msra.mxu0 0.0
    %2665 = vmatprep.subr.mxu0 0.0
    %2666 = vmatpush1.msra.mxu0 0.0
    %2667 = vmatprep.subr.mxu0 0.0
    %2668 = vmatpush1.msra.mxu0 0.0
    %2669 = vmatprep.subr.mxu0 0.0
    %2670 = vmatpush1.msra.mxu0 0.0
    %2671 = vmatprep.subr.mxu0 0.0
    %2672 = vmatpush1.msra.mxu0 0.0
    %2673 = vmatprep.subr.mxu0 0.0
    %2674 = vmatpush1.msra.mxu0 0.0
    %2675 = vmatprep.subr.mxu0 0.0
    %2676 = vmatpush1.msra.mxu0 0.0
    %2677 = vmatprep.subr.mxu0 0.0
    %2678 = vmatpush1.msra.mxu0 0.0
    %2679 = vmatprep.subr.mxu0 0.0
    %2680 = vmatpush1.msra.mxu0 0.0
    %2681 = vmatprep.mubr.f32.mxu0 0.0
    %2682 = vmatmul.mubr.f32.gmra.mrb[0].mxu0 %v2615
    %v2683 = vpop.f32.mrb[0].mxu0
    %v2684 = vadd.f32 0.0, %v2683
    %v2685 = vpop.f32.mrb[0].mxu0
    %v2686 = vadd.f32 0.0, %v2685
    %2687 = vdwg.mxu0
    %v2688 = vadd.f32 %v2182, %v2684
    %v2689 = vadd.f32 %v2183, %v2686
    %v2690 = vxor.u32 %v2688, 2147483648
    %v2691 = vxor.u32 %v2689, 2147483648
    %v2692 = vmul.f32 %v2690, 1.442695
    %v2693 = vpow.pop %v2692
    %v2694 = vmul.f32 %v2691, 1.442695
    %v2695 = vpow.pop %v2694
    %v2696 = vadd.f32 %v2693, 1.0
    %v2697 = vadd.f32 %v2695, 1.0
    %v2698 = vrcp.pop %v2696
    %v2699 = vmul.f32 1.0, %v2698
    %v2700 = vrcp.pop %v2697
    %v2701 = vmul.f32 1.0, %v2700
    %v2702 = vtanh.pop %v2689
    %v2703 = vmul.f32 %v2699, %v2607
    %2705 = vrot.lane.b32.xlu0 %v2702, 64
    %v2706 = vpop.permute.xlu0 %2705
    %v2708 = vmul.f32 %v2699, %v2706
    %2710 = vrot.lane.b32.xlu0 %v2708, 64
    %v2711 = vpop.permute.xlu0 %2710
    %v2713 = vadd.f32 %v2703, %v2711
    %v2714 = vtanh.pop %v2713
    %2716 = vrot.lane.b32.xlu0 %v2714, 64
    %v2717 = vpop.permute.xlu0 %2716
    %v2719 = vmul.f32 %v2701, %v2717
    %v2721 = vsel %vm445, %v2719, 0
    %2723 = vmatprep.subr.mxu0 %v410
    %2724 = vmatpush1.msra.mxu0 %v409
    %2725 = vmatprep.subr.mxu0 %v412
    %2726 = vmatpush1.msra.mxu0 %v411
    %2727 = vmatprep.subr.mxu0 %v414
    %2728 = vmatpush1.msra.mxu0 %v413
    %2729 = vmatprep.subr.mxu0 %v416
    %2730 = vmatpush1.msra.mxu0 %v415
    %2731 = vmatprep.subr.mxu0 %v418
    %2732 = vmatpush1.msra.mxu0 %v417
    %2733 = vmatprep.subr.mxu0 %v420
    %2734 = vmatpush1.msra.mxu0 %v419
    %2735 = vmatprep.subr.mxu0 %v422
    %2736 = vmatpush1.msra.mxu0 %v421
    %2737 = vmatprep.subr.mxu0 %v424
    %2738 = vmatpush1.msra.mxu0 %v423
    %2739 = vmatprep.subr.mxu0 0.0
    %2740 = vmatpush1.msra.mxu0 0.0
    %2741 = vmatprep.subr.mxu0 0.0
    %2742 = vmatpush1.msra.mxu0 0.0
    %2743 = vmatprep.subr.mxu0 0.0
    %2744 = vmatpush1.msra.mxu0 0.0
    %2745 = vmatprep.subr.mxu0 0.0
    %2746 = vmatpush1.msra.mxu0 0.0
    %2747 = vmatprep.subr.mxu0 0.0
    %2748 = vmatpush1.msra.mxu0 0.0
    %2749 = vmatprep.subr.mxu0 0.0
    %2750 = vmatpush1.msra.mxu0 0.0
    %2751 = vmatprep.subr.mxu0 0.0
    %2752 = vmatpush1.msra.mxu0 0.0
    %2753 = vmatprep.subr.mxu0 0.0
    %2754 = vmatpush1.msra.mxu0 0.0
    %2755 = vmatprep.subr.mxu0 0.0
    %2756 = vmatpush1.msra.mxu0 0.0
    %2757 = vmatprep.subr.mxu0 0.0
    %2758 = vmatpush1.msra.mxu0 0.0
    %2759 = vmatprep.subr.mxu0 0.0
    %2760 = vmatpush1.msra.mxu0 0.0
    %2761 = vmatprep.subr.mxu0 0.0
    %2762 = vmatpush1.msra.mxu0 0.0
    %2763 = vmatprep.subr.mxu0 0.0
    %2764 = vmatpush1.msra.mxu0 0.0
    %2765 = vmatprep.subr.mxu0 0.0
    %2766 = vmatpush1.msra.mxu0 0.0
    %2767 = vmatprep.subr.mxu0 0.0
    %2768 = vmatpush1.msra.mxu0 0.0
    %2769 = vmatprep.subr.mxu0 0.0
    %2770 = vmatpush1.msra.mxu0 0.0
    %2771 = vmatprep.subr.mxu0 0.0
    %2772 = vmatpush1.msra.mxu0 0.0
    %2773 = vmatprep.subr.mxu0 0.0
    %2774 = vmatpush1.msra.mxu0 0.0
    %2775 = vmatprep.subr.mxu0 0.0
    %2776 = vmatpush1.msra.mxu0 0.0
    %2777 = vmatprep.subr.mxu0 0.0
    %2778 = vmatpush1.msra.mxu0 0.0
    %2779 = vmatprep.subr.mxu0 0.0
    %2780 = vmatpush1.msra.mxu0 0.0
    %2781 = vmatprep.subr.mxu0 0.0
    %2782 = vmatpush1.msra.mxu0 0.0
    %2783 = vmatprep.subr.mxu0 0.0
    %2784 = vmatpush1.msra.mxu0 0.0
    %2785 = vmatprep.subr.mxu0 0.0
    %2786 = vmatpush1.msra.mxu0 0.0
    %2787 = vmatprep.mubr.f32.mxu0 0.0
    %2788 = vmatmul.mubr.f32.gmra.mrb[0].mxu0 %v2721
    %v2789 = vpop.f32.mrb[0].mxu0
    %v2790 = vadd.f32 0.0, %v2789
    %v2791 = vpop.f32.mrb[0].mxu0
    %v2792 = vadd.f32 0.0, %v2791
    %2793 = vdwg.mxu0
    %v2794 = vadd.f32 %v2184, %v2790
    %v2795 = vadd.f32 %v2185, %v2792
    %v2796 = vxor.u32 %v2794, 2147483648
    %v2797 = vxor.u32 %v2795, 2147483648
    %v2798 = vmul.f32 %v2796, 1.442695
    %v2799 = vpow.pop %v2798
    %v2800 = vmul.f32 %v2797, 1.442695
    %v2801 = vpow.pop %v2800
    %v2802 = vadd.f32 %v2799, 1.0
    %v2803 = vadd.f32 %v2801, 1.0
    %v2804 = vrcp.pop %v2802
    %v2805 = vmul.f32 1.0, %v2804
    %v2806 = vrcp.pop %v2803
    %v2807 = vmul.f32 1.0, %v2806
    %v2808 = vtanh.pop %v2795
    %v2809 = vmul.f32 %v2805, %v2713
    %2811 = vrot.lane.b32.xlu0 %v2808, 64
    %v2812 = vpop.permute.xlu0 %2811
    %v2814 = vmul.f32 %v2805, %v2812
    %2816 = vrot.lane.b32.xlu0 %v2814, 64
    %v2817 = vpop.permute.xlu0 %2816
    %v2819 = vadd.f32 %v2809, %v2817
    %v2820 = vtanh.pop %v2819
    %2822 = vrot.lane.b32.xlu0 %v2820, 64
    %v2823 = vpop.permute.xlu0 %2822
    %v2825 = vmul.f32 %v2807, %v2823
    %v2827 = vsel %vm445, %v2825, 0
    %2829 = vmatprep.subr.mxu0 %v410
    %2830 = vmatpush1.msra.mxu0 %v409
    %2831 = vmatprep.subr.mxu0 %v412
    %2832 = vmatpush1.msra.mxu0 %v411
    %2833 = vmatprep.subr.mxu0 %v414
    %2834 = vmatpush1.msra.mxu0 %v413
    %2835 = vmatprep.subr.mxu0 %v416
    %2836 = vmatpush1.msra.mxu0 %v415
    %2837 = vmatprep.subr.mxu0 %v418
    %2838 = vmatpush1.msra.mxu0 %v417
    %2839 = vmatprep.subr.mxu0 %v420
    %2840 = vmatpush1.msra.mxu0 %v419
    %2841 = vmatprep.subr.mxu0 %v422
    %2842 = vmatpush1.msra.mxu0 %v421
    %2843 = vmatprep.subr.mxu0 %v424
    %2844 = vmatpush1.msra.mxu0 %v423
    %2845 = vmatprep.subr.mxu0 0.0
    %2846 = vmatpush1.msra.mxu0 0.0
    %2847 = vmatprep.subr.mxu0 0.0
    %2848 = vmatpush1.msra.mxu0 0.0
    %2849 = vmatprep.subr.mxu0 0.0
    %2850 = vmatpush1.msra.mxu0 0.0
    %2851 = vmatprep.subr.mxu0 0.0
    %2852 = vmatpush1.msra.mxu0 0.0
    %2853 = vmatprep.subr.mxu0 0.0
    %2854 = vmatpush1.msra.mxu0 0.0
    %2855 = vmatprep.subr.mxu0 0.0
    %2856 = vmatpush1.msra.mxu0 0.0
    %2857 = vmatprep.subr.mxu0 0.0
    %2858 = vmatpush1.msra.mxu0 0.0
    %2859 = vmatprep.subr.mxu0 0.0
    %2860 = vmatpush1.msra.mxu0 0.0
    %2861 = vmatprep.subr.mxu0 0.0
    %2862 = vmatpush1.msra.mxu0 0.0
    %2863 = vmatprep.subr.mxu0 0.0
    %2864 = vmatpush1.msra.mxu0 0.0
    %2865 = vmatprep.subr.mxu0 0.0
    %2866 = vmatpush1.msra.mxu0 0.0
    %2867 = vmatprep.subr.mxu0 0.0
    %2868 = vmatpush1.msra.mxu0 0.0
    %2869 = vmatprep.subr.mxu0 0.0
    %2870 = vmatpush1.msra.mxu0 0.0
    %2871 = vmatprep.subr.mxu0 0.0
    %2872 = vmatpush1.msra.mxu0 0.0
    %2873 = vmatprep.subr.mxu0 0.0
    %2874 = vmatpush1.msra.mxu0 0.0
    %2875 = vmatprep.subr.mxu0 0.0
    %2876 = vmatpush1.msra.mxu0 0.0
    %2877 = vmatprep.subr.mxu0 0.0
    %2878 = vmatpush1.msra.mxu0 0.0
    %2879 = vmatprep.subr.mxu0 0.0
    %2880 = vmatpush1.msra.mxu0 0.0
    %2881 = vmatprep.subr.mxu0 0.0
    %2882 = vmatpush1.msra.mxu0 0.0
    %2883 = vmatprep.subr.mxu0 0.0
    %2884 = vmatpush1.msra.mxu0 0.0
    %2885 = vmatprep.subr.mxu0 0.0
    %2886 = vmatpush1.msra.mxu0 0.0
    %2887 = vmatprep.subr.mxu0 0.0
    %2888 = vmatpush1.msra.mxu0 0.0
    %2889 = vmatprep.subr.mxu0 0.0
    %2890 = vmatpush1.msra.mxu0 0.0
    %2891 = vmatprep.subr.mxu0 0.0
    %2892 = vmatpush1.msra.mxu0 0.0
    %2893 = vmatprep.mubr.f32.mxu0 0.0
    %2894 = vmatmul.mubr.f32.gmra.mrb[0].mxu0 %v2827
    %v2895 = vpop.f32.mrb[0].mxu0
    %v2896 = vadd.f32 0.0, %v2895
    %v2897 = vpop.f32.mrb[0].mxu0
    %v2898 = vadd.f32 0.0, %v2897
    %2899 = vdwg.mxu0
    %v2900 = vadd.f32 %v2186, %v2896
    %v2901 = vadd.f32 %v2187, %v2898
    %v2902 = vxor.u32 %v2900, 2147483648
    %v2903 = vxor.u32 %v2901, 2147483648
    %v2904 = vmul.f32 %v2902, 1.442695
    %v2905 = vpow.pop %v2904
    %v2906 = vmul.f32 %v2903, 1.442695
    %v2907 = vpow.pop %v2906
    %v2908 = vadd.f32 %v2905, 1.0
    %v2909 = vadd.f32 %v2907, 1.0
    %v2910 = vrcp.pop %v2908
    %v2911 = vmul.f32 1.0, %v2910
    %v2912 = vrcp.pop %v2909
    %v2913 = vmul.f32 1.0, %v2912
    %v2914 = vtanh.pop %v2901
    %v2915 = vmul.f32 %v2911, %v2819
    %2917 = vrot.lane.b32.xlu0 %v2914, 64
    %v2918 = vpop.permute.xlu0 %2917
    %v2920 = vmul.f32 %v2911, %v2918
    %2922 = vrot.lane.b32.xlu0 %v2920, 64
    %v2923 = vpop.permute.xlu0 %2922
    %v2925 = vadd.f32 %v2915, %v2923
    %v2926 = vtanh.pop %v2925
    %2928 = vrot.lane.b32.xlu0 %v2926, 64
    %v2929 = vpop.permute.xlu0 %2928
    %v2931 = vmul.f32 %v2913, %v2929
    %v2933 = vsel %vm445, %v2931, 0
    %2935 = vmatprep.subr.mxu0 %v410
    %2936 = vmatpush1.msra.mxu0 %v409
    %2937 = vmatprep.subr.mxu0 %v412
    %2938 = vmatpush1.msra.mxu0 %v411
    %2939 = vmatprep.subr.mxu0 %v414
    %2940 = vmatpush1.msra.mxu0 %v413
    %2941 = vmatprep.subr.mxu0 %v416
    %2942 = vmatpush1.msra.mxu0 %v415
    %2943 = vmatprep.subr.mxu0 %v418
    %2944 = vmatpush1.msra.mxu0 %v417
    %2945 = vmatprep.subr.mxu0 %v420
    %2946 = vmatpush1.msra.mxu0 %v419
    %2947 = vmatprep.subr.mxu0 %v422
    %2948 = vmatpush1.msra.mxu0 %v421
    %2949 = vmatprep.subr.mxu0 %v424
    %2950 = vmatpush1.msra.mxu0 %v423
    %2951 = vmatprep.subr.mxu0 0.0
    %2952 = vmatpush1.msra.mxu0 0.0
    %2953 = vmatprep.subr.mxu0 0.0
    %2954 = vmatpush1.msra.mxu0 0.0
    %2955 = vmatprep.subr.mxu0 0.0
    %2956 = vmatpush1.msra.mxu0 0.0
    %2957 = vmatprep.subr.mxu0 0.0
    %2958 = vmatpush1.msra.mxu0 0.0
    %2959 = vmatprep.subr.mxu0 0.0
    %2960 = vmatpush1.msra.mxu0 0.0
    %2961 = vmatprep.subr.mxu0 0.0
    %2962 = vmatpush1.msra.mxu0 0.0
    %2963 = vmatprep.subr.mxu0 0.0
    %2964 = vmatpush1.msra.mxu0 0.0
    %2965 = vmatprep.subr.mxu0 0.0
    %2966 = vmatpush1.msra.mxu0 0.0
    %2967 = vmatprep.subr.mxu0 0.0
    %2968 = vmatpush1.msra.mxu0 0.0
    %2969 = vmatprep.subr.mxu0 0.0
    %2970 = vmatpush1.msra.mxu0 0.0
    %2971 = vmatprep.subr.mxu0 0.0
    %2972 = vmatpush1.msra.mxu0 0.0
    %2973 = vmatprep.subr.mxu0 0.0
    %2974 = vmatpush1.msra.mxu0 0.0
    %2975 = vmatprep.subr.mxu0 0.0
    %2976 = vmatpush1.msra.mxu0 0.0
    %2977 = vmatprep.subr.mxu0 0.0
    %2978 = vmatpush1.msra.mxu0 0.0
    %2979 = vmatprep.subr.mxu0 0.0
    %2980 = vmatpush1.msra.mxu0 0.0
    %2981 = vmatprep.subr.mxu0 0.0
    %2982 = vmatpush1.msra.mxu0 0.0
    %2983 = vmatprep.subr.mxu0 0.0
    %2984 = vmatpush1.msra.mxu0 0.0
    %2985 = vmatprep.subr.mxu0 0.0
    %2986 = vmatpush1.msra.mxu0 0.0
    %2987 = vmatprep.subr.mxu0 0.0
    %2988 = vmatpush1.msra.mxu0 0.0
    %2989 = vmatprep.subr.mxu0 0.0
    %2990 = vmatpush1.msra.mxu0 0.0
    %2991 = vmatprep.subr.mxu0 0.0
    %2992 = vmatpush1.msra.mxu0 0.0
    %2993 = vmatprep.subr.mxu0 0.0
    %2994 = vmatpush1.msra.mxu0 0.0
    %2995 = vmatprep.subr.mxu0 0.0
    %2996 = vmatpush1.msra.mxu0 0.0
    %2997 = vmatprep.subr.mxu0 0.0
    %2998 = vmatpush1.msra.mxu0 0.0
    %2999 = vmatprep.mubr.f32.mxu0 0.0
    %3000 = vmatmul.mubr.f32.gmra.mrb[0].mxu0 %v2933
    %v3001 = vpop.f32.mrb[0].mxu0
    %v3002 = vadd.f32 0.0, %v3001
    %v3003 = vpop.f32.mrb[0].mxu0
    %v3004 = vadd.f32 0.0, %v3003
    %3005 = vdwg.mxu0
    %v3006 = vadd.f32 %v2188, %v3002
    %v3007 = vadd.f32 %v2189, %v3004
    %v3008 = vxor.u32 %v3006, 2147483648
    %v3009 = vxor.u32 %v3007, 2147483648
    %v3010 = vmul.f32 %v3008, 1.442695
    %v3011 = vpow.pop %v3010
    %v3012 = vmul.f32 %v3009, 1.442695
    %v3013 = vpow.pop %v3012
    %v3014 = vadd.f32 %v3011, 1.0
    %v3015 = vadd.f32 %v3013, 1.0
    %v3016 = vrcp.pop %v3014
    %v3017 = vmul.f32 1.0, %v3016
    %v3018 = vrcp.pop %v3015
    %v3019 = vmul.f32 1.0, %v3018
    %v3020 = vtanh.pop %v3007
    %v3021 = vmul.f32 %v3017, %v2925
    %3023 = vrot.lane.b32.xlu0 %v3020, 64
    %v3024 = vpop.permute.xlu0 %3023
    %v3026 = vmul.f32 %v3017, %v3024
    %3028 = vrot.lane.b32.xlu0 %v3026, 64
    %v3029 = vpop.permute.xlu0 %3028
    %v3031 = vadd.f32 %v3021, %v3029
    %v3032 = vtanh.pop %v3031
    %3034 = vrot.lane.b32.xlu0 %v3032, 64
    %v3035 = vpop.permute.xlu0 %3034
    %v3037 = vmul.f32 %v3019, %v3035
    %v3038 = vsel %vm190, %v2295, %v3037
    %v3039 = vsel %vm190, %v2401, %v2931
    %v3040 = vsel %vm190, %v2507, %v2825
    %v3041 = vsel %vm190, %v2613, %v2719
    %v3042 = vsel %vm190, %v2719, %v2613
    %v3043 = vsel %vm190, %v2825, %v2507
    %v3044 = vsel %vm190, %v2931, %v2401
    %v3045 = vsel %vm190, %v3037, %v2295
    %v3046 = vld [vmem:[%s4] sm:$0xff]
    %v3047 = vld [vmem:[%s4 + $0x8] sm:$0xff]
    %v3048 = vld [vmem:[%s4 + $0x10] sm:$0xff]
    %v3049 = vld [vmem:[%s4 + $0x18] sm:$0xff]
    %v3050 = vld [vmem:[%s4 + $0x20] sm:$0xff]
    %v3051 = vld [vmem:[%s4 + $0x28] sm:$0xff]
    %v3052 = vld [vmem:[%s4 + $0x30] sm:$0xff]
    %v3053 = vld [vmem:[%s4 + $0x38] sm:$0xff]
    %v3054 = vld [vmem:[%s5] sm:$0x1]
    %v3055 = vld [vmem:[%s6] sm:$0x1]
    %v3057 = vlaneseq
    %v3058 = vshrl.u32 %v3057, 7
    %v3059 = vsub.s32 0, %v3058
    %v3060 = vrot.slane %v3054, %v3059
    %v3063 = vsel %vm445, %v1294, 0
    %v3066 = vsel %vm445, %v1295, 0
    %v3069 = vsel %vm445, %v1296, 0
    %v3072 = vsel %vm445, %v1297, 0
    %v3075 = vsel %vm445, %v1298, 0
    %v3078 = vsel %vm445, %v1299, 0
    %v3081 = vsel %vm445, %v1300, 0
    %v3084 = vsel %vm445, %v1301, 0
    %v3087 = vsel %vm445, %v2166, 0
    %v3090 = vsel %vm445, %v2167, 0
    %v3093 = vsel %vm445, %v2168, 0
    %v3096 = vsel %vm445, %v2169, 0
    %v3099 = vsel %vm445, %v2170, 0
    %v3102 = vsel %vm445, %v2171, 0
    %v3105 = vsel %vm445, %v2172, 0
    %v3108 = vsel %vm445, %v2173, 0
    %v3111 = vsel %vm445, %v3038, 0
    %v3114 = vsel %vm445, %v3039, 0
    %v3117 = vsel %vm445, %v3040, 0
    %v3120 = vsel %vm445, %v3041, 0
    %v3123 = vsel %vm445, %v3042, 0
    %v3126 = vsel %vm445, %v3043, 0
    %v3129 = vsel %vm445, %v3044, 0
    %v3132 = vsel %vm445, %v3045, 0
    %3134 = vmatprep.subr.mxu0 0.0
    %3135 = vmatpush1.msra.mxu0 %v3046
    %3136 = vmatprep.subr.mxu0 0.0
    %3137 = vmatpush1.msra.mxu0 %v3047
    %3138 = vmatprep.subr.mxu0 0.0
    %3139 = vmatpush1.msra.mxu0 %v3048
    %3140 = vmatprep.subr.mxu0 0.0
    %3141 = vmatpush1.msra.mxu0 %v3049
    %3142 = vmatprep.subr.mxu0 0.0
    %3143 = vmatpush1.msra.mxu0 %v3050
    %3144 = vmatprep.subr.mxu0 0.0
    %3145 = vmatpush1.msra.mxu0 %v3051
    %3146 = vmatprep.subr.mxu0 0.0
    %3147 = vmatpush1.msra.mxu0 %v3052
    %3148 = vmatprep.subr.mxu0 0.0
    %3149 = vmatpush1.msra.mxu0 %v3053
    %3150 = vmatprep.subr.mxu0 0.0
    %3151 = vmatpush1.msra.mxu0 0.0
    %3152 = vmatprep.subr.mxu0 0.0
    %3153 = vmatpush1.msra.mxu0 0.0
    %3154 = vmatprep.subr.mxu0 0.0
    %3155 = vmatpush1.msra.mxu0 0.0
    %3156 = vmatprep.subr.mxu0 0.0
    %3157 = vmatpush1.msra.mxu0 0.0
    %3158 = vmatprep.subr.mxu0 0.0
    %3159 = vmatpush1.msra.mxu0 0.0
    %3160 = vmatprep.subr.mxu0 0.0
    %3161 = vmatpush1.msra.mxu0 0.0
    %3162 = vmatprep.subr.mxu0 0.0
    %3163 = vmatpush1.msra.mxu0 0.0
    %3164 = vmatprep.subr.mxu0 0.0
    %3165 = vmatpush1.msra.mxu0 0.0
    %3166 = vmatprep.subr.mxu0 0.0
    %3167 = vmatpush1.msra.mxu0 0.0
    %3168 = vmatprep.subr.mxu0 0.0
    %3169 = vmatpush1.msra.mxu0 0.0
    %3170 = vmatprep.subr.mxu0 0.0
    %3171 = vmatpush1.msra.mxu0 0.0
    %3172 = vmatprep.subr.mxu0 0.0
    %3173 = vmatpush1.msra.mxu0 0.0
    %3174 = vmatprep.subr.mxu0 0.0
    %3175 = vmatpush1.msra.mxu0 0.0
    %3176 = vmatprep.subr.mxu0 0.0
    %3177 = vmatpush1.msra.mxu0 0.0
    %3178 = vmatprep.subr.mxu0 0.0
    %3179 = vmatpush1.msra.mxu0 0.0
    %3180 = vmatprep.subr.mxu0 0.0
    %3181 = vmatpush1.msra.mxu0 0.0
    %3182 = vmatprep.subr.mxu0 0.0
    %3183 = vmatpush1.msra.mxu0 0.0
    %3184 = vmatprep.subr.mxu0 0.0
    %3185 = vmatpush1.msra.mxu0 0.0
    %3186 = vmatprep.subr.mxu0 0.0
    %3187 = vmatpush1.msra.mxu0 0.0
    %3188 = vmatprep.subr.mxu0 0.0
    %3189 = vmatpush1.msra.mxu0 0.0
    %3190 = vmatprep.subr.mxu0 0.0
    %3191 = vmatpush1.msra.mxu0 0.0
    %3192 = vmatprep.subr.mxu0 0.0
    %3193 = vmatpush1.msra.mxu0 0.0
    %3194 = vmatprep.subr.mxu0 0.0
    %3195 = vmatpush1.msra.mxu0 0.0
    %3196 = vmatprep.subr.mxu0 0.0
    %3197 = vmatpush1.msra.mxu0 0.0
    %3198 = vmatprep.mubr.f32.mxu0 0.0
    %3199 = vmatmul.mubr.f32.gmra.mrb[0].mxu0 %v3063
    %v3200 = vpop.f32.mrb[0].mxu0
    %v3201 = vadd.f32 %v3060, %v3200
    %v3202 = vpop.f32.mrb[0].mxu0
    %3203 = vmatprep.mubr.f32.mxu0 0.0
    %3204 = vmatmul.mubr.f32.gmra.mrb[0].mxu0 %v3066
    %v3205 = vpop.f32.mrb[0].mxu0
    %v3206 = vadd.f32 %v3060, %v3205
    %v3207 = vpop.f32.mrb[0].mxu0
    %3208 = vmatprep.mubr.f32.mxu0 0.0
    %3209 = vmatmul.mubr.f32.gmra.mrb[0].mxu0 %v3069
    %v3210 = vpop.f32.mrb[0].mxu0
    %v3211 = vadd.f32 %v3060, %v3210
    %v3212 = vpop.f32.mrb[0].mxu0
    %3213 = vmatprep.mubr.f32.mxu0 0.0
    %3214 = vmatmul.mubr.f32.gmra.mrb[0].mxu0 %v3072
    %v3215 = vpop.f32.mrb[0].mxu0
    %v3216 = vadd.f32 %v3060, %v3215
    %v3217 = vpop.f32.mrb[0].mxu0
    %3218 = vmatprep.mubr.f32.mxu0 0.0
    %3219 = vmatmul.mubr.f32.gmra.mrb[0].mxu0 %v3075
    %v3220 = vpop.f32.mrb[0].mxu0
    %v3221 = vadd.f32 %v3060, %v3220
    %v3222 = vpop.f32.mrb[0].mxu0
    %3223 = vmatprep.mubr.f32.mxu0 0.0
    %3224 = vmatmul.mubr.f32.gmra.mrb[0].mxu0 %v3078
    %v3225 = vpop.f32.mrb[0].mxu0
    %v3226 = vadd.f32 %v3060, %v3225
    %v3227 = vpop.f32.mrb[0].mxu0
    %3228 = vmatprep.mubr.f32.mxu0 0.0
    %3229 = vmatmul.mubr.f32.gmra.mrb[0].mxu0 %v3081
    %v3230 = vpop.f32.mrb[0].mxu0
    %v3231 = vadd.f32 %v3060, %v3230
    %v3232 = vpop.f32.mrb[0].mxu0
    %3233 = vmatprep.mubr.f32.mxu0 0.0
    %3234 = vmatmul.mubr.f32.gmra.mrb[0].mxu0 %v3084
    %v3235 = vpop.f32.mrb[0].mxu0
    %v3236 = vadd.f32 %v3060, %v3235
    %v3237 = vpop.f32.mrb[0].mxu0
    %3238 = vmatprep.mubr.f32.mxu0 0.0
    %3239 = vmatmul.mubr.f32.gmra.mrb[0].mxu0 %v3087
    %v3240 = vpop.f32.mrb[0].mxu0
    %v3241 = vadd.f32 %v3060, %v3240
    %v3242 = vpop.f32.mrb[0].mxu0
    %3243 = vmatprep.mubr.f32.mxu0 0.0
    %3244 = vmatmul.mubr.f32.gmra.mrb[0].mxu0 %v3090
    %v3245 = vpop.f32.mrb[0].mxu0
    %v3246 = vadd.f32 %v3060, %v3245
    %v3247 = vpop.f32.mrb[0].mxu0
    %3248 = vmatprep.mubr.f32.mxu0 0.0
    %3249 = vmatmul.mubr.f32.gmra.mrb[0].mxu0 %v3093
    %v3250 = vpop.f32.mrb[0].mxu0
    %v3251 = vadd.f32 %v3060, %v3250
    %v3252 = vpop.f32.mrb[0].mxu0
    %3253 = vmatprep.mubr.f32.mxu0 0.0
    %3254 = vmatmul.mubr.f32.gmra.mrb[0].mxu0 %v3096
    %v3255 = vpop.f32.mrb[0].mxu0
    %v3256 = vadd.f32 %v3060, %v3255
    %v3257 = vpop.f32.mrb[0].mxu0
    %3258 = vmatprep.mubr.f32.mxu0 0.0
    %3259 = vmatmul.mubr.f32.gmra.mrb[0].mxu0 %v3099
    %v3260 = vpop.f32.mrb[0].mxu0
    %v3261 = vadd.f32 %v3060, %v3260
    %v3262 = vpop.f32.mrb[0].mxu0
    %3263 = vmatprep.mubr.f32.mxu0 0.0
    %3264 = vmatmul.mubr.f32.gmra.mrb[0].mxu0 %v3102
    %v3265 = vpop.f32.mrb[0].mxu0
    %v3266 = vadd.f32 %v3060, %v3265
    %v3267 = vpop.f32.mrb[0].mxu0
    %3268 = vmatprep.mubr.f32.mxu0 0.0
    %3269 = vmatmul.mubr.f32.gmra.mrb[0].mxu0 %v3105
    %v3270 = vpop.f32.mrb[0].mxu0
    %v3271 = vadd.f32 %v3060, %v3270
    %v3272 = vpop.f32.mrb[0].mxu0
    %3273 = vmatprep.mubr.f32.mxu0 0.0
    %3274 = vmatmul.mubr.f32.gmra.mrb[0].mxu0 %v3108
    %v3275 = vpop.f32.mrb[0].mxu0
    %v3276 = vadd.f32 %v3060, %v3275
    %v3277 = vpop.f32.mrb[0].mxu0
    %3278 = vmatprep.mubr.f32.mxu0 0.0
    %3279 = vmatmul.mubr.f32.gmra.mrb[0].mxu0 %v3111
    %v3280 = vpop.f32.mrb[0].mxu0
    %v3281 = vadd.f32 %v3060, %v3280
    %v3282 = vpop.f32.mrb[0].mxu0
    %3283 = vmatprep.mubr.f32.mxu0 0.0
    %3284 = vmatmul.mubr.f32.gmra.mrb[0].mxu0 %v3114
    %v3285 = vpop.f32.mrb[0].mxu0
    %v3286 = vadd.f32 %v3060, %v3285
    %v3287 = vpop.f32.mrb[0].mxu0
    %3288 = vmatprep.mubr.f32.mxu0 0.0
    %3289 = vmatmul.mubr.f32.gmra.mrb[0].mxu0 %v3117
    %v3290 = vpop.f32.mrb[0].mxu0
    %v3291 = vadd.f32 %v3060, %v3290
    %v3292 = vpop.f32.mrb[0].mxu0
    %3293 = vmatprep.mubr.f32.mxu0 0.0
    %3294 = vmatmul.mubr.f32.gmra.mrb[0].mxu0 %v3120
    %v3295 = vpop.f32.mrb[0].mxu0
    %v3296 = vadd.f32 %v3060, %v3295
    %v3297 = vpop.f32.mrb[0].mxu0
    %3298 = vmatprep.mubr.f32.mxu0 0.0
    %3299 = vmatmul.mubr.f32.gmra.mrb[0].mxu0 %v3123
    %v3300 = vpop.f32.mrb[0].mxu0
    %v3301 = vadd.f32 %v3060, %v3300
    %v3302 = vpop.f32.mrb[0].mxu0
    %3303 = vmatprep.mubr.f32.mxu0 0.0
    %3304 = vmatmul.mubr.f32.gmra.mrb[0].mxu0 %v3126
    %v3305 = vpop.f32.mrb[0].mxu0
    %v3306 = vadd.f32 %v3060, %v3305
    %v3307 = vpop.f32.mrb[0].mxu0
    %3308 = vmatprep.mubr.f32.mxu0 0.0
    %3309 = vmatmul.mubr.f32.gmra.mrb[0].mxu0 %v3129
    %v3310 = vpop.f32.mrb[0].mxu0
    %v3311 = vadd.f32 %v3060, %v3310
    %v3312 = vpop.f32.mrb[0].mxu0
    %3313 = vmatprep.mubr.f32.mxu0 0.0
    %3314 = vmatmul.mubr.f32.gmra.mrb[0].mxu0 %v3132
    %v3315 = vpop.f32.mrb[0].mxu0
    %v3316 = vadd.f32 %v3060, %v3315
    %v3317 = vpop.f32.mrb[0].mxu0
    %3318 = vdwg.mxu0
    %v3319 = vtanh.pop %v3201
    %v3320 = vtanh.pop %v3206
    %v3321 = vtanh.pop %v3211
    %v3322 = vtanh.pop %v3216
    %v3323 = vtanh.pop %v3221
    %v3324 = vtanh.pop %v3226
    %v3325 = vtanh.pop %v3231
    %v3326 = vtanh.pop %v3236
    %v3327 = vtanh.pop %v3241
    %v3328 = vtanh.pop %v3246
    %v3329 = vtanh.pop %v3251
    %v3330 = vtanh.pop %v3256
    %v3331 = vtanh.pop %v3261
    %v3332 = vtanh.pop %v3266
    %v3333 = vtanh.pop %v3271
    %v3334 = vtanh.pop %v3276
    %v3335 = vtanh.pop %v3281
    %v3336 = vtanh.pop %v3286
    %v3337 = vtanh.pop %v3291
    %v3338 = vtanh.pop %v3296
    %v3339 = vtanh.pop %v3301
    %v3340 = vtanh.pop %v3306
    %v3341 = vtanh.pop %v3311
    %v3342 = vtanh.pop %v3316
    %v3344 = vlaneseq
    %v3345 = vshrl.u32 %v3344, 7
    %v3346 = vsub.s32 0, %v3345
    %v3347 = vrot.slane %v3055, %v3346
    %v3349 = vmul.f32 %v3319, %v3347
    %v3350 = vmul.f32 %v3320, %v3347
    %v3351 = vmul.f32 %v3321, %v3347
    %v3352 = vmul.f32 %v3322, %v3347
    %v3353 = vmul.f32 %v3323, %v3347
    %v3354 = vmul.f32 %v3324, %v3347
    %v3355 = vmul.f32 %v3325, %v3347
    %v3356 = vmul.f32 %v3326, %v3347
    %v3357 = vmul.f32 %v3327, %v3347
    %v3358 = vmul.f32 %v3328, %v3347
    %v3359 = vmul.f32 %v3329, %v3347
    %v3360 = vmul.f32 %v3330, %v3347
    %v3361 = vmul.f32 %v3331, %v3347
    %v3362 = vmul.f32 %v3332, %v3347
    %v3363 = vmul.f32 %v3333, %v3347
    %v3364 = vmul.f32 %v3334, %v3347
    %v3365 = vmul.f32 %v3335, %v3347
    %v3366 = vmul.f32 %v3336, %v3347
    %v3367 = vmul.f32 %v3337, %v3347
    %v3368 = vmul.f32 %v3338, %v3347
    %v3369 = vmul.f32 %v3339, %v3347
    %v3370 = vmul.f32 %v3340, %v3347
    %v3371 = vmul.f32 %v3341, %v3347
    %v3372 = vmul.f32 %v3342, %v3347
    %v3373 = vsel %vm445, %v3349, 0.0
    %3374 = vadd.xlane.f32.xlu0 %v3373
    %v3375 = vpop.xlane.xlu0 %3374
    %v3376 = vsel %vm445, %v3350, 0.0
    %3377 = vadd.xlane.f32.xlu0 %v3376
    %v3378 = vpop.xlane.xlu0 %3377
    %v3379 = vsel %vm445, %v3351, 0.0
    %3380 = vadd.xlane.f32.xlu0 %v3379
    %v3381 = vpop.xlane.xlu0 %3380
    %v3382 = vsel %vm445, %v3352, 0.0
    %3383 = vadd.xlane.f32.xlu0 %v3382
    %v3384 = vpop.xlane.xlu0 %3383
    %v3385 = vsel %vm445, %v3353, 0.0
    %3386 = vadd.xlane.f32.xlu0 %v3385
    %v3387 = vpop.xlane.xlu0 %3386
    %v3388 = vsel %vm445, %v3354, 0.0
    %3389 = vadd.xlane.f32.xlu0 %v3388
    %v3390 = vpop.xlane.xlu0 %3389
    %v3391 = vsel %vm445, %v3355, 0.0
    %3392 = vadd.xlane.f32.xlu0 %v3391
    %v3393 = vpop.xlane.xlu0 %3392
    %v3394 = vsel %vm445, %v3356, 0.0
    %3395 = vadd.xlane.f32.xlu0 %v3394
    %v3396 = vpop.xlane.xlu0 %3395
    %v3397 = vsel %vm445, %v3357, 0.0
    %3398 = vadd.xlane.f32.xlu0 %v3397
    %v3399 = vpop.xlane.xlu0 %3398
    %v3400 = vsel %vm445, %v3358, 0.0
    %3401 = vadd.xlane.f32.xlu0 %v3400
    %v3402 = vpop.xlane.xlu0 %3401
    %v3403 = vsel %vm445, %v3359, 0.0
    %3404 = vadd.xlane.f32.xlu0 %v3403
    %v3405 = vpop.xlane.xlu0 %3404
    %v3406 = vsel %vm445, %v3360, 0.0
    %3407 = vadd.xlane.f32.xlu0 %v3406
    %v3408 = vpop.xlane.xlu0 %3407
    %v3409 = vsel %vm445, %v3361, 0.0
    %3410 = vadd.xlane.f32.xlu0 %v3409
    %v3411 = vpop.xlane.xlu0 %3410
    %v3412 = vsel %vm445, %v3362, 0.0
    %3413 = vadd.xlane.f32.xlu0 %v3412
    %v3414 = vpop.xlane.xlu0 %3413
    %v3415 = vsel %vm445, %v3363, 0.0
    %3416 = vadd.xlane.f32.xlu0 %v3415
    %v3417 = vpop.xlane.xlu0 %3416
    %v3418 = vsel %vm445, %v3364, 0.0
    %3419 = vadd.xlane.f32.xlu0 %v3418
    %v3420 = vpop.xlane.xlu0 %3419
    %v3421 = vsel %vm445, %v3365, 0.0
    %3422 = vadd.xlane.f32.xlu0 %v3421
    %v3423 = vpop.xlane.xlu0 %3422
    %v3424 = vsel %vm445, %v3366, 0.0
    %3425 = vadd.xlane.f32.xlu0 %v3424
    %v3426 = vpop.xlane.xlu0 %3425
    %v3427 = vsel %vm445, %v3367, 0.0
    %3428 = vadd.xlane.f32.xlu0 %v3427
    %v3429 = vpop.xlane.xlu0 %3428
    %v3430 = vsel %vm445, %v3368, 0.0
    %3431 = vadd.xlane.f32.xlu0 %v3430
    %v3432 = vpop.xlane.xlu0 %3431
    %v3433 = vsel %vm445, %v3369, 0.0
    %3434 = vadd.xlane.f32.xlu0 %v3433
    %v3435 = vpop.xlane.xlu0 %3434
    %v3436 = vsel %vm445, %v3370, 0.0
    %3437 = vadd.xlane.f32.xlu0 %v3436
    %v3438 = vpop.xlane.xlu0 %3437
    %v3439 = vsel %vm445, %v3371, 0.0
    %3440 = vadd.xlane.f32.xlu0 %v3439
    %v3441 = vpop.xlane.xlu0 %3440
    %v3442 = vsel %vm445, %v3372, 0.0
    %3443 = vadd.xlane.f32.xlu0 %v3442
    %v3444 = vpop.xlane.xlu0 %3443
    %v3445 = vmax.f32 %v3375, %v3378
    %v3446 = vmax.f32 %v3445, %v3381
    %v3447 = vmax.f32 %v3446, %v3384
    %v3448 = vmax.f32 %v3447, %v3387
    %v3449 = vmax.f32 %v3448, %v3390
    %v3450 = vmax.f32 %v3449, %v3393
    %v3451 = vmax.f32 %v3450, %v3396
    %v3452 = vsub.f32 %v3375, %v3451
    %v3453 = vsub.f32 %v3378, %v3451
    %v3454 = vsub.f32 %v3381, %v3451
    %v3455 = vsub.f32 %v3384, %v3451
    %v3456 = vsub.f32 %v3387, %v3451
    %v3457 = vsub.f32 %v3390, %v3451
    %v3458 = vsub.f32 %v3393, %v3451
    %v3459 = vsub.f32 %v3396, %v3451
    %v3460 = vmul.f32 %v3452, 1.442695
    %v3461 = vpow.pop %v3460
    %v3462 = vmul.f32 %v3453, 1.442695
    %v3463 = vpow.pop %v3462
    %v3464 = vmul.f32 %v3454, 1.442695
    %v3465 = vpow.pop %v3464
    %v3466 = vmul.f32 %v3455, 1.442695
    %v3467 = vpow.pop %v3466
    %v3468 = vmul.f32 %v3456, 1.442695
    %v3469 = vpow.pop %v3468
    %v3470 = vmul.f32 %v3457, 1.442695
    %v3471 = vpow.pop %v3470
    %v3472 = vmul.f32 %v3458, 1.442695
    %v3473 = vpow.pop %v3472
    %v3474 = vmul.f32 %v3459, 1.442695
    %v3475 = vpow.pop %v3474
    %v3476 = vadd.f32 %v3461, %v3463
    %v3477 = vadd.f32 %v3476, %v3465
    %v3478 = vadd.f32 %v3477, %v3467
    %v3479 = vadd.f32 %v3478, %v3469
    %v3480 = vadd.f32 %v3479, %v3471
    %v3481 = vadd.f32 %v3480, %v3473
    %v3482 = vadd.f32 %v3481, %v3475
    %v3483 = vrcp.pop %v3482
    %v3484 = vmul.f32 1.0, %v3483
    %v3485 = vmul.f32 %v3461, %v3484
    %3487 = vset.pattern.permute.xlu0 0
    %3488 = vperm.xlu0 %3487, %v3485
    %v3489 = vpop.permute.xlu0 %3488
    %v3491 = vmul.f32 %v3489, %v1294
    %v3492 = vmul.f32 %v3463, %v3484
    %3494 = vset.pattern.permute.xlu0 0
    %3495 = vperm.xlu0 %3494, %v3492
    %v3496 = vpop.permute.xlu0 %3495
    %v3498 = vmul.f32 %v3496, %v1295
    %v3499 = vadd.f32 %v3491, %v3498
    %v3500 = vmul.f32 %v3465, %v3484
    %3502 = vset.pattern.permute.xlu0 0
    %3503 = vperm.xlu0 %3502, %v3500
    %v3504 = vpop.permute.xlu0 %3503
    %v3506 = vmul.f32 %v3504, %v1296
    %v3507 = vadd.f32 %v3499, %v3506
    %v3508 = vmul.f32 %v3467, %v3484
    %3510 = vset.pattern.permute.xlu0 0
    %3511 = vperm.xlu0 %3510, %v3508
    %v3512 = vpop.permute.xlu0 %3511
    %v3514 = vmul.f32 %v3512, %v1297
    %v3515 = vadd.f32 %v3507, %v3514
    %v3516 = vmul.f32 %v3469, %v3484
    %3518 = vset.pattern.permute.xlu0 0
    %3519 = vperm.xlu0 %3518, %v3516
    %v3520 = vpop.permute.xlu0 %3519
    %v3522 = vmul.f32 %v3520, %v1298
    %v3523 = vadd.f32 %v3515, %v3522
    %v3524 = vmul.f32 %v3471, %v3484
    %3526 = vset.pattern.permute.xlu0 0
    %3527 = vperm.xlu0 %3526, %v3524
    %v3528 = vpop.permute.xlu0 %3527
    %v3530 = vmul.f32 %v3528, %v1299
    %v3531 = vadd.f32 %v3523, %v3530
    %v3532 = vmul.f32 %v3473, %v3484
    %3534 = vset.pattern.permute.xlu0 0
    %3535 = vperm.xlu0 %3534, %v3532
    %v3536 = vpop.permute.xlu0 %3535
    %v3538 = vmul.f32 %v3536, %v1300
    %v3539 = vadd.f32 %v3531, %v3538
    %v3540 = vmul.f32 %v3475, %v3484
    %3542 = vset.pattern.permute.xlu0 0
    %3543 = vperm.xlu0 %3542, %v3540
    %v3544 = vpop.permute.xlu0 %3543
    %v3546 = vmul.f32 %v3544, %v1301
    %v3547 = vadd.f32 %v3539, %v3546
    %v3548 = vmax.f32 %v3399, %v3402
    %v3549 = vmax.f32 %v3548, %v3405
    %v3550 = vmax.f32 %v3549, %v3408
    %v3551 = vmax.f32 %v3550, %v3411
    %v3552 = vmax.f32 %v3551, %v3414
    %v3553 = vmax.f32 %v3552, %v3417
    %v3554 = vmax.f32 %v3553, %v3420
    %v3555 = vsub.f32 %v3399, %v3554
    %v3556 = vsub.f32 %v3402, %v3554
    %v3557 = vsub.f32 %v3405, %v3554
    %v3558 = vsub.f32 %v3408, %v3554
    %v3559 = vsub.f32 %v3411, %v3554
    %v3560 = vsub.f32 %v3414, %v3554
    %v3561 = vsub.f32 %v3417, %v3554
    %v3562 = vsub.f32 %v3420, %v3554
    %v3563 = vmul.f32 %v3555, 1.442695
    %v3564 = vpow.pop %v3563
    %v3565 = vmul.f32 %v3556, 1.442695
    %v3566 = vpow.pop %v3565
    %v3567 = vmul.f32 %v3557, 1.442695
    %v3568 = vpow.pop %v3567
    %v3569 = vmul.f32 %v3558, 1.442695
    %v3570 = vpow.pop %v3569
    %v3571 = vmul.f32 %v3559, 1.442695
    %v3572 = vpow.pop %v3571
    %v3573 = vmul.f32 %v3560, 1.442695
    %v3574 = vpow.pop %v3573
    %v3575 = vmul.f32 %v3561, 1.442695
    %v3576 = vpow.pop %v3575
    %v3577 = vmul.f32 %v3562, 1.442695
    %v3578 = vpow.pop %v3577
    %v3579 = vadd.f32 %v3564, %v3566
    %v3580 = vadd.f32 %v3579, %v3568
    %v3581 = vadd.f32 %v3580, %v3570
    %v3582 = vadd.f32 %v3581, %v3572
    %v3583 = vadd.f32 %v3582, %v3574
    %v3584 = vadd.f32 %v3583, %v3576
    %v3585 = vadd.f32 %v3584, %v3578
    %v3586 = vrcp.pop %v3585
    %v3587 = vmul.f32 1.0, %v3586
    %v3588 = vmul.f32 %v3564, %v3587
    %3590 = vset.pattern.permute.xlu0 0
    %3591 = vperm.xlu0 %3590, %v3588
    %v3592 = vpop.permute.xlu0 %3591
    %v3594 = vmul.f32 %v3592, %v2166
    %v3595 = vmul.f32 %v3566, %v3587
    %3597 = vset.pattern.permute.xlu0 0
    %3598 = vperm.xlu0 %3597, %v3595
    %v3599 = vpop.permute.xlu0 %3598
    %v3601 = vmul.f32 %v3599, %v2167
    %v3602 = vadd.f32 %v3594, %v3601
    %v3603 = vmul.f32 %v3568, %v3587
    %3605 = vset.pattern.permute.xlu0 0
    %3606 = vperm.xlu0 %3605, %v3603
    %v3607 = vpop.permute.xlu0 %3606
    %v3609 = vmul.f32 %v3607, %v2168
    %v3610 = vadd.f32 %v3602, %v3609
    %v3611 = vmul.f32 %v3570, %v3587
    %3613 = vset.pattern.permute.xlu0 0
    %3614 = vperm.xlu0 %3613, %v3611
    %v3615 = vpop.permute.xlu0 %3614
    %v3617 = vmul.f32 %v3615, %v2169
    %v3618 = vadd.f32 %v3610, %v3617
    %v3619 = vmul.f32 %v3572, %v3587
    %3621 = vset.pattern.permute.xlu0 0
    %3622 = vperm.xlu0 %3621, %v3619
    %v3623 = vpop.permute.xlu0 %3622
    %v3625 = vmul.f32 %v3623, %v2170
    %v3626 = vadd.f32 %v3618, %v3625
    %v3627 = vmul.f32 %v3574, %v3587
    %3629 = vset.pattern.permute.xlu0 0
    %3630 = vperm.xlu0 %3629, %v3627
    %v3631 = vpop.permute.xlu0 %3630
    %v3633 = vmul.f32 %v3631, %v2171
    %v3634 = vadd.f32 %v3626, %v3633
    %v3635 = vmul.f32 %v3576, %v3587
    %3637 = vset.pattern.permute.xlu0 0
    %3638 = vperm.xlu0 %3637, %v3635
    %v3639 = vpop.permute.xlu0 %3638
    %v3641 = vmul.f32 %v3639, %v2172
    %v3642 = vadd.f32 %v3634, %v3641
    %v3643 = vmul.f32 %v3578, %v3587
    %3645 = vset.pattern.permute.xlu0 0
    %3646 = vperm.xlu0 %3645, %v3643
    %v3647 = vpop.permute.xlu0 %3646
    %v3649 = vmul.f32 %v3647, %v2173
    %v3650 = vadd.f32 %v3642, %v3649
    %v3651 = vmax.f32 %v3423, %v3426
    %v3652 = vmax.f32 %v3651, %v3429
    %v3653 = vmax.f32 %v3652, %v3432
    %v3654 = vmax.f32 %v3653, %v3435
    %v3655 = vmax.f32 %v3654, %v3438
    %v3656 = vmax.f32 %v3655, %v3441
    %v3657 = vmax.f32 %v3656, %v3444
    %v3658 = vsub.f32 %v3423, %v3657
    %v3659 = vsub.f32 %v3426, %v3657
    %v3660 = vsub.f32 %v3429, %v3657
    %v3661 = vsub.f32 %v3432, %v3657
    %v3662 = vsub.f32 %v3435, %v3657
    %v3663 = vsub.f32 %v3438, %v3657
    %v3664 = vsub.f32 %v3441, %v3657
    %v3665 = vsub.f32 %v3444, %v3657
    %v3666 = vmul.f32 %v3658, 1.442695
    %v3667 = vpow.pop %v3666
    %v3668 = vmul.f32 %v3659, 1.442695
    %v3669 = vpow.pop %v3668
    %v3670 = vmul.f32 %v3660, 1.442695
    %v3671 = vpow.pop %v3670
    %v3672 = vmul.f32 %v3661, 1.442695
    %v3673 = vpow.pop %v3672
    %v3674 = vmul.f32 %v3662, 1.442695
    %v3675 = vpow.pop %v3674
    %v3676 = vmul.f32 %v3663, 1.442695
    %v3677 = vpow.pop %v3676
    %v3678 = vmul.f32 %v3664, 1.442695
    %v3679 = vpow.pop %v3678
    %v3680 = vmul.f32 %v3665, 1.442695
    %v3681 = vpow.pop %v3680
    %v3682 = vadd.f32 %v3667, %v3669
    %v3683 = vadd.f32 %v3682, %v3671
    %v3684 = vadd.f32 %v3683, %v3673
    %v3685 = vadd.f32 %v3684, %v3675
    %v3686 = vadd.f32 %v3685, %v3677
    %v3687 = vadd.f32 %v3686, %v3679
    %v3688 = vadd.f32 %v3687, %v3681
    %v3689 = vrcp.pop %v3688
    %v3690 = vmul.f32 1.0, %v3689
    %v3691 = vmul.f32 %v3667, %v3690
    %3693 = vset.pattern.permute.xlu0 0
    %3694 = vperm.xlu0 %3693, %v3691
    %v3695 = vpop.permute.xlu0 %3694
    %v3697 = vmul.f32 %v3695, %v3038
    %v3698 = vmul.f32 %v3669, %v3690
    %3700 = vset.pattern.permute.xlu0 0
    %3701 = vperm.xlu0 %3700, %v3698
    %v3702 = vpop.permute.xlu0 %3701
    %v3704 = vmul.f32 %v3702, %v3039
    %v3705 = vadd.f32 %v3697, %v3704
    %v3706 = vmul.f32 %v3671, %v3690
    %3708 = vset.pattern.permute.xlu0 0
    %3709 = vperm.xlu0 %3708, %v3706
    %v3710 = vpop.permute.xlu0 %3709
    %v3712 = vmul.f32 %v3710, %v3040
    %v3713 = vadd.f32 %v3705, %v3712
    %v3714 = vmul.f32 %v3673, %v3690
    %3716 = vset.pattern.permute.xlu0 0
    %3717 = vperm.xlu0 %3716, %v3714
    %v3718 = vpop.permute.xlu0 %3717
    %v3720 = vmul.f32 %v3718, %v3041
    %v3721 = vadd.f32 %v3713, %v3720
    %v3722 = vmul.f32 %v3675, %v3690
    %3724 = vset.pattern.permute.xlu0 0
    %3725 = vperm.xlu0 %3724, %v3722
    %v3726 = vpop.permute.xlu0 %3725
    %v3728 = vmul.f32 %v3726, %v3042
    %v3729 = vadd.f32 %v3721, %v3728
    %v3730 = vmul.f32 %v3677, %v3690
    %3732 = vset.pattern.permute.xlu0 0
    %3733 = vperm.xlu0 %3732, %v3730
    %v3734 = vpop.permute.xlu0 %3733
    %v3736 = vmul.f32 %v3734, %v3043
    %v3737 = vadd.f32 %v3729, %v3736
    %v3738 = vmul.f32 %v3679, %v3690
    %3740 = vset.pattern.permute.xlu0 0
    %3741 = vperm.xlu0 %3740, %v3738
    %v3742 = vpop.permute.xlu0 %3741
    %v3744 = vmul.f32 %v3742, %v3044
    %v3745 = vadd.f32 %v3737, %v3744
    %v3746 = vmul.f32 %v3681, %v3690
    %3748 = vset.pattern.permute.xlu0 0
    %3749 = vperm.xlu0 %3748, %v3746
    %v3750 = vpop.permute.xlu0 %3749
    %v3752 = vmul.f32 %v3750, %v3045
    %v3753 = vadd.f32 %v3745, %v3752
    %v3754 = vld [vmem:[%s7] sm:$0xff]
    %v3755 = vld [vmem:[%s7 + $0x8] sm:$0xff]
    %v3756 = vld [vmem:[%s7 + $0x10] sm:$0xff]
    %v3757 = vld [vmem:[%s7 + $0x18] sm:$0xff]
    %v3758 = vld [vmem:[%s7 + $0x20] sm:$0xff]
    %v3759 = vld [vmem:[%s7 + $0x28] sm:$0xff]
    %v3760 = vld [vmem:[%s7 + $0x30] sm:$0xff]
    %v3761 = vld [vmem:[%s7 + $0x38] sm:$0xff]
    %v3762 = vld [vmem:[%s7 + $0x40] sm:$0xff]
    %v3763 = vld [vmem:[%s7 + $0x48] sm:$0xff]
    %v3764 = vld [vmem:[%s7 + $0x50] sm:$0xff]
    %v3765 = vld [vmem:[%s7 + $0x58] sm:$0xff]
    %v3766 = vld [vmem:[%s7 + $0x60] sm:$0xff]
    %v3767 = vld [vmem:[%s7 + $0x68] sm:$0xff]
    %v3768 = vld [vmem:[%s7 + $0x70] sm:$0xff]
    %v3769 = vld [vmem:[%s7 + $0x78] sm:$0xff]
    %v3770 = vld [vmem:[%s9] sm:$0x3]
    %v3772 = vlaneseq
    %v3773 = vshrl.u32 %v3772, 7
    %v3774 = vsub.s32 0, %v3773
    %v3775 = vrot.slane %v3770, %v3774
    %v3776 = vlaneseq
    %v3777 = vshrl.u32 %v3776, 7
    %v3778 = vsub.s32 1, %v3777
    %v3779 = vrot.slane %v3770, %v3778
    %v3783 = vsel %vm445, %v3547, 0
    %v3786 = vsel %vm445, %v3650, 0
    %v3789 = vsel %vm445, %v3753, 0
    %3791 = vmatprep.subr.mxu0 %v3755
    %3792 = vmatpush1.msra.mxu0 %v3754
    %3793 = vmatprep.subr.mxu0 %v3757
    %3794 = vmatpush1.msra.mxu0 %v3756
    %3795 = vmatprep.subr.mxu0 %v3759
    %3796 = vmatpush1.msra.mxu0 %v3758
    %3797 = vmatprep.subr.mxu0 %v3761
    %3798 = vmatpush1.msra.mxu0 %v3760
    %3799 = vmatprep.subr.mxu0 %v3763
    %3800 = vmatpush1.msra.mxu0 %v3762
    %3801 = vmatprep.subr.mxu0 %v3765
    %3802 = vmatpush1.msra.mxu0 %v3764
    %3803 = vmatprep.subr.mxu0 %v3767
    %3804 = vmatpush1.msra.mxu0 %v3766
    %3805 = vmatprep.subr.mxu0 %v3769
    %3806 = vmatpush1.msra.mxu0 %v3768
    %3807 = vmatprep.subr.mxu0 0.0
    %3808 = vmatpush1.msra.mxu0 0.0
    %3809 = vmatprep.subr.mxu0 0.0
    %3810 = vmatpush1.msra.mxu0 0.0
    %3811 = vmatprep.subr.mxu0 0.0
    %3812 = vmatpush1.msra.mxu0 0.0
    %3813 = vmatprep.subr.mxu0 0.0
    %3814 = vmatpush1.msra.mxu0 0.0
    %3815 = vmatprep.subr.mxu0 0.0
    %3816 = vmatpush1.msra.mxu0 0.0
    %3817 = vmatprep.subr.mxu0 0.0
    %3818 = vmatpush1.msra.mxu0 0.0
    %3819 = vmatprep.subr.mxu0 0.0
    %3820 = vmatpush1.msra.mxu0 0.0
    %3821 = vmatprep.subr.mxu0 0.0
    %3822 = vmatpush1.msra.mxu0 0.0
    %3823 = vmatprep.subr.mxu0 0.0
    %3824 = vmatpush1.msra.mxu0 0.0
    %3825 = vmatprep.subr.mxu0 0.0
    %3826 = vmatpush1.msra.mxu0 0.0
    %3827 = vmatprep.subr.mxu0 0.0
    %3828 = vmatpush1.msra.mxu0 0.0
    %3829 = vmatprep.subr.mxu0 0.0
    %3830 = vmatpush1.msra.mxu0 0.0
    %3831 = vmatprep.subr.mxu0 0.0
    %3832 = vmatpush1.msra.mxu0 0.0
    %3833 = vmatprep.subr.mxu0 0.0
    %3834 = vmatpush1.msra.mxu0 0.0
    %3835 = vmatprep.subr.mxu0 0.0
    %3836 = vmatpush1.msra.mxu0 0.0
    %3837 = vmatprep.subr.mxu0 0.0
    %3838 = vmatpush1.msra.mxu0 0.0
    %3839 = vmatprep.subr.mxu0 0.0
    %3840 = vmatpush1.msra.mxu0 0.0
    %3841 = vmatprep.subr.mxu0 0.0
    %3842 = vmatpush1.msra.mxu0 0.0
    %3843 = vmatprep.subr.mxu0 0.0
    %3844 = vmatpush1.msra.mxu0 0.0
    %3845 = vmatprep.subr.mxu0 0.0
    %3846 = vmatpush1.msra.mxu0 0.0
    %3847 = vmatprep.subr.mxu0 0.0
    %3848 = vmatpush1.msra.mxu0 0.0
    %3849 = vmatprep.subr.mxu0 0.0
    %3850 = vmatpush1.msra.mxu0 0.0
    %3851 = vmatprep.subr.mxu0 0.0
    %3852 = vmatpush1.msra.mxu0 0.0
    %3853 = vmatprep.subr.mxu0 0.0
    %3854 = vmatpush1.msra.mxu0 0.0
    %3855 = vmatprep.mubr.f32.mxu0 0.0
    %3856 = vmatmul.mubr.f32.gmra.mrb[0].mxu0 %v3783
    %v3857 = vpop.f32.mrb[0].mxu0
    %v3858 = vadd.f32 %v3775, %v3857
    %v3859 = vpop.f32.mrb[0].mxu0
    %v3860 = vadd.f32 %v3779, %v3859
    %3861 = vmatprep.mubr.f32.mxu0 0.0
    %3862 = vmatmul.mubr.f32.gmra.mrb[0].mxu0 %v3786
    %v3863 = vpop.f32.mrb[0].mxu0
    %v3864 = vadd.f32 %v3775, %v3863
    %v3865 = vpop.f32.mrb[0].mxu0
    %v3866 = vadd.f32 %v3779, %v3865
    %3867 = vmatprep.mubr.f32.mxu0 0.0
    %3868 = vmatmul.mubr.f32.gmra.mrb[0].mxu0 %v3789
    %v3869 = vpop.f32.mrb[0].mxu0
    %v3870 = vadd.f32 %v3775, %v3869
    %v3871 = vpop.f32.mrb[0].mxu0
    %v3872 = vadd.f32 %v3779, %v3871
    %3873 = vdwg.mxu0
    %v3874 = vld [vmem:[%s8] sm:$0xff]
    %v3875 = vld [vmem:[%s8 + $0x8] sm:$0xff]
    %v3876 = vld [vmem:[%s8 + $0x10] sm:$0xff]
    %v3877 = vld [vmem:[%s8 + $0x18] sm:$0xff]
    %v3878 = vld [vmem:[%s8 + $0x20] sm:$0xff]
    %v3879 = vld [vmem:[%s8 + $0x28] sm:$0xff]
    %v3880 = vld [vmem:[%s8 + $0x30] sm:$0xff]
    %v3881 = vld [vmem:[%s8 + $0x38] sm:$0xff]
    %v3882 = vld [vmem:[%s8 + $0x40] sm:$0xff]
    %v3883 = vld [vmem:[%s8 + $0x48] sm:$0xff]
    %v3884 = vld [vmem:[%s8 + $0x50] sm:$0xff]
    %v3885 = vld [vmem:[%s8 + $0x58] sm:$0xff]
    %v3886 = vld [vmem:[%s8 + $0x60] sm:$0xff]
    %v3887 = vld [vmem:[%s8 + $0x68] sm:$0xff]
    %v3888 = vld [vmem:[%s8 + $0x70] sm:$0xff]
    %v3889 = vld [vmem:[%s8 + $0x78] sm:$0xff]
    %v3890 = vsel %vm427, %v3858, %v3870
    %v3891 = vsel %vm428, %v3860, %v3872
    %v3892 = vsel %vm427, %v3870, %v3858
    %v3893 = vsel %vm428, %v3872, %v3860
    %3894 = vmatprep.subr.mxu0 %v3875
    %3895 = vmatpush1.msra.mxu0 %v3874
    %3896 = vmatprep.subr.mxu0 %v3877
    %3897 = vmatpush1.msra.mxu0 %v3876
    %3898 = vmatprep.subr.mxu0 %v3879
    %3899 = vmatpush1.msra.mxu0 %v3878
    %3900 = vmatprep.subr.mxu0 %v3881
    %3901 = vmatpush1.msra.mxu0 %v3880
    %3902 = vmatprep.subr.mxu0 %v3883
    %3903 = vmatpush1.msra.mxu0 %v3882
    %3904 = vmatprep.subr.mxu0 %v3885
    %3905 = vmatpush1.msra.mxu0 %v3884
    %3906 = vmatprep.subr.mxu0 %v3887
    %3907 = vmatpush1.msra.mxu0 %v3886
    %3908 = vmatprep.subr.mxu0 %v3889
    %3909 = vmatpush1.msra.mxu0 %v3888
    %3910 = vmatprep.subr.mxu0 0.0
    %3911 = vmatpush1.msra.mxu0 0.0
    %3912 = vmatprep.subr.mxu0 0.0
    %3913 = vmatpush1.msra.mxu0 0.0
    %3914 = vmatprep.subr.mxu0 0.0
    %3915 = vmatpush1.msra.mxu0 0.0
    %3916 = vmatprep.subr.mxu0 0.0
    %3917 = vmatpush1.msra.mxu0 0.0
    %3918 = vmatprep.subr.mxu0 0.0
    %3919 = vmatpush1.msra.mxu0 0.0
    %3920 = vmatprep.subr.mxu0 0.0
    %3921 = vmatpush1.msra.mxu0 0.0
    %3922 = vmatprep.subr.mxu0 0.0
    %3923 = vmatpush1.msra.mxu0 0.0
    %3924 = vmatprep.subr.mxu0 0.0
    %3925 = vmatpush1.msra.mxu0 0.0
    %3926 = vmatprep.subr.mxu0 0.0
    %3927 = vmatpush1.msra.mxu0 0.0
    %3928 = vmatprep.subr.mxu0 0.0
    %3929 = vmatpush1.msra.mxu0 0.0
    %3930 = vmatprep.subr.mxu0 0.0
    %3931 = vmatpush1.msra.mxu0 0.0
    %3932 = vmatprep.subr.mxu0 0.0
    %3933 = vmatpush1.msra.mxu0 0.0
    %3934 = vmatprep.subr.mxu0 0.0
    %3935 = vmatpush1.msra.mxu0 0.0
    %3936 = vmatprep.subr.mxu0 0.0
    %3937 = vmatpush1.msra.mxu0 0.0
    %3938 = vmatprep.subr.mxu0 0.0
    %3939 = vmatpush1.msra.mxu0 0.0
    %3940 = vmatprep.subr.mxu0 0.0
    %3941 = vmatpush1.msra.mxu0 0.0
    %3942 = vmatprep.subr.mxu0 0.0
    %3943 = vmatpush1.msra.mxu0 0.0
    %3944 = vmatprep.subr.mxu0 0.0
    %3945 = vmatpush1.msra.mxu0 0.0
    %3946 = vmatprep.subr.mxu0 0.0
    %3947 = vmatpush1.msra.mxu0 0.0
    %3948 = vmatprep.subr.mxu0 0.0
    %3949 = vmatpush1.msra.mxu0 0.0
    %3950 = vmatprep.subr.mxu0 0.0
    %3951 = vmatpush1.msra.mxu0 0.0
    %3952 = vmatprep.subr.mxu0 0.0
    %3953 = vmatpush1.msra.mxu0 0.0
    %3954 = vmatprep.subr.mxu0 0.0
    %3955 = vmatpush1.msra.mxu0 0.0
    %3956 = vmatprep.subr.mxu0 0.0
    %3957 = vmatpush1.msra.mxu0 0.0
    %3958 = vmatprep.mubr.f32.mxu0 0.0
    %3959 = vmatmul.mubr.f32.gmra.mrb[0].mxu0 %v447
    %v3960 = vpop.f32.mrb[0].mxu0
    %v3961 = vadd.f32 0.0, %v3960
    %v3962 = vpop.f32.mrb[0].mxu0
    %v3963 = vadd.f32 0.0, %v3962
    %3964 = vdwg.mxu0
    %v3965 = vadd.f32 %v3890, %v3961
    %v3966 = vadd.f32 %v3891, %v3963
    %v3967 = vxor.u32 %v3965, 2147483648
    %v3968 = vxor.u32 %v3966, 2147483648
    %v3969 = vmul.f32 %v3967, 1.442695
    %v3970 = vpow.pop %v3969
    %v3971 = vmul.f32 %v3968, 1.442695
    %v3972 = vpow.pop %v3971
    %v3973 = vadd.f32 %v3970, 1.0
    %v3974 = vadd.f32 %v3972, 1.0
    %v3975 = vrcp.pop %v3973
    %v3976 = vmul.f32 1.0, %v3975
    %v3977 = vrcp.pop %v3974
    %v3978 = vmul.f32 1.0, %v3977
    %v3979 = vtanh.pop %v3966
    %v3980 = vmul.f32 %v3976, 0.0
    %3982 = vrot.lane.b32.xlu0 %v3979, 64
    %v3983 = vpop.permute.xlu0 %3982
    %v3985 = vmul.f32 %v3976, %v3983
    %3987 = vrot.lane.b32.xlu0 %v3985, 64
    %v3988 = vpop.permute.xlu0 %3987
    %v3990 = vadd.f32 %v3980, %v3988
    %v3991 = vtanh.pop %v3990
    %3993 = vrot.lane.b32.xlu0 %v3991, 64
    %v3994 = vpop.permute.xlu0 %3993
    %v3996 = vmul.f32 %v3978, %v3994
    %v3998 = vsel %vm445, %v3996, 0
    %4000 = vmatprep.subr.mxu0 %v3875
    %4001 = vmatpush1.msra.mxu0 %v3874
    %4002 = vmatprep.subr.mxu0 %v3877
    %4003 = vmatpush1.msra.mxu0 %v3876
    %4004 = vmatprep.subr.mxu0 %v3879
    %4005 = vmatpush1.msra.mxu0 %v3878
    %4006 = vmatprep.subr.mxu0 %v3881
    %4007 = vmatpush1.msra.mxu0 %v3880
    %4008 = vmatprep.subr.mxu0 %v3883
    %4009 = vmatpush1.msra.mxu0 %v3882
    %4010 = vmatprep.subr.mxu0 %v3885
    %4011 = vmatpush1.msra.mxu0 %v3884
    %4012 = vmatprep.subr.mxu0 %v3887
    %4013 = vmatpush1.msra.mxu0 %v3886
    %4014 = vmatprep.subr.mxu0 %v3889
    %4015 = vmatpush1.msra.mxu0 %v3888
    %4016 = vmatprep.subr.mxu0 0.0
    %4017 = vmatpush1.msra.mxu0 0.0
    %4018 = vmatprep.subr.mxu0 0.0
    %4019 = vmatpush1.msra.mxu0 0.0
    %4020 = vmatprep.subr.mxu0 0.0
    %4021 = vmatpush1.msra.mxu0 0.0
    %4022 = vmatprep.subr.mxu0 0.0
    %4023 = vmatpush1.msra.mxu0 0.0
    %4024 = vmatprep.subr.mxu0 0.0
    %4025 = vmatpush1.msra.mxu0 0.0
    %4026 = vmatprep.subr.mxu0 0.0
    %4027 = vmatpush1.msra.mxu0 0.0
    %4028 = vmatprep.subr.mxu0 0.0
    %4029 = vmatpush1.msra.mxu0 0.0
    %4030 = vmatprep.subr.mxu0 0.0
    %4031 = vmatpush1.msra.mxu0 0.0
    %4032 = vmatprep.subr.mxu0 0.0
    %4033 = vmatpush1.msra.mxu0 0.0
    %4034 = vmatprep.subr.mxu0 0.0
    %4035 = vmatpush1.msra.mxu0 0.0
    %4036 = vmatprep.subr.mxu0 0.0
    %4037 = vmatpush1.msra.mxu0 0.0
    %4038 = vmatprep.subr.mxu0 0.0
    %4039 = vmatpush1.msra.mxu0 0.0
    %4040 = vmatprep.subr.mxu0 0.0
    %4041 = vmatpush1.msra.mxu0 0.0
    %4042 = vmatprep.subr.mxu0 0.0
    %4043 = vmatpush1.msra.mxu0 0.0
    %4044 = vmatprep.subr.mxu0 0.0
    %4045 = vmatpush1.msra.mxu0 0.0
    %4046 = vmatprep.subr.mxu0 0.0
    %4047 = vmatpush1.msra.mxu0 0.0
    %4048 = vmatprep.subr.mxu0 0.0
    %4049 = vmatpush1.msra.mxu0 0.0
    %4050 = vmatprep.subr.mxu0 0.0
    %4051 = vmatpush1.msra.mxu0 0.0
    %4052 = vmatprep.subr.mxu0 0.0
    %4053 = vmatpush1.msra.mxu0 0.0
    %4054 = vmatprep.subr.mxu0 0.0
    %4055 = vmatpush1.msra.mxu0 0.0
    %4056 = vmatprep.subr.mxu0 0.0
    %4057 = vmatpush1.msra.mxu0 0.0
    %4058 = vmatprep.subr.mxu0 0.0
    %4059 = vmatpush1.msra.mxu0 0.0
    %4060 = vmatprep.subr.mxu0 0.0
    %4061 = vmatpush1.msra.mxu0 0.0
    %4062 = vmatprep.subr.mxu0 0.0
    %4063 = vmatpush1.msra.mxu0 0.0
    %4064 = vmatprep.mubr.f32.mxu0 0.0
    %4065 = vmatmul.mubr.f32.gmra.mrb[0].mxu0 %v3998
    %v4066 = vpop.f32.mrb[0].mxu0
    %v4067 = vadd.f32 0.0, %v4066
    %v4068 = vpop.f32.mrb[0].mxu0
    %v4069 = vadd.f32 0.0, %v4068
    %4070 = vdwg.mxu0
    %v4071 = vadd.f32 %v3864, %v4067
    %v4072 = vadd.f32 %v3866, %v4069
    %v4073 = vxor.u32 %v4071, 2147483648
    %v4074 = vxor.u32 %v4072, 2147483648
    %v4075 = vmul.f32 %v4073, 1.442695
    %v4076 = vpow.pop %v4075
    %v4077 = vmul.f32 %v4074, 1.442695
    %v4078 = vpow.pop %v4077
    %v4079 = vadd.f32 %v4076, 1.0
    %v4080 = vadd.f32 %v4078, 1.0
    %v4081 = vrcp.pop %v4079
    %v4082 = vmul.f32 1.0, %v4081
    %v4083 = vrcp.pop %v4080
    %v4084 = vmul.f32 1.0, %v4083
    %v4085 = vtanh.pop %v4072
    %v4086 = vmul.f32 %v4082, %v3990
    %4088 = vrot.lane.b32.xlu0 %v4085, 64
    %v4089 = vpop.permute.xlu0 %4088
    %v4091 = vmul.f32 %v4082, %v4089
    %4093 = vrot.lane.b32.xlu0 %v4091, 64
    %v4094 = vpop.permute.xlu0 %4093
    %v4096 = vadd.f32 %v4086, %v4094
    %v4097 = vtanh.pop %v4096
    %4099 = vrot.lane.b32.xlu0 %v4097, 64
    %v4100 = vpop.permute.xlu0 %4099
    %v4102 = vmul.f32 %v4084, %v4100
    %v4104 = vsel %vm445, %v4102, 0
    %4106 = vmatprep.subr.mxu0 %v3875
    %4107 = vmatpush1.msra.mxu0 %v3874
    %4108 = vmatprep.subr.mxu0 %v3877
    %4109 = vmatpush1.msra.mxu0 %v3876
    %4110 = vmatprep.subr.mxu0 %v3879
    %4111 = vmatpush1.msra.mxu0 %v3878
    %4112 = vmatprep.subr.mxu0 %v3881
    %4113 = vmatpush1.msra.mxu0 %v3880
    %4114 = vmatprep.subr.mxu0 %v3883
    %4115 = vmatpush1.msra.mxu0 %v3882
    %4116 = vmatprep.subr.mxu0 %v3885
    %4117 = vmatpush1.msra.mxu0 %v3884
    %4118 = vmatprep.subr.mxu0 %v3887
    %4119 = vmatpush1.msra.mxu0 %v3886
    %4120 = vmatprep.subr.mxu0 %v3889
    %4121 = vmatpush1.msra.mxu0 %v3888
    %4122 = vmatprep.subr.mxu0 0.0
    %4123 = vmatpush1.msra.mxu0 0.0
    %4124 = vmatprep.subr.mxu0 0.0
    %4125 = vmatpush1.msra.mxu0 0.0
    %4126 = vmatprep.subr.mxu0 0.0
    %4127 = vmatpush1.msra.mxu0 0.0
    %4128 = vmatprep.subr.mxu0 0.0
    %4129 = vmatpush1.msra.mxu0 0.0
    %4130 = vmatprep.subr.mxu0 0.0
    %4131 = vmatpush1.msra.mxu0 0.0
    %4132 = vmatprep.subr.mxu0 0.0
    %4133 = vmatpush1.msra.mxu0 0.0
    %4134 = vmatprep.subr.mxu0 0.0
    %4135 = vmatpush1.msra.mxu0 0.0
    %4136 = vmatprep.subr.mxu0 0.0
    %4137 = vmatpush1.msra.mxu0 0.0
    %4138 = vmatprep.subr.mxu0 0.0
    %4139 = vmatpush1.msra.mxu0 0.0
    %4140 = vmatprep.subr.mxu0 0.0
    %4141 = vmatpush1.msra.mxu0 0.0
    %4142 = vmatprep.subr.mxu0 0.0
    %4143 = vmatpush1.msra.mxu0 0.0
    %4144 = vmatprep.subr.mxu0 0.0
    %4145 = vmatpush1.msra.mxu0 0.0
    %4146 = vmatprep.subr.mxu0 0.0
    %4147 = vmatpush1.msra.mxu0 0.0
    %4148 = vmatprep.subr.mxu0 0.0
    %4149 = vmatpush1.msra.mxu0 0.0
    %4150 = vmatprep.subr.mxu0 0.0
    %4151 = vmatpush1.msra.mxu0 0.0
    %4152 = vmatprep.subr.mxu0 0.0
    %4153 = vmatpush1.msra.mxu0 0.0
    %4154 = vmatprep.subr.mxu0 0.0
    %4155 = vmatpush1.msra.mxu0 0.0
    %4156 = vmatprep.subr.mxu0 0.0
    %4157 = vmatpush1.msra.mxu0 0.0
    %4158 = vmatprep.subr.mxu0 0.0
    %4159 = vmatpush1.msra.mxu0 0.0
    %4160 = vmatprep.subr.mxu0 0.0
    %4161 = vmatpush1.msra.mxu0 0.0
    %4162 = vmatprep.subr.mxu0 0.0
    %4163 = vmatpush1.msra.mxu0 0.0
    %4164 = vmatprep.subr.mxu0 0.0
    %4165 = vmatpush1.msra.mxu0 0.0
    %4166 = vmatprep.subr.mxu0 0.0
    %4167 = vmatpush1.msra.mxu0 0.0
    %4168 = vmatprep.subr.mxu0 0.0
    %4169 = vmatpush1.msra.mxu0 0.0
    %4170 = vmatprep.mubr.f32.mxu0 0.0
    %4171 = vmatmul.mubr.f32.gmra.mrb[0].mxu0 %v4104
    %v4172 = vpop.f32.mrb[0].mxu0
    %v4173 = vadd.f32 0.0, %v4172
    %v4174 = vpop.f32.mrb[0].mxu0
    %v4175 = vadd.f32 0.0, %v4174
    %4176 = vdwg.mxu0
    %v4177 = vadd.f32 %v3892, %v4173
    %v4178 = vadd.f32 %v3893, %v4175
    %v4179 = vxor.u32 %v4177, 2147483648
    %v4180 = vxor.u32 %v4178, 2147483648
    %v4181 = vmul.f32 %v4179, 1.442695
    %v4182 = vpow.pop %v4181
    %v4183 = vmul.f32 %v4180, 1.442695
    %v4184 = vpow.pop %v4183
    %v4185 = vadd.f32 %v4182, 1.0
    %v4186 = vadd.f32 %v4184, 1.0
    %v4187 = vrcp.pop %v4185
    %v4188 = vmul.f32 1.0, %v4187
    %v4189 = vrcp.pop %v4186
    %v4190 = vmul.f32 1.0, %v4189
    %v4191 = vtanh.pop %v4178
    %v4192 = vmul.f32 %v4188, %v4096
    %4194 = vrot.lane.b32.xlu0 %v4191, 64
    %v4195 = vpop.permute.xlu0 %4194
    %v4197 = vmul.f32 %v4188, %v4195
    %4199 = vrot.lane.b32.xlu0 %v4197, 64
    %v4200 = vpop.permute.xlu0 %4199
    %v4202 = vadd.f32 %v4192, %v4200
    %v4203 = vtanh.pop %v4202
    %4205 = vrot.lane.b32.xlu0 %v4203, 64
    %v4206 = vpop.permute.xlu0 %4205
    %v4208 = vmul.f32 %v4190, %v4206
    %v4209 = vsel %vm190, %v3996, %v4208
    %v4210 = vsel %vm190, %v4208, %v3996
    %v4211 = vld [vmem:[%s10] sm:$0xff]
    %v4212 = vld [vmem:[%s10 + $0x8] sm:$0xff]
    %v4213 = vld [vmem:[%s10 + $0x10] sm:$0xff]
    %v4214 = vld [vmem:[%s10 + $0x18] sm:$0xff]
    %v4215 = vld [vmem:[%s10 + $0x20] sm:$0xff]
    %v4216 = vld [vmem:[%s10 + $0x28] sm:$0xff]
    %v4217 = vld [vmem:[%s10 + $0x30] sm:$0xff]
    %v4218 = vld [vmem:[%s10 + $0x38] sm:$0xff]
    %v4219 = vld [vmem:[%s11] sm:$0x1]
    %v4220 = vld [vmem:[%s12] sm:$0x1]
    %v4222 = vlaneseq
    %v4223 = vshrl.u32 %v4222, 7
    %v4224 = vsub.s32 0, %v4223
    %v4225 = vrot.slane %v4219, %v4224
    %v4228 = vsel %vm445, %v4209, 0
    %v4231 = vsel %vm445, %v4210, 0
    %4233 = vmatprep.subr.mxu0 0.0
    %4234 = vmatpush1.msra.mxu0 %v4211
    %4235 = vmatprep.subr.mxu0 0.0
    %4236 = vmatpush1.msra.mxu0 %v4212
    %4237 = vmatprep.subr.mxu0 0.0
    %4238 = vmatpush1.msra.mxu0 %v4213
    %4239 = vmatprep.subr.mxu0 0.0
    %4240 = vmatpush1.msra.mxu0 %v4214
    %4241 = vmatprep.subr.mxu0 0.0
    %4242 = vmatpush1.msra.mxu0 %v4215
    %4243 = vmatprep.subr.mxu0 0.0
    %4244 = vmatpush1.msra.mxu0 %v4216
    %4245 = vmatprep.subr.mxu0 0.0
    %4246 = vmatpush1.msra.mxu0 %v4217
    %4247 = vmatprep.subr.mxu0 0.0
    %4248 = vmatpush1.msra.mxu0 %v4218
    %4249 = vmatprep.subr.mxu0 0.0
    %4250 = vmatpush1.msra.mxu0 0.0
    %4251 = vmatprep.subr.mxu0 0.0
    %4252 = vmatpush1.msra.mxu0 0.0
    %4253 = vmatprep.subr.mxu0 0.0
    %4254 = vmatpush1.msra.mxu0 0.0
    %4255 = vmatprep.subr.mxu0 0.0
    %4256 = vmatpush1.msra.mxu0 0.0
    %4257 = vmatprep.subr.mxu0 0.0
    %4258 = vmatpush1.msra.mxu0 0.0
    %4259 = vmatprep.subr.mxu0 0.0
    %4260 = vmatpush1.msra.mxu0 0.0
    %4261 = vmatprep.subr.mxu0 0.0
    %4262 = vmatpush1.msra.mxu0 0.0
    %4263 = vmatprep.subr.mxu0 0.0
    %4264 = vmatpush1.msra.mxu0 0.0
    %4265 = vmatprep.subr.mxu0 0.0
    %4266 = vmatpush1.msra.mxu0 0.0
    %4267 = vmatprep.subr.mxu0 0.0
    %4268 = vmatpush1.msra.mxu0 0.0
    %4269 = vmatprep.subr.mxu0 0.0
    %4270 = vmatpush1.msra.mxu0 0.0
    %4271 = vmatprep.subr.mxu0 0.0
    %4272 = vmatpush1.msra.mxu0 0.0
    %4273 = vmatprep.subr.mxu0 0.0
    %4274 = vmatpush1.msra.mxu0 0.0
    %4275 = vmatprep.subr.mxu0 0.0
    %4276 = vmatpush1.msra.mxu0 0.0
    %4277 = vmatprep.subr.mxu0 0.0
    %4278 = vmatpush1.msra.mxu0 0.0
    %4279 = vmatprep.subr.mxu0 0.0
    %4280 = vmatpush1.msra.mxu0 0.0
    %4281 = vmatprep.subr.mxu0 0.0
    %4282 = vmatpush1.msra.mxu0 0.0
    %4283 = vmatprep.subr.mxu0 0.0
    %4284 = vmatpush1.msra.mxu0 0.0
    %4285 = vmatprep.subr.mxu0 0.0
    %4286 = vmatpush1.msra.mxu0 0.0
    %4287 = vmatprep.subr.mxu0 0.0
    %4288 = vmatpush1.msra.mxu0 0.0
    %4289 = vmatprep.subr.mxu0 0.0
    %4290 = vmatpush1.msra.mxu0 0.0
    %4291 = vmatprep.subr.mxu0 0.0
    %4292 = vmatpush1.msra.mxu0 0.0
    %4293 = vmatprep.subr.mxu0 0.0
    %4294 = vmatpush1.msra.mxu0 0.0
    %4295 = vmatprep.subr.mxu0 0.0
    %4296 = vmatpush1.msra.mxu0 0.0
    %4297 = vmatprep.mubr.f32.mxu0 0.0
    %4298 = vmatmul.mubr.f32.gmra.mrb[0].mxu0 %v4228
    %v4299 = vpop.f32.mrb[0].mxu0
    %v4300 = vadd.f32 %v4225, %v4299
    %v4301 = vpop.f32.mrb[0].mxu0
    %4302 = vmatprep.mubr.f32.mxu0 0.0
    %4303 = vmatmul.mubr.f32.gmra.mrb[0].mxu0 %v4104
    %v4304 = vpop.f32.mrb[0].mxu0
    %v4305 = vadd.f32 %v4225, %v4304
    %v4306 = vpop.f32.mrb[0].mxu0
    %4307 = vmatprep.mubr.f32.mxu0 0.0
    %4308 = vmatmul.mubr.f32.gmra.mrb[0].mxu0 %v4231
    %v4309 = vpop.f32.mrb[0].mxu0
    %v4310 = vadd.f32 %v4225, %v4309
    %v4311 = vpop.f32.mrb[0].mxu0
    %4312 = vdwg.mxu0
    %v4313 = vtanh.pop %v4300
    %v4314 = vtanh.pop %v4305
    %v4315 = vtanh.pop %v4310
    %v4317 = vlaneseq
    %v4318 = vshrl.u32 %v4317, 7
    %v4319 = vsub.s32 0, %v4318
    %v4320 = vrot.slane %v4220, %v4319
    %v4322 = vmul.f32 %v4313, %v4320
    %v4323 = vmul.f32 %v4314, %v4320
    %v4324 = vmul.f32 %v4315, %v4320
    %v4325 = vsel %vm445, %v4322, 0.0
    %4326 = vadd.xlane.f32.xlu0 %v4325
    %v4327 = vpop.xlane.xlu0 %4326
    %v4328 = vsel %vm445, %v4323, 0.0
    %4329 = vadd.xlane.f32.xlu0 %v4328
    %v4330 = vpop.xlane.xlu0 %4329
    %v4331 = vsel %vm445, %v4324, 0.0
    %4332 = vadd.xlane.f32.xlu0 %v4331
    %v4333 = vpop.xlane.xlu0 %4332
    %v4334 = vmax.f32 %v4327, %v4330
    %v4335 = vmax.f32 %v4334, %v4333
    %v4336 = vsub.f32 %v4327, %v4335
    %v4337 = vsub.f32 %v4330, %v4335
    %v4338 = vsub.f32 %v4333, %v4335
    %v4339 = vmul.f32 %v4336, 1.442695
    %v4340 = vpow.pop %v4339
    %v4341 = vmul.f32 %v4337, 1.442695
    %v4342 = vpow.pop %v4341
    %v4343 = vmul.f32 %v4338, 1.442695
    %v4344 = vpow.pop %v4343
    %v4345 = vadd.f32 %v4340, %v4342
    %v4346 = vadd.f32 %v4345, %v4344
    %v4347 = vrcp.pop %v4346
    %v4348 = vmul.f32 1.0, %v4347
    %v4349 = vmul.f32 %v4340, %v4348
    %4351 = vset.pattern.permute.xlu0 0
    %4352 = vperm.xlu0 %4351, %v4349
    %v4353 = vpop.permute.xlu0 %4352
    %v4355 = vmul.f32 %v4353, %v4209
    %v4356 = vmul.f32 %v4342, %v4348
    %4358 = vset.pattern.permute.xlu0 0
    %4359 = vperm.xlu0 %4358, %v4356
    %v4360 = vpop.permute.xlu0 %4359
    %v4362 = vmul.f32 %v4360, %v4102
    %v4363 = vadd.f32 %v4355, %v4362
    %v4364 = vmul.f32 %v4344, %v4348
    %4366 = vset.pattern.permute.xlu0 0
    %4367 = vperm.xlu0 %4366, %v4364
    %v4368 = vpop.permute.xlu0 %4367
    %v4370 = vmul.f32 %v4368, %v4210
    %v4371 = vadd.f32 %v4363, %v4370
    %v4372 = vld [vmem:[%s13] sm:$0xff]
    %v4373 = vld [vmem:[%s13 + $0x8] sm:$0xff]
    %v4374 = vld [vmem:[%s13 + $0x10] sm:$0xff]
    %v4375 = vld [vmem:[%s13 + $0x18] sm:$0xff]
    %v4376 = vld [vmem:[%s13 + $0x20] sm:$0xff]
    %v4377 = vld [vmem:[%s13 + $0x28] sm:$0xff]
    %v4378 = vld [vmem:[%s13 + $0x30] sm:$0xff]
    %v4379 = vld [vmem:[%s13 + $0x38] sm:$0xff]
    %v4380 = vld [vmem:[%s13 + $0x40] sm:$0xff]
    %v4381 = vld [vmem:[%s13 + $0x48] sm:$0xff]
    %v4382 = vld [vmem:[%s13 + $0x50] sm:$0xff]
    %v4383 = vld [vmem:[%s13 + $0x58] sm:$0xff]
    %v4384 = vld [vmem:[%s13 + $0x60] sm:$0xff]
    %v4385 = vld [vmem:[%s13 + $0x68] sm:$0xff]
    %v4386 = vld [vmem:[%s13 + $0x70] sm:$0xff]
    %v4387 = vld [vmem:[%s13 + $0x78] sm:$0xff]
    %v4388 = vld [vmem:[%s15] sm:$0x3]
    %v4390 = vlaneseq
    %v4391 = vshrl.u32 %v4390, 7
    %v4392 = vsub.s32 0, %v4391
    %v4393 = vrot.slane %v4388, %v4392
    %v4394 = vlaneseq
    %v4395 = vshrl.u32 %v4394, 7
    %v4396 = vsub.s32 1, %v4395
    %v4397 = vrot.slane %v4388, %v4396
    %v4401 = vsel %vm445, %v4371, 0
    %4403 = vmatprep.subr.mxu0 %v4373
    %4404 = vmatpush1.msra.mxu0 %v4372
    %4405 = vmatprep.subr.mxu0 %v4375
    %4406 = vmatpush1.msra.mxu0 %v4374
    %4407 = vmatprep.subr.mxu0 %v4377
    %4408 = vmatpush1.msra.mxu0 %v4376
    %4409 = vmatprep.subr.mxu0 %v4379
    %4410 = vmatpush1.msra.mxu0 %v4378
    %4411 = vmatprep.subr.mxu0 %v4381
    %4412 = vmatpush1.msra.mxu0 %v4380
    %4413 = vmatprep.subr.mxu0 %v4383
    %4414 = vmatpush1.msra.mxu0 %v4382
    %4415 = vmatprep.subr.mxu0 %v4385
    %4416 = vmatpush1.msra.mxu0 %v4384
    %4417 = vmatprep.subr.mxu0 %v4387
    %4418 = vmatpush1.msra.mxu0 %v4386
    %4419 = vmatprep.subr.mxu0 0.0
    %4420 = vmatpush1.msra.mxu0 0.0
    %4421 = vmatprep.subr.mxu0 0.0
    %4422 = vmatpush1.msra.mxu0 0.0
    %4423 = vmatprep.subr.mxu0 0.0
    %4424 = vmatpush1.msra.mxu0 0.0
    %4425 = vmatprep.subr.mxu0 0.0
    %4426 = vmatpush1.msra.mxu0 0.0
    %4427 = vmatprep.subr.mxu0 0.0
    %4428 = vmatpush1.msra.mxu0 0.0
    %4429 = vmatprep.subr.mxu0 0.0
    %4430 = vmatpush1.msra.mxu0 0.0
    %4431 = vmatprep.subr.mxu0 0.0
    %4432 = vmatpush1.msra.mxu0 0.0
    %4433 = vmatprep.subr.mxu0 0.0
    %4434 = vmatpush1.msra.mxu0 0.0
    %4435 = vmatprep.subr.mxu0 0.0
    %4436 = vmatpush1.msra.mxu0 0.0
    %4437 = vmatprep.subr.mxu0 0.0
    %4438 = vmatpush1.msra.mxu0 0.0
    %4439 = vmatprep.subr.mxu0 0.0
    %4440 = vmatpush1.msra.mxu0 0.0
    %4441 = vmatprep.subr.mxu0 0.0
    %4442 = vmatpush1.msra.mxu0 0.0
    %4443 = vmatprep.subr.mxu0 0.0
    %4444 = vmatpush1.msra.mxu0 0.0
    %4445 = vmatprep.subr.mxu0 0.0
    %4446 = vmatpush1.msra.mxu0 0.0
    %4447 = vmatprep.subr.mxu0 0.0
    %4448 = vmatpush1.msra.mxu0 0.0
    %4449 = vmatprep.subr.mxu0 0.0
    %4450 = vmatpush1.msra.mxu0 0.0
    %4451 = vmatprep.subr.mxu0 0.0
    %4452 = vmatpush1.msra.mxu0 0.0
    %4453 = vmatprep.subr.mxu0 0.0
    %4454 = vmatpush1.msra.mxu0 0.0
    %4455 = vmatprep.subr.mxu0 0.0
    %4456 = vmatpush1.msra.mxu0 0.0
    %4457 = vmatprep.subr.mxu0 0.0
    %4458 = vmatpush1.msra.mxu0 0.0
    %4459 = vmatprep.subr.mxu0 0.0
    %4460 = vmatpush1.msra.mxu0 0.0
    %4461 = vmatprep.subr.mxu0 0.0
    %4462 = vmatpush1.msra.mxu0 0.0
    %4463 = vmatprep.subr.mxu0 0.0
    %4464 = vmatpush1.msra.mxu0 0.0
    %4465 = vmatprep.subr.mxu0 0.0
    %4466 = vmatpush1.msra.mxu0 0.0
    %4467 = vmatprep.mubr.f32.mxu0 0.0
    %4468 = vmatmul.mubr.f32.gmra.mrb[0].mxu0 %v4401
    %v4469 = vpop.f32.mrb[0].mxu0
    %v4470 = vadd.f32 %v4393, %v4469
    %v4471 = vpop.f32.mrb[0].mxu0
    %v4472 = vadd.f32 %v4397, %v4471
    %4473 = vdwg.mxu0
    %v4474 = vld [vmem:[%s14] sm:$0xff]
    %v4475 = vld [vmem:[%s14 + $0x8] sm:$0xff]
    %v4476 = vld [vmem:[%s14 + $0x10] sm:$0xff]
    %v4477 = vld [vmem:[%s14 + $0x18] sm:$0xff]
    %v4478 = vld [vmem:[%s14 + $0x20] sm:$0xff]
    %v4479 = vld [vmem:[%s14 + $0x28] sm:$0xff]
    %v4480 = vld [vmem:[%s14 + $0x30] sm:$0xff]
    %v4481 = vld [vmem:[%s14 + $0x38] sm:$0xff]
    %v4482 = vld [vmem:[%s14 + $0x40] sm:$0xff]
    %v4483 = vld [vmem:[%s14 + $0x48] sm:$0xff]
    %v4484 = vld [vmem:[%s14 + $0x50] sm:$0xff]
    %v4485 = vld [vmem:[%s14 + $0x58] sm:$0xff]
    %v4486 = vld [vmem:[%s14 + $0x60] sm:$0xff]
    %v4487 = vld [vmem:[%s14 + $0x68] sm:$0xff]
    %v4488 = vld [vmem:[%s14 + $0x70] sm:$0xff]
    %v4489 = vld [vmem:[%s14 + $0x78] sm:$0xff]
    %v4492 = vrot.slane %v4470, 4
    %v4493 = vrot.slane %v4472, 4
    %v4496 = vsel %vm427, %v4470, %v4492
    %v4497 = vsel %vm428, %v4472, %v4493
    %4498 = vmatprep.subr.mxu0 %v4475
    %4499 = vmatpush1.msra.mxu0 %v4474
    %4500 = vmatprep.subr.mxu0 %v4477
    %4501 = vmatpush1.msra.mxu0 %v4476
    %4502 = vmatprep.subr.mxu0 %v4479
    %4503 = vmatpush1.msra.mxu0 %v4478
    %4504 = vmatprep.subr.mxu0 %v4481
    %4505 = vmatpush1.msra.mxu0 %v4480
    %4506 = vmatprep.subr.mxu0 %v4483
    %4507 = vmatpush1.msra.mxu0 %v4482
    %4508 = vmatprep.subr.mxu0 %v4485
    %4509 = vmatpush1.msra.mxu0 %v4484
    %4510 = vmatprep.subr.mxu0 %v4487
    %4511 = vmatpush1.msra.mxu0 %v4486
    %4512 = vmatprep.subr.mxu0 %v4489
    %4513 = vmatpush1.msra.mxu0 %v4488
    %4514 = vmatprep.subr.mxu0 0.0
    %4515 = vmatpush1.msra.mxu0 0.0
    %4516 = vmatprep.subr.mxu0 0.0
    %4517 = vmatpush1.msra.mxu0 0.0
    %4518 = vmatprep.subr.mxu0 0.0
    %4519 = vmatpush1.msra.mxu0 0.0
    %4520 = vmatprep.subr.mxu0 0.0
    %4521 = vmatpush1.msra.mxu0 0.0
    %4522 = vmatprep.subr.mxu0 0.0
    %4523 = vmatpush1.msra.mxu0 0.0
    %4524 = vmatprep.subr.mxu0 0.0
    %4525 = vmatpush1.msra.mxu0 0.0
    %4526 = vmatprep.subr.mxu0 0.0
    %4527 = vmatpush1.msra.mxu0 0.0
    %4528 = vmatprep.subr.mxu0 0.0
    %4529 = vmatpush1.msra.mxu0 0.0
    %4530 = vmatprep.subr.mxu0 0.0
    %4531 = vmatpush1.msra.mxu0 0.0
    %4532 = vmatprep.subr.mxu0 0.0
    %4533 = vmatpush1.msra.mxu0 0.0
    %4534 = vmatprep.subr.mxu0 0.0
    %4535 = vmatpush1.msra.mxu0 0.0
    %4536 = vmatprep.subr.mxu0 0.0
    %4537 = vmatpush1.msra.mxu0 0.0
    %4538 = vmatprep.subr.mxu0 0.0
    %4539 = vmatpush1.msra.mxu0 0.0
    %4540 = vmatprep.subr.mxu0 0.0
    %4541 = vmatpush1.msra.mxu0 0.0
    %4542 = vmatprep.subr.mxu0 0.0
    %4543 = vmatpush1.msra.mxu0 0.0
    %4544 = vmatprep.subr.mxu0 0.0
    %4545 = vmatpush1.msra.mxu0 0.0
    %4546 = vmatprep.subr.mxu0 0.0
    %4547 = vmatpush1.msra.mxu0 0.0
    %4548 = vmatprep.subr.mxu0 0.0
    %4549 = vmatpush1.msra.mxu0 0.0
    %4550 = vmatprep.subr.mxu0 0.0
    %4551 = vmatpush1.msra.mxu0 0.0
    %4552 = vmatprep.subr.mxu0 0.0
    %4553 = vmatpush1.msra.mxu0 0.0
    %4554 = vmatprep.subr.mxu0 0.0
    %4555 = vmatpush1.msra.mxu0 0.0
    %4556 = vmatprep.subr.mxu0 0.0
    %4557 = vmatpush1.msra.mxu0 0.0
    %4558 = vmatprep.subr.mxu0 0.0
    %4559 = vmatpush1.msra.mxu0 0.0
    %4560 = vmatprep.subr.mxu0 0.0
    %4561 = vmatpush1.msra.mxu0 0.0
    %4562 = vmatprep.mubr.f32.mxu0 0.0
    %4563 = vmatmul.mubr.f32.gmra.mrb[0].mxu0 %v447
    %v4564 = vpop.f32.mrb[0].mxu0
    %v4565 = vadd.f32 0.0, %v4564
    %v4566 = vpop.f32.mrb[0].mxu0
    %v4567 = vadd.f32 0.0, %v4566
    %4568 = vdwg.mxu0
    %v4569 = vadd.f32 %v4496, %v4565
    %v4570 = vadd.f32 %v4497, %v4567
    %v4571 = vxor.u32 %v4569, 2147483648
    %v4572 = vxor.u32 %v4570, 2147483648
    %v4573 = vmul.f32 %v4571, 1.442695
    %v4574 = vpow.pop %v4573
    %v4575 = vmul.f32 %v4572, 1.442695
    %v4576 = vpow.pop %v4575
    %v4577 = vadd.f32 %v4574, 1.0
    %v4578 = vadd.f32 %v4576, 1.0
    %v4579 = vrcp.pop %v4577
    %v4580 = vmul.f32 1.0, %v4579
    %v4581 = vrcp.pop %v4578
    %v4582 = vmul.f32 1.0, %v4581
    %v4583 = vtanh.pop %v4570
    %v4584 = vmul.f32 %v4580, 0.0
    %4586 = vrot.lane.b32.xlu0 %v4583, 64
    %v4587 = vpop.permute.xlu0 %4586
    %v4589 = vmul.f32 %v4580, %v4587
    %4591 = vrot.lane.b32.xlu0 %v4589, 64
    %v4592 = vpop.permute.xlu0 %4591
    %v4594 = vadd.f32 %v4584, %v4592
    %v4595 = vtanh.pop %v4594
    %4597 = vrot.lane.b32.xlu0 %v4595, 64
    %v4598 = vpop.permute.xlu0 %4597
    %v4600 = vmul.f32 %v4582, %v4598
    %v4602 = vsel %vm445, %v4600, 0
    %4604 = vmatprep.subr.mxu0 %v4475
    %4605 = vmatpush1.msra.mxu0 %v4474
    %4606 = vmatprep.subr.mxu0 %v4477
    %4607 = vmatpush1.msra.mxu0 %v4476
    %4608 = vmatprep.subr.mxu0 %v4479
    %4609 = vmatpush1.msra.mxu0 %v4478
    %4610 = vmatprep.subr.mxu0 %v4481
    %4611 = vmatpush1.msra.mxu0 %v4480
    %4612 = vmatprep.subr.mxu0 %v4483
    %4613 = vmatpush1.msra.mxu0 %v4482
    %4614 = vmatprep.subr.mxu0 %v4485
    %4615 = vmatpush1.msra.mxu0 %v4484
    %4616 = vmatprep.subr.mxu0 %v4487
    %4617 = vmatpush1.msra.mxu0 %v4486
    %4618 = vmatprep.subr.mxu0 %v4489
    %4619 = vmatpush1.msra.mxu0 %v4488
    %4620 = vmatprep.subr.mxu0 0.0
    %4621 = vmatpush1.msra.mxu0 0.0
    %4622 = vmatprep.subr.mxu0 0.0
    %4623 = vmatpush1.msra.mxu0 0.0
    %4624 = vmatprep.subr.mxu0 0.0
    %4625 = vmatpush1.msra.mxu0 0.0
    %4626 = vmatprep.subr.mxu0 0.0
    %4627 = vmatpush1.msra.mxu0 0.0
    %4628 = vmatprep.subr.mxu0 0.0
    %4629 = vmatpush1.msra.mxu0 0.0
    %4630 = vmatprep.subr.mxu0 0.0
    %4631 = vmatpush1.msra.mxu0 0.0
    %4632 = vmatprep.subr.mxu0 0.0
    %4633 = vmatpush1.msra.mxu0 0.0
    %4634 = vmatprep.subr.mxu0 0.0
    %4635 = vmatpush1.msra.mxu0 0.0
    %4636 = vmatprep.subr.mxu0 0.0
    %4637 = vmatpush1.msra.mxu0 0.0
    %4638 = vmatprep.subr.mxu0 0.0
    %4639 = vmatpush1.msra.mxu0 0.0
    %4640 = vmatprep.subr.mxu0 0.0
    %4641 = vmatpush1.msra.mxu0 0.0
    %4642 = vmatprep.subr.mxu0 0.0
    %4643 = vmatpush1.msra.mxu0 0.0
    %4644 = vmatprep.subr.mxu0 0.0
    %4645 = vmatpush1.msra.mxu0 0.0
    %4646 = vmatprep.subr.mxu0 0.0
    %4647 = vmatpush1.msra.mxu0 0.0
    %4648 = vmatprep.subr.mxu0 0.0
    %4649 = vmatpush1.msra.mxu0 0.0
    %4650 = vmatprep.subr.mxu0 0.0
    %4651 = vmatpush1.msra.mxu0 0.0
    %4652 = vmatprep.subr.mxu0 0.0
    %4653 = vmatpush1.msra.mxu0 0.0
    %4654 = vmatprep.subr.mxu0 0.0
    %4655 = vmatpush1.msra.mxu0 0.0
    %4656 = vmatprep.subr.mxu0 0.0
    %4657 = vmatpush1.msra.mxu0 0.0
    %4658 = vmatprep.subr.mxu0 0.0
    %4659 = vmatpush1.msra.mxu0 0.0
    %4660 = vmatprep.subr.mxu0 0.0
    %4661 = vmatpush1.msra.mxu0 0.0
    %4662 = vmatprep.subr.mxu0 0.0
    %4663 = vmatpush1.msra.mxu0 0.0
    %4664 = vmatprep.subr.mxu0 0.0
    %4665 = vmatpush1.msra.mxu0 0.0
    %4666 = vmatprep.subr.mxu0 0.0
    %4667 = vmatpush1.msra.mxu0 0.0
    %4668 = vmatprep.mubr.f32.mxu0 0.0
    %4669 = vmatmul.mubr.f32.gmra.mrb[0].mxu0 %v4602
    %v4670 = vpop.f32.mrb[0].mxu0
    %v4671 = vadd.f32 0.0, %v4670
    %v4672 = vpop.f32.mrb[0].mxu0
    %v4673 = vadd.f32 0.0, %v4672
    %4674 = vdwg.mxu0
    %v4677 = vrot.slane %v4671, 6
    %v4678 = vrot.slane %v4673, 6
    %v4681 = vadd.f32 %v4470, %v4677
    %v4682 = vadd.f32 %v4472, %v4678
    %v4683 = vxor.u32 %v4681, 2147483648
    %v4684 = vxor.u32 %v4682, 2147483648
    %v4685 = vmul.f32 %v4683, 1.442695
    %v4686 = vpow.pop %v4685
    %v4687 = vmul.f32 %v4684, 1.442695
    %v4688 = vpow.pop %v4687
    %v4689 = vadd.f32 %v4686, 1.0
    %v4690 = vadd.f32 %v4688, 1.0
    %v4691 = vrcp.pop %v4689
    %v4692 = vmul.f32 1.0, %v4691
    %v4693 = vrcp.pop %v4690
    %v4694 = vmul.f32 1.0, %v4693
    %v4695 = vtanh.pop %v4682
    %v4697 = vrot.slane %v4594, 6
    %v4699 = vmul.f32 %v4692, %v4697
    %4701 = vrot.lane.b32.xlu0 %v4695, 64
    %v4702 = vpop.permute.xlu0 %4701
    %v4704 = vmul.f32 %v4692, %v4702
    %4706 = vrot.lane.b32.xlu0 %v4704, 64
    %v4707 = vpop.permute.xlu0 %4706
    %v4709 = vadd.f32 %v4699, %v4707
    %v4710 = vtanh.pop %v4709
    %4712 = vrot.lane.b32.xlu0 %v4710, 64
    %v4713 = vpop.permute.xlu0 %4712
    %v4715 = vmul.f32 %v4694, %v4713
    %v4717 = vrot.slane %v4715, 2
    %v4718 = vsel %vm445, %v4717, 0
    %4720 = vmatprep.subr.mxu0 %v4475
    %4721 = vmatpush1.msra.mxu0 %v4474
    %4722 = vmatprep.subr.mxu0 %v4477
    %4723 = vmatpush1.msra.mxu0 %v4476
    %4724 = vmatprep.subr.mxu0 %v4479
    %4725 = vmatpush1.msra.mxu0 %v4478
    %4726 = vmatprep.subr.mxu0 %v4481
    %4727 = vmatpush1.msra.mxu0 %v4480
    %4728 = vmatprep.subr.mxu0 %v4483
    %4729 = vmatpush1.msra.mxu0 %v4482
    %4730 = vmatprep.subr.mxu0 %v4485
    %4731 = vmatpush1.msra.mxu0 %v4484
    %4732 = vmatprep.subr.mxu0 %v4487
    %4733 = vmatpush1.msra.mxu0 %v4486
    %4734 = vmatprep.subr.mxu0 %v4489
    %4735 = vmatpush1.msra.mxu0 %v4488
    %4736 = vmatprep.subr.mxu0 0.0
    %4737 = vmatpush1.msra.mxu0 0.0
    %4738 = vmatprep.subr.mxu0 0.0
    %4739 = vmatpush1.msra.mxu0 0.0
    %4740 = vmatprep.subr.mxu0 0.0
    %4741 = vmatpush1.msra.mxu0 0.0
    %4742 = vmatprep.subr.mxu0 0.0
    %4743 = vmatpush1.msra.mxu0 0.0
    %4744 = vmatprep.subr.mxu0 0.0
    %4745 = vmatpush1.msra.mxu0 0.0
    %4746 = vmatprep.subr.mxu0 0.0
    %4747 = vmatpush1.msra.mxu0 0.0
    %4748 = vmatprep.subr.mxu0 0.0
    %4749 = vmatpush1.msra.mxu0 0.0
    %4750 = vmatprep.subr.mxu0 0.0
    %4751 = vmatpush1.msra.mxu0 0.0
    %4752 = vmatprep.subr.mxu0 0.0
    %4753 = vmatpush1.msra.mxu0 0.0
    %4754 = vmatprep.subr.mxu0 0.0
    %4755 = vmatpush1.msra.mxu0 0.0
    %4756 = vmatprep.subr.mxu0 0.0
    %4757 = vmatpush1.msra.mxu0 0.0
    %4758 = vmatprep.subr.mxu0 0.0
    %4759 = vmatpush1.msra.mxu0 0.0
    %4760 = vmatprep.subr.mxu0 0.0
    %4761 = vmatpush1.msra.mxu0 0.0
    %4762 = vmatprep.subr.mxu0 0.0
    %4763 = vmatpush1.msra.mxu0 0.0
    %4764 = vmatprep.subr.mxu0 0.0
    %4765 = vmatpush1.msra.mxu0 0.0
    %4766 = vmatprep.subr.mxu0 0.0
    %4767 = vmatpush1.msra.mxu0 0.0
    %4768 = vmatprep.subr.mxu0 0.0
    %4769 = vmatpush1.msra.mxu0 0.0
    %4770 = vmatprep.subr.mxu0 0.0
    %4771 = vmatpush1.msra.mxu0 0.0
    %4772 = vmatprep.subr.mxu0 0.0
    %4773 = vmatpush1.msra.mxu0 0.0
    %4774 = vmatprep.subr.mxu0 0.0
    %4775 = vmatpush1.msra.mxu0 0.0
    %4776 = vmatprep.subr.mxu0 0.0
    %4777 = vmatpush1.msra.mxu0 0.0
    %4778 = vmatprep.subr.mxu0 0.0
    %4779 = vmatpush1.msra.mxu0 0.0
    %4780 = vmatprep.subr.mxu0 0.0
    %4781 = vmatpush1.msra.mxu0 0.0
    %4782 = vmatprep.subr.mxu0 0.0
    %4783 = vmatpush1.msra.mxu0 0.0
    %4784 = vmatprep.mubr.f32.mxu0 0.0
    %4785 = vmatmul.mubr.f32.gmra.mrb[0].mxu0 %v4718
    %v4786 = vpop.f32.mrb[0].mxu0
    %v4787 = vadd.f32 0.0, %v4786
    %v4788 = vpop.f32.mrb[0].mxu0
    %v4789 = vadd.f32 0.0, %v4788
    %4790 = vdwg.mxu0
    %v4793 = vrot.slane %v4787, 4
    %v4794 = vrot.slane %v4789, 4
    %v4797 = vadd.f32 %v4496, %v4793
    %v4798 = vadd.f32 %v4497, %v4794
    %v4799 = vxor.u32 %v4797, 2147483648
    %v4800 = vxor.u32 %v4798, 2147483648
    %v4801 = vmul.f32 %v4799, 1.442695
    %v4802 = vpow.pop %v4801
    %v4803 = vmul.f32 %v4800, 1.442695
    %v4804 = vpow.pop %v4803
    %v4805 = vadd.f32 %v4802, 1.0
    %v4806 = vadd.f32 %v4804, 1.0
    %v4807 = vrcp.pop %v4805
    %v4808 = vmul.f32 1.0, %v4807
    %v4809 = vrcp.pop %v4806
    %v4810 = vmul.f32 1.0, %v4809
    %v4811 = vtanh.pop %v4798
    %v4813 = vrot.slane %v4709, 6
    %v4815 = vmul.f32 %v4808, %v4813
    %4817 = vrot.lane.b32.xlu0 %v4811, 64
    %v4818 = vpop.permute.xlu0 %4817
    %v4820 = vmul.f32 %v4808, %v4818
    %4822 = vrot.lane.b32.xlu0 %v4820, 64
    %v4823 = vpop.permute.xlu0 %4822
    %v4825 = vadd.f32 %v4815, %v4823
    %v4826 = vtanh.pop %v4825
    %4828 = vrot.lane.b32.xlu0 %v4826, 64
    %v4829 = vpop.permute.xlu0 %4828
    %v4831 = vmul.f32 %v4810, %v4829
    %vm4832 = vcmask 1041408
    %v4833 = vsel %vm4832, %v4600, %v4715
    %vm4834 = vcmask 1043456
    %v4835 = vsel %vm4834, %v4833, %v4831
    %v4837 = vrot.slane %v4831, 4
    %v4839 = vrot.slane %v4600, 4
    %v4841 = vsel %vm4832, %v4837, %v4715
    %v4842 = vsel %vm4834, %v4841, %v4839
    %v4843 = vsel %vm190, %v4835, %v4842
    %v4844 = vld [vmem:[%s16] sm:$0xff]
    %v4845 = vld [vmem:[%s16 + $0x8] sm:$0xff]
    %v4846 = vld [vmem:[%s16 + $0x10] sm:$0xff]
    %v4847 = vld [vmem:[%s16 + $0x18] sm:$0xff]
    %v4848 = vld [vmem:[%s16 + $0x20] sm:$0xff]
    %v4849 = vld [vmem:[%s16 + $0x28] sm:$0xff]
    %v4850 = vld [vmem:[%s16 + $0x30] sm:$0xff]
    %v4851 = vld [vmem:[%s16 + $0x38] sm:$0xff]
    %v4852 = vld [vmem:[%s17] sm:$0x1]
    %v4853 = vld [vmem:[%s18] sm:$0x1]
    %v4855 = vlaneseq
    %v4856 = vshrl.u32 %v4855, 7
    %v4857 = vsub.s32 0, %v4856
    %v4858 = vrot.slane %v4852, %v4857
    %v4861 = vsel %vm445, %v4843, 0
    %4863 = vmatprep.subr.mxu0 0.0
    %4864 = vmatpush1.msra.mxu0 %v4844
    %4865 = vmatprep.subr.mxu0 0.0
    %4866 = vmatpush1.msra.mxu0 %v4845
    %4867 = vmatprep.subr.mxu0 0.0
    %4868 = vmatpush1.msra.mxu0 %v4846
    %4869 = vmatprep.subr.mxu0 0.0
    %4870 = vmatpush1.msra.mxu0 %v4847
    %4871 = vmatprep.subr.mxu0 0.0
    %4872 = vmatpush1.msra.mxu0 %v4848
    %4873 = vmatprep.subr.mxu0 0.0
    %4874 = vmatpush1.msra.mxu0 %v4849
    %4875 = vmatprep.subr.mxu0 0.0
    %4876 = vmatpush1.msra.mxu0 %v4850
    %4877 = vmatprep.subr.mxu0 0.0
    %4878 = vmatpush1.msra.mxu0 %v4851
    %4879 = vmatprep.subr.mxu0 0.0
    %4880 = vmatpush1.msra.mxu0 0.0
    %4881 = vmatprep.subr.mxu0 0.0
    %4882 = vmatpush1.msra.mxu0 0.0
    %4883 = vmatprep.subr.mxu0 0.0
    %4884 = vmatpush1.msra.mxu0 0.0
    %4885 = vmatprep.subr.mxu0 0.0
    %4886 = vmatpush1.msra.mxu0 0.0
    %4887 = vmatprep.subr.mxu0 0.0
    %4888 = vmatpush1.msra.mxu0 0.0
    %4889 = vmatprep.subr.mxu0 0.0
    %4890 = vmatpush1.msra.mxu0 0.0
    %4891 = vmatprep.subr.mxu0 0.0
    %4892 = vmatpush1.msra.mxu0 0.0
    %4893 = vmatprep.subr.mxu0 0.0
    %4894 = vmatpush1.msra.mxu0 0.0
    %4895 = vmatprep.subr.mxu0 0.0
    %4896 = vmatpush1.msra.mxu0 0.0
    %4897 = vmatprep.subr.mxu0 0.0
    %4898 = vmatpush1.msra.mxu0 0.0
    %4899 = vmatprep.subr.mxu0 0.0
    %4900 = vmatpush1.msra.mxu0 0.0
    %4901 = vmatprep.subr.mxu0 0.0
    %4902 = vmatpush1.msra.mxu0 0.0
    %4903 = vmatprep.subr.mxu0 0.0
    %4904 = vmatpush1.msra.mxu0 0.0
    %4905 = vmatprep.subr.mxu0 0.0
    %4906 = vmatpush1.msra.mxu0 0.0
    %4907 = vmatprep.subr.mxu0 0.0
    %4908 = vmatpush1.msra.mxu0 0.0
    %4909 = vmatprep.subr.mxu0 0.0
    %4910 = vmatpush1.msra.mxu0 0.0
    %4911 = vmatprep.subr.mxu0 0.0
    %4912 = vmatpush1.msra.mxu0 0.0
    %4913 = vmatprep.subr.mxu0 0.0
    %4914 = vmatpush1.msra.mxu0 0.0
    %4915 = vmatprep.subr.mxu0 0.0
    %4916 = vmatpush1.msra.mxu0 0.0
    %4917 = vmatprep.subr.mxu0 0.0
    %4918 = vmatpush1.msra.mxu0 0.0
    %4919 = vmatprep.subr.mxu0 0.0
    %4920 = vmatpush1.msra.mxu0 0.0
    %4921 = vmatprep.subr.mxu0 0.0
    %4922 = vmatpush1.msra.mxu0 0.0
    %4923 = vmatprep.subr.mxu0 0.0
    %4924 = vmatpush1.msra.mxu0 0.0
    %4925 = vmatprep.subr.mxu0 0.0
    %4926 = vmatpush1.msra.mxu0 0.0
    %4927 = vmatprep.mubr.f32.mxu0 0.0
    %4928 = vmatmul.mubr.f32.gmra.mrb[0].mxu0 %v4861
    %v4929 = vpop.f32.mrb[0].mxu0
    %v4930 = vadd.f32 %v4858, %v4929
    %v4931 = vpop.f32.mrb[0].mxu0
    %4932 = vdwg.mxu0
    %v4933 = vtanh.pop %v4930
    %v4935 = vlaneseq
    %v4936 = vshrl.u32 %v4935, 7
    %v4937 = vsub.s32 0, %v4936
    %v4938 = vrot.slane %v4853, %v4937
    %v4940 = vmul.f32 %v4933, %v4938
    %vm4941 = vcmask 521216
    %v4942 = vsel %vm4941, %v4940, 0.0
    %4943 = vadd.xlane.f32.xlu0 %v4942
    %v4944 = vpop.xlane.xlu0 %4943
    %v4946 = vrot.slane %v4944, 2
    %v4948 = vmax.f32 %v4944, %v4946
    %v4949 = vrot.slane %v4944, 4
    %v4951 = vmax.f32 %v4948, %v4949
    %v4953 = vrot.slane %v4951, 6
    %v4955 = vrot.slane %v4951, 4
    %v4957 = vsel %vm4832, %v4951, %v4953
    %v4958 = vsel %vm4834, %v4957, %v4955
    %v4959 = vsub.f32 %v4944, %v4958
    %v4960 = vmul.f32 %v4959, 1.442695
    %v4961 = vpow.pop %v4960
    %v4963 = vrot.slane %v4961, 2
    %v4965 = vadd.f32 %v4961, %v4963
    %v4966 = vrot.slane %v4961, 4
    %v4968 = vadd.f32 %v4965, %v4966
    %v4969 = vrcp.pop %v4968
    %v4970 = vmul.f32 1.0, %v4969
    %v4971 = vmul.f32 %v4961, %v4970
    %4973 = vset.pattern.permute.xlu0 0
    %4974 = vperm.xlu0 %4973, %v4971
    %v4975 = vpop.permute.xlu0 %4974
    %v4977 = vmul.f32 %v4975, %v4843
    %v4979 = vrot.slane %v4970, 6
    %v4981 = vmul.f32 %v4961, %v4979
    %4983 = vset.pattern.permute.xlu0 0
    %4984 = vperm.xlu0 %4983, %v4981
    %v4985 = vpop.permute.xlu0 %4984
    %v4987 = vmul.f32 %v4985, %v4843
    %v4989 = vrot.slane %v4987, 2
    %v4991 = vadd.f32 %v4977, %v4989
    %v4992 = vrot.slane %v4970, 4
    %v4994 = vmul.f32 %v4961, %v4992
    %4996 = vset.pattern.permute.xlu0 0
    %4997 = vperm.xlu0 %4996, %v4994
    %v4998 = vpop.permute.xlu0 %4997
    %v5000 = vmul.f32 %v4998, %v4843
    %v5002 = vrot.slane %v5000, 4
    %v5004 = vadd.f32 %v4991, %v5002
    %v5005 = vld [vmem:[%s19] sm:$0xff]
    %v5006 = vld [vmem:[%s19 + $0x8] sm:$0xff]
    %v5007 = vld [vmem:[%s19 + $0x10] sm:$0xff]
    %v5008 = vld [vmem:[%s19 + $0x18] sm:$0xff]
    %v5009 = vld [vmem:[%s19 + $0x20] sm:$0xff]
    %v5010 = vld [vmem:[%s19 + $0x28] sm:$0xff]
    %v5011 = vld [vmem:[%s19 + $0x30] sm:$0xff]
    %v5012 = vld [vmem:[%s19 + $0x38] sm:$0xff]
    %v5013 = vld [vmem:[%s20] sm:$0x1]
    %v5015 = vlaneseq
    %v5016 = vshrl.u32 %v5015, 7
    %v5017 = vsub.s32 0, %v5016
    %v5018 = vrot.slane %v5013, %v5017
    %v5021 = vsel %vm445, %v5004, 0
    %5023 = vmatprep.subr.mxu0 0.0
    %5024 = vmatpush1.msra.mxu0 %v5005
    %5025 = vmatprep.subr.mxu0 0.0
    %5026 = vmatpush1.msra.mxu0 %v5006
    %5027 = vmatprep.subr.mxu0 0.0
    %5028 = vmatpush1.msra.mxu0 %v5007
    %5029 = vmatprep.subr.mxu0 0.0
    %5030 = vmatpush1.msra.mxu0 %v5008
    %5031 = vmatprep.subr.mxu0 0.0
    %5032 = vmatpush1.msra.mxu0 %v5009
    %5033 = vmatprep.subr.mxu0 0.0
    %5034 = vmatpush1.msra.mxu0 %v5010
    %5035 = vmatprep.subr.mxu0 0.0
    %5036 = vmatpush1.msra.mxu0 %v5011
    %5037 = vmatprep.subr.mxu0 0.0
    %5038 = vmatpush1.msra.mxu0 %v5012
    %5039 = vmatprep.subr.mxu0 0.0
    %5040 = vmatpush1.msra.mxu0 0.0
    %5041 = vmatprep.subr.mxu0 0.0
    %5042 = vmatpush1.msra.mxu0 0.0
    %5043 = vmatprep.subr.mxu0 0.0
    %5044 = vmatpush1.msra.mxu0 0.0
    %5045 = vmatprep.subr.mxu0 0.0
    %5046 = vmatpush1.msra.mxu0 0.0
    %5047 = vmatprep.subr.mxu0 0.0
    %5048 = vmatpush1.msra.mxu0 0.0
    %5049 = vmatprep.subr.mxu0 0.0
    %5050 = vmatpush1.msra.mxu0 0.0
    %5051 = vmatprep.subr.mxu0 0.0
    %5052 = vmatpush1.msra.mxu0 0.0
    %5053 = vmatprep.subr.mxu0 0.0
    %5054 = vmatpush1.msra.mxu0 0.0
    %5055 = vmatprep.subr.mxu0 0.0
    %5056 = vmatpush1.msra.mxu0 0.0
    %5057 = vmatprep.subr.mxu0 0.0
    %5058 = vmatpush1.msra.mxu0 0.0
    %5059 = vmatprep.subr.mxu0 0.0
    %5060 = vmatpush1.msra.mxu0 0.0
    %5061 = vmatprep.subr.mxu0 0.0
    %5062 = vmatpush1.msra.mxu0 0.0
    %5063 = vmatprep.subr.mxu0 0.0
    %5064 = vmatpush1.msra.mxu0 0.0
    %5065 = vmatprep.subr.mxu0 0.0
    %5066 = vmatpush1.msra.mxu0 0.0
    %5067 = vmatprep.subr.mxu0 0.0
    %5068 = vmatpush1.msra.mxu0 0.0
    %5069 = vmatprep.subr.mxu0 0.0
    %5070 = vmatpush1.msra.mxu0 0.0
    %5071 = vmatprep.subr.mxu0 0.0
    %5072 = vmatpush1.msra.mxu0 0.0
    %5073 = vmatprep.subr.mxu0 0.0
    %5074 = vmatpush1.msra.mxu0 0.0
    %5075 = vmatprep.subr.mxu0 0.0
    %5076 = vmatpush1.msra.mxu0 0.0
    %5077 = vmatprep.subr.mxu0 0.0
    %5078 = vmatpush1.msra.mxu0 0.0
    %5079 = vmatprep.subr.mxu0 0.0
    %5080 = vmatpush1.msra.mxu0 0.0
    %5081 = vmatprep.subr.mxu0 0.0
    %5082 = vmatpush1.msra.mxu0 0.0
    %5083 = vmatprep.subr.mxu0 0.0
    %5084 = vmatpush1.msra.mxu0 0.0
    %5085 = vmatprep.subr.mxu0 0.0
    %5086 = vmatpush1.msra.mxu0 0.0
    %5087 = vmatprep.mubr.f32.mxu0 0.0
    %5088 = vmatmul.mubr.f32.gmra.mrb[0].mxu0 %v5021
    %v5089 = vpop.f32.mrb[0].mxu0
    %v5090 = vadd.f32 %v5018, %v5089
    %v5091 = vpop.f32.mrb[0].mxu0
    %5092 = vdwg.mxu0
    %vm5093 = vcmask 25600
    %5094 = vst.msk [vmem:[#allocation2] sm:$0x3] %vm5093, %v5090
    // Predicated region
    $region86: #{hier_att_net_forward.1} parent=1 // pred_check
      _
    $region87: #{hier_att_net_forward.1} parent=1 // pred_check_branch
      %5096 = sbr.rel (0) target = $region89
    $region88: #{hier_att_net_forward.1} parent=1 // pred_region
      %s5098 = ssub.s32 32, 32
      %5099 = vsyncadd [#allocation3], %s5098
      %s5101 = sshll.u32 [#allocation2], 4
      %s5102 = int_to_ptr.vmem [resolvable:$true] %s5101
      %5104 = dma.vmem_to_hbm [thread:$0]  %s5102, 32, %s21, [#allocation3]
    $region89: #{hier_att_net_forward.1} parent=1 // pred_fallthru
      _
    // Predicated region
    $region90: #{hier_att_net_forward.1} parent=1 // pred_check
      _
    $region91: #{hier_att_net_forward.1} parent=1 // pred_check_branch
      %5106 = sbr.rel (0) target = $region93
    $region92: #{hier_att_net_forward.1} parent=1 // pred_region
      %5107 = dma.done [#allocation3], 32
    $region93: #{hier_att_net_forward.1} parent=1 // pred_fallthru
      _
    %5108 = vsyncpa [#allocation3], 1

</llo_original>
